<compile_context>
chip_gen: v6e
topology: v6e:2x2x1
jax: 0.10.0
libtpu: 0.0.40
codegen_flags: <defaults>
</compile_context>

<pallas_src>
import functools

import jax
import jax.numpy as jnp
from jax import lax
from jax.experimental import pallas as pl
from jax.experimental.pallas import tpu as pltpu


# ---------------------------------------------------------------------------
# conv1: Conv2d(1->30, 5x5, pad=2) + bias + ReLU + MaxPool2x2, fused.
# Input is pre-split (in XLA, on the tiny 1-channel image) into the 4 polyphase
# streams S[rp,cp] = x_pad[rp::2, cp::2]; the pooled output at (r, c) is the max
# over the 4 conv phases, each of which only needs unit-stride slices of the
# streams.  Row-tiled over pooled rows (_TH1 per grid step).
# ---------------------------------------------------------------------------
_TH1 = 16  # pooled output rows per grid step (divides 112, multiple of 8)


def _conv1_pool_kernel(x_ref, w_ref, b_ref, o_ref, taps_ref, *, cout, k):
    # x_ref   : (4, 114, 114)  polyphase streams of the padded input image (VMEM)
    # w_ref   : (cout*k*k,)    f32 weights in SMEM, index co*k*k + ky*k + kx
    # b_ref   : (cout,)        f32 bias in SMEM
    # o_ref   : (cout, _TH1, 112)  fused conv+relu+pool rows of this tile
    # taps_ref: ((k+1), (k+1), _TH1, 112) VMEM scratch with the hoisted taps
    th = o_ref.shape[1]
    wo = o_ref.shape[2]
    j = pl.program_id(1)
    r0 = pl.multiple_of(j * th, th)

    # Phase 1: hoist all shifted taps ONCE per tile; every tap below is reused
    # by all `cout` output channels (previously re-sliced per channel).
    ncode = k + 1
    for rc in range(ncode):
        for cc in range(ncode):
            s = (rc % 2) * 2 + (cc % 2)
            taps_ref[rc, cc] = x_ref[s, pl.ds(r0 + rc // 2, th), pl.ds(cc // 2, wo)]

    # Phase 2: per output channel accumulate the 4 pooling phases on the VPU;
    # the fused 2x2 maxpool is just an elementwise max of the 4 accumulators.
    @pl.loop(0, cout)
    def _(co):
        zero = jnp.zeros((th, wo), jnp.float32)
        a00, a01, a10, a11 = zero, zero, zero, zero
        for ky in range(k):
            for kx in range(k):
                wv = w_ref[co * (k * k) + ky * k + kx]          # one splat / 4 planes
                a00 = a00 + wv * taps_ref[ky, kx]
                a01 = a01 + wv * taps_ref[ky, kx + 1]
                a10 = a10 + wv * taps_ref[ky + 1, kx]
                a11 = a11 + wv * taps_ref[ky + 1, kx + 1]
        m = jnp.maximum(jnp.maximum(a00, a01), jnp.maximum(a10, a11))
        o_ref[co] = jnp.maximum(m + b_ref[co], 0.0)


def conv1_relu_pool(x, w, b):
    n = x.shape[0]
    cout, _, k, _ = w.shape                    # (30, 1, 5, 5)
    pad = k // 2
    # Padding + polyphase split of the 1-channel raw input is a negligible XLA op.
    xp = jnp.pad(x[:, 0], ((0, 0), (pad, pad), (pad, pad)))            # (N,228,228)
    xs = jnp.stack([xp[:, p::2, q::2] for p in (0, 1) for q in (0, 1)],
                   axis=1)                                             # (N,4,114,114)
    hs, ws_ = xs.shape[2], xs.shape[3]
    ho, wo = x.shape[2] // 2, x.shape[3] // 2                          # 112, 112
    kernel = functools.partial(_conv1_pool_kernel, cout=cout, k=k)
    return pl.pallas_call(
        kernel,
        out_shape=jax.ShapeDtypeStruct((n, cout, ho, wo), jnp.float32),
        grid=(n, ho // _TH1),
        in_specs=[
            pl.BlockSpec((None, 4, hs, ws_), lambda i, j: (i, 0, 0, 0)),
            pl.BlockSpec(memory_space=pltpu.MemorySpace.SMEM),
            pl.BlockSpec(memory_space=pltpu.MemorySpace.SMEM),
        ],
        out_specs=pl.BlockSpec((None, cout, _TH1, wo), lambda i, j: (i, 0, j, 0)),
        scratch_shapes=[pltpu.VMEM((k + 1, k + 1, _TH1, wo), jnp.float32)],
        compiler_params=pltpu.CompilerParams(
            dimension_semantics=("parallel", "parallel")),
    )(xs, w.reshape(-1), b)


# ---------------------------------------------------------------------------
# conv2: Conv2d(30->15, 3x3, pad=1) + bias + ReLU + MaxPool2x2, fused.
# Same polyphase trick; one grid step per batch element (pooled height is 56).
# The output-channel loop is outermost so the 4 phase accumulators stay in
# vregs, carried through a fori_loop over the 30 input channels.
# ---------------------------------------------------------------------------
def _conv2_pool_kernel(x_ref, w_ref, b_ref, o_ref, *, cin, cout, k):
    # x_ref : (cin, 4, 57, 57) polyphase streams per input channel (VMEM)
    # w_ref : (cout*cin*k*k,)  f32 weights in SMEM
    # b_ref : (cout,)          f32 bias in SMEM
    # o_ref : (cout, 56, 56)
    ho, wo = o_ref.shape[1], o_ref.shape[2]

    @pl.loop(0, cout)
    def _(co):
        def ci_body(ci, acc):
            a00, a01, a10, a11 = acc
            base = (co * cin + ci) * (k * k)
            for ky in range(k):
                for kx in range(k):
                    wv = w_ref[base + ky * k + kx]
                    t00 = x_ref[ci, (ky % 2) * 2 + (kx % 2),
                                pl.ds(ky // 2, ho), pl.ds(kx // 2, wo)]
                    t01 = x_ref[ci, (ky % 2) * 2 + ((kx + 1) % 2),
                                pl.ds(ky // 2, ho), pl.ds((kx + 1) // 2, wo)]
                    t10 = x_ref[ci, ((ky + 1) % 2) * 2 + (kx % 2),
                                pl.ds((ky + 1) // 2, ho), pl.ds(kx // 2, wo)]
                    t11 = x_ref[ci, ((ky + 1) % 2) * 2 + ((kx + 1) % 2),
                                pl.ds((ky + 1) // 2, ho), pl.ds((kx + 1) // 2, wo)]
                    a00 = a00 + wv * t00
                    a01 = a01 + wv * t01
                    a10 = a10 + wv * t10
                    a11 = a11 + wv * t11
            return a00, a01, a10, a11

        zero = jnp.zeros((ho, wo), jnp.float32)
        a00, a01, a10, a11 = lax.fori_loop(0, cin, ci_body,
                                           (zero, zero, zero, zero))
        m = jnp.maximum(jnp.maximum(a00, a01), jnp.maximum(a10, a11))
        o_ref[co] = jnp.maximum(m + b_ref[co], 0.0)


def conv2_relu_pool(x, w, b):
    n, cin, h, wd = x.shape                    # (N, 30, 112, 112)
    cout, _, k, _ = w.shape                    # (15, 30, 3, 3)
    pad = k // 2
    # TODO(synk): the pad + polyphase split of the pooled conv1 activation is
    # still an XLA pass (~3 MB/img); folding it into conv1's output stage would
    # need parity-split accumulators in the conv1 kernel.
    xp = jnp.pad(x, ((0, 0), (0, 0), (pad, pad), (pad, pad)))          # (N,30,114,114)
    xs = jnp.stack([xp[:, :, p::2, q::2] for p in (0, 1) for q in (0, 1)],
                   axis=2)                                             # (N,30,4,57,57)
    hs, ws_ = xs.shape[3], xs.shape[4]
    ho, wo = h // 2, wd // 2                                           # 56, 56
    kernel = functools.partial(_conv2_pool_kernel, cin=cin, cout=cout, k=k)
    return pl.pallas_call(
        kernel,
        out_shape=jax.ShapeDtypeStruct((n, cout, ho, wo), jnp.float32),
        grid=(n,),
        in_specs=[
            pl.BlockSpec((None, cin, 4, hs, ws_), lambda i: (i, 0, 0, 0, 0)),
            pl.BlockSpec(memory_space=pltpu.MemorySpace.SMEM),
            pl.BlockSpec(memory_space=pltpu.MemorySpace.SMEM),
        ],
        out_specs=pl.BlockSpec((None, cout, ho, wo), lambda i: (i, 0, 0, 0)),
        compiler_params=pltpu.CompilerParams(
            dimension_semantics=("parallel",)),
    )(xs, w.reshape(-1), b)


# ---------------------------------------------------------------------------
# Fused MLP head: fc1 (K-tiled bf16 MXU matmul, f32 VMEM accumulator) -> ReLU
# -> fc2 -> ReLU -> fc3, finalized on the last K step.
# ---------------------------------------------------------------------------
def _mlp_kernel(x_ref, w1_ref, b1_ref, w2_ref, b2_ref, w3_ref, b3_ref,
                o_ref, acc_ref):
    kstep = pl.program_id(0)

    @pl.when(kstep == 0)
    def _():
        acc_ref[...] = jnp.zeros_like(acc_ref)

    acc_ref[...] += jnp.dot(x_ref[...], w1_ref[...],
                            preferred_element_type=jnp.float32)

    @pl.when(kstep == pl.num_programs(0) - 1)
    def _():
        h1 = jnp.maximum(acc_ref[...] + b1_ref[...], 0.0)
        h2 = jnp.maximum(
            jnp.dot(h1, w2_ref[...], preferred_element_type=jnp.float32)
            + b2_ref[...], 0.0)
        o_ref[...] = (jnp.dot(h2, w3_ref[...],
                              preferred_element_type=jnp.float32)
                      + b3_ref[...])


def mlp_head(x, w1, b1, w2, b2, w3, b3):
    n, kdim = x.shape
    kp = ((kdim + 127) // 128) * 128              # pad K to a lane multiple
    # bf16 fc1 operands: halves the HBM-bound 24 MB weight read; f32 accumulator.
    xp = jnp.pad(x, ((0, 0), (0, kp - kdim))).astype(jnp.bfloat16)
    w1p = jnp.pad(w1, ((0, kp - kdim), (0, 0))).astype(jnp.bfloat16)
    h1, h2, nc = w1.shape[1], w2.shape[1], w3.shape[1]

    # largest multiple-of-128 divisor of kp not exceeding 8192 (keeps the w1
    # block ~1.5 MB -> safe on v7x's 64 MiB VMEM, per review: keep K tiling).
    d = kp // 128
    ktile = 128
    for t in range(1, d + 1):
        if d % t == 0 and t * 128 <= 8192:
            ktile = t * 128
    nk = kp // ktile

    return pl.pallas_call(
        _mlp_kernel,
        out_shape=jax.ShapeDtypeStruct((n, nc), jnp.float32),
        grid=(nk,),
        in_specs=[
            pl.BlockSpec((n, ktile), lambda i: (0, i)),
            pl.BlockSpec((ktile, h1), lambda i: (i, 0)),
            pl.BlockSpec((1, h1), lambda i: (0, 0)),
            pl.BlockSpec((h1, h2), lambda i: (0, 0)),
            pl.BlockSpec((1, h2), lambda i: (0, 0)),
            pl.BlockSpec((h2, nc), lambda i: (0, 0)),
            pl.BlockSpec((1, nc), lambda i: (0, 0)),
        ],
        out_specs=pl.BlockSpec((n, nc), lambda i: (0, 0)),
        scratch_shapes=[pltpu.VMEM((n, h1), jnp.float32)],
        compiler_params=pltpu.CompilerParams(
            dimension_semantics=("arbitrary",)),
    )(xp, w1p, b1.reshape(1, -1), w2, b2.reshape(1, -1), w3, b3.reshape(1, -1))


# ---------------------------------------------------------------------------
# Full forward pass (Pallas) and pure-JAX reference
# ---------------------------------------------------------------------------
def cnn_forward(x, p):
    y = conv1_relu_pool(x, p["w_conv1"], p["b_conv1"])      # (N,30,112,112)
    y = conv2_relu_pool(y, p["w_conv2"], p["b_conv2"])      # (N,15, 56, 56)
    # Dropout2d(0.2): identity at inference.
    # TODO(synk): training-mode channel dropout (torch RNG) not reproduced.
    y = y.reshape(y.shape[0], -1)                           # NCHW flatten
    return mlp_head(y, p["w_fc1"], p["b_fc1"], p["w_fc2"], p["b_fc2"],
                    p["w_fc3"], p["b_fc3"])                 # (N, 345)


def cnn_reference(x, p):
    dn = ("NCHW", "OIHW", "NCHW")
    y = lax.conv_general_dilated(x, p["w_conv1"], (1, 1), [(2, 2), (2, 2)],
                                 dimension_numbers=dn)
    y = jnp.maximum(y + p["b_conv1"][None, :, None, None], 0.0)
    y = lax.reduce_window(y, -jnp.inf, lax.max, (1, 1, 2, 2), (1, 1, 2, 2),
                          "VALID")
    y = lax.conv_general_dilated(y, p["w_conv2"], (1, 1), [(1, 1), (1, 1)],
                                 dimension_numbers=dn)
    y = jnp.maximum(y + p["b_conv2"][None, :, None, None], 0.0)
    y = lax.reduce_window(y, -jnp.inf, lax.max, (1, 1, 2, 2), (1, 1, 2, 2),
                          "VALID")
    y = y.reshape(y.shape[0], -1)
    # fc1 in bf16 (mirrors the Pallas kernel's dtype choice), f32 accumulation.
    h1 = jnp.maximum(
        jnp.dot(y.astype(jnp.bfloat16), p["w_fc1"].astype(jnp.bfloat16),
                preferred_element_type=jnp.float32) + p["b_fc1"], 0.0)
    h2 = jnp.maximum(h1 @ p["w_fc2"] + p["b_fc2"], 0.0)
    return h2 @ p["w_fc3"] + p["b_fc3"]


def init_params(key, num_classes=345):
    ks = jax.random.split(key, 10)

    def winit(k, shape, fan_in):
        return (jax.random.normal(k, shape, jnp.float32)
                * jnp.sqrt(2.0 / fan_in).astype(jnp.float32))

    return {
        "w_conv1": winit(ks[0], (30, 1, 5, 5), 1 * 5 * 5),
        "b_conv1": jax.random.normal(ks[1], (30,), jnp.float32) * 0.05,
        "w_conv2": winit(ks[2], (15, 30, 3, 3), 30 * 3 * 3),
        "b_conv2": jax.random.normal(ks[3], (15,), jnp.float32) * 0.05,
        "w_fc1": winit(ks[4], (15 * 56 * 56, 128), 15 * 56 * 56),
        "b_fc1": jax.random.normal(ks[5], (128,), jnp.float32) * 0.05,
        "w_fc2": winit(ks[6], (128, 50), 128),
        "b_fc2": jax.random.normal(ks[7], (50,), jnp.float32) * 0.05,
        "w_fc3": winit(ks[8], (50, num_classes), 50),
        "b_fc3": jax.random.normal(ks[9], (num_classes,), jnp.float32) * 0.05,
    }


if __name__ == "__main__":
    key = jax.random.PRNGKey(0)
    kx, kp = jax.random.split(key)
    params = init_params(kp)

    # fc1 expects 15*56*56 features => input spatial must be 224x224, 1 channel.
    x = jax.random.normal(kx, (2, 1, 224, 224), jnp.float32)

    out = jax.jit(cnn_forward)(x, params)
    out = jax.block_until_ready(out)

    ref = cnn_reference(x, params)
    assert out.shape == (2, 345), out.shape
    err = float(jnp.max(jnp.abs(out - ref)))
    scale = max(1.0, float(jnp.max(jnp.abs(ref))))
    assert err <= 2e-2 * scale, f"max abs err {err} vs scale {scale}"
    print("KERNEL_OK")
</pallas_src>

<mosaic_0001>
module attributes {stable_mosaic.version = 11 : i64} {
  func.func @_conv1_pool_kernel(%arg0: i32, %arg1: i32, %arg2: memref<1x4x114x114xf32, #tpu.memory_space<vmem>>, %arg3: memref<750xf32, #tpu.memory_space<smem>>, %arg4: memref<30xf32, #tpu.memory_space<smem>>, %arg5: memref<1x30x16x112xf32, #tpu.memory_space<vmem>>, %arg6: memref<6x6x16x112xf32, #tpu.memory_space<vmem>>) attributes {dimension_semantics = [#tpu.dimension_semantics<parallel>, #tpu.dimension_semantics<parallel>], iteration_bounds = array<i64: 2, 7>, scalar_prefetch = 0 : i64, scratch_operands = 1 : i64, tpu.core_type = #tpu.core_type<tc>, window_params = [{transform_indices = @transform_0, window_bounds = array<i64: 1, 4, 114, 114>}, {transform_indices = @transform_1, window_bounds = array<i64: 750>}, {transform_indices = @transform_2, window_bounds = array<i64: 30>}, {transform_indices = @transform_3, window_bounds = array<i64: 1, 30, 16, 112>}]} {
    %c16_i32 = arith.constant 16 : i32
    %0 = arith.muli %arg1, %c16_i32 : i32
    %1 = tpu.assume_multiple %0, 16 : i32
    %c0_i32 = arith.constant 0 : i32
    %2 = arith.addi %1, %c0_i32 : i32
    %c0 = arith.constant 0 : index
    %c0_0 = arith.constant 0 : index
    %3 = arith.index_cast %2 : i32 to index
    %c0_1 = arith.constant 0 : index
    %4 = vector.load %arg2[%c0, %c0_0, %3, %c0_1] : memref<1x4x114x114xf32, #tpu.memory_space<vmem>>, vector<1x1x16x112xf32>
    %5 = vector.shape_cast %4 : vector<1x1x16x112xf32> to vector<16x112xf32>
    %c0_2 = arith.constant 0 : index
    %c0_3 = arith.constant 0 : index
    %c0_4 = arith.constant 0 : index
    %c0_5 = arith.constant 0 : index
    %6 = vector.load %arg6[%c0_2, %c0_3, %c0_4, %c0_5] : memref<6x6x16x112xf32, #tpu.memory_space<vmem>>, vector<1x1x16x112xf32>
    %7 = vector.shape_cast %6 : vector<1x1x16x112xf32> to vector<16x112xf32>
    %8 = vector.shape_cast %5 : vector<16x112xf32> to vector<1x1x16x112xf32>
    tpu.vector_store %arg6[%c0_2, %c0_3, %c0_4, %c0_5], %8 {strides = array<i32>} : memref<6x6x16x112xf32, #tpu.memory_space<vmem>>, vector<1x1x16x112xf32>,
    %c0_i32_6 = arith.constant 0 : i32
    %9 = arith.addi %1, %c0_i32_6 : i32
    %c0_7 = arith.constant 0 : index
    %c1 = arith.constant 1 : index
    %10 = arith.index_cast %9 : i32 to index
    %c0_8 = arith.constant 0 : index
    %11 = vector.load %arg2[%c0_7, %c1, %10, %c0_8] : memref<1x4x114x114xf32, #tpu.memory_space<vmem>>, vector<1x1x16x112xf32>
    %12 = vector.shape_cast %11 : vector<1x1x16x112xf32> to vector<16x112xf32>
    %c0_9 = arith.constant 0 : index
    %c1_10 = arith.constant 1 : index
    %c0_11 = arith.constant 0 : index
    %c0_12 = arith.constant 0 : index
    %13 = vector.load %arg6[%c0_9, %c1_10, %c0_11, %c0_12] : memref<6x6x16x112xf32, #tpu.memory_space<vmem>>, vector<1x1x16x112xf32>
    %14 = vector.shape_cast %13 : vector<1x1x16x112xf32> to vector<16x112xf32>
    %15 = vector.shape_cast %12 : vector<16x112xf32> to vector<1x1x16x112xf32>
    tpu.vector_store %arg6[%c0_9, %c1_10, %c0_11, %c0_12], %15 {strides = array<i32>} : memref<6x6x16x112xf32, #tpu.memory_space<vmem>>, vector<1x1x16x112xf32>,
    %c0_i32_13 = arith.constant 0 : i32
    %16 = arith.addi %1, %c0_i32_13 : i32
    %c0_14 = arith.constant 0 : index
    %c0_15 = arith.constant 0 : index
    %17 = arith.index_cast %16 : i32 to index
    %c1_16 = arith.constant 1 : index
    %18 = vector.load %arg2[%c0_14, %c0_15, %17, %c1_16] : memref<1x4x114x114xf32, #tpu.memory_space<vmem>>, vector<1x1x16x112xf32>
    %19 = vector.shape_cast %18 : vector<1x1x16x112xf32> to vector<16x112xf32>
    %c0_17 = arith.constant 0 : index
    %c2 = arith.constant 2 : index
    %c0_18 = arith.constant 0 : index
    %c0_19 = arith.constant 0 : index
    %20 = vector.load %arg6[%c0_17, %c2, %c0_18, %c0_19] : memref<6x6x16x112xf32, #tpu.memory_space<vmem>>, vector<1x1x16x112xf32>
    %21 = vector.shape_cast %20 : vector<1x1x16x112xf32> to vector<16x112xf32>
    %22 = vector.shape_cast %19 : vector<16x112xf32> to vector<1x1x16x112xf32>
    tpu.vector_store %arg6[%c0_17, %c2, %c0_18, %c0_19], %22 {strides = array<i32>} : memref<6x6x16x112xf32, #tpu.memory_space<vmem>>, vector<1x1x16x112xf32>,
    %c0_i32_20 = arith.constant 0 : i32
    %23 = arith.addi %1, %c0_i32_20 : i32
    %c0_21 = arith.constant 0 : index
    %c1_22 = arith.constant 1 : index
    %24 = arith.index_cast %23 : i32 to index
    %c1_23 = arith.constant 1 : index
    %25 = vector.load %arg2[%c0_21, %c1_22, %24, %c1_23] : memref<1x4x114x114xf32, #tpu.memory_space<vmem>>, vector<1x1x16x112xf32>
    %26 = vector.shape_cast %25 : vector<1x1x16x112xf32> to vector<16x112xf32>
    %c0_24 = arith.constant 0 : index
    %c3 = arith.constant 3 : index
    %c0_25 = arith.constant 0 : index
    %c0_26 = arith.constant 0 : index
    %27 = vector.load %arg6[%c0_24, %c3, %c0_25, %c0_26] : memref<6x6x16x112xf32, #tpu.memory_space<vmem>>, vector<1x1x16x112xf32>
    %28 = vector.shape_cast %27 : vector<1x1x16x112xf32> to vector<16x112xf32>
    %29 = vector.shape_cast %26 : vector<16x112xf32> to vector<1x1x16x112xf32>
    tpu.vector_store %arg6[%c0_24, %c3, %c0_25, %c0_26], %29 {strides = array<i32>} : memref<6x6x16x112xf32, #tpu.memory_space<vmem>>, vector<1x1x16x112xf32>,
    %c0_i32_27 = arith.constant 0 : i32
    %30 = arith.addi %1, %c0_i32_27 : i32
    %c0_28 = arith.constant 0 : index
    %c0_29 = arith.constant 0 : index
    %31 = arith.index_cast %30 : i32 to index
    %c2_30 = arith.constant 2 : index
    %32 = vector.load %arg2[%c0_28, %c0_29, %31, %c2_30] : memref<1x4x114x114xf32, #tpu.memory_space<vmem>>, vector<1x1x16x112xf32>
    %33 = vector.shape_cast %32 : vector<1x1x16x112xf32> to vector<16x112xf32>
    %c0_31 = arith.constant 0 : index
    %c4 = arith.constant 4 : index
    %c0_32 = arith.constant 0 : index
    %c0_33 = arith.constant 0 : index
    %34 = vector.load %arg6[%c0_31, %c4, %c0_32, %c0_33] : memref<6x6x16x112xf32, #tpu.memory_space<vmem>>, vector<1x1x16x112xf32>
    %35 = vector.shape_cast %34 : vector<1x1x16x112xf32> to vector<16x112xf32>
    %36 = vector.shape_cast %33 : vector<16x112xf32> to vector<1x1x16x112xf32>
    tpu.vector_store %arg6[%c0_31, %c4, %c0_32, %c0_33], %36 {strides = array<i32>} : memref<6x6x16x112xf32, #tpu.memory_space<vmem>>, vector<1x1x16x112xf32>,
    %c0_i32_34 = arith.constant 0 : i32
    %37 = arith.addi %1, %c0_i32_34 : i32
    %c0_35 = arith.constant 0 : index
    %c1_36 = arith.constant 1 : index
    %38 = arith.index_cast %37 : i32 to index
    %c2_37 = arith.constant 2 : index
    %39 = vector.load %arg2[%c0_35, %c1_36, %38, %c2_37] : memref<1x4x114x114xf32, #tpu.memory_space<vmem>>, vector<1x1x16x112xf32>
    %40 = vector.shape_cast %39 : vector<1x1x16x112xf32> to vector<16x112xf32>
    %c0_38 = arith.constant 0 : index
    %c5 = arith.constant 5 : index
    %c0_39 = arith.constant 0 : index
    %c0_40 = arith.constant 0 : index
    %41 = vector.load %arg6[%c0_38, %c5, %c0_39, %c0_40] : memref<6x6x16x112xf32, #tpu.memory_space<vmem>>, vector<1x1x16x112xf32>
    %42 = vector.shape_cast %41 : vector<1x1x16x112xf32> to vector<16x112xf32>
    %43 = vector.shape_cast %40 : vector<16x112xf32> to vector<1x1x16x112xf32>
    tpu.vector_store %arg6[%c0_38, %c5, %c0_39, %c0_40], %43 {strides = array<i32>} : memref<6x6x16x112xf32, #tpu.memory_space<vmem>>, vector<1x1x16x112xf32>,
    %c0_i32_41 = arith.constant 0 : i32
    %44 = arith.addi %1, %c0_i32_41 : i32
    %c0_42 = arith.constant 0 : index
    %c2_43 = arith.constant 2 : index
    %45 = arith.index_cast %44 : i32 to index
    %c0_44 = arith.constant 0 : index
    %46 = vector.load %arg2[%c0_42, %c2_43, %45, %c0_44] : memref<1x4x114x114xf32, #tpu.memory_space<vmem>>, vector<1x1x16x112xf32>
    %47 = vector.shape_cast %46 : vector<1x1x16x112xf32> to vector<16x112xf32>
    %c1_45 = arith.constant 1 : index
    %c0_46 = arith.constant 0 : index
    %c0_47 = arith.constant 0 : index
    %c0_48 = arith.constant 0 : index
    %48 = vector.load %arg6[%c1_45, %c0_46, %c0_47, %c0_48] : memref<6x6x16x112xf32, #tpu.memory_space<vmem>>, vector<1x1x16x112xf32>
    %49 = vector.shape_cast %48 : vector<1x1x16x112xf32> to vector<16x112xf32>
    %50 = vector.shape_cast %47 : vector<16x112xf32> to vector<1x1x16x112xf32>
    tpu.vector_store %arg6[%c1_45, %c0_46, %c0_47, %c0_48], %50 {strides = array<i32>} : memref<6x6x16x112xf32, #tpu.memory_space<vmem>>, vector<1x1x16x112xf32>,
    %c0_i32_49 = arith.constant 0 : i32
    %51 = arith.addi %1, %c0_i32_49 : i32
    %c0_50 = arith.constant 0 : index
    %c3_51 = arith.constant 3 : index
    %52 = arith.index_cast %51 : i32 to index
    %c0_52 = arith.constant 0 : index
    %53 = vector.load %arg2[%c0_50, %c3_51, %52, %c0_52] : memref<1x4x114x114xf32, #tpu.memory_space<vmem>>, vector<1x1x16x112xf32>
    %54 = vector.shape_cast %53 : vector<1x1x16x112xf32> to vector<16x112xf32>
    %c1_53 = arith.constant 1 : index
    %c1_54 = arith.constant 1 : index
    %c0_55 = arith.constant 0 : index
    %c0_56 = arith.constant 0 : index
    %55 = vector.load %arg6[%c1_53, %c1_54, %c0_55, %c0_56] : memref<6x6x16x112xf32, #tpu.memory_space<vmem>>, vector<1x1x16x112xf32>
    %56 = vector.shape_cast %55 : vector<1x1x16x112xf32> to vector<16x112xf32>
    %57 = vector.shape_cast %54 : vector<16x112xf32> to vector<1x1x16x112xf32>
    tpu.vector_store %arg6[%c1_53, %c1_54, %c0_55, %c0_56], %57 {strides = array<i32>} : memref<6x6x16x112xf32, #tpu.memory_space<vmem>>, vector<1x1x16x112xf32>,
    %c0_i32_57 = arith.constant 0 : i32
    %58 = arith.addi %1, %c0_i32_57 : i32
    %c0_58 = arith.constant 0 : index
    %c2_59 = arith.constant 2 : index
    %59 = arith.index_cast %58 : i32 to index
    %c1_60 = arith.constant 1 : index
    %60 = vector.load %arg2[%c0_58, %c2_59, %59, %c1_60] : memref<1x4x114x114xf32, #tpu.memory_space<vmem>>, vector<1x1x16x112xf32>
    %61 = vector.shape_cast %60 : vector<1x1x16x112xf32> to vector<16x112xf32>
    %c1_61 = arith.constant 1 : index
    %c2_62 = arith.constant 2 : index
    %c0_63 = arith.constant 0 : index
    %c0_64 = arith.constant 0 : index
    %62 = vector.load %arg6[%c1_61, %c2_62, %c0_63, %c0_64] : memref<6x6x16x112xf32, #tpu.memory_space<vmem>>, vector<1x1x16x112xf32>
    %63 = vector.shape_cast %62 : vector<1x1x16x112xf32> to vector<16x112xf32>
    %64 = vector.shape_cast %61 : vector<16x112xf32> to vector<1x1x16x112xf32>
    tpu.vector_store %arg6[%c1_61, %c2_62, %c0_63, %c0_64], %64 {strides = array<i32>} : memref<6x6x16x112xf32, #tpu.memory_space<vmem>>, vector<1x1x16x112xf32>,
    %c0_i32_65 = arith.constant 0 : i32
    %65 = arith.addi %1, %c0_i32_65 : i32
    %c0_66 = arith.constant 0 : index
    %c3_67 = arith.constant 3 : index
    %66 = arith.index_cast %65 : i32 to index
    %c1_68 = arith.constant 1 : index
    %67 = vector.load %arg2[%c0_66, %c3_67, %66, %c1_68] : memref<1x4x114x114xf32, #tpu.memory_space<vmem>>, vector<1x1x16x112xf32>
    %68 = vector.shape_cast %67 : vector<1x1x16x112xf32> to vector<16x112xf32>
    %c1_69 = arith.constant 1 : index
    %c3_70 = arith.constant 3 : index
    %c0_71 = arith.constant 0 : index
    %c0_72 = arith.constant 0 : index
    %69 = vector.load %arg6[%c1_69, %c3_70, %c0_71, %c0_72] : memref<6x6x16x112xf32, #tpu.memory_space<vmem>>, vector<1x1x16x112xf32>
    %70 = vector.shape_cast %69 : vector<1x1x16x112xf32> to vector<16x112xf32>
    %71 = vector.shape_cast %68 : vector<16x112xf32> to vector<1x1x16x112xf32>
    tpu.vector_store %arg6[%c1_69, %c3_70, %c0_71, %c0_72], %71 {strides = array<i32>} : memref<6x6x16x112xf32, #tpu.memory_space<vmem>>, vector<1x1x16x112xf32>,
    %c0_i32_73 = arith.constant 0 : i32
    %72 = arith.addi %1, %c0_i32_73 : i32
    %c0_74 = arith.constant 0 : index
    %c2_75 = arith.constant 2 : index
    %73 = arith.index_cast %72 : i32 to index
    %c2_76 = arith.constant 2 : index
    %74 = vector.load %arg2[%c0_74, %c2_75, %73, %c2_76] : memref<1x4x114x114xf32, #tpu.memory_space<vmem>>, vector<1x1x16x112xf32>
    %75 = vector.shape_cast %74 : vector<1x1x16x112xf32> to vector<16x112xf32>
    %c1_77 = arith.constant 1 : index
    %c4_78 = arith.constant 4 : index
    %c0_79 = arith.constant 0 : index
    %c0_80 = arith.constant 0 : index
    %76 = vector.load %arg6[%c1_77, %c4_78, %c0_79, %c0_80] : memref<6x6x16x112xf32, #tpu.memory_space<vmem>>, vector<1x1x16x112xf32>
    %77 = vector.shape_cast %76 : vector<1x1x16x112xf32> to vector<16x112xf32>
    %78 = vector.shape_cast %75 : vector<16x112xf32> to vector<1x1x16x112xf32>
    tpu.vector_store %arg6[%c1_77, %c4_78, %c0_79, %c0_80], %78 {strides = array<i32>} : memref<6x6x16x112xf32, #tpu.memory_space<vmem>>, vector<1x1x16x112xf32>,
    %c0_i32_81 = arith.constant 0 : i32
    %79 = arith.addi %1, %c0_i32_81 : i32
    %c0_82 = arith.constant 0 : index
    %c3_83 = arith.constant 3 : index
    %80 = arith.index_cast %79 : i32 to index
    %c2_84 = arith.constant 2 : index
    %81 = vector.load %arg2[%c0_82, %c3_83, %80, %c2_84] : memref<1x4x114x114xf32, #tpu.memory_space<vmem>>, vector<1x1x16x112xf32>
    %82 = vector.shape_cast %81 : vector<1x1x16x112xf32> to vector<16x112xf32>
    %c1_85 = arith.constant 1 : index
    %c5_86 = arith.constant 5 : index
    %c0_87 = arith.constant 0 : index
    %c0_88 = arith.constant 0 : index
    %83 = vector.load %arg6[%c1_85, %c5_86, %c0_87, %c0_88] : memref<6x6x16x112xf32, #tpu.memory_space<vmem>>, vector<1x1x16x112xf32>
    %84 = vector.shape_cast %83 : vector<1x1x16x112xf32> to vector<16x112xf32>
    %85 = vector.shape_cast %82 : vector<16x112xf32> to vector<1x1x16x112xf32>
    tpu.vector_store %arg6[%c1_85, %c5_86, %c0_87, %c0_88], %85 {strides = array<i32>} : memref<6x6x16x112xf32, #tpu.memory_space<vmem>>, vector<1x1x16x112xf32>,
    %c1_i32 = arith.constant 1 : i32
    %86 = arith.addi %1, %c1_i32 : i32
    %c0_89 = arith.constant 0 : index
    %c0_90 = arith.constant 0 : index
    %87 = arith.index_cast %86 : i32 to index
    %c0_91 = arith.constant 0 : index
    %88 = vector.load %arg2[%c0_89, %c0_90, %87, %c0_91] : memref<1x4x114x114xf32, #tpu.memory_space<vmem>>, vector<1x1x16x112xf32>
    %89 = vector.shape_cast %88 : vector<1x1x16x112xf32> to vector<16x112xf32>
    %c2_92 = arith.constant 2 : index
    %c0_93 = arith.constant 0 : index
    %c0_94 = arith.constant 0 : index
    %c0_95 = arith.constant 0 : index
    %90 = vector.load %arg6[%c2_92, %c0_93, %c0_94, %c0_95] : memref<6x6x16x112xf32, #tpu.memory_space<vmem>>, vector<1x1x16x112xf32>
    %91 = vector.shape_cast %90 : vector<1x1x16x112xf32> to vector<16x112xf32>
    %92 = vector.shape_cast %89 : vector<16x112xf32> to vector<1x1x16x112xf32>
    tpu.vector_store %arg6[%c2_92, %c0_93, %c0_94, %c0_95], %92 {strides = array<i32>} : memref<6x6x16x112xf32, #tpu.memory_space<vmem>>, vector<1x1x16x112xf32>,
    %c1_i32_96 = arith.constant 1 : i32
    %93 = arith.addi %1, %c1_i32_96 : i32
    %c0_97 = arith.constant 0 : index
    %c1_98 = arith.constant 1 : index
    %94 = arith.index_cast %93 : i32 to index
    %c0_99 = arith.constant 0 : index
    %95 = vector.load %arg2[%c0_97, %c1_98, %94, %c0_99] : memref<1x4x114x114xf32, #tpu.memory_space<vmem>>, vector<1x1x16x112xf32>
    %96 = vector.shape_cast %95 : vector<1x1x16x112xf32> to vector<16x112xf32>
    %c2_100 = arith.constant 2 : index
    %c1_101 = arith.constant 1 : index
    %c0_102 = arith.constant 0 : index
    %c0_103 = arith.constant 0 : index
    %97 = vector.load %arg6[%c2_100, %c1_101, %c0_102, %c0_103] : memref<6x6x16x112xf32, #tpu.memory_space<vmem>>, vector<1x1x16x112xf32>
    %98 = vector.shape_cast %97 : vector<1x1x16x112xf32> to vector<16x112xf32>
    %99 = vector.shape_cast %96 : vector<16x112xf32> to vector<1x1x16x112xf32>
    tpu.vector_store %arg6[%c2_100, %c1_101, %c0_102, %c0_103], %99 {strides = array<i32>} : memref<6x6x16x112xf32, #tpu.memory_space<vmem>>, vector<1x1x16x112xf32>,
    %c1_i32_104 = arith.constant 1 : i32
    %100 = arith.addi %1, %c1_i32_104 : i32
    %c0_105 = arith.constant 0 : index
    %c0_106 = arith.constant 0 : index
    %101 = arith.index_cast %100 : i32 to index
    %c1_107 = arith.constant 1 : index
    %102 = vector.load %arg2[%c0_105, %c0_106, %101, %c1_107] : memref<1x4x114x114xf32, #tpu.memory_space<vmem>>, vector<1x1x16x112xf32>
    %103 = vector.shape_cast %102 : vector<1x1x16x112xf32> to vector<16x112xf32>
    %c2_108 = arith.constant 2 : index
    %c2_109 = arith.constant 2 : index
    %c0_110 = arith.constant 0 : index
    %c0_111 = arith.constant 0 : index
    %104 = vector.load %arg6[%c2_108, %c2_109, %c0_110, %c0_111] : memref<6x6x16x112xf32, #tpu.memory_space<vmem>>, vector<1x1x16x112xf32>
    %105 = vector.shape_cast %104 : vector<1x1x16x112xf32> to vector<16x112xf32>
    %106 = vector.shape_cast %103 : vector<16x112xf32> to vector<1x1x16x112xf32>
    tpu.vector_store %arg6[%c2_108, %c2_109, %c0_110, %c0_111], %106 {strides = array<i32>} : memref<6x6x16x112xf32, #tpu.memory_space<vmem>>, vector<1x1x16x112xf32>,
    %c1_i32_112 = arith.constant 1 : i32
    %107 = arith.addi %1, %c1_i32_112 : i32
    %c0_113 = arith.constant 0 : index
    %c1_114 = arith.constant 1 : index
    %108 = arith.index_cast %107 : i32 to index
    %c1_115 = arith.constant 1 : index
    %109 = vector.load %arg2[%c0_113, %c1_114, %108, %c1_115] : memref<1x4x114x114xf32, #tpu.memory_space<vmem>>, vector<1x1x16x112xf32>
    %110 = vector.shape_cast %109 : vector<1x1x16x112xf32> to vector<16x112xf32>
    %c2_116 = arith.constant 2 : index
    %c3_117 = arith.constant 3 : index
    %c0_118 = arith.constant 0 : index
    %c0_119 = arith.constant 0 : index
    %111 = vector.load %arg6[%c2_116, %c3_117, %c0_118, %c0_119] : memref<6x6x16x112xf32, #tpu.memory_space<vmem>>, vector<1x1x16x112xf32>
    %112 = vector.shape_cast %111 : vector<1x1x16x112xf32> to vector<16x112xf32>
    %113 = vector.shape_cast %110 : vector<16x112xf32> to vector<1x1x16x112xf32>
    tpu.vector_store %arg6[%c2_116, %c3_117, %c0_118, %c0_119], %113 {strides = array<i32>} : memref<6x6x16x112xf32, #tpu.memory_space<vmem>>, vector<1x1x16x112xf32>,
    %c1_i32_120 = arith.constant 1 : i32
    %114 = arith.addi %1, %c1_i32_120 : i32
    %c0_121 = arith.constant 0 : index
    %c0_122 = arith.constant 0 : index
    %115 = arith.index_cast %114 : i32 to index
    %c2_123 = arith.constant 2 : index
    %116 = vector.load %arg2[%c0_121, %c0_122, %115, %c2_123] : memref<1x4x114x114xf32, #tpu.memory_space<vmem>>, vector<1x1x16x112xf32>
    %117 = vector.shape_cast %116 : vector<1x1x16x112xf32> to vector<16x112xf32>
    %c2_124 = arith.constant 2 : index
    %c4_125 = arith.constant 4 : index
    %c0_126 = arith.constant 0 : index
    %c0_127 = arith.constant 0 : index
    %118 = vector.load %arg6[%c2_124, %c4_125, %c0_126, %c0_127] : memref<6x6x16x112xf32, #tpu.memory_space<vmem>>, vector<1x1x16x112xf32>
    %119 = vector.shape_cast %118 : vector<1x1x16x112xf32> to vector<16x112xf32>
    %120 = vector.shape_cast %117 : vector<16x112xf32> to vector<1x1x16x112xf32>
    tpu.vector_store %arg6[%c2_124, %c4_125, %c0_126, %c0_127], %120 {strides = array<i32>} : memref<6x6x16x112xf32, #tpu.memory_space<vmem>>, vector<1x1x16x112xf32>,
    %c1_i32_128 = arith.constant 1 : i32
    %121 = arith.addi %1, %c1_i32_128 : i32
    %c0_129 = arith.constant 0 : index
    %c1_130 = arith.constant 1 : index
    %122 = arith.index_cast %121 : i32 to index
    %c2_131 = arith.constant 2 : index
    %123 = vector.load %arg2[%c0_129, %c1_130, %122, %c2_131] : memref<1x4x114x114xf32, #tpu.memory_space<vmem>>, vector<1x1x16x112xf32>
    %124 = vector.shape_cast %123 : vector<1x1x16x112xf32> to vector<16x112xf32>
    %c2_132 = arith.constant 2 : index
    %c5_133 = arith.constant 5 : index
    %c0_134 = arith.constant 0 : index
    %c0_135 = arith.constant 0 : index
    %125 = vector.load %arg6[%c2_132, %c5_133, %c0_134, %c0_135] : memref<6x6x16x112xf32, #tpu.memory_space<vmem>>, vector<1x1x16x112xf32>
    %126 = vector.shape_cast %125 : vector<1x1x16x112xf32> to vector<16x112xf32>
    %127 = vector.shape_cast %124 : vector<16x112xf32> to vector<1x1x16x112xf32>
    tpu.vector_store %arg6[%c2_132, %c5_133, %c0_134, %c0_135], %127 {strides = array<i32>} : memref<6x6x16x112xf32, #tpu.memory_space<vmem>>, vector<1x1x16x112xf32>,
    %c1_i32_136 = arith.constant 1 : i32
    %128 = arith.addi %1, %c1_i32_136 : i32
    %c0_137 = arith.constant 0 : index
    %c2_138 = arith.constant 2 : index
    %129 = arith.index_cast %128 : i32 to index
    %c0_139 = arith.constant 0 : index
    %130 = vector.load %arg2[%c0_137, %c2_138, %129, %c0_139] : memref<1x4x114x114xf32, #tpu.memory_space<vmem>>, vector<1x1x16x112xf32>
    %131 = vector.shape_cast %130 : vector<1x1x16x112xf32> to vector<16x112xf32>
    %c3_140 = arith.constant 3 : index
    %c0_141 = arith.constant 0 : index
    %c0_142 = arith.constant 0 : index
    %c0_143 = arith.constant 0 : index
    %132 = vector.load %arg6[%c3_140, %c0_141, %c0_142, %c0_143] : memref<6x6x16x112xf32, #tpu.memory_space<vmem>>, vector<1x1x16x112xf32>
    %133 = vector.shape_cast %132 : vector<1x1x16x112xf32> to vector<16x112xf32>
    %134 = vector.shape_cast %131 : vector<16x112xf32> to vector<1x1x16x112xf32>
    tpu.vector_store %arg6[%c3_140, %c0_141, %c0_142, %c0_143], %134 {strides = array<i32>} : memref<6x6x16x112xf32, #tpu.memory_space<vmem>>, vector<1x1x16x112xf32>,
    %c1_i32_144 = arith.constant 1 : i32
    %135 = arith.addi %1, %c1_i32_144 : i32
    %c0_145 = arith.constant 0 : index
    %c3_146 = arith.constant 3 : index
    %136 = arith.index_cast %135 : i32 to index
    %c0_147 = arith.constant 0 : index
    %137 = vector.load %arg2[%c0_145, %c3_146, %136, %c0_147] : memref<1x4x114x114xf32, #tpu.memory_space<vmem>>, vector<1x1x16x112xf32>
    %138 = vector.shape_cast %137 : vector<1x1x16x112xf32> to vector<16x112xf32>
    %c3_148 = arith.constant 3 : index
    %c1_149 = arith.constant 1 : index
    %c0_150 = arith.constant 0 : index
    %c0_151 = arith.constant 0 : index
    %139 = vector.load %arg6[%c3_148, %c1_149, %c0_150, %c0_151] : memref<6x6x16x112xf32, #tpu.memory_space<vmem>>, vector<1x1x16x112xf32>
    %140 = vector.shape_cast %139 : vector<1x1x16x112xf32> to vector<16x112xf32>
    %141 = vector.shape_cast %138 : vector<16x112xf32> to vector<1x1x16x112xf32>
    tpu.vector_store %arg6[%c3_148, %c1_149, %c0_150, %c0_151], %141 {strides = array<i32>} : memref<6x6x16x112xf32, #tpu.memory_space<vmem>>, vector<1x1x16x112xf32>,
    %c1_i32_152 = arith.constant 1 : i32
    %142 = arith.addi %1, %c1_i32_152 : i32
    %c0_153 = arith.constant 0 : index
    %c2_154 = arith.constant 2 : index
    %143 = arith.index_cast %142 : i32 to index
    %c1_155 = arith.constant 1 : index
    %144 = vector.load %arg2[%c0_153, %c2_154, %143, %c1_155] : memref<1x4x114x114xf32, #tpu.memory_space<vmem>>, vector<1x1x16x112xf32>
    %145 = vector.shape_cast %144 : vector<1x1x16x112xf32> to vector<16x112xf32>
    %c3_156 = arith.constant 3 : index
    %c2_157 = arith.constant 2 : index
    %c0_158 = arith.constant 0 : index
    %c0_159 = arith.constant 0 : index
    %146 = vector.load %arg6[%c3_156, %c2_157, %c0_158, %c0_159] : memref<6x6x16x112xf32, #tpu.memory_space<vmem>>, vector<1x1x16x112xf32>
    %147 = vector.shape_cast %146 : vector<1x1x16x112xf32> to vector<16x112xf32>
    %148 = vector.shape_cast %145 : vector<16x112xf32> to vector<1x1x16x112xf32>
    tpu.vector_store %arg6[%c3_156, %c2_157, %c0_158, %c0_159], %148 {strides = array<i32>} : memref<6x6x16x112xf32, #tpu.memory_space<vmem>>, vector<1x1x16x112xf32>,
    %c1_i32_160 = arith.constant 1 : i32
    %149 = arith.addi %1, %c1_i32_160 : i32
    %c0_161 = arith.constant 0 : index
    %c3_162 = arith.constant 3 : index
    %150 = arith.index_cast %149 : i32 to index
    %c1_163 = arith.constant 1 : index
    %151 = vector.load %arg2[%c0_161, %c3_162, %150, %c1_163] : memref<1x4x114x114xf32, #tpu.memory_space<vmem>>, vector<1x1x16x112xf32>
    %152 = vector.shape_cast %151 : vector<1x1x16x112xf32> to vector<16x112xf32>
    %c3_164 = arith.constant 3 : index
    %c3_165 = arith.constant 3 : index
    %c0_166 = arith.constant 0 : index
    %c0_167 = arith.constant 0 : index
    %153 = vector.load %arg6[%c3_164, %c3_165, %c0_166, %c0_167] : memref<6x6x16x112xf32, #tpu.memory_space<vmem>>, vector<1x1x16x112xf32>
    %154 = vector.shape_cast %153 : vector<1x1x16x112xf32> to vector<16x112xf32>
    %155 = vector.shape_cast %152 : vector<16x112xf32> to vector<1x1x16x112xf32>
    tpu.vector_store %arg6[%c3_164, %c3_165, %c0_166, %c0_167], %155 {strides = array<i32>} : memref<6x6x16x112xf32, #tpu.memory_space<vmem>>, vector<1x1x16x112xf32>,
    %c1_i32_168 = arith.constant 1 : i32
    %156 = arith.addi %1, %c1_i32_168 : i32
    %c0_169 = arith.constant 0 : index
    %c2_170 = arith.constant 2 : index
    %157 = arith.index_cast %156 : i32 to index
    %c2_171 = arith.constant 2 : index
    %158 = vector.load %arg2[%c0_169, %c2_170, %157, %c2_171] : memref<1x4x114x114xf32, #tpu.memory_space<vmem>>, vector<1x1x16x112xf32>
    %159 = vector.shape_cast %158 : vector<1x1x16x112xf32> to vector<16x112xf32>
    %c3_172 = arith.constant 3 : index
    %c4_173 = arith.constant 4 : index
    %c0_174 = arith.constant 0 : index
    %c0_175 = arith.constant 0 : index
    %160 = vector.load %arg6[%c3_172, %c4_173, %c0_174, %c0_175] : memref<6x6x16x112xf32, #tpu.memory_space<vmem>>, vector<1x1x16x112xf32>
    %161 = vector.shape_cast %160 : vector<1x1x16x112xf32> to vector<16x112xf32>
    %162 = vector.shape_cast %159 : vector<16x112xf32> to vector<1x1x16x112xf32>
    tpu.vector_store %arg6[%c3_172, %c4_173, %c0_174, %c0_175], %162 {strides = array<i32>} : memref<6x6x16x112xf32, #tpu.memory_space<vmem>>, vector<1x1x16x112xf32>,
    %c1_i32_176 = arith.constant 1 : i32
    %163 = arith.addi %1, %c1_i32_176 : i32
    %c0_177 = arith.constant 0 : index
    %c3_178 = arith.constant 3 : index
    %164 = arith.index_cast %163 : i32 to index
    %c2_179 = arith.constant 2 : index
    %165 = vector.load %arg2[%c0_177, %c3_178, %164, %c2_179] : memref<1x4x114x114xf32, #tpu.memory_space<vmem>>, vector<1x1x16x112xf32>
    %166 = vector.shape_cast %165 : vector<1x1x16x112xf32> to vector<16x112xf32>
    %c3_180 = arith.constant 3 : index
    %c5_181 = arith.constant 5 : index
    %c0_182 = arith.constant 0 : index
    %c0_183 = arith.constant 0 : index
    %167 = vector.load %arg6[%c3_180, %c5_181, %c0_182, %c0_183] : memref<6x6x16x112xf32, #tpu.memory_space<vmem>>, vector<1x1x16x112xf32>
    %168 = vector.shape_cast %167 : vector<1x1x16x112xf32> to vector<16x112xf32>
    %169 = vector.shape_cast %166 : vector<16x112xf32> to vector<1x1x16x112xf32>
    tpu.vector_store %arg6[%c3_180, %c5_181, %c0_182, %c0_183], %169 {strides = array<i32>} : memref<6x6x16x112xf32, #tpu.memory_space<vmem>>, vector<1x1x16x112xf32>,
    %c2_i32 = arith.constant 2 : i32
    %170 = arith.addi %1, %c2_i32 : i32
    %c0_184 = arith.constant 0 : index
    %c0_185 = arith.constant 0 : index
    %171 = arith.index_cast %170 : i32 to index
    %c0_186 = arith.constant 0 : index
    %172 = vector.load %arg2[%c0_184, %c0_185, %171, %c0_186] : memref<1x4x114x114xf32, #tpu.memory_space<vmem>>, vector<1x1x16x112xf32>
    %173 = vector.shape_cast %172 : vector<1x1x16x112xf32> to vector<16x112xf32>
    %c4_187 = arith.constant 4 : index
    %c0_188 = arith.constant 0 : index
    %c0_189 = arith.constant 0 : index
    %c0_190 = arith.constant 0 : index
    %174 = vector.load %arg6[%c4_187, %c0_188, %c0_189, %c0_190] : memref<6x6x16x112xf32, #tpu.memory_space<vmem>>, vector<1x1x16x112xf32>
    %175 = vector.shape_cast %174 : vector<1x1x16x112xf32> to vector<16x112xf32>
    %176 = vector.shape_cast %173 : vector<16x112xf32> to vector<1x1x16x112xf32>
    tpu.vector_store %arg6[%c4_187, %c0_188, %c0_189, %c0_190], %176 {strides = array<i32>} : memref<6x6x16x112xf32, #tpu.memory_space<vmem>>, vector<1x1x16x112xf32>,
    %c2_i32_191 = arith.constant 2 : i32
    %177 = arith.addi %1, %c2_i32_191 : i32
    %c0_192 = arith.constant 0 : index
    %c1_193 = arith.constant 1 : index
    %178 = arith.index_cast %177 : i32 to index
    %c0_194 = arith.constant 0 : index
    %179 = vector.load %arg2[%c0_192, %c1_193, %178, %c0_194] : memref<1x4x114x114xf32, #tpu.memory_space<vmem>>, vector<1x1x16x112xf32>
    %180 = vector.shape_cast %179 : vector<1x1x16x112xf32> to vector<16x112xf32>
    %c4_195 = arith.constant 4 : index
    %c1_196 = arith.constant 1 : index
    %c0_197 = arith.constant 0 : index
    %c0_198 = arith.constant 0 : index
    %181 = vector.load %arg6[%c4_195, %c1_196, %c0_197, %c0_198] : memref<6x6x16x112xf32, #tpu.memory_space<vmem>>, vector<1x1x16x112xf32>
    %182 = vector.shape_cast %181 : vector<1x1x16x112xf32> to vector<16x112xf32>
    %183 = vector.shape_cast %180 : vector<16x112xf32> to vector<1x1x16x112xf32>
    tpu.vector_store %arg6[%c4_195, %c1_196, %c0_197, %c0_198], %183 {strides = array<i32>} : memref<6x6x16x112xf32, #tpu.memory_space<vmem>>, vector<1x1x16x112xf32>,
    %c2_i32_199 = arith.constant 2 : i32
    %184 = arith.addi %1, %c2_i32_199 : i32
    %c0_200 = arith.constant 0 : index
    %c0_201 = arith.constant 0 : index
    %185 = arith.index_cast %184 : i32 to index
    %c1_202 = arith.constant 1 : index
    %186 = vector.load %arg2[%c0_200, %c0_201, %185, %c1_202] : memref<1x4x114x114xf32, #tpu.memory_space<vmem>>, vector<1x1x16x112xf32>
    %187 = vector.shape_cast %186 : vector<1x1x16x112xf32> to vector<16x112xf32>
    %c4_203 = arith.constant 4 : index
    %c2_204 = arith.constant 2 : index
    %c0_205 = arith.constant 0 : index
    %c0_206 = arith.constant 0 : index
    %188 = vector.load %arg6[%c4_203, %c2_204, %c0_205, %c0_206] : memref<6x6x16x112xf32, #tpu.memory_space<vmem>>, vector<1x1x16x112xf32>
    %189 = vector.shape_cast %188 : vector<1x1x16x112xf32> to vector<16x112xf32>
    %190 = vector.shape_cast %187 : vector<16x112xf32> to vector<1x1x16x112xf32>
    tpu.vector_store %arg6[%c4_203, %c2_204, %c0_205, %c0_206], %190 {strides = array<i32>} : memref<6x6x16x112xf32, #tpu.memory_space<vmem>>, vector<1x1x16x112xf32>,
    %c2_i32_207 = arith.constant 2 : i32
    %191 = arith.addi %1, %c2_i32_207 : i32
    %c0_208 = arith.constant 0 : index
    %c1_209 = arith.constant 1 : index
    %192 = arith.index_cast %191 : i32 to index
    %c1_210 = arith.constant 1 : index
    %193 = vector.load %arg2[%c0_208, %c1_209, %192, %c1_210] : memref<1x4x114x114xf32, #tpu.memory_space<vmem>>, vector<1x1x16x112xf32>
    %194 = vector.shape_cast %193 : vector<1x1x16x112xf32> to vector<16x112xf32>
    %c4_211 = arith.constant 4 : index
    %c3_212 = arith.constant 3 : index
    %c0_213 = arith.constant 0 : index
    %c0_214 = arith.constant 0 : index
    %195 = vector.load %arg6[%c4_211, %c3_212, %c0_213, %c0_214] : memref<6x6x16x112xf32, #tpu.memory_space<vmem>>, vector<1x1x16x112xf32>
    %196 = vector.shape_cast %195 : vector<1x1x16x112xf32> to vector<16x112xf32>
    %197 = vector.shape_cast %194 : vector<16x112xf32> to vector<1x1x16x112xf32>
    tpu.vector_store %arg6[%c4_211, %c3_212, %c0_213, %c0_214], %197 {strides = array<i32>} : memref<6x6x16x112xf32, #tpu.memory_space<vmem>>, vector<1x1x16x112xf32>,
    %c2_i32_215 = arith.constant 2 : i32
    %198 = arith.addi %1, %c2_i32_215 : i32
    %c0_216 = arith.constant 0 : index
    %c0_217 = arith.constant 0 : index
    %199 = arith.index_cast %198 : i32 to index
    %c2_218 = arith.constant 2 : index
    %200 = vector.load %arg2[%c0_216, %c0_217, %199, %c2_218] : memref<1x4x114x114xf32, #tpu.memory_space<vmem>>, vector<1x1x16x112xf32>
    %201 = vector.shape_cast %200 : vector<1x1x16x112xf32> to vector<16x112xf32>
    %c4_219 = arith.constant 4 : index
    %c4_220 = arith.constant 4 : index
    %c0_221 = arith.constant 0 : index
    %c0_222 = arith.constant 0 : index
    %202 = vector.load %arg6[%c4_219, %c4_220, %c0_221, %c0_222] : memref<6x6x16x112xf32, #tpu.memory_space<vmem>>, vector<1x1x16x112xf32>
    %203 = vector.shape_cast %202 : vector<1x1x16x112xf32> to vector<16x112xf32>
    %204 = vector.shape_cast %201 : vector<16x112xf32> to vector<1x1x16x112xf32>
    tpu.vector_store %arg6[%c4_219, %c4_220, %c0_221, %c0_222], %204 {strides = array<i32>} : memref<6x6x16x112xf32, #tpu.memory_space<vmem>>, vector<1x1x16x112xf32>,
    %c2_i32_223 = arith.constant 2 : i32
    %205 = arith.addi %1, %c2_i32_223 : i32
    %c0_224 = arith.constant 0 : index
    %c1_225 = arith.constant 1 : index
    %206 = arith.index_cast %205 : i32 to index
    %c2_226 = arith.constant 2 : index
    %207 = vector.load %arg2[%c0_224, %c1_225, %206, %c2_226] : memref<1x4x114x114xf32, #tpu.memory_space<vmem>>, vector<1x1x16x112xf32>
    %208 = vector.shape_cast %207 : vector<1x1x16x112xf32> to vector<16x112xf32>
    %c4_227 = arith.constant 4 : index
    %c5_228 = arith.constant 5 : index
    %c0_229 = arith.constant 0 : index
    %c0_230 = arith.constant 0 : index
    %209 = vector.load %arg6[%c4_227, %c5_228, %c0_229, %c0_230] : memref<6x6x16x112xf32, #tpu.memory_space<vmem>>, vector<1x1x16x112xf32>
    %210 = vector.shape_cast %209 : vector<1x1x16x112xf32> to vector<16x112xf32>
    %211 = vector.shape_cast %208 : vector<16x112xf32> to vector<1x1x16x112xf32>
    tpu.vector_store %arg6[%c4_227, %c5_228, %c0_229, %c0_230], %211 {strides = array<i32>} : memref<6x6x16x112xf32, #tpu.memory_space<vmem>>, vector<1x1x16x112xf32>,
    %c2_i32_231 = arith.constant 2 : i32
    %212 = arith.addi %1, %c2_i32_231 : i32
    %c0_232 = arith.constant 0 : index
    %c2_233 = arith.constant 2 : index
    %213 = arith.index_cast %212 : i32 to index
    %c0_234 = arith.constant 0 : index
    %214 = vector.load %arg2[%c0_232, %c2_233, %213, %c0_234] : memref<1x4x114x114xf32, #tpu.memory_space<vmem>>, vector<1x1x16x112xf32>
    %215 = vector.shape_cast %214 : vector<1x1x16x112xf32> to vector<16x112xf32>
    %c5_235 = arith.constant 5 : index
    %c0_236 = arith.constant 0 : index
    %c0_237 = arith.constant 0 : index
    %c0_238 = arith.constant 0 : index
    %216 = vector.load %arg6[%c5_235, %c0_236, %c0_237, %c0_238] : memref<6x6x16x112xf32, #tpu.memory_space<vmem>>, vector<1x1x16x112xf32>
    %217 = vector.shape_cast %216 : vector<1x1x16x112xf32> to vector<16x112xf32>
    %218 = vector.shape_cast %215 : vector<16x112xf32> to vector<1x1x16x112xf32>
    tpu.vector_store %arg6[%c5_235, %c0_236, %c0_237, %c0_238], %218 {strides = array<i32>} : memref<6x6x16x112xf32, #tpu.memory_space<vmem>>, vector<1x1x16x112xf32>,
    %c2_i32_239 = arith.constant 2 : i32
    %219 = arith.addi %1, %c2_i32_239 : i32
    %c0_240 = arith.constant 0 : index
    %c3_241 = arith.constant 3 : index
    %220 = arith.index_cast %219 : i32 to index
    %c0_242 = arith.constant 0 : index
    %221 = vector.load %arg2[%c0_240, %c3_241, %220, %c0_242] : memref<1x4x114x114xf32, #tpu.memory_space<vmem>>, vector<1x1x16x112xf32>
    %222 = vector.shape_cast %221 : vector<1x1x16x112xf32> to vector<16x112xf32>
    %c5_243 = arith.constant 5 : index
    %c1_244 = arith.constant 1 : index
    %c0_245 = arith.constant 0 : index
    %c0_246 = arith.constant 0 : index
    %223 = vector.load %arg6[%c5_243, %c1_244, %c0_245, %c0_246] : memref<6x6x16x112xf32, #tpu.memory_space<vmem>>, vector<1x1x16x112xf32>
    %224 = vector.shape_cast %223 : vector<1x1x16x112xf32> to vector<16x112xf32>
    %225 = vector.shape_cast %222 : vector<16x112xf32> to vector<1x1x16x112xf32>
    tpu.vector_store %arg6[%c5_243, %c1_244, %c0_245, %c0_246], %225 {strides = array<i32>} : memref<6x6x16x112xf32, #tpu.memory_space<vmem>>, vector<1x1x16x112xf32>,
    %c2_i32_247 = arith.constant 2 : i32
    %226 = arith.addi %1, %c2_i32_247 : i32
    %c0_248 = arith.constant 0 : index
    %c2_249 = arith.constant 2 : index
    %227 = arith.index_cast %226 : i32 to index
    %c1_250 = arith.constant 1 : index
    %228 = vector.load %arg2[%c0_248, %c2_249, %227, %c1_250] : memref<1x4x114x114xf32, #tpu.memory_space<vmem>>, vector<1x1x16x112xf32>
    %229 = vector.shape_cast %228 : vector<1x1x16x112xf32> to vector<16x112xf32>
    %c5_251 = arith.constant 5 : index
    %c2_252 = arith.constant 2 : index
    %c0_253 = arith.constant 0 : index
    %c0_254 = arith.constant 0 : index
    %230 = vector.load %arg6[%c5_251, %c2_252, %c0_253, %c0_254] : memref<6x6x16x112xf32, #tpu.memory_space<vmem>>, vector<1x1x16x112xf32>
    %231 = vector.shape_cast %230 : vector<1x1x16x112xf32> to vector<16x112xf32>
    %232 = vector.shape_cast %229 : vector<16x112xf32> to vector<1x1x16x112xf32>
    tpu.vector_store %arg6[%c5_251, %c2_252, %c0_253, %c0_254], %232 {strides = array<i32>} : memref<6x6x16x112xf32, #tpu.memory_space<vmem>>, vector<1x1x16x112xf32>,
    %c2_i32_255 = arith.constant 2 : i32
    %233 = arith.addi %1, %c2_i32_255 : i32
    %c0_256 = arith.constant 0 : index
    %c3_257 = arith.constant 3 : index
    %234 = arith.index_cast %233 : i32 to index
    %c1_258 = arith.constant 1 : index
    %235 = vector.load %arg2[%c0_256, %c3_257, %234, %c1_258] : memref<1x4x114x114xf32, #tpu.memory_space<vmem>>, vector<1x1x16x112xf32>
    %236 = vector.shape_cast %235 : vector<1x1x16x112xf32> to vector<16x112xf32>
    %c5_259 = arith.constant 5 : index
    %c3_260 = arith.constant 3 : index
    %c0_261 = arith.constant 0 : index
    %c0_262 = arith.constant 0 : index
    %237 = vector.load %arg6[%c5_259, %c3_260, %c0_261, %c0_262] : memref<6x6x16x112xf32, #tpu.memory_space<vmem>>, vector<1x1x16x112xf32>
    %238 = vector.shape_cast %237 : vector<1x1x16x112xf32> to vector<16x112xf32>
    %239 = vector.shape_cast %236 : vector<16x112xf32> to vector<1x1x16x112xf32>
    tpu.vector_store %arg6[%c5_259, %c3_260, %c0_261, %c0_262], %239 {strides = array<i32>} : memref<6x6x16x112xf32, #tpu.memory_space<vmem>>, vector<1x1x16x112xf32>,
    %c2_i32_263 = arith.constant 2 : i32
    %240 = arith.addi %1, %c2_i32_263 : i32
    %c0_264 = arith.constant 0 : index
    %c2_265 = arith.constant 2 : index
    %241 = arith.index_cast %240 : i32 to index
    %c2_266 = arith.constant 2 : index
    %242 = vector.load %arg2[%c0_264, %c2_265, %241, %c2_266] : memref<1x4x114x114xf32, #tpu.memory_space<vmem>>, vector<1x1x16x112xf32>
    %243 = vector.shape_cast %242 : vector<1x1x16x112xf32> to vector<16x112xf32>
    %c5_267 = arith.constant 5 : index
    %c4_268 = arith.constant 4 : index
    %c0_269 = arith.constant 0 : index
    %c0_270 = arith.constant 0 : index
    %244 = vector.load %arg6[%c5_267, %c4_268, %c0_269, %c0_270] : memref<6x6x16x112xf32, #tpu.memory_space<vmem>>, vector<1x1x16x112xf32>
    %245 = vector.shape_cast %244 : vector<1x1x16x112xf32> to vector<16x112xf32>
    %246 = vector.shape_cast %243 : vector<16x112xf32> to vector<1x1x16x112xf32>
    tpu.vector_store %arg6[%c5_267, %c4_268, %c0_269, %c0_270], %246 {strides = array<i32>} : memref<6x6x16x112xf32, #tpu.memory_space<vmem>>, vector<1x1x16x112xf32>,
    %c2_i32_271 = arith.constant 2 : i32
    %247 = arith.addi %1, %c2_i32_271 : i32
    %c0_272 = arith.constant 0 : index
    %c3_273 = arith.constant 3 : index
    %248 = arith.index_cast %247 : i32 to index
    %c2_274 = arith.constant 2 : index
    %249 = vector.load %arg2[%c0_272, %c3_273, %248, %c2_274] : memref<1x4x114x114xf32, #tpu.memory_space<vmem>>, vector<1x1x16x112xf32>
    %250 = vector.shape_cast %249 : vector<1x1x16x112xf32> to vector<16x112xf32>
    %c5_275 = arith.constant 5 : index
    %c5_276 = arith.constant 5 : index
    %c0_277 = arith.constant 0 : index
    %c0_278 = arith.constant 0 : index
    %251 = vector.load %arg6[%c5_275, %c5_276, %c0_277, %c0_278] : memref<6x6x16x112xf32, #tpu.memory_space<vmem>>, vector<1x1x16x112xf32>
    %252 = vector.shape_cast %251 : vector<1x1x16x112xf32> to vector<16x112xf32>
    %253 = vector.shape_cast %250 : vector<16x112xf32> to vector<1x1x16x112xf32>
    tpu.vector_store %arg6[%c5_275, %c5_276, %c0_277, %c0_278], %253 {strides = array<i32>} : memref<6x6x16x112xf32, #tpu.memory_space<vmem>>, vector<1x1x16x112xf32>,
    %c0_i32_279 = arith.constant 0 : i32
    %c30_i32 = arith.constant 30 : i32
    %254 = arith.addi %c0_i32_279, %c30_i32 : i32
    %c1_i32_280 = arith.constant 1 : i32
    scf.for %arg7 = %c0_i32_279 to %254 step %c1_i32_280  : i32 {
      %c1_i32_282 = arith.constant 1 : i32
      %255 = arith.muli %arg7, %c1_i32_282 : i32
      %c0_i32_283 = arith.constant 0 : i32
      %256 = arith.addi %c0_i32_283, %255 : i32
      %cst = arith.constant 0.000000e+00 : f32
      %257 = vector.broadcast %cst : f32 to vector<16x112xf32>
      %c25_i32 = arith.constant 25 : i32
      %258 = arith.muli %256, %c25_i32 : i32
      %c0_i32_284 = arith.constant 0 : i32
      %259 = arith.addi %258, %c0_i32_284 : i32
      %c0_i32_285 = arith.constant 0 : i32
      %260 = arith.addi %259, %c0_i32_285 : i32
      %261 = arith.index_cast %260 : i32 to index
      %262 = memref.load %arg3[%261] : memref<750xf32, #tpu.memory_space<smem>>
      %c0_286 = arith.constant 0 : index
      %c0_287 = arith.constant 0 : index
      %c0_288 = arith.constant 0 : index
      %c0_289 = arith.constant 0 : index
      %263 = vector.load %arg6[%c0_286, %c0_287, %c0_288, %c0_289] : memref<6x6x16x112xf32, #tpu.memory_space<vmem>>, vector<1x1x16x112xf32>
      %264 = vector.shape_cast %263 : vector<1x1x16x112xf32> to vector<16x112xf32>
      %265 = vector.broadcast %262 : f32 to vector<16x112xf32>
      %266 = arith.mulf %265, %264 : vector<16x112xf32>
      %267 = arith.addf %257, %266 : vector<16x112xf32>
      %c0_290 = arith.constant 0 : index
      %c1_291 = arith.constant 1 : index
      %c0_292 = arith.constant 0 : index
      %c0_293 = arith.constant 0 : index
      %268 = vector.load %arg6[%c0_290, %c1_291, %c0_292, %c0_293] : memref<6x6x16x112xf32, #tpu.memory_space<vmem>>, vector<1x1x16x112xf32>
      %269 = vector.shape_cast %268 : vector<1x1x16x112xf32> to vector<16x112xf32>
      %270 = vector.broadcast %262 : f32 to vector<16x112xf32>
      %271 = arith.mulf %270, %269 : vector<16x112xf32>
      %272 = arith.addf %257, %271 : vector<16x112xf32>
      %c1_294 = arith.constant 1 : index
      %c0_295 = arith.constant 0 : index
      %c0_296 = arith.constant 0 : index
      %c0_297 = arith.constant 0 : index
      %273 = vector.load %arg6[%c1_294, %c0_295, %c0_296, %c0_297] : memref<6x6x16x112xf32, #tpu.memory_space<vmem>>, vector<1x1x16x112xf32>
      %274 = vector.shape_cast %273 : vector<1x1x16x112xf32> to vector<16x112xf32>
      %275 = vector.broadcast %262 : f32 to vector<16x112xf32>
      %276 = arith.mulf %275, %274 : vector<16x112xf32>
      %277 = arith.addf %257, %276 : vector<16x112xf32>
      %c1_298 = arith.constant 1 : index
      %c1_299 = arith.constant 1 : index
      %c0_300 = arith.constant 0 : index
      %c0_301 = arith.constant 0 : index
      %278 = vector.load %arg6[%c1_298, %c1_299, %c0_300, %c0_301] : memref<6x6x16x112xf32, #tpu.memory_space<vmem>>, vector<1x1x16x112xf32>
      %279 = vector.shape_cast %278 : vector<1x1x16x112xf32> to vector<16x112xf32>
      %280 = vector.broadcast %262 : f32 to vector<16x112xf32>
      %281 = arith.mulf %280, %279 : vector<16x112xf32>
      %282 = arith.addf %257, %281 : vector<16x112xf32>
      %c25_i32_302 = arith.constant 25 : i32
      %283 = arith.muli %256, %c25_i32_302 : i32
      %c0_i32_303 = arith.constant 0 : i32
      %284 = arith.addi %283, %c0_i32_303 : i32
      %c1_i32_304 = arith.constant 1 : i32
      %285 = arith.addi %284, %c1_i32_304 : i32
      %286 = arith.index_cast %285 : i32 to index
      %287 = memref.load %arg3[%286] : memref<750xf32, #tpu.memory_space<smem>>
      %c0_305 = arith.constant 0 : index
      %c1_306 = arith.constant 1 : index
      %c0_307 = arith.constant 0 : index
      %c0_308 = arith.constant 0 : index
      %288 = vector.load %arg6[%c0_305, %c1_306, %c0_307, %c0_308] : memref<6x6x16x112xf32, #tpu.memory_space<vmem>>, vector<1x1x16x112xf32>
      %289 = vector.shape_cast %288 : vector<1x1x16x112xf32> to vector<16x112xf32>
      %290 = vector.broadcast %287 : f32 to vector<16x112xf32>
      %291 = arith.mulf %290, %289 : vector<16x112xf32>
      %292 = arith.addf %267, %291 : vector<16x112xf32>
      %c0_309 = arith.constant 0 : index
      %c2_310 = arith.constant 2 : index
      %c0_311 = arith.constant 0 : index
      %c0_312 = arith.constant 0 : index
      %293 = vector.load %arg6[%c0_309, %c2_310, %c0_311, %c0_312] : memref<6x6x16x112xf32, #tpu.memory_space<vmem>>, vector<1x1x16x112xf32>
      %294 = vector.shape_cast %293 : vector<1x1x16x112xf32> to vector<16x112xf32>
      %295 = vector.broadcast %287 : f32 to vector<16x112xf32>
      %296 = arith.mulf %295, %294 : vector<16x112xf32>
      %297 = arith.addf %272, %296 : vector<16x112xf32>
      %c1_313 = arith.constant 1 : index
      %c1_314 = arith.constant 1 : index
      %c0_315 = arith.constant 0 : index
      %c0_316 = arith.constant 0 : index
      %298 = vector.load %arg6[%c1_313, %c1_314, %c0_315, %c0_316] : memref<6x6x16x112xf32, #tpu.memory_space<vmem>>, vector<1x1x16x112xf32>
      %299 = vector.shape_cast %298 : vector<1x1x16x112xf32> to vector<16x112xf32>
      %300 = vector.broadcast %287 : f32 to vector<16x112xf32>
      %301 = arith.mulf %300, %299 : vector<16x112xf32>
      %302 = arith.addf %277, %301 : vector<16x112xf32>
      %c1_317 = arith.constant 1 : index
      %c2_318 = arith.constant 2 : index
      %c0_319 = arith.constant 0 : index
      %c0_320 = arith.constant 0 : index
      %303 = vector.load %arg6[%c1_317, %c2_318, %c0_319, %c0_320] : memref<6x6x16x112xf32, #tpu.memory_space<vmem>>, vector<1x1x16x112xf32>
      %304 = vector.shape_cast %303 : vector<1x1x16x112xf32> to vector<16x112xf32>
      %305 = vector.broadcast %287 : f32 to vector<16x112xf32>
      %306 = arith.mulf %305, %304 : vector<16x112xf32>
      %307 = arith.addf %282, %306 : vector<16x112xf32>
      %c25_i32_321 = arith.constant 25 : i32
      %308 = arith.muli %256, %c25_i32_321 : i32
      %c0_i32_322 = arith.constant 0 : i32
      %309 = arith.addi %308, %c0_i32_322 : i32
      %c2_i32_323 = arith.constant 2 : i32
      %310 = arith.addi %309, %c2_i32_323 : i32
      %311 = arith.index_cast %310 : i32 to index
      %312 = memref.load %arg3[%311] : memref<750xf32, #tpu.memory_space<smem>>
      %c0_324 = arith.constant 0 : index
      %c2_325 = arith.constant 2 : index
      %c0_326 = arith.constant 0 : index
      %c0_327 = arith.constant 0 : index
      %313 = vector.load %arg6[%c0_324, %c2_325, %c0_326, %c0_327] : memref<6x6x16x112xf32, #tpu.memory_space<vmem>>, vector<1x1x16x112xf32>
      %314 = vector.shape_cast %313 : vector<1x1x16x112xf32> to vector<16x112xf32>
      %315 = vector.broadcast %312 : f32 to vector<16x112xf32>
      %316 = arith.mulf %315, %314 : vector<16x112xf32>
      %317 = arith.addf %292, %316 : vector<16x112xf32>
      %c0_328 = arith.constant 0 : index
      %c3_329 = arith.constant 3 : index
      %c0_330 = arith.constant 0 : index
      %c0_331 = arith.constant 0 : index
      %318 = vector.load %arg6[%c0_328, %c3_329, %c0_330, %c0_331] : memref<6x6x16x112xf32, #tpu.memory_space<vmem>>, vector<1x1x16x112xf32>
      %319 = vector.shape_cast %318 : vector<1x1x16x112xf32> to vector<16x112xf32>
      %320 = vector.broadcast %312 : f32 to vector<16x112xf32>
      %321 = arith.mulf %320, %319 : vector<16x112xf32>
      %322 = arith.addf %297, %321 : vector<16x112xf32>
      %c1_332 = arith.constant 1 : index
      %c2_333 = arith.constant 2 : index
      %c0_334 = arith.constant 0 : index
      %c0_335 = arith.constant 0 : index
      %323 = vector.load %arg6[%c1_332, %c2_333, %c0_334, %c0_335] : memref<6x6x16x112xf32, #tpu.memory_space<vmem>>, vector<1x1x16x112xf32>
      %324 = vector.shape_cast %323 : vector<1x1x16x112xf32> to vector<16x112xf32>
      %325 = vector.broadcast %312 : f32 to vector<16x112xf32>
      %326 = arith.mulf %325, %324 : vector<16x112xf32>
      %327 = arith.addf %302, %326 : vector<16x112xf32>
      %c1_336 = arith.constant 1 : index
      %c3_337 = arith.constant 3 : index
      %c0_338 = arith.constant 0 : index
      %c0_339 = arith.constant 0 : index
      %328 = vector.load %arg6[%c1_336, %c3_337, %c0_338, %c0_339] : memref<6x6x16x112xf32, #tpu.memory_space<vmem>>, vector<1x1x16x112xf32>
      %329 = vector.shape_cast %328 : vector<1x1x16x112xf32> to vector<16x112xf32>
      %330 = vector.broadcast %312 : f32 to vector<16x112xf32>
      %331 = arith.mulf %330, %329 : vector<16x112xf32>
      %332 = arith.addf %307, %331 : vector<16x112xf32>
      %c25_i32_340 = arith.constant 25 : i32
      %333 = arith.muli %256, %c25_i32_340 : i32
      %c0_i32_341 = arith.constant 0 : i32
      %334 = arith.addi %333, %c0_i32_341 : i32
      %c3_i32 = arith.constant 3 : i32
      %335 = arith.addi %334, %c3_i32 : i32
      %336 = arith.index_cast %335 : i32 to index
      %337 = memref.load %arg3[%336] : memref<750xf32, #tpu.memory_space<smem>>
      %c0_342 = arith.constant 0 : index
      %c3_343 = arith.constant 3 : index
      %c0_344 = arith.constant 0 : index
      %c0_345 = arith.constant 0 : index
      %338 = vector.load %arg6[%c0_342, %c3_343, %c0_344, %c0_345] : memref<6x6x16x112xf32, #tpu.memory_space<vmem>>, vector<1x1x16x112xf32>
      %339 = vector.shape_cast %338 : vector<1x1x16x112xf32> to vector<16x112xf32>
      %340 = vector.broadcast %337 : f32 to vector<16x112xf32>
      %341 = arith.mulf %340, %339 : vector<16x112xf32>
      %342 = arith.addf %317, %341 : vector<16x112xf32>
      %c0_346 = arith.constant 0 : index
      %c4_347 = arith.constant 4 : index
      %c0_348 = arith.constant 0 : index
      %c0_349 = arith.constant 0 : index
      %343 = vector.load %arg6[%c0_346, %c4_347, %c0_348, %c0_349] : memref<6x6x16x112xf32, #tpu.memory_space<vmem>>, vector<1x1x16x112xf32>
      %344 = vector.shape_cast %343 : vector<1x1x16x112xf32> to vector<16x112xf32>
      %345 = vector.broadcast %337 : f32 to vector<16x112xf32>
      %346 = arith.mulf %345, %344 : vector<16x112xf32>
      %347 = arith.addf %322, %346 : vector<16x112xf32>
      %c1_350 = arith.constant 1 : index
      %c3_351 = arith.constant 3 : index
      %c0_352 = arith.constant 0 : index
      %c0_353 = arith.constant 0 : index
      %348 = vector.load %arg6[%c1_350, %c3_351, %c0_352, %c0_353] : memref<6x6x16x112xf32, #tpu.memory_space<vmem>>, vector<1x1x16x112xf32>
      %349 = vector.shape_cast %348 : vector<1x1x16x112xf32> to vector<16x112xf32>
      %350 = vector.broadcast %337 : f32 to vector<16x112xf32>
      %351 = arith.mulf %350, %349 : vector<16x112xf32>
      %352 = arith.addf %327, %351 : vector<16x112xf32>
      %c1_354 = arith.constant 1 : index
      %c4_355 = arith.constant 4 : index
      %c0_356 = arith.constant 0 : index
      %c0_357 = arith.constant 0 : index
      %353 = vector.load %arg6[%c1_354, %c4_355, %c0_356, %c0_357] : memref<6x6x16x112xf32, #tpu.memory_space<vmem>>, vector<1x1x16x112xf32>
      %354 = vector.shape_cast %353 : vector<1x1x16x112xf32> to vector<16x112xf32>
      %355 = vector.broadcast %337 : f32 to vector<16x112xf32>
      %356 = arith.mulf %355, %354 : vector<16x112xf32>
      %357 = arith.addf %332, %356 : vector<16x112xf32>
      %c25_i32_358 = arith.constant 25 : i32
      %358 = arith.muli %256, %c25_i32_358 : i32
      %c0_i32_359 = arith.constant 0 : i32
      %359 = arith.addi %358, %c0_i32_359 : i32
      %c4_i32 = arith.constant 4 : i32
      %360 = arith.addi %359, %c4_i32 : i32
      %361 = arith.index_cast %360 : i32 to index
      %362 = memref.load %arg3[%361] : memref<750xf32, #tpu.memory_space<smem>>
      %c0_360 = arith.constant 0 : index
      %c4_361 = arith.constant 4 : index
      %c0_362 = arith.constant 0 : index
      %c0_363 = arith.constant 0 : index
      %363 = vector.load %arg6[%c0_360, %c4_361, %c0_362, %c0_363] : memref<6x6x16x112xf32, #tpu.memory_space<vmem>>, vector<1x1x16x112xf32>
      %364 = vector.shape_cast %363 : vector<1x1x16x112xf32> to vector<16x112xf32>
      %365 = vector.broadcast %362 : f32 to vector<16x112xf32>
      %366 = arith.mulf %365, %364 : vector<16x112xf32>
      %367 = arith.addf %342, %366 : vector<16x112xf32>
      %c0_364 = arith.constant 0 : index
      %c5_365 = arith.constant 5 : index
      %c0_366 = arith.constant 0 : index
      %c0_367 = arith.constant 0 : index
      %368 = vector.load %arg6[%c0_364, %c5_365, %c0_366, %c0_367] : memref<6x6x16x112xf32, #tpu.memory_space<vmem>>, vector<1x1x16x112xf32>
      %369 = vector.shape_cast %368 : vector<1x1x16x112xf32> to vector<16x112xf32>
      %370 = vector.broadcast %362 : f32 to vector<16x112xf32>
      %371 = arith.mulf %370, %369 : vector<16x112xf32>
      %372 = arith.addf %347, %371 : vector<16x112xf32>
      %c1_368 = arith.constant 1 : index
      %c4_369 = arith.constant 4 : index
      %c0_370 = arith.constant 0 : index
      %c0_371 = arith.constant 0 : index
      %373 = vector.load %arg6[%c1_368, %c4_369, %c0_370, %c0_371] : memref<6x6x16x112xf32, #tpu.memory_space<vmem>>, vector<1x1x16x112xf32>
      %374 = vector.shape_cast %373 : vector<1x1x16x112xf32> to vector<16x112xf32>
      %375 = vector.broadcast %362 : f32 to vector<16x112xf32>
      %376 = arith.mulf %375, %374 : vector<16x112xf32>
      %377 = arith.addf %352, %376 : vector<16x112xf32>
      %c1_372 = arith.constant 1 : index
      %c5_373 = arith.constant 5 : index
      %c0_374 = arith.constant 0 : index
      %c0_375 = arith.constant 0 : index
      %378 = vector.load %arg6[%c1_372, %c5_373, %c0_374, %c0_375] : memref<6x6x16x112xf32, #tpu.memory_space<vmem>>, vector<1x1x16x112xf32>
      %379 = vector.shape_cast %378 : vector<1x1x16x112xf32> to vector<16x112xf32>
      %380 = vector.broadcast %362 : f32 to vector<16x112xf32>
      %381 = arith.mulf %380, %379 : vector<16x112xf32>
      %382 = arith.addf %357, %381 : vector<16x112xf32>
      %c25_i32_376 = arith.constant 25 : i32
      %383 = arith.muli %256, %c25_i32_376 : i32
      %c5_i32 = arith.constant 5 : i32
      %384 = arith.addi %383, %c5_i32 : i32
      %c0_i32_377 = arith.constant 0 : i32
      %385 = arith.addi %384, %c0_i32_377 : i32
      %386 = arith.index_cast %385 : i32 to index
      %387 = memref.load %arg3[%386] : memref<750xf32, #tpu.memory_space<smem>>
      %c1_378 = arith.constant 1 : index
      %c0_379 = arith.constant 0 : index
      %c0_380 = arith.constant 0 : index
      %c0_381 = arith.constant 0 : index
      %388 = vector.load %arg6[%c1_378, %c0_379, %c0_380, %c0_381] : memref<6x6x16x112xf32, #tpu.memory_space<vmem>>, vector<1x1x16x112xf32>
      %389 = vector.shape_cast %388 : vector<1x1x16x112xf32> to vector<16x112xf32>
      %390 = vector.broadcast %387 : f32 to vector<16x112xf32>
      %391 = arith.mulf %390, %389 : vector<16x112xf32>
      %392 = arith.addf %367, %391 : vector<16x112xf32>
      %c1_382 = arith.constant 1 : index
      %c1_383 = arith.constant 1 : index
      %c0_384 = arith.constant 0 : index
      %c0_385 = arith.constant 0 : index
      %393 = vector.load %arg6[%c1_382, %c1_383, %c0_384, %c0_385] : memref<6x6x16x112xf32, #tpu.memory_space<vmem>>, vector<1x1x16x112xf32>
      %394 = vector.shape_cast %393 : vector<1x1x16x112xf32> to vector<16x112xf32>
      %395 = vector.broadcast %387 : f32 to vector<16x112xf32>
      %396 = arith.mulf %395, %394 : vector<16x112xf32>
      %397 = arith.addf %372, %396 : vector<16x112xf32>
      %c2_386 = arith.constant 2 : index
      %c0_387 = arith.constant 0 : index
      %c0_388 = arith.constant 0 : index
      %c0_389 = arith.constant 0 : index
      %398 = vector.load %arg6[%c2_386, %c0_387, %c0_388, %c0_389] : memref<6x6x16x112xf32, #tpu.memory_space<vmem>>, vector<1x1x16x112xf32>
      %399 = vector.shape_cast %398 : vector<1x1x16x112xf32> to vector<16x112xf32>
      %400 = vector.broadcast %387 : f32 to vector<16x112xf32>
      %401 = arith.mulf %400, %399 : vector<16x112xf32>
      %402 = arith.addf %377, %401 : vector<16x112xf32>
      %c2_390 = arith.constant 2 : index
      %c1_391 = arith.constant 1 : index
      %c0_392 = arith.constant 0 : index
      %c0_393 = arith.constant 0 : index
      %403 = vector.load %arg6[%c2_390, %c1_391, %c0_392, %c0_393] : memref<6x6x16x112xf32, #tpu.memory_space<vmem>>, vector<1x1x16x112xf32>
      %404 = vector.shape_cast %403 : vector<1x1x16x112xf32> to vector<16x112xf32>
      %405 = vector.broadcast %387 : f32 to vector<16x112xf32>
      %406 = arith.mulf %405, %404 : vector<16x112xf32>
      %407 = arith.addf %382, %406 : vector<16x112xf32>
      %c25_i32_394 = arith.constant 25 : i32
      %408 = arith.muli %256, %c25_i32_394 : i32
      %c5_i32_395 = arith.constant 5 : i32
      %409 = arith.addi %408, %c5_i32_395 : i32
      %c1_i32_396 = arith.constant 1 : i32
      %410 = arith.addi %409, %c1_i32_396 : i32
      %411 = arith.index_cast %410 : i32 to index
      %412 = memref.load %arg3[%411] : memref<750xf32, #tpu.memory_space<smem>>
      %c1_397 = arith.constant 1 : index
      %c1_398 = arith.constant 1 : index
      %c0_399 = arith.constant 0 : index
      %c0_400 = arith.constant 0 : index
      %413 = vector.load %arg6[%c1_397, %c1_398, %c0_399, %c0_400] : memref<6x6x16x112xf32, #tpu.memory_space<vmem>>, vector<1x1x16x112xf32>
      %414 = vector.shape_cast %413 : vector<1x1x16x112xf32> to vector<16x112xf32>
      %415 = vector.broadcast %412 : f32 to vector<16x112xf32>
      %416 = arith.mulf %415, %414 : vector<16x112xf32>
      %417 = arith.addf %392, %416 : vector<16x112xf32>
      %c1_401 = arith.constant 1 : index
      %c2_402 = arith.constant 2 : index
      %c0_403 = arith.constant 0 : index
      %c0_404 = arith.constant 0 : index
      %418 = vector.load %arg6[%c1_401, %c2_402, %c0_403, %c0_404] : memref<6x6x16x112xf32, #tpu.memory_space<vmem>>, vector<1x1x16x112xf32>
      %419 = vector.shape_cast %418 : vector<1x1x16x112xf32> to vector<16x112xf32>
      %420 = vector.broadcast %412 : f32 to vector<16x112xf32>
      %421 = arith.mulf %420, %419 : vector<16x112xf32>
      %422 = arith.addf %397, %421 : vector<16x112xf32>
      %c2_405 = arith.constant 2 : index
      %c1_406 = arith.constant 1 : index
      %c0_407 = arith.constant 0 : index
      %c0_408 = arith.constant 0 : index
      %423 = vector.load %arg6[%c2_405, %c1_406, %c0_407, %c0_408] : memref<6x6x16x112xf32, #tpu.memory_space<vmem>>, vector<1x1x16x112xf32>
      %424 = vector.shape_cast %423 : vector<1x1x16x112xf32> to vector<16x112xf32>
      %425 = vector.broadcast %412 : f32 to vector<16x112xf32>
      %426 = arith.mulf %425, %424 : vector<16x112xf32>
      %427 = arith.addf %402, %426 : vector<16x112xf32>
      %c2_409 = arith.constant 2 : index
      %c2_410 = arith.constant 2 : index
      %c0_411 = arith.constant 0 : index
      %c0_412 = arith.constant 0 : index
      %428 = vector.load %arg6[%c2_409, %c2_410, %c0_411, %c0_412] : memref<6x6x16x112xf32, #tpu.memory_space<vmem>>, vector<1x1x16x112xf32>
      %429 = vector.shape_cast %428 : vector<1x1x16x112xf32> to vector<16x112xf32>
      %430 = vector.broadcast %412 : f32 to vector<16x112xf32>
      %431 = arith.mulf %430, %429 : vector<16x112xf32>
      %432 = arith.addf %407, %431 : vector<16x112xf32>
      %c25_i32_413 = arith.constant 25 : i32
      %433 = arith.muli %256, %c25_i32_413 : i32
      %c5_i32_414 = arith.constant 5 : i32
      %434 = arith.addi %433, %c5_i32_414 : i32
      %c2_i32_415 = arith.constant 2 : i32
      %435 = arith.addi %434, %c2_i32_415 : i32
      %436 = arith.index_cast %435 : i32 to index
      %437 = memref.load %arg3[%436] : memref<750xf32, #tpu.memory_space<smem>>
      %c1_416 = arith.constant 1 : index
      %c2_417 = arith.constant 2 : index
      %c0_418 = arith.constant 0 : index
      %c0_419 = arith.constant 0 : index
      %438 = vector.load %arg6[%c1_416, %c2_417, %c0_418, %c0_419] : memref<6x6x16x112xf32, #tpu.memory_space<vmem>>, vector<1x1x16x112xf32>
      %439 = vector.shape_cast %438 : vector<1x1x16x112xf32> to vector<16x112xf32>
      %440 = vector.broadcast %437 : f32 to vector<16x112xf32>
      %441 = arith.mulf %440, %439 : vector<16x112xf32>
      %442 = arith.addf %417, %441 : vector<16x112xf32>
      %c1_420 = arith.constant 1 : index
      %c3_421 = arith.constant 3 : index
      %c0_422 = arith.constant 0 : index
      %c0_423 = arith.constant 0 : index
      %443 = vector.load %arg6[%c1_420, %c3_421, %c0_422, %c0_423] : memref<6x6x16x112xf32, #tpu.memory_space<vmem>>, vector<1x1x16x112xf32>
      %444 = vector.shape_cast %443 : vector<1x1x16x112xf32> to vector<16x112xf32>
      %445 = vector.broadcast %437 : f32 to vector<16x112xf32>
      %446 = arith.mulf %445, %444 : vector<16x112xf32>
      %447 = arith.addf %422, %446 : vector<16x112xf32>
      %c2_424 = arith.constant 2 : index
      %c2_425 = arith.constant 2 : index
      %c0_426 = arith.constant 0 : index
      %c0_427 = arith.constant 0 : index
      %448 = vector.load %arg6[%c2_424, %c2_425, %c0_426, %c0_427] : memref<6x6x16x112xf32, #tpu.memory_space<vmem>>, vector<1x1x16x112xf32>
      %449 = vector.shape_cast %448 : vector<1x1x16x112xf32> to vector<16x112xf32>
      %450 = vector.broadcast %437 : f32 to vector<16x112xf32>
      %451 = arith.mulf %450, %449 : vector<16x112xf32>
      %452 = arith.addf %427, %451 : vector<16x112xf32>
      %c2_428 = arith.constant 2 : index
      %c3_429 = arith.constant 3 : index
      %c0_430 = arith.constant 0 : index
      %c0_431 = arith.constant 0 : index
      %453 = vector.load %arg6[%c2_428, %c3_429, %c0_430, %c0_431] : memref<6x6x16x112xf32, #tpu.memory_space<vmem>>, vector<1x1x16x112xf32>
      %454 = vector.shape_cast %453 : vector<1x1x16x112xf32> to vector<16x112xf32>
      %455 = vector.broadcast %437 : f32 to vector<16x112xf32>
      %456 = arith.mulf %455, %454 : vector<16x112xf32>
      %457 = arith.addf %432, %456 : vector<16x112xf32>
      %c25_i32_432 = arith.constant 25 : i32
      %458 = arith.muli %256, %c25_i32_432 : i32
      %c5_i32_433 = arith.constant 5 : i32
      %459 = arith.addi %458, %c5_i32_433 : i32
      %c3_i32_434 = arith.constant 3 : i32
      %460 = arith.addi %459, %c3_i32_434 : i32
      %461 = arith.index_cast %460 : i32 to index
      %462 = memref.load %arg3[%461] : memref<750xf32, #tpu.memory_space<smem>>
      %c1_435 = arith.constant 1 : index
      %c3_436 = arith.constant 3 : index
      %c0_437 = arith.constant 0 : index
      %c0_438 = arith.constant 0 : index
      %463 = vector.load %arg6[%c1_435, %c3_436, %c0_437, %c0_438] : memref<6x6x16x112xf32, #tpu.memory_space<vmem>>, vector<1x1x16x112xf32>
      %464 = vector.shape_cast %463 : vector<1x1x16x112xf32> to vector<16x112xf32>
      %465 = vector.broadcast %462 : f32 to vector<16x112xf32>
      %466 = arith.mulf %465, %464 : vector<16x112xf32>
      %467 = arith.addf %442, %466 : vector<16x112xf32>
      %c1_439 = arith.constant 1 : index
      %c4_440 = arith.constant 4 : index
      %c0_441 = arith.constant 0 : index
      %c0_442 = arith.constant 0 : index
      %468 = vector.load %arg6[%c1_439, %c4_440, %c0_441, %c0_442] : memref<6x6x16x112xf32, #tpu.memory_space<vmem>>, vector<1x1x16x112xf32>
      %469 = vector.shape_cast %468 : vector<1x1x16x112xf32> to vector<16x112xf32>
      %470 = vector.broadcast %462 : f32 to vector<16x112xf32>
      %471 = arith.mulf %470, %469 : vector<16x112xf32>
      %472 = arith.addf %447, %471 : vector<16x112xf32>
      %c2_443 = arith.constant 2 : index
      %c3_444 = arith.constant 3 : index
      %c0_445 = arith.constant 0 : index
      %c0_446 = arith.constant 0 : index
      %473 = vector.load %arg6[%c2_443, %c3_444, %c0_445, %c0_446] : memref<6x6x16x112xf32, #tpu.memory_space<vmem>>, vector<1x1x16x112xf32>
      %474 = vector.shape_cast %473 : vector<1x1x16x112xf32> to vector<16x112xf32>
      %475 = vector.broadcast %462 : f32 to vector<16x112xf32>
      %476 = arith.mulf %475, %474 : vector<16x112xf32>
      %477 = arith.addf %452, %476 : vector<16x112xf32>
      %c2_447 = arith.constant 2 : index
      %c4_448 = arith.constant 4 : index
      %c0_449 = arith.constant 0 : index
      %c0_450 = arith.constant 0 : index
      %478 = vector.load %arg6[%c2_447, %c4_448, %c0_449, %c0_450] : memref<6x6x16x112xf32, #tpu.memory_space<vmem>>, vector<1x1x16x112xf32>
      %479 = vector.shape_cast %478 : vector<1x1x16x112xf32> to vector<16x112xf32>
      %480 = vector.broadcast %462 : f32 to vector<16x112xf32>
      %481 = arith.mulf %480, %479 : vector<16x112xf32>
      %482 = arith.addf %457, %481 : vector<16x112xf32>
      %c25_i32_451 = arith.constant 25 : i32
      %483 = arith.muli %256, %c25_i32_451 : i32
      %c5_i32_452 = arith.constant 5 : i32
      %484 = arith.addi %483, %c5_i32_452 : i32
      %c4_i32_453 = arith.constant 4 : i32
      %485 = arith.addi %484, %c4_i32_453 : i32
      %486 = arith.index_cast %485 : i32 to index
      %487 = memref.load %arg3[%486] : memref<750xf32, #tpu.memory_space<smem>>
      %c1_454 = arith.constant 1 : index
      %c4_455 = arith.constant 4 : index
      %c0_456 = arith.constant 0 : index
      %c0_457 = arith.constant 0 : index
      %488 = vector.load %arg6[%c1_454, %c4_455, %c0_456, %c0_457] : memref<6x6x16x112xf32, #tpu.memory_space<vmem>>, vector<1x1x16x112xf32>
      %489 = vector.shape_cast %488 : vector<1x1x16x112xf32> to vector<16x112xf32>
      %490 = vector.broadcast %487 : f32 to vector<16x112xf32>
      %491 = arith.mulf %490, %489 : vector<16x112xf32>
      %492 = arith.addf %467, %491 : vector<16x112xf32>
      %c1_458 = arith.constant 1 : index
      %c5_459 = arith.constant 5 : index
      %c0_460 = arith.constant 0 : index
      %c0_461 = arith.constant 0 : index
      %493 = vector.load %arg6[%c1_458, %c5_459, %c0_460, %c0_461] : memref<6x6x16x112xf32, #tpu.memory_space<vmem>>, vector<1x1x16x112xf32>
      %494 = vector.shape_cast %493 : vector<1x1x16x112xf32> to vector<16x112xf32>
      %495 = vector.broadcast %487 : f32 to vector<16x112xf32>
      %496 = arith.mulf %495, %494 : vector<16x112xf32>
      %497 = arith.addf %472, %496 : vector<16x112xf32>
      %c2_462 = arith.constant 2 : index
      %c4_463 = arith.constant 4 : index
      %c0_464 = arith.constant 0 : index
      %c0_465 = arith.constant 0 : index
      %498 = vector.load %arg6[%c2_462, %c4_463, %c0_464, %c0_465] : memref<6x6x16x112xf32, #tpu.memory_space<vmem>>, vector<1x1x16x112xf32>
      %499 = vector.shape_cast %498 : vector<1x1x16x112xf32> to vector<16x112xf32>
      %500 = vector.broadcast %487 : f32 to vector<16x112xf32>
      %501 = arith.mulf %500, %499 : vector<16x112xf32>
      %502 = arith.addf %477, %501 : vector<16x112xf32>
      %c2_466 = arith.constant 2 : index
      %c5_467 = arith.constant 5 : index
      %c0_468 = arith.constant 0 : index
      %c0_469 = arith.constant 0 : index
      %503 = vector.load %arg6[%c2_466, %c5_467, %c0_468, %c0_469] : memref<6x6x16x112xf32, #tpu.memory_space<vmem>>, vector<1x1x16x112xf32>
      %504 = vector.shape_cast %503 : vector<1x1x16x112xf32> to vector<16x112xf32>
      %505 = vector.broadcast %487 : f32 to vector<16x112xf32>
      %506 = arith.mulf %505, %504 : vector<16x112xf32>
      %507 = arith.addf %482, %506 : vector<16x112xf32>
      %c25_i32_470 = arith.constant 25 : i32
      %508 = arith.muli %256, %c25_i32_470 : i32
      %c10_i32 = arith.constant 10 : i32
      %509 = arith.addi %508, %c10_i32 : i32
      %c0_i32_471 = arith.constant 0 : i32
      %510 = arith.addi %509, %c0_i32_471 : i32
      %511 = arith.index_cast %510 : i32 to index
      %512 = memref.load %arg3[%511] : memref<750xf32, #tpu.memory_space<smem>>
      %c2_472 = arith.constant 2 : index
      %c0_473 = arith.constant 0 : index
      %c0_474 = arith.constant 0 : index
      %c0_475 = arith.constant 0 : index
      %513 = vector.load %arg6[%c2_472, %c0_473, %c0_474, %c0_475] : memref<6x6x16x112xf32, #tpu.memory_space<vmem>>, vector<1x1x16x112xf32>
      %514 = vector.shape_cast %513 : vector<1x1x16x112xf32> to vector<16x112xf32>
      %515 = vector.broadcast %512 : f32 to vector<16x112xf32>
      %516 = arith.mulf %515, %514 : vector<16x112xf32>
      %517 = arith.addf %492, %516 : vector<16x112xf32>
      %c2_476 = arith.constant 2 : index
      %c1_477 = arith.constant 1 : index
      %c0_478 = arith.constant 0 : index
      %c0_479 = arith.constant 0 : index
      %518 = vector.load %arg6[%c2_476, %c1_477, %c0_478, %c0_479] : memref<6x6x16x112xf32, #tpu.memory_space<vmem>>, vector<1x1x16x112xf32>
      %519 = vector.shape_cast %518 : vector<1x1x16x112xf32> to vector<16x112xf32>
      %520 = vector.broadcast %512 : f32 to vector<16x112xf32>
      %521 = arith.mulf %520, %519 : vector<16x112xf32>
      %522 = arith.addf %497, %521 : vector<16x112xf32>
      %c3_480 = arith.constant 3 : index
      %c0_481 = arith.constant 0 : index
      %c0_482 = arith.constant 0 : index
      %c0_483 = arith.constant 0 : index
      %523 = vector.load %arg6[%c3_480, %c0_481, %c0_482, %c0_483] : memref<6x6x16x112xf32, #tpu.memory_space<vmem>>, vector<1x1x16x112xf32>
      %524 = vector.shape_cast %523 : vector<1x1x16x112xf32> to vector<16x112xf32>
      %525 = vector.broadcast %512 : f32 to vector<16x112xf32>
      %526 = arith.mulf %525, %524 : vector<16x112xf32>
      %527 = arith.addf %502, %526 : vector<16x112xf32>
      %c3_484 = arith.constant 3 : index
      %c1_485 = arith.constant 1 : index
      %c0_486 = arith.constant 0 : index
      %c0_487 = arith.constant 0 : index
      %528 = vector.load %arg6[%c3_484, %c1_485, %c0_486, %c0_487] : memref<6x6x16x112xf32, #tpu.memory_space<vmem>>, vector<1x1x16x112xf32>
      %529 = vector.shape_cast %528 : vector<1x1x16x112xf32> to vector<16x112xf32>
      %530 = vector.broadcast %512 : f32 to vector<16x112xf32>
      %531 = arith.mulf %530, %529 : vector<16x112xf32>
      %532 = arith.addf %507, %531 : vector<16x112xf32>
      %c25_i32_488 = arith.constant 25 : i32
      %533 = arith.muli %256, %c25_i32_488 : i32
      %c10_i32_489 = arith.constant 10 : i32
      %534 = arith.addi %533, %c10_i32_489 : i32
      %c1_i32_490 = arith.constant 1 : i32
      %535 = arith.addi %534, %c1_i32_490 : i32
      %536 = arith.index_cast %535 : i32 to index
      %537 = memref.load %arg3[%536] : memref<750xf32, #tpu.memory_space<smem>>
      %c2_491 = arith.constant 2 : index
      %c1_492 = arith.constant 1 : index
      %c0_493 = arith.constant 0 : index
      %c0_494 = arith.constant 0 : index
      %538 = vector.load %arg6[%c2_491, %c1_492, %c0_493, %c0_494] : memref<6x6x16x112xf32, #tpu.memory_space<vmem>>, vector<1x1x16x112xf32>
      %539 = vector.shape_cast %538 : vector<1x1x16x112xf32> to vector<16x112xf32>
      %540 = vector.broadcast %537 : f32 to vector<16x112xf32>
      %541 = arith.mulf %540, %539 : vector<16x112xf32>
      %542 = arith.addf %517, %541 : vector<16x112xf32>
      %c2_495 = arith.constant 2 : index
      %c2_496 = arith.constant 2 : index
      %c0_497 = arith.constant 0 : index
      %c0_498 = arith.constant 0 : index
      %543 = vector.load %arg6[%c2_495, %c2_496, %c0_497, %c0_498] : memref<6x6x16x112xf32, #tpu.memory_space<vmem>>, vector<1x1x16x112xf32>
      %544 = vector.shape_cast %543 : vector<1x1x16x112xf32> to vector<16x112xf32>
      %545 = vector.broadcast %537 : f32 to vector<16x112xf32>
      %546 = arith.mulf %545, %544 : vector<16x112xf32>
      %547 = arith.addf %522, %546 : vector<16x112xf32>
      %c3_499 = arith.constant 3 : index
      %c1_500 = arith.constant 1 : index
      %c0_501 = arith.constant 0 : index
      %c0_502 = arith.constant 0 : index
      %548 = vector.load %arg6[%c3_499, %c1_500, %c0_501, %c0_502] : memref<6x6x16x112xf32, #tpu.memory_space<vmem>>, vector<1x1x16x112xf32>
      %549 = vector.shape_cast %548 : vector<1x1x16x112xf32> to vector<16x112xf32>
      %550 = vector.broadcast %537 : f32 to vector<16x112xf32>
      %551 = arith.mulf %550, %549 : vector<16x112xf32>
      %552 = arith.addf %527, %551 : vector<16x112xf32>
      %c3_503 = arith.constant 3 : index
      %c2_504 = arith.constant 2 : index
      %c0_505 = arith.constant 0 : index
      %c0_506 = arith.constant 0 : index
      %553 = vector.load %arg6[%c3_503, %c2_504, %c0_505, %c0_506] : memref<6x6x16x112xf32, #tpu.memory_space<vmem>>, vector<1x1x16x112xf32>
      %554 = vector.shape_cast %553 : vector<1x1x16x112xf32> to vector<16x112xf32>
      %555 = vector.broadcast %537 : f32 to vector<16x112xf32>
      %556 = arith.mulf %555, %554 : vector<16x112xf32>
      %557 = arith.addf %532, %556 : vector<16x112xf32>
      %c25_i32_507 = arith.constant 25 : i32
      %558 = arith.muli %256, %c25_i32_507 : i32
      %c10_i32_508 = arith.constant 10 : i32
      %559 = arith.addi %558, %c10_i32_508 : i32
      %c2_i32_509 = arith.constant 2 : i32
      %560 = arith.addi %559, %c2_i32_509 : i32
      %561 = arith.index_cast %560 : i32 to index
      %562 = memref.load %arg3[%561] : memref<750xf32, #tpu.memory_space<smem>>
      %c2_510 = arith.constant 2 : index
      %c2_511 = arith.constant 2 : index
      %c0_512 = arith.constant 0 : index
      %c0_513 = arith.constant 0 : index
      %563 = vector.load %arg6[%c2_510, %c2_511, %c0_512, %c0_513] : memref<6x6x16x112xf32, #tpu.memory_space<vmem>>, vector<1x1x16x112xf32>
      %564 = vector.shape_cast %563 : vector<1x1x16x112xf32> to vector<16x112xf32>
      %565 = vector.broadcast %562 : f32 to vector<16x112xf32>
      %566 = arith.mulf %565, %564 : vector<16x112xf32>
      %567 = arith.addf %542, %566 : vector<16x112xf32>
      %c2_514 = arith.constant 2 : index
      %c3_515 = arith.constant 3 : index
      %c0_516 = arith.constant 0 : index
      %c0_517 = arith.constant 0 : index
      %568 = vector.load %arg6[%c2_514, %c3_515, %c0_516, %c0_517] : memref<6x6x16x112xf32, #tpu.memory_space<vmem>>, vector<1x1x16x112xf32>
      %569 = vector.shape_cast %568 : vector<1x1x16x112xf32> to vector<16x112xf32>
      %570 = vector.broadcast %562 : f32 to vector<16x112xf32>
      %571 = arith.mulf %570, %569 : vector<16x112xf32>
      %572 = arith.addf %547, %571 : vector<16x112xf32>
      %c3_518 = arith.constant 3 : index
      %c2_519 = arith.constant 2 : index
      %c0_520 = arith.constant 0 : index
      %c0_521 = arith.constant 0 : index
      %573 = vector.load %arg6[%c3_518, %c2_519, %c0_520, %c0_521] : memref<6x6x16x112xf32, #tpu.memory_space<vmem>>, vector<1x1x16x112xf32>
      %574 = vector.shape_cast %573 : vector<1x1x16x112xf32> to vector<16x112xf32>
      %575 = vector.broadcast %562 : f32 to vector<16x112xf32>
      %576 = arith.mulf %575, %574 : vector<16x112xf32>
      %577 = arith.addf %552, %576 : vector<16x112xf32>
      %c3_522 = arith.constant 3 : index
      %c3_523 = arith.constant 3 : index
      %c0_524 = arith.constant 0 : index
      %c0_525 = arith.constant 0 : index
      %578 = vector.load %arg6[%c3_522, %c3_523, %c0_524, %c0_525] : memref<6x6x16x112xf32, #tpu.memory_space<vmem>>, vector<1x1x16x112xf32>
      %579 = vector.shape_cast %578 : vector<1x1x16x112xf32> to vector<16x112xf32>
      %580 = vector.broadcast %562 : f32 to vector<16x112xf32>
      %581 = arith.mulf %580, %579 : vector<16x112xf32>
      %582 = arith.addf %557, %581 : vector<16x112xf32>
      %c25_i32_526 = arith.constant 25 : i32
      %583 = arith.muli %256, %c25_i32_526 : i32
      %c10_i32_527 = arith.constant 10 : i32
      %584 = arith.addi %583, %c10_i32_527 : i32
      %c3_i32_528 = arith.constant 3 : i32
      %585 = arith.addi %584, %c3_i32_528 : i32
      %586 = arith.index_cast %585 : i32 to index
      %587 = memref.load %arg3[%586] : memref<750xf32, #tpu.memory_space<smem>>
      %c2_529 = arith.constant 2 : index
      %c3_530 = arith.constant 3 : index
      %c0_531 = arith.constant 0 : index
      %c0_532 = arith.constant 0 : index
      %588 = vector.load %arg6[%c2_529, %c3_530, %c0_531, %c0_532] : memref<6x6x16x112xf32, #tpu.memory_space<vmem>>, vector<1x1x16x112xf32>
      %589 = vector.shape_cast %588 : vector<1x1x16x112xf32> to vector<16x112xf32>
      %590 = vector.broadcast %587 : f32 to vector<16x112xf32>
      %591 = arith.mulf %590, %589 : vector<16x112xf32>
      %592 = arith.addf %567, %591 : vector<16x112xf32>
      %c2_533 = arith.constant 2 : index
      %c4_534 = arith.constant 4 : index
      %c0_535 = arith.constant 0 : index
      %c0_536 = arith.constant 0 : index
      %593 = vector.load %arg6[%c2_533, %c4_534, %c0_535, %c0_536] : memref<6x6x16x112xf32, #tpu.memory_space<vmem>>, vector<1x1x16x112xf32>
      %594 = vector.shape_cast %593 : vector<1x1x16x112xf32> to vector<16x112xf32>
      %595 = vector.broadcast %587 : f32 to vector<16x112xf32>
      %596 = arith.mulf %595, %594 : vector<16x112xf32>
      %597 = arith.addf %572, %596 : vector<16x112xf32>
      %c3_537 = arith.constant 3 : index
      %c3_538 = arith.constant 3 : index
      %c0_539 = arith.constant 0 : index
      %c0_540 = arith.constant 0 : index
      %598 = vector.load %arg6[%c3_537, %c3_538, %c0_539, %c0_540] : memref<6x6x16x112xf32, #tpu.memory_space<vmem>>, vector<1x1x16x112xf32>
      %599 = vector.shape_cast %598 : vector<1x1x16x112xf32> to vector<16x112xf32>
      %600 = vector.broadcast %587 : f32 to vector<16x112xf32>
      %601 = arith.mulf %600, %599 : vector<16x112xf32>
      %602 = arith.addf %577, %601 : vector<16x112xf32>
      %c3_541 = arith.constant 3 : index
      %c4_542 = arith.constant 4 : index
      %c0_543 = arith.constant 0 : index
      %c0_544 = arith.constant 0 : index
      %603 = vector.load %arg6[%c3_541, %c4_542, %c0_543, %c0_544] : memref<6x6x16x112xf32, #tpu.memory_space<vmem>>, vector<1x1x16x112xf32>
      %604 = vector.shape_cast %603 : vector<1x1x16x112xf32> to vector<16x112xf32>
      %605 = vector.broadcast %587 : f32 to vector<16x112xf32>
      %606 = arith.mulf %605, %604 : vector<16x112xf32>
      %607 = arith.addf %582, %606 : vector<16x112xf32>
      %c25_i32_545 = arith.constant 25 : i32
      %608 = arith.muli %256, %c25_i32_545 : i32
      %c10_i32_546 = arith.constant 10 : i32
      %609 = arith.addi %608, %c10_i32_546 : i32
      %c4_i32_547 = arith.constant 4 : i32
      %610 = arith.addi %609, %c4_i32_547 : i32
      %611 = arith.index_cast %610 : i32 to index
      %612 = memref.load %arg3[%611] : memref<750xf32, #tpu.memory_space<smem>>
      %c2_548 = arith.constant 2 : index
      %c4_549 = arith.constant 4 : index
      %c0_550 = arith.constant 0 : index
      %c0_551 = arith.constant 0 : index
      %613 = vector.load %arg6[%c2_548, %c4_549, %c0_550, %c0_551] : memref<6x6x16x112xf32, #tpu.memory_space<vmem>>, vector<1x1x16x112xf32>
      %614 = vector.shape_cast %613 : vector<1x1x16x112xf32> to vector<16x112xf32>
      %615 = vector.broadcast %612 : f32 to vector<16x112xf32>
      %616 = arith.mulf %615, %614 : vector<16x112xf32>
      %617 = arith.addf %592, %616 : vector<16x112xf32>
      %c2_552 = arith.constant 2 : index
      %c5_553 = arith.constant 5 : index
      %c0_554 = arith.constant 0 : index
      %c0_555 = arith.constant 0 : index
      %618 = vector.load %arg6[%c2_552, %c5_553, %c0_554, %c0_555] : memref<6x6x16x112xf32, #tpu.memory_space<vmem>>, vector<1x1x16x112xf32>
      %619 = vector.shape_cast %618 : vector<1x1x16x112xf32> to vector<16x112xf32>
      %620 = vector.broadcast %612 : f32 to vector<16x112xf32>
      %621 = arith.mulf %620, %619 : vector<16x112xf32>
      %622 = arith.addf %597, %621 : vector<16x112xf32>
      %c3_556 = arith.constant 3 : index
      %c4_557 = arith.constant 4 : index
      %c0_558 = arith.constant 0 : index
      %c0_559 = arith.constant 0 : index
      %623 = vector.load %arg6[%c3_556, %c4_557, %c0_558, %c0_559] : memref<6x6x16x112xf32, #tpu.memory_space<vmem>>, vector<1x1x16x112xf32>
      %624 = vector.shape_cast %623 : vector<1x1x16x112xf32> to vector<16x112xf32>
      %625 = vector.broadcast %612 : f32 to vector<16x112xf32>
      %626 = arith.mulf %625, %624 : vector<16x112xf32>
      %627 = arith.addf %602, %626 : vector<16x112xf32>
      %c3_560 = arith.constant 3 : index
      %c5_561 = arith.constant 5 : index
      %c0_562 = arith.constant 0 : index
      %c0_563 = arith.constant 0 : index
      %628 = vector.load %arg6[%c3_560, %c5_561, %c0_562, %c0_563] : memref<6x6x16x112xf32, #tpu.memory_space<vmem>>, vector<1x1x16x112xf32>
      %629 = vector.shape_cast %628 : vector<1x1x16x112xf32> to vector<16x112xf32>
      %630 = vector.broadcast %612 : f32 to vector<16x112xf32>
      %631 = arith.mulf %630, %629 : vector<16x112xf32>
      %632 = arith.addf %607, %631 : vector<16x112xf32>
      %c25_i32_564 = arith.constant 25 : i32
      %633 = arith.muli %256, %c25_i32_564 : i32
      %c15_i32 = arith.constant 15 : i32
      %634 = arith.addi %633, %c15_i32 : i32
      %c0_i32_565 = arith.constant 0 : i32
      %635 = arith.addi %634, %c0_i32_565 : i32
      %636 = arith.index_cast %635 : i32 to index
      %637 = memref.load %arg3[%636] : memref<750xf32, #tpu.memory_space<smem>>
      %c3_566 = arith.constant 3 : index
      %c0_567 = arith.constant 0 : index
      %c0_568 = arith.constant 0 : index
      %c0_569 = arith.constant 0 : index
      %638 = vector.load %arg6[%c3_566, %c0_567, %c0_568, %c0_569] : memref<6x6x16x112xf32, #tpu.memory_space<vmem>>, vector<1x1x16x112xf32>
      %639 = vector.shape_cast %638 : vector<1x1x16x112xf32> to vector<16x112xf32>
      %640 = vector.broadcast %637 : f32 to vector<16x112xf32>
      %641 = arith.mulf %640, %639 : vector<16x112xf32>
      %642 = arith.addf %617, %641 : vector<16x112xf32>
      %c3_570 = arith.constant 3 : index
      %c1_571 = arith.constant 1 : index
      %c0_572 = arith.constant 0 : index
      %c0_573 = arith.constant 0 : index
      %643 = vector.load %arg6[%c3_570, %c1_571, %c0_572, %c0_573] : memref<6x6x16x112xf32, #tpu.memory_space<vmem>>, vector<1x1x16x112xf32>
      %644 = vector.shape_cast %643 : vector<1x1x16x112xf32> to vector<16x112xf32>
      %645 = vector.broadcast %637 : f32 to vector<16x112xf32>
      %646 = arith.mulf %645, %644 : vector<16x112xf32>
      %647 = arith.addf %622, %646 : vector<16x112xf32>
      %c4_574 = arith.constant 4 : index
      %c0_575 = arith.constant 0 : index
      %c0_576 = arith.constant 0 : index
      %c0_577 = arith.constant 0 : index
      %648 = vector.load %arg6[%c4_574, %c0_575, %c0_576, %c0_577] : memref<6x6x16x112xf32, #tpu.memory_space<vmem>>, vector<1x1x16x112xf32>
      %649 = vector.shape_cast %648 : vector<1x1x16x112xf32> to vector<16x112xf32>
      %650 = vector.broadcast %637 : f32 to vector<16x112xf32>
      %651 = arith.mulf %650, %649 : vector<16x112xf32>
      %652 = arith.addf %627, %651 : vector<16x112xf32>
      %c4_578 = arith.constant 4 : index
      %c1_579 = arith.constant 1 : index
      %c0_580 = arith.constant 0 : index
      %c0_581 = arith.constant 0 : index
      %653 = vector.load %arg6[%c4_578, %c1_579, %c0_580, %c0_581] : memref<6x6x16x112xf32, #tpu.memory_space<vmem>>, vector<1x1x16x112xf32>
      %654 = vector.shape_cast %653 : vector<1x1x16x112xf32> to vector<16x112xf32>
      %655 = vector.broadcast %637 : f32 to vector<16x112xf32>
      %656 = arith.mulf %655, %654 : vector<16x112xf32>
      %657 = arith.addf %632, %656 : vector<16x112xf32>
      %c25_i32_582 = arith.constant 25 : i32
      %658 = arith.muli %256, %c25_i32_582 : i32
      %c15_i32_583 = arith.constant 15 : i32
      %659 = arith.addi %658, %c15_i32_583 : i32
      %c1_i32_584 = arith.constant 1 : i32
      %660 = arith.addi %659, %c1_i32_584 : i32
      %661 = arith.index_cast %660 : i32 to index
      %662 = memref.load %arg3[%661] : memref<750xf32, #tpu.memory_space<smem>>
      %c3_585 = arith.constant 3 : index
      %c1_586 = arith.constant 1 : index
      %c0_587 = arith.constant 0 : index
      %c0_588 = arith.constant 0 : index
      %663 = vector.load %arg6[%c3_585, %c1_586, %c0_587, %c0_588] : memref<6x6x16x112xf32, #tpu.memory_space<vmem>>, vector<1x1x16x112xf32>
      %664 = vector.shape_cast %663 : vector<1x1x16x112xf32> to vector<16x112xf32>
      %665 = vector.broadcast %662 : f32 to vector<16x112xf32>
      %666 = arith.mulf %665, %664 : vector<16x112xf32>
      %667 = arith.addf %642, %666 : vector<16x112xf32>
      %c3_589 = arith.constant 3 : index
      %c2_590 = arith.constant 2 : index
      %c0_591 = arith.constant 0 : index
      %c0_592 = arith.constant 0 : index
      %668 = vector.load %arg6[%c3_589, %c2_590, %c0_591, %c0_592] : memref<6x6x16x112xf32, #tpu.memory_space<vmem>>, vector<1x1x16x112xf32>
      %669 = vector.shape_cast %668 : vector<1x1x16x112xf32> to vector<16x112xf32>
      %670 = vector.broadcast %662 : f32 to vector<16x112xf32>
      %671 = arith.mulf %670, %669 : vector<16x112xf32>
      %672 = arith.addf %647, %671 : vector<16x112xf32>
      %c4_593 = arith.constant 4 : index
      %c1_594 = arith.constant 1 : index
      %c0_595 = arith.constant 0 : index
      %c0_596 = arith.constant 0 : index
      %673 = vector.load %arg6[%c4_593, %c1_594, %c0_595, %c0_596] : memref<6x6x16x112xf32, #tpu.memory_space<vmem>>, vector<1x1x16x112xf32>
      %674 = vector.shape_cast %673 : vector<1x1x16x112xf32> to vector<16x112xf32>
      %675 = vector.broadcast %662 : f32 to vector<16x112xf32>
      %676 = arith.mulf %675, %674 : vector<16x112xf32>
      %677 = arith.addf %652, %676 : vector<16x112xf32>
      %c4_597 = arith.constant 4 : index
      %c2_598 = arith.constant 2 : index
      %c0_599 = arith.constant 0 : index
      %c0_600 = arith.constant 0 : index
      %678 = vector.load %arg6[%c4_597, %c2_598, %c0_599, %c0_600] : memref<6x6x16x112xf32, #tpu.memory_space<vmem>>, vector<1x1x16x112xf32>
      %679 = vector.shape_cast %678 : vector<1x1x16x112xf32> to vector<16x112xf32>
      %680 = vector.broadcast %662 : f32 to vector<16x112xf32>
      %681 = arith.mulf %680, %679 : vector<16x112xf32>
      %682 = arith.addf %657, %681 : vector<16x112xf32>
      %c25_i32_601 = arith.constant 25 : i32
      %683 = arith.muli %256, %c25_i32_601 : i32
      %c15_i32_602 = arith.constant 15 : i32
      %684 = arith.addi %683, %c15_i32_602 : i32
      %c2_i32_603 = arith.constant 2 : i32
      %685 = arith.addi %684, %c2_i32_603 : i32
      %686 = arith.index_cast %685 : i32 to index
      %687 = memref.load %arg3[%686] : memref<750xf32, #tpu.memory_space<smem>>
      %c3_604 = arith.constant 3 : index
      %c2_605 = arith.constant 2 : index
      %c0_606 = arith.constant 0 : index
      %c0_607 = arith.constant 0 : index
      %688 = vector.load %arg6[%c3_604, %c2_605, %c0_606, %c0_607] : memref<6x6x16x112xf32, #tpu.memory_space<vmem>>, vector<1x1x16x112xf32>
      %689 = vector.shape_cast %688 : vector<1x1x16x112xf32> to vector<16x112xf32>
      %690 = vector.broadcast %687 : f32 to vector<16x112xf32>
      %691 = arith.mulf %690, %689 : vector<16x112xf32>
      %692 = arith.addf %667, %691 : vector<16x112xf32>
      %c3_608 = arith.constant 3 : index
      %c3_609 = arith.constant 3 : index
      %c0_610 = arith.constant 0 : index
      %c0_611 = arith.constant 0 : index
      %693 = vector.load %arg6[%c3_608, %c3_609, %c0_610, %c0_611] : memref<6x6x16x112xf32, #tpu.memory_space<vmem>>, vector<1x1x16x112xf32>
      %694 = vector.shape_cast %693 : vector<1x1x16x112xf32> to vector<16x112xf32>
      %695 = vector.broadcast %687 : f32 to vector<16x112xf32>
      %696 = arith.mulf %695, %694 : vector<16x112xf32>
      %697 = arith.addf %672, %696 : vector<16x112xf32>
      %c4_612 = arith.constant 4 : index
      %c2_613 = arith.constant 2 : index
      %c0_614 = arith.constant 0 : index
      %c0_615 = arith.constant 0 : index
      %698 = vector.load %arg6[%c4_612, %c2_613, %c0_614, %c0_615] : memref<6x6x16x112xf32, #tpu.memory_space<vmem>>, vector<1x1x16x112xf32>
      %699 = vector.shape_cast %698 : vector<1x1x16x112xf32> to vector<16x112xf32>
      %700 = vector.broadcast %687 : f32 to vector<16x112xf32>
      %701 = arith.mulf %700, %699 : vector<16x112xf32>
      %702 = arith.addf %677, %701 : vector<16x112xf32>
      %c4_616 = arith.constant 4 : index
      %c3_617 = arith.constant 3 : index
      %c0_618 = arith.constant 0 : index
      %c0_619 = arith.constant 0 : index
      %703 = vector.load %arg6[%c4_616, %c3_617, %c0_618, %c0_619] : memref<6x6x16x112xf32, #tpu.memory_space<vmem>>, vector<1x1x16x112xf32>
      %704 = vector.shape_cast %703 : vector<1x1x16x112xf32> to vector<16x112xf32>
      %705 = vector.broadcast %687 : f32 to vector<16x112xf32>
      %706 = arith.mulf %705, %704 : vector<16x112xf32>
      %707 = arith.addf %682, %706 : vector<16x112xf32>
      %c25_i32_620 = arith.constant 25 : i32
      %708 = arith.muli %256, %c25_i32_620 : i32
      %c15_i32_621 = arith.constant 15 : i32
      %709 = arith.addi %708, %c15_i32_621 : i32
      %c3_i32_622 = arith.constant 3 : i32
      %710 = arith.addi %709, %c3_i32_622 : i32
      %711 = arith.index_cast %710 : i32 to index
      %712 = memref.load %arg3[%711] : memref<750xf32, #tpu.memory_space<smem>>
      %c3_623 = arith.constant 3 : index
      %c3_624 = arith.constant 3 : index
      %c0_625 = arith.constant 0 : index
      %c0_626 = arith.constant 0 : index
      %713 = vector.load %arg6[%c3_623, %c3_624, %c0_625, %c0_626] : memref<6x6x16x112xf32, #tpu.memory_space<vmem>>, vector<1x1x16x112xf32>
      %714 = vector.shape_cast %713 : vector<1x1x16x112xf32> to vector<16x112xf32>
      %715 = vector.broadcast %712 : f32 to vector<16x112xf32>
      %716 = arith.mulf %715, %714 : vector<16x112xf32>
      %717 = arith.addf %692, %716 : vector<16x112xf32>
      %c3_627 = arith.constant 3 : index
      %c4_628 = arith.constant 4 : index
      %c0_629 = arith.constant 0 : index
      %c0_630 = arith.constant 0 : index
      %718 = vector.load %arg6[%c3_627, %c4_628, %c0_629, %c0_630] : memref<6x6x16x112xf32, #tpu.memory_space<vmem>>, vector<1x1x16x112xf32>
      %719 = vector.shape_cast %718 : vector<1x1x16x112xf32> to vector<16x112xf32>
      %720 = vector.broadcast %712 : f32 to vector<16x112xf32>
      %721 = arith.mulf %720, %719 : vector<16x112xf32>
      %722 = arith.addf %697, %721 : vector<16x112xf32>
      %c4_631 = arith.constant 4 : index
      %c3_632 = arith.constant 3 : index
      %c0_633 = arith.constant 0 : index
      %c0_634 = arith.constant 0 : index
      %723 = vector.load %arg6[%c4_631, %c3_632, %c0_633, %c0_634] : memref<6x6x16x112xf32, #tpu.memory_space<vmem>>, vector<1x1x16x112xf32>
      %724 = vector.shape_cast %723 : vector<1x1x16x112xf32> to vector<16x112xf32>
      %725 = vector.broadcast %712 : f32 to vector<16x112xf32>
      %726 = arith.mulf %725, %724 : vector<16x112xf32>
      %727 = arith.addf %702, %726 : vector<16x112xf32>
      %c4_635 = arith.constant 4 : index
      %c4_636 = arith.constant 4 : index
      %c0_637 = arith.constant 0 : index
      %c0_638 = arith.constant 0 : index
      %728 = vector.load %arg6[%c4_635, %c4_636, %c0_637, %c0_638] : memref<6x6x16x112xf32, #tpu.memory_space<vmem>>, vector<1x1x16x112xf32>
      %729 = vector.shape_cast %728 : vector<1x1x16x112xf32> to vector<16x112xf32>
      %730 = vector.broadcast %712 : f32 to vector<16x112xf32>
      %731 = arith.mulf %730, %729 : vector<16x112xf32>
      %732 = arith.addf %707, %731 : vector<16x112xf32>
      %c25_i32_639 = arith.constant 25 : i32
      %733 = arith.muli %256, %c25_i32_639 : i32
      %c15_i32_640 = arith.constant 15 : i32
      %734 = arith.addi %733, %c15_i32_640 : i32
      %c4_i32_641 = arith.constant 4 : i32
      %735 = arith.addi %734, %c4_i32_641 : i32
      %736 = arith.index_cast %735 : i32 to index
      %737 = memref.load %arg3[%736] : memref<750xf32, #tpu.memory_space<smem>>
      %c3_642 = arith.constant 3 : index
      %c4_643 = arith.constant 4 : index
      %c0_644 = arith.constant 0 : index
      %c0_645 = arith.constant 0 : index
      %738 = vector.load %arg6[%c3_642, %c4_643, %c0_644, %c0_645] : memref<6x6x16x112xf32, #tpu.memory_space<vmem>>, vector<1x1x16x112xf32>
      %739 = vector.shape_cast %738 : vector<1x1x16x112xf32> to vector<16x112xf32>
      %740 = vector.broadcast %737 : f32 to vector<16x112xf32>
      %741 = arith.mulf %740, %739 : vector<16x112xf32>
      %742 = arith.addf %717, %741 : vector<16x112xf32>
      %c3_646 = arith.constant 3 : index
      %c5_647 = arith.constant 5 : index
      %c0_648 = arith.constant 0 : index
      %c0_649 = arith.constant 0 : index
      %743 = vector.load %arg6[%c3_646, %c5_647, %c0_648, %c0_649] : memref<6x6x16x112xf32, #tpu.memory_space<vmem>>, vector<1x1x16x112xf32>
      %744 = vector.shape_cast %743 : vector<1x1x16x112xf32> to vector<16x112xf32>
      %745 = vector.broadcast %737 : f32 to vector<16x112xf32>
      %746 = arith.mulf %745, %744 : vector<16x112xf32>
      %747 = arith.addf %722, %746 : vector<16x112xf32>
      %c4_650 = arith.constant 4 : index
      %c4_651 = arith.constant 4 : index
      %c0_652 = arith.constant 0 : index
      %c0_653 = arith.constant 0 : index
      %748 = vector.load %arg6[%c4_650, %c4_651, %c0_652, %c0_653] : memref<6x6x16x112xf32, #tpu.memory_space<vmem>>, vector<1x1x16x112xf32>
      %749 = vector.shape_cast %748 : vector<1x1x16x112xf32> to vector<16x112xf32>
      %750 = vector.broadcast %737 : f32 to vector<16x112xf32>
      %751 = arith.mulf %750, %749 : vector<16x112xf32>
      %752 = arith.addf %727, %751 : vector<16x112xf32>
      %c4_654 = arith.constant 4 : index
      %c5_655 = arith.constant 5 : index
      %c0_656 = arith.constant 0 : index
      %c0_657 = arith.constant 0 : index
      %753 = vector.load %arg6[%c4_654, %c5_655, %c0_656, %c0_657] : memref<6x6x16x112xf32, #tpu.memory_space<vmem>>, vector<1x1x16x112xf32>
      %754 = vector.shape_cast %753 : vector<1x1x16x112xf32> to vector<16x112xf32>
      %755 = vector.broadcast %737 : f32 to vector<16x112xf32>
      %756 = arith.mulf %755, %754 : vector<16x112xf32>
      %757 = arith.addf %732, %756 : vector<16x112xf32>
      %c25_i32_658 = arith.constant 25 : i32
      %758 = arith.muli %256, %c25_i32_658 : i32
      %c20_i32 = arith.constant 20 : i32
      %759 = arith.addi %758, %c20_i32 : i32
      %c0_i32_659 = arith.constant 0 : i32
      %760 = arith.addi %759, %c0_i32_659 : i32
      %761 = arith.index_cast %760 : i32 to index
      %762 = memref.load %arg3[%761] : memref<750xf32, #tpu.memory_space<smem>>
      %c4_660 = arith.constant 4 : index
      %c0_661 = arith.constant 0 : index
      %c0_662 = arith.constant 0 : index
      %c0_663 = arith.constant 0 : index
      %763 = vector.load %arg6[%c4_660, %c0_661, %c0_662, %c0_663] : memref<6x6x16x112xf32, #tpu.memory_space<vmem>>, vector<1x1x16x112xf32>
      %764 = vector.shape_cast %763 : vector<1x1x16x112xf32> to vector<16x112xf32>
      %765 = vector.broadcast %762 : f32 to vector<16x112xf32>
      %766 = arith.mulf %765, %764 : vector<16x112xf32>
      %767 = arith.addf %742, %766 : vector<16x112xf32>
      %c4_664 = arith.constant 4 : index
      %c1_665 = arith.constant 1 : index
      %c0_666 = arith.constant 0 : index
      %c0_667 = arith.constant 0 : index
      %768 = vector.load %arg6[%c4_664, %c1_665, %c0_666, %c0_667] : memref<6x6x16x112xf32, #tpu.memory_space<vmem>>, vector<1x1x16x112xf32>
      %769 = vector.shape_cast %768 : vector<1x1x16x112xf32> to vector<16x112xf32>
      %770 = vector.broadcast %762 : f32 to vector<16x112xf32>
      %771 = arith.mulf %770, %769 : vector<16x112xf32>
      %772 = arith.addf %747, %771 : vector<16x112xf32>
      %c5_668 = arith.constant 5 : index
      %c0_669 = arith.constant 0 : index
      %c0_670 = arith.constant 0 : index
      %c0_671 = arith.constant 0 : index
      %773 = vector.load %arg6[%c5_668, %c0_669, %c0_670, %c0_671] : memref<6x6x16x112xf32, #tpu.memory_space<vmem>>, vector<1x1x16x112xf32>
      %774 = vector.shape_cast %773 : vector<1x1x16x112xf32> to vector<16x112xf32>
      %775 = vector.broadcast %762 : f32 to vector<16x112xf32>
      %776 = arith.mulf %775, %774 : vector<16x112xf32>
      %777 = arith.addf %752, %776 : vector<16x112xf32>
      %c5_672 = arith.constant 5 : index
      %c1_673 = arith.constant 1 : index
      %c0_674 = arith.constant 0 : index
      %c0_675 = arith.constant 0 : index
      %778 = vector.load %arg6[%c5_672, %c1_673, %c0_674, %c0_675] : memref<6x6x16x112xf32, #tpu.memory_space<vmem>>, vector<1x1x16x112xf32>
      %779 = vector.shape_cast %778 : vector<1x1x16x112xf32> to vector<16x112xf32>
      %780 = vector.broadcast %762 : f32 to vector<16x112xf32>
      %781 = arith.mulf %780, %779 : vector<16x112xf32>
      %782 = arith.addf %757, %781 : vector<16x112xf32>
      %c25_i32_676 = arith.constant 25 : i32
      %783 = arith.muli %256, %c25_i32_676 : i32
      %c20_i32_677 = arith.constant 20 : i32
      %784 = arith.addi %783, %c20_i32_677 : i32
      %c1_i32_678 = arith.constant 1 : i32
      %785 = arith.addi %784, %c1_i32_678 : i32
      %786 = arith.index_cast %785 : i32 to index
      %787 = memref.load %arg3[%786] : memref<750xf32, #tpu.memory_space<smem>>
      %c4_679 = arith.constant 4 : index
      %c1_680 = arith.constant 1 : index
      %c0_681 = arith.constant 0 : index
      %c0_682 = arith.constant 0 : index
      %788 = vector.load %arg6[%c4_679, %c1_680, %c0_681, %c0_682] : memref<6x6x16x112xf32, #tpu.memory_space<vmem>>, vector<1x1x16x112xf32>
      %789 = vector.shape_cast %788 : vector<1x1x16x112xf32> to vector<16x112xf32>
      %790 = vector.broadcast %787 : f32 to vector<16x112xf32>
      %791 = arith.mulf %790, %789 : vector<16x112xf32>
      %792 = arith.addf %767, %791 : vector<16x112xf32>
      %c4_683 = arith.constant 4 : index
      %c2_684 = arith.constant 2 : index
      %c0_685 = arith.constant 0 : index
      %c0_686 = arith.constant 0 : index
      %793 = vector.load %arg6[%c4_683, %c2_684, %c0_685, %c0_686] : memref<6x6x16x112xf32, #tpu.memory_space<vmem>>, vector<1x1x16x112xf32>
      %794 = vector.shape_cast %793 : vector<1x1x16x112xf32> to vector<16x112xf32>
      %795 = vector.broadcast %787 : f32 to vector<16x112xf32>
      %796 = arith.mulf %795, %794 : vector<16x112xf32>
      %797 = arith.addf %772, %796 : vector<16x112xf32>
      %c5_687 = arith.constant 5 : index
      %c1_688 = arith.constant 1 : index
      %c0_689 = arith.constant 0 : index
      %c0_690 = arith.constant 0 : index
      %798 = vector.load %arg6[%c5_687, %c1_688, %c0_689, %c0_690] : memref<6x6x16x112xf32, #tpu.memory_space<vmem>>, vector<1x1x16x112xf32>
      %799 = vector.shape_cast %798 : vector<1x1x16x112xf32> to vector<16x112xf32>
      %800 = vector.broadcast %787 : f32 to vector<16x112xf32>
      %801 = arith.mulf %800, %799 : vector<16x112xf32>
      %802 = arith.addf %777, %801 : vector<16x112xf32>
      %c5_691 = arith.constant 5 : index
      %c2_692 = arith.constant 2 : index
      %c0_693 = arith.constant 0 : index
      %c0_694 = arith.constant 0 : index
      %803 = vector.load %arg6[%c5_691, %c2_692, %c0_693, %c0_694] : memref<6x6x16x112xf32, #tpu.memory_space<vmem>>, vector<1x1x16x112xf32>
      %804 = vector.shape_cast %803 : vector<1x1x16x112xf32> to vector<16x112xf32>
      %805 = vector.broadcast %787 : f32 to vector<16x112xf32>
      %806 = arith.mulf %805, %804 : vector<16x112xf32>
      %807 = arith.addf %782, %806 : vector<16x112xf32>
      %c25_i32_695 = arith.constant 25 : i32
      %808 = arith.muli %256, %c25_i32_695 : i32
      %c20_i32_696 = arith.constant 20 : i32
      %809 = arith.addi %808, %c20_i32_696 : i32
      %c2_i32_697 = arith.constant 2 : i32
      %810 = arith.addi %809, %c2_i32_697 : i32
      %811 = arith.index_cast %810 : i32 to index
      %812 = memref.load %arg3[%811] : memref<750xf32, #tpu.memory_space<smem>>
      %c4_698 = arith.constant 4 : index
      %c2_699 = arith.constant 2 : index
      %c0_700 = arith.constant 0 : index
      %c0_701 = arith.constant 0 : index
      %813 = vector.load %arg6[%c4_698, %c2_699, %c0_700, %c0_701] : memref<6x6x16x112xf32, #tpu.memory_space<vmem>>, vector<1x1x16x112xf32>
      %814 = vector.shape_cast %813 : vector<1x1x16x112xf32> to vector<16x112xf32>
      %815 = vector.broadcast %812 : f32 to vector<16x112xf32>
      %816 = arith.mulf %815, %814 : vector<16x112xf32>
      %817 = arith.addf %792, %816 : vector<16x112xf32>
      %c4_702 = arith.constant 4 : index
      %c3_703 = arith.constant 3 : index
      %c0_704 = arith.constant 0 : index
      %c0_705 = arith.constant 0 : index
      %818 = vector.load %arg6[%c4_702, %c3_703, %c0_704, %c0_705] : memref<6x6x16x112xf32, #tpu.memory_space<vmem>>, vector<1x1x16x112xf32>
      %819 = vector.shape_cast %818 : vector<1x1x16x112xf32> to vector<16x112xf32>
      %820 = vector.broadcast %812 : f32 to vector<16x112xf32>
      %821 = arith.mulf %820, %819 : vector<16x112xf32>
      %822 = arith.addf %797, %821 : vector<16x112xf32>
      %c5_706 = arith.constant 5 : index
      %c2_707 = arith.constant 2 : index
      %c0_708 = arith.constant 0 : index
      %c0_709 = arith.constant 0 : index
      %823 = vector.load %arg6[%c5_706, %c2_707, %c0_708, %c0_709] : memref<6x6x16x112xf32, #tpu.memory_space<vmem>>, vector<1x1x16x112xf32>
      %824 = vector.shape_cast %823 : vector<1x1x16x112xf32> to vector<16x112xf32>
      %825 = vector.broadcast %812 : f32 to vector<16x112xf32>
      %826 = arith.mulf %825, %824 : vector<16x112xf32>
      %827 = arith.addf %802, %826 : vector<16x112xf32>
      %c5_710 = arith.constant 5 : index
      %c3_711 = arith.constant 3 : index
      %c0_712 = arith.constant 0 : index
      %c0_713 = arith.constant 0 : index
      %828 = vector.load %arg6[%c5_710, %c3_711, %c0_712, %c0_713] : memref<6x6x16x112xf32, #tpu.memory_space<vmem>>, vector<1x1x16x112xf32>
      %829 = vector.shape_cast %828 : vector<1x1x16x112xf32> to vector<16x112xf32>
      %830 = vector.broadcast %812 : f32 to vector<16x112xf32>
      %831 = arith.mulf %830, %829 : vector<16x112xf32>
      %832 = arith.addf %807, %831 : vector<16x112xf32>
      %c25_i32_714 = arith.constant 25 : i32
      %833 = arith.muli %256, %c25_i32_714 : i32
      %c20_i32_715 = arith.constant 20 : i32
      %834 = arith.addi %833, %c20_i32_715 : i32
      %c3_i32_716 = arith.constant 3 : i32
      %835 = arith.addi %834, %c3_i32_716 : i32
      %836 = arith.index_cast %835 : i32 to index
      %837 = memref.load %arg3[%836] : memref<750xf32, #tpu.memory_space<smem>>
      %c4_717 = arith.constant 4 : index
      %c3_718 = arith.constant 3 : index
      %c0_719 = arith.constant 0 : index
      %c0_720 = arith.constant 0 : index
      %838 = vector.load %arg6[%c4_717, %c3_718, %c0_719, %c0_720] : memref<6x6x16x112xf32, #tpu.memory_space<vmem>>, vector<1x1x16x112xf32>
      %839 = vector.shape_cast %838 : vector<1x1x16x112xf32> to vector<16x112xf32>
      %840 = vector.broadcast %837 : f32 to vector<16x112xf32>
      %841 = arith.mulf %840, %839 : vector<16x112xf32>
      %842 = arith.addf %817, %841 : vector<16x112xf32>
      %c4_721 = arith.constant 4 : index
      %c4_722 = arith.constant 4 : index
      %c0_723 = arith.constant 0 : index
      %c0_724 = arith.constant 0 : index
      %843 = vector.load %arg6[%c4_721, %c4_722, %c0_723, %c0_724] : memref<6x6x16x112xf32, #tpu.memory_space<vmem>>, vector<1x1x16x112xf32>
      %844 = vector.shape_cast %843 : vector<1x1x16x112xf32> to vector<16x112xf32>
      %845 = vector.broadcast %837 : f32 to vector<16x112xf32>
      %846 = arith.mulf %845, %844 : vector<16x112xf32>
      %847 = arith.addf %822, %846 : vector<16x112xf32>
      %c5_725 = arith.constant 5 : index
      %c3_726 = arith.constant 3 : index
      %c0_727 = arith.constant 0 : index
      %c0_728 = arith.constant 0 : index
      %848 = vector.load %arg6[%c5_725, %c3_726, %c0_727, %c0_728] : memref<6x6x16x112xf32, #tpu.memory_space<vmem>>, vector<1x1x16x112xf32>
      %849 = vector.shape_cast %848 : vector<1x1x16x112xf32> to vector<16x112xf32>
      %850 = vector.broadcast %837 : f32 to vector<16x112xf32>
      %851 = arith.mulf %850, %849 : vector<16x112xf32>
      %852 = arith.addf %827, %851 : vector<16x112xf32>
      %c5_729 = arith.constant 5 : index
      %c4_730 = arith.constant 4 : index
      %c0_731 = arith.constant 0 : index
      %c0_732 = arith.constant 0 : index
      %853 = vector.load %arg6[%c5_729, %c4_730, %c0_731, %c0_732] : memref<6x6x16x112xf32, #tpu.memory_space<vmem>>, vector<1x1x16x112xf32>
      %854 = vector.shape_cast %853 : vector<1x1x16x112xf32> to vector<16x112xf32>
      %855 = vector.broadcast %837 : f32 to vector<16x112xf32>
      %856 = arith.mulf %855, %854 : vector<16x112xf32>
      %857 = arith.addf %832, %856 : vector<16x112xf32>
      %c25_i32_733 = arith.constant 25 : i32
      %858 = arith.muli %256, %c25_i32_733 : i32
      %c20_i32_734 = arith.constant 20 : i32
      %859 = arith.addi %858, %c20_i32_734 : i32
      %c4_i32_735 = arith.constant 4 : i32
      %860 = arith.addi %859, %c4_i32_735 : i32
      %861 = arith.index_cast %860 : i32 to index
      %862 = memref.load %arg3[%861] : memref<750xf32, #tpu.memory_space<smem>>
      %c4_736 = arith.constant 4 : index
      %c4_737 = arith.constant 4 : index
      %c0_738 = arith.constant 0 : index
      %c0_739 = arith.constant 0 : index
      %863 = vector.load %arg6[%c4_736, %c4_737, %c0_738, %c0_739] : memref<6x6x16x112xf32, #tpu.memory_space<vmem>>, vector<1x1x16x112xf32>
      %864 = vector.shape_cast %863 : vector<1x1x16x112xf32> to vector<16x112xf32>
      %865 = vector.broadcast %862 : f32 to vector<16x112xf32>
      %866 = arith.mulf %865, %864 : vector<16x112xf32>
      %867 = arith.addf %842, %866 : vector<16x112xf32>
      %c4_740 = arith.constant 4 : index
      %c5_741 = arith.constant 5 : index
      %c0_742 = arith.constant 0 : index
      %c0_743 = arith.constant 0 : index
      %868 = vector.load %arg6[%c4_740, %c5_741, %c0_742, %c0_743] : memref<6x6x16x112xf32, #tpu.memory_space<vmem>>, vector<1x1x16x112xf32>
      %869 = vector.shape_cast %868 : vector<1x1x16x112xf32> to vector<16x112xf32>
      %870 = vector.broadcast %862 : f32 to vector<16x112xf32>
      %871 = arith.mulf %870, %869 : vector<16x112xf32>
      %872 = arith.addf %847, %871 : vector<16x112xf32>
      %c5_744 = arith.constant 5 : index
      %c4_745 = arith.constant 4 : index
      %c0_746 = arith.constant 0 : index
      %c0_747 = arith.constant 0 : index
      %873 = vector.load %arg6[%c5_744, %c4_745, %c0_746, %c0_747] : memref<6x6x16x112xf32, #tpu.memory_space<vmem>>, vector<1x1x16x112xf32>
      %874 = vector.shape_cast %873 : vector<1x1x16x112xf32> to vector<16x112xf32>
      %875 = vector.broadcast %862 : f32 to vector<16x112xf32>
      %876 = arith.mulf %875, %874 : vector<16x112xf32>
      %877 = arith.addf %852, %876 : vector<16x112xf32>
      %c5_748 = arith.constant 5 : index
      %c5_749 = arith.constant 5 : index
      %c0_750 = arith.constant 0 : index
      %c0_751 = arith.constant 0 : index
      %878 = vector.load %arg6[%c5_748, %c5_749, %c0_750, %c0_751] : memref<6x6x16x112xf32, #tpu.memory_space<vmem>>, vector<1x1x16x112xf32>
      %879 = vector.shape_cast %878 : vector<1x1x16x112xf32> to vector<16x112xf32>
      %880 = vector.broadcast %862 : f32 to vector<16x112xf32>
      %881 = arith.mulf %880, %879 : vector<16x112xf32>
      %882 = arith.addf %857, %881 : vector<16x112xf32>
      %883 = arith.maximumf %867, %872 : vector<16x112xf32>
      %884 = arith.maximumf %877, %882 : vector<16x112xf32>
      %885 = arith.maximumf %883, %884 : vector<16x112xf32>
      %886 = arith.index_cast %256 : i32 to index
      %887 = memref.load %arg4[%886] : memref<30xf32, #tpu.memory_space<smem>>
      %888 = vector.broadcast %887 : f32 to vector<16x112xf32>
      %889 = arith.addf %885, %888 : vector<16x112xf32>
      %cst_752 = arith.constant 0.000000e+00 : f32
      %890 = vector.broadcast %cst_752 : f32 to vector<16x112xf32>
      %891 = arith.maximumf %889, %890 : vector<16x112xf32>
      %c0_753 = arith.constant 0 : index
      %892 = arith.index_cast %256 : i32 to index
      %c0_754 = arith.constant 0 : index
      %c0_755 = arith.constant 0 : index
      %893 = vector.load %arg5[%c0_753, %892, %c0_754, %c0_755] : memref<1x30x16x112xf32, #tpu.memory_space<vmem>>, vector<1x1x16x112xf32>
      %894 = vector.shape_cast %893 : vector<1x1x16x112xf32> to vector<16x112xf32>
      %895 = vector.shape_cast %891 : vector<16x112xf32> to vector<1x1x16x112xf32>
      tpu.vector_store %arg5[%c0_753, %892, %c0_754, %c0_755], %895 {strides = array<i32>} : memref<1x30x16x112xf32, #tpu.memory_space<vmem>>, vector<1x1x16x112xf32>,
    }
    %c30_i32_281 = arith.constant 30 : i32
    return
  }
  func.func @transform_0(%arg0: i32, %arg1: i32) -> (i32, i32, i32, i32) {
    %c0_i32 = arith.constant 0 : i32
    %c0_i32_0 = arith.constant 0 : i32
    %c0_i32_1 = arith.constant 0 : i32
    %c0_i32_2 = arith.constant 0 : i32
    return %arg0, %c0_i32, %c0_i32_0, %c0_i32_1 : i32, i32, i32, i32
  }
  func.func @transform_1(%arg0: i32, %arg1: i32) -> i32 {
    %c0_i32 = arith.constant 0 : i32
    %c0_i32_0 = arith.constant 0 : i32
    return %c0_i32 : i32
  }
  func.func @transform_2(%arg0: i32, %arg1: i32) -> i32 {
    %c0_i32 = arith.constant 0 : i32
    %c0_i32_0 = arith.constant 0 : i32
    return %c0_i32 : i32
  }
  func.func @transform_3(%arg0: i32, %arg1: i32) -> (i32, i32, i32, i32) {
    %c0_i32 = arith.constant 0 : i32
    %c0_i32_0 = arith.constant 0 : i32
    %c0_i32_1 = arith.constant 0 : i32
    return %arg0, %c0_i32, %arg1, %c0_i32_0 : i32, i32, i32, i32
  }
}

module attributes {stable_mosaic.version = 11 : i64} {
  func.func @_conv2_pool_kernel(%arg0: i32, %arg1: memref<1x30x4x57x57xf32, #tpu.memory_space<vmem>>, %arg2: memref<4050xf32, #tpu.memory_space<smem>>, %arg3: memref<15xf32, #tpu.memory_space<smem>>, %arg4: memref<1x15x56x56xf32, #tpu.memory_space<vmem>>) attributes {dimension_semantics = [#tpu.dimension_semantics<parallel>], iteration_bounds = array<i64: 2>, scalar_prefetch = 0 : i64, scratch_operands = 0 : i64, tpu.core_type = #tpu.core_type<tc>, window_params = [{transform_indices = @transform_0, window_bounds = array<i64: 1, 30, 4, 57, 57>}, {transform_indices = @transform_1, window_bounds = array<i64: 4050>}, {transform_indices = @transform_2, window_bounds = array<i64: 15>}, {transform_indices = @transform_3, window_bounds = array<i64: 1, 15, 56, 56>}]} {
    %c0_i32 = arith.constant 0 : i32
    %c15_i32 = arith.constant 15 : i32
    %0 = arith.addi %c0_i32, %c15_i32 : i32
    %c1_i32 = arith.constant 1 : i32
    scf.for %arg5 = %c0_i32 to %0 step %c1_i32  : i32 {
      %c1_i32_1 = arith.constant 1 : i32
      %1 = arith.muli %arg5, %c1_i32_1 : i32
      %c0_i32_2 = arith.constant 0 : i32
      %2 = arith.addi %c0_i32_2, %1 : i32
      %cst = arith.constant 0.000000e+00 : f32
      %3 = vector.broadcast %cst : f32 to vector<56x56xf32>
      %c0_i32_3 = arith.constant 0 : i32
      %c30_i32 = arith.constant 30 : i32
      %4 = arith.addi %c0_i32_3, %c30_i32 : i32
      %c1_i32_4 = arith.constant 1 : i32
      %5:4 = scf.for %arg6 = %c0_i32_3 to %4 step %c1_i32_4 iter_args(%arg7 = %3, %arg8 = %3, %arg9 = %3, %arg10 = %3) -> (vector<56x56xf32>, vector<56x56xf32>, vector<56x56xf32>, vector<56x56xf32>)  : i32 {
        %c30_i32_9 = arith.constant 30 : i32
        %19 = arith.muli %2, %c30_i32_9 : i32
        %20 = arith.addi %19, %arg6 : i32
        %c9_i32 = arith.constant 9 : i32
        %21 = arith.muli %20, %c9_i32 : i32
        %c0_i32_10 = arith.constant 0 : i32
        %22 = arith.addi %21, %c0_i32_10 : i32
        %c0_i32_11 = arith.constant 0 : i32
        %23 = arith.addi %22, %c0_i32_11 : i32
        %24 = arith.index_cast %23 : i32 to index
        %25 = memref.load %arg2[%24] : memref<4050xf32, #tpu.memory_space<smem>>
        %c0_12 = arith.constant 0 : index
        %26 = arith.index_cast %arg6 : i32 to index
        %c0_13 = arith.constant 0 : index
        %c0_14 = arith.constant 0 : index
        %c0_15 = arith.constant 0 : index
        %27 = vector.load %arg1[%c0_12, %26, %c0_13, %c0_14, %c0_15] : memref<1x30x4x57x57xf32, #tpu.memory_space<vmem>>, vector<1x1x1x56x56xf32>
        %28 = vector.shape_cast %27 : vector<1x1x1x56x56xf32> to vector<56x56xf32>
        %c0_16 = arith.constant 0 : index
        %29 = arith.index_cast %arg6 : i32 to index
        %c1 = arith.constant 1 : index
        %c0_17 = arith.constant 0 : index
        %c0_18 = arith.constant 0 : index
        %30 = vector.load %arg1[%c0_16, %29, %c1, %c0_17, %c0_18] : memref<1x30x4x57x57xf32, #tpu.memory_space<vmem>>, vector<1x1x1x56x56xf32>
        %31 = vector.shape_cast %30 : vector<1x1x1x56x56xf32> to vector<56x56xf32>
        %c0_19 = arith.constant 0 : index
        %32 = arith.index_cast %arg6 : i32 to index
        %c2 = arith.constant 2 : index
        %c0_20 = arith.constant 0 : index
        %c0_21 = arith.constant 0 : index
        %33 = vector.load %arg1[%c0_19, %32, %c2, %c0_20, %c0_21] : memref<1x30x4x57x57xf32, #tpu.memory_space<vmem>>, vector<1x1x1x56x56xf32>
        %34 = vector.shape_cast %33 : vector<1x1x1x56x56xf32> to vector<56x56xf32>
        %c0_22 = arith.constant 0 : index
        %35 = arith.index_cast %arg6 : i32 to index
        %c3 = arith.constant 3 : index
        %c0_23 = arith.constant 0 : index
        %c0_24 = arith.constant 0 : index
        %36 = vector.load %arg1[%c0_22, %35, %c3, %c0_23, %c0_24] : memref<1x30x4x57x57xf32, #tpu.memory_space<vmem>>, vector<1x1x1x56x56xf32>
        %37 = vector.shape_cast %36 : vector<1x1x1x56x56xf32> to vector<56x56xf32>
        %38 = vector.broadcast %25 : f32 to vector<56x56xf32>
        %39 = arith.mulf %38, %28 : vector<56x56xf32>
        %40 = arith.addf %arg7, %39 : vector<56x56xf32>
        %41 = vector.broadcast %25 : f32 to vector<56x56xf32>
        %42 = arith.mulf %41, %31 : vector<56x56xf32>
        %43 = arith.addf %arg8, %42 : vector<56x56xf32>
        %44 = vector.broadcast %25 : f32 to vector<56x56xf32>
        %45 = arith.mulf %44, %34 : vector<56x56xf32>
        %46 = arith.addf %arg9, %45 : vector<56x56xf32>
        %47 = vector.broadcast %25 : f32 to vector<56x56xf32>
        %48 = arith.mulf %47, %37 : vector<56x56xf32>
        %49 = arith.addf %arg10, %48 : vector<56x56xf32>
        %c0_i32_25 = arith.constant 0 : i32
        %50 = arith.addi %21, %c0_i32_25 : i32
        %c1_i32_26 = arith.constant 1 : i32
        %51 = arith.addi %50, %c1_i32_26 : i32
        %52 = arith.index_cast %51 : i32 to index
        %53 = memref.load %arg2[%52] : memref<4050xf32, #tpu.memory_space<smem>>
        %c0_27 = arith.constant 0 : index
        %54 = arith.index_cast %arg6 : i32 to index
        %c1_28 = arith.constant 1 : index
        %c0_29 = arith.constant 0 : index
        %c0_30 = arith.constant 0 : index
        %55 = vector.load %arg1[%c0_27, %54, %c1_28, %c0_29, %c0_30] : memref<1x30x4x57x57xf32, #tpu.memory_space<vmem>>, vector<1x1x1x56x56xf32>
        %56 = vector.shape_cast %55 : vector<1x1x1x56x56xf32> to vector<56x56xf32>
        %c0_31 = arith.constant 0 : index
        %57 = arith.index_cast %arg6 : i32 to index
        %c0_32 = arith.constant 0 : index
        %c0_33 = arith.constant 0 : index
        %c1_34 = arith.constant 1 : index
        %58 = vector.load %arg1[%c0_31, %57, %c0_32, %c0_33, %c1_34] : memref<1x30x4x57x57xf32, #tpu.memory_space<vmem>>, vector<1x1x1x56x56xf32>
        %59 = vector.shape_cast %58 : vector<1x1x1x56x56xf32> to vector<56x56xf32>
        %c0_35 = arith.constant 0 : index
        %60 = arith.index_cast %arg6 : i32 to index
        %c3_36 = arith.constant 3 : index
        %c0_37 = arith.constant 0 : index
        %c0_38 = arith.constant 0 : index
        %61 = vector.load %arg1[%c0_35, %60, %c3_36, %c0_37, %c0_38] : memref<1x30x4x57x57xf32, #tpu.memory_space<vmem>>, vector<1x1x1x56x56xf32>
        %62 = vector.shape_cast %61 : vector<1x1x1x56x56xf32> to vector<56x56xf32>
        %c0_39 = arith.constant 0 : index
        %63 = arith.index_cast %arg6 : i32 to index
        %c2_40 = arith.constant 2 : index
        %c0_41 = arith.constant 0 : index
        %c1_42 = arith.constant 1 : index
        %64 = vector.load %arg1[%c0_39, %63, %c2_40, %c0_41, %c1_42] : memref<1x30x4x57x57xf32, #tpu.memory_space<vmem>>, vector<1x1x1x56x56xf32>
        %65 = vector.shape_cast %64 : vector<1x1x1x56x56xf32> to vector<56x56xf32>
        %66 = vector.broadcast %53 : f32 to vector<56x56xf32>
        %67 = arith.mulf %66, %56 : vector<56x56xf32>
        %68 = arith.addf %40, %67 : vector<56x56xf32>
        %69 = vector.broadcast %53 : f32 to vector<56x56xf32>
        %70 = arith.mulf %69, %59 : vector<56x56xf32>
        %71 = arith.addf %43, %70 : vector<56x56xf32>
        %72 = vector.broadcast %53 : f32 to vector<56x56xf32>
        %73 = arith.mulf %72, %62 : vector<56x56xf32>
        %74 = arith.addf %46, %73 : vector<56x56xf32>
        %75 = vector.broadcast %53 : f32 to vector<56x56xf32>
        %76 = arith.mulf %75, %65 : vector<56x56xf32>
        %77 = arith.addf %49, %76 : vector<56x56xf32>
        %c0_i32_43 = arith.constant 0 : i32
        %78 = arith.addi %21, %c0_i32_43 : i32
        %c2_i32 = arith.constant 2 : i32
        %79 = arith.addi %78, %c2_i32 : i32
        %80 = arith.index_cast %79 : i32 to index
        %81 = memref.load %arg2[%80] : memref<4050xf32, #tpu.memory_space<smem>>
        %c0_44 = arith.constant 0 : index
        %82 = arith.index_cast %arg6 : i32 to index
        %c0_45 = arith.constant 0 : index
        %c0_46 = arith.constant 0 : index
        %c1_47 = arith.constant 1 : index
        %83 = vector.load %arg1[%c0_44, %82, %c0_45, %c0_46, %c1_47] : memref<1x30x4x57x57xf32, #tpu.memory_space<vmem>>, vector<1x1x1x56x56xf32>
        %84 = vector.shape_cast %83 : vector<1x1x1x56x56xf32> to vector<56x56xf32>
        %c0_48 = arith.constant 0 : index
        %85 = arith.index_cast %arg6 : i32 to index
        %c1_49 = arith.constant 1 : index
        %c0_50 = arith.constant 0 : index
        %c1_51 = arith.constant 1 : index
        %86 = vector.load %arg1[%c0_48, %85, %c1_49, %c0_50, %c1_51] : memref<1x30x4x57x57xf32, #tpu.memory_space<vmem>>, vector<1x1x1x56x56xf32>
        %87 = vector.shape_cast %86 : vector<1x1x1x56x56xf32> to vector<56x56xf32>
        %c0_52 = arith.constant 0 : index
        %88 = arith.index_cast %arg6 : i32 to index
        %c2_53 = arith.constant 2 : index
        %c0_54 = arith.constant 0 : index
        %c1_55 = arith.constant 1 : index
        %89 = vector.load %arg1[%c0_52, %88, %c2_53, %c0_54, %c1_55] : memref<1x30x4x57x57xf32, #tpu.memory_space<vmem>>, vector<1x1x1x56x56xf32>
        %90 = vector.shape_cast %89 : vector<1x1x1x56x56xf32> to vector<56x56xf32>
        %c0_56 = arith.constant 0 : index
        %91 = arith.index_cast %arg6 : i32 to index
        %c3_57 = arith.constant 3 : index
        %c0_58 = arith.constant 0 : index
        %c1_59 = arith.constant 1 : index
        %92 = vector.load %arg1[%c0_56, %91, %c3_57, %c0_58, %c1_59] : memref<1x30x4x57x57xf32, #tpu.memory_space<vmem>>, vector<1x1x1x56x56xf32>
        %93 = vector.shape_cast %92 : vector<1x1x1x56x56xf32> to vector<56x56xf32>
        %94 = vector.broadcast %81 : f32 to vector<56x56xf32>
        %95 = arith.mulf %94, %84 : vector<56x56xf32>
        %96 = arith.addf %68, %95 : vector<56x56xf32>
        %97 = vector.broadcast %81 : f32 to vector<56x56xf32>
        %98 = arith.mulf %97, %87 : vector<56x56xf32>
        %99 = arith.addf %71, %98 : vector<56x56xf32>
        %100 = vector.broadcast %81 : f32 to vector<56x56xf32>
        %101 = arith.mulf %100, %90 : vector<56x56xf32>
        %102 = arith.addf %74, %101 : vector<56x56xf32>
        %103 = vector.broadcast %81 : f32 to vector<56x56xf32>
        %104 = arith.mulf %103, %93 : vector<56x56xf32>
        %105 = arith.addf %77, %104 : vector<56x56xf32>
        %c3_i32 = arith.constant 3 : i32
        %106 = arith.addi %21, %c3_i32 : i32
        %c0_i32_60 = arith.constant 0 : i32
        %107 = arith.addi %106, %c0_i32_60 : i32
        %108 = arith.index_cast %107 : i32 to index
        %109 = memref.load %arg2[%108] : memref<4050xf32, #tpu.memory_space<smem>>
        %c0_61 = arith.constant 0 : index
        %110 = arith.index_cast %arg6 : i32 to index
        %c2_62 = arith.constant 2 : index
        %c0_63 = arith.constant 0 : index
        %c0_64 = arith.constant 0 : index
        %111 = vector.load %arg1[%c0_61, %110, %c2_62, %c0_63, %c0_64] : memref<1x30x4x57x57xf32, #tpu.memory_space<vmem>>, vector<1x1x1x56x56xf32>
        %112 = vector.shape_cast %111 : vector<1x1x1x56x56xf32> to vector<56x56xf32>
        %c0_65 = arith.constant 0 : index
        %113 = arith.index_cast %arg6 : i32 to index
        %c3_66 = arith.constant 3 : index
        %c0_67 = arith.constant 0 : index
        %c0_68 = arith.constant 0 : index
        %114 = vector.load %arg1[%c0_65, %113, %c3_66, %c0_67, %c0_68] : memref<1x30x4x57x57xf32, #tpu.memory_space<vmem>>, vector<1x1x1x56x56xf32>
        %115 = vector.shape_cast %114 : vector<1x1x1x56x56xf32> to vector<56x56xf32>
        %c0_69 = arith.constant 0 : index
        %116 = arith.index_cast %arg6 : i32 to index
        %c0_70 = arith.constant 0 : index
        %c1_71 = arith.constant 1 : index
        %c0_72 = arith.constant 0 : index
        %117 = vector.load %arg1[%c0_69, %116, %c0_70, %c1_71, %c0_72] : memref<1x30x4x57x57xf32, #tpu.memory_space<vmem>>, vector<1x1x1x56x56xf32>
        %118 = vector.shape_cast %117 : vector<1x1x1x56x56xf32> to vector<56x56xf32>
        %c0_73 = arith.constant 0 : index
        %119 = arith.index_cast %arg6 : i32 to index
        %c1_74 = arith.constant 1 : index
        %c1_75 = arith.constant 1 : index
        %c0_76 = arith.constant 0 : index
        %120 = vector.load %arg1[%c0_73, %119, %c1_74, %c1_75, %c0_76] : memref<1x30x4x57x57xf32, #tpu.memory_space<vmem>>, vector<1x1x1x56x56xf32>
        %121 = vector.shape_cast %120 : vector<1x1x1x56x56xf32> to vector<56x56xf32>
        %122 = vector.broadcast %109 : f32 to vector<56x56xf32>
        %123 = arith.mulf %122, %112 : vector<56x56xf32>
        %124 = arith.addf %96, %123 : vector<56x56xf32>
        %125 = vector.broadcast %109 : f32 to vector<56x56xf32>
        %126 = arith.mulf %125, %115 : vector<56x56xf32>
        %127 = arith.addf %99, %126 : vector<56x56xf32>
        %128 = vector.broadcast %109 : f32 to vector<56x56xf32>
        %129 = arith.mulf %128, %118 : vector<56x56xf32>
        %130 = arith.addf %102, %129 : vector<56x56xf32>
        %131 = vector.broadcast %109 : f32 to vector<56x56xf32>
        %132 = arith.mulf %131, %121 : vector<56x56xf32>
        %133 = arith.addf %105, %132 : vector<56x56xf32>
        %c3_i32_77 = arith.constant 3 : i32
        %134 = arith.addi %21, %c3_i32_77 : i32
        %c1_i32_78 = arith.constant 1 : i32
        %135 = arith.addi %134, %c1_i32_78 : i32
        %136 = arith.index_cast %135 : i32 to index
        %137 = memref.load %arg2[%136] : memref<4050xf32, #tpu.memory_space<smem>>
        %c0_79 = arith.constant 0 : index
        %138 = arith.index_cast %arg6 : i32 to index
        %c3_80 = arith.constant 3 : index
        %c0_81 = arith.constant 0 : index
        %c0_82 = arith.constant 0 : index
        %139 = vector.load %arg1[%c0_79, %138, %c3_80, %c0_81, %c0_82] : memref<1x30x4x57x57xf32, #tpu.memory_space<vmem>>, vector<1x1x1x56x56xf32>
        %140 = vector.shape_cast %139 : vector<1x1x1x56x56xf32> to vector<56x56xf32>
        %c0_83 = arith.constant 0 : index
        %141 = arith.index_cast %arg6 : i32 to index
        %c2_84 = arith.constant 2 : index
        %c0_85 = arith.constant 0 : index
        %c1_86 = arith.constant 1 : index
        %142 = vector.load %arg1[%c0_83, %141, %c2_84, %c0_85, %c1_86] : memref<1x30x4x57x57xf32, #tpu.memory_space<vmem>>, vector<1x1x1x56x56xf32>
        %143 = vector.shape_cast %142 : vector<1x1x1x56x56xf32> to vector<56x56xf32>
        %c0_87 = arith.constant 0 : index
        %144 = arith.index_cast %arg6 : i32 to index
        %c1_88 = arith.constant 1 : index
        %c1_89 = arith.constant 1 : index
        %c0_90 = arith.constant 0 : index
        %145 = vector.load %arg1[%c0_87, %144, %c1_88, %c1_89, %c0_90] : memref<1x30x4x57x57xf32, #tpu.memory_space<vmem>>, vector<1x1x1x56x56xf32>
        %146 = vector.shape_cast %145 : vector<1x1x1x56x56xf32> to vector<56x56xf32>
        %c0_91 = arith.constant 0 : index
        %147 = arith.index_cast %arg6 : i32 to index
        %c0_92 = arith.constant 0 : index
        %c1_93 = arith.constant 1 : index
        %c1_94 = arith.constant 1 : index
        %148 = vector.load %arg1[%c0_91, %147, %c0_92, %c1_93, %c1_94] : memref<1x30x4x57x57xf32, #tpu.memory_space<vmem>>, vector<1x1x1x56x56xf32>
        %149 = vector.shape_cast %148 : vector<1x1x1x56x56xf32> to vector<56x56xf32>
        %150 = vector.broadcast %137 : f32 to vector<56x56xf32>
        %151 = arith.mulf %150, %140 : vector<56x56xf32>
        %152 = arith.addf %124, %151 : vector<56x56xf32>
        %153 = vector.broadcast %137 : f32 to vector<56x56xf32>
        %154 = arith.mulf %153, %143 : vector<56x56xf32>
        %155 = arith.addf %127, %154 : vector<56x56xf32>
        %156 = vector.broadcast %137 : f32 to vector<56x56xf32>
        %157 = arith.mulf %156, %146 : vector<56x56xf32>
        %158 = arith.addf %130, %157 : vector<56x56xf32>
        %159 = vector.broadcast %137 : f32 to vector<56x56xf32>
        %160 = arith.mulf %159, %149 : vector<56x56xf32>
        %161 = arith.addf %133, %160 : vector<56x56xf32>
        %c3_i32_95 = arith.constant 3 : i32
        %162 = arith.addi %21, %c3_i32_95 : i32
        %c2_i32_96 = arith.constant 2 : i32
        %163 = arith.addi %162, %c2_i32_96 : i32
        %164 = arith.index_cast %163 : i32 to index
        %165 = memref.load %arg2[%164] : memref<4050xf32, #tpu.memory_space<smem>>
        %c0_97 = arith.constant 0 : index
        %166 = arith.index_cast %arg6 : i32 to index
        %c2_98 = arith.constant 2 : index
        %c0_99 = arith.constant 0 : index
        %c1_100 = arith.constant 1 : index
        %167 = vector.load %arg1[%c0_97, %166, %c2_98, %c0_99, %c1_100] : memref<1x30x4x57x57xf32, #tpu.memory_space<vmem>>, vector<1x1x1x56x56xf32>
        %168 = vector.shape_cast %167 : vector<1x1x1x56x56xf32> to vector<56x56xf32>
        %c0_101 = arith.constant 0 : index
        %169 = arith.index_cast %arg6 : i32 to index
        %c3_102 = arith.constant 3 : index
        %c0_103 = arith.constant 0 : index
        %c1_104 = arith.constant 1 : index
        %170 = vector.load %arg1[%c0_101, %169, %c3_102, %c0_103, %c1_104] : memref<1x30x4x57x57xf32, #tpu.memory_space<vmem>>, vector<1x1x1x56x56xf32>
        %171 = vector.shape_cast %170 : vector<1x1x1x56x56xf32> to vector<56x56xf32>
        %c0_105 = arith.constant 0 : index
        %172 = arith.index_cast %arg6 : i32 to index
        %c0_106 = arith.constant 0 : index
        %c1_107 = arith.constant 1 : index
        %c1_108 = arith.constant 1 : index
        %173 = vector.load %arg1[%c0_105, %172, %c0_106, %c1_107, %c1_108] : memref<1x30x4x57x57xf32, #tpu.memory_space<vmem>>, vector<1x1x1x56x56xf32>
        %174 = vector.shape_cast %173 : vector<1x1x1x56x56xf32> to vector<56x56xf32>
        %c0_109 = arith.constant 0 : index
        %175 = arith.index_cast %arg6 : i32 to index
        %c1_110 = arith.constant 1 : index
        %c1_111 = arith.constant 1 : index
        %c1_112 = arith.constant 1 : index
        %176 = vector.load %arg1[%c0_109, %175, %c1_110, %c1_111, %c1_112] : memref<1x30x4x57x57xf32, #tpu.memory_space<vmem>>, vector<1x1x1x56x56xf32>
        %177 = vector.shape_cast %176 : vector<1x1x1x56x56xf32> to vector<56x56xf32>
        %178 = vector.broadcast %165 : f32 to vector<56x56xf32>
        %179 = arith.mulf %178, %168 : vector<56x56xf32>
        %180 = arith.addf %152, %179 : vector<56x56xf32>
        %181 = vector.broadcast %165 : f32 to vector<56x56xf32>
        %182 = arith.mulf %181, %171 : vector<56x56xf32>
        %183 = arith.addf %155, %182 : vector<56x56xf32>
        %184 = vector.broadcast %165 : f32 to vector<56x56xf32>
        %185 = arith.mulf %184, %174 : vector<56x56xf32>
        %186 = arith.addf %158, %185 : vector<56x56xf32>
        %187 = vector.broadcast %165 : f32 to vector<56x56xf32>
        %188 = arith.mulf %187, %177 : vector<56x56xf32>
        %189 = arith.addf %161, %188 : vector<56x56xf32>
        %c6_i32 = arith.constant 6 : i32
        %190 = arith.addi %21, %c6_i32 : i32
        %c0_i32_113 = arith.constant 0 : i32
        %191 = arith.addi %190, %c0_i32_113 : i32
        %192 = arith.index_cast %191 : i32 to index
        %193 = memref.load %arg2[%192] : memref<4050xf32, #tpu.memory_space<smem>>
        %c0_114 = arith.constant 0 : index
        %194 = arith.index_cast %arg6 : i32 to index
        %c0_115 = arith.constant 0 : index
        %c1_116 = arith.constant 1 : index
        %c0_117 = arith.constant 0 : index
        %195 = vector.load %arg1[%c0_114, %194, %c0_115, %c1_116, %c0_117] : memref<1x30x4x57x57xf32, #tpu.memory_space<vmem>>, vector<1x1x1x56x56xf32>
        %196 = vector.shape_cast %195 : vector<1x1x1x56x56xf32> to vector<56x56xf32>
        %c0_118 = arith.constant 0 : index
        %197 = arith.index_cast %arg6 : i32 to index
        %c1_119 = arith.constant 1 : index
        %c1_120 = arith.constant 1 : index
        %c0_121 = arith.constant 0 : index
        %198 = vector.load %arg1[%c0_118, %197, %c1_119, %c1_120, %c0_121] : memref<1x30x4x57x57xf32, #tpu.memory_space<vmem>>, vector<1x1x1x56x56xf32>
        %199 = vector.shape_cast %198 : vector<1x1x1x56x56xf32> to vector<56x56xf32>
        %c0_122 = arith.constant 0 : index
        %200 = arith.index_cast %arg6 : i32 to index
        %c2_123 = arith.constant 2 : index
        %c1_124 = arith.constant 1 : index
        %c0_125 = arith.constant 0 : index
        %201 = vector.load %arg1[%c0_122, %200, %c2_123, %c1_124, %c0_125] : memref<1x30x4x57x57xf32, #tpu.memory_space<vmem>>, vector<1x1x1x56x56xf32>
        %202 = vector.shape_cast %201 : vector<1x1x1x56x56xf32> to vector<56x56xf32>
        %c0_126 = arith.constant 0 : index
        %203 = arith.index_cast %arg6 : i32 to index
        %c3_127 = arith.constant 3 : index
        %c1_128 = arith.constant 1 : index
        %c0_129 = arith.constant 0 : index
        %204 = vector.load %arg1[%c0_126, %203, %c3_127, %c1_128, %c0_129] : memref<1x30x4x57x57xf32, #tpu.memory_space<vmem>>, vector<1x1x1x56x56xf32>
        %205 = vector.shape_cast %204 : vector<1x1x1x56x56xf32> to vector<56x56xf32>
        %206 = vector.broadcast %193 : f32 to vector<56x56xf32>
        %207 = arith.mulf %206, %196 : vector<56x56xf32>
        %208 = arith.addf %180, %207 : vector<56x56xf32>
        %209 = vector.broadcast %193 : f32 to vector<56x56xf32>
        %210 = arith.mulf %209, %199 : vector<56x56xf32>
        %211 = arith.addf %183, %210 : vector<56x56xf32>
        %212 = vector.broadcast %193 : f32 to vector<56x56xf32>
        %213 = arith.mulf %212, %202 : vector<56x56xf32>
        %214 = arith.addf %186, %213 : vector<56x56xf32>
        %215 = vector.broadcast %193 : f32 to vector<56x56xf32>
        %216 = arith.mulf %215, %205 : vector<56x56xf32>
        %217 = arith.addf %189, %216 : vector<56x56xf32>
        %c6_i32_130 = arith.constant 6 : i32
        %218 = arith.addi %21, %c6_i32_130 : i32
        %c1_i32_131 = arith.constant 1 : i32
        %219 = arith.addi %218, %c1_i32_131 : i32
        %220 = arith.index_cast %219 : i32 to index
        %221 = memref.load %arg2[%220] : memref<4050xf32, #tpu.memory_space<smem>>
        %c0_132 = arith.constant 0 : index
        %222 = arith.index_cast %arg6 : i32 to index
        %c1_133 = arith.constant 1 : index
        %c1_134 = arith.constant 1 : index
        %c0_135 = arith.constant 0 : index
        %223 = vector.load %arg1[%c0_132, %222, %c1_133, %c1_134, %c0_135] : memref<1x30x4x57x57xf32, #tpu.memory_space<vmem>>, vector<1x1x1x56x56xf32>
        %224 = vector.shape_cast %223 : vector<1x1x1x56x56xf32> to vector<56x56xf32>
        %c0_136 = arith.constant 0 : index
        %225 = arith.index_cast %arg6 : i32 to index
        %c0_137 = arith.constant 0 : index
        %c1_138 = arith.constant 1 : index
        %c1_139 = arith.constant 1 : index
        %226 = vector.load %arg1[%c0_136, %225, %c0_137, %c1_138, %c1_139] : memref<1x30x4x57x57xf32, #tpu.memory_space<vmem>>, vector<1x1x1x56x56xf32>
        %227 = vector.shape_cast %226 : vector<1x1x1x56x56xf32> to vector<56x56xf32>
        %c0_140 = arith.constant 0 : index
        %228 = arith.index_cast %arg6 : i32 to index
        %c3_141 = arith.constant 3 : index
        %c1_142 = arith.constant 1 : index
        %c0_143 = arith.constant 0 : index
        %229 = vector.load %arg1[%c0_140, %228, %c3_141, %c1_142, %c0_143] : memref<1x30x4x57x57xf32, #tpu.memory_space<vmem>>, vector<1x1x1x56x56xf32>
        %230 = vector.shape_cast %229 : vector<1x1x1x56x56xf32> to vector<56x56xf32>
        %c0_144 = arith.constant 0 : index
        %231 = arith.index_cast %arg6 : i32 to index
        %c2_145 = arith.constant 2 : index
        %c1_146 = arith.constant 1 : index
        %c1_147 = arith.constant 1 : index
        %232 = vector.load %arg1[%c0_144, %231, %c2_145, %c1_146, %c1_147] : memref<1x30x4x57x57xf32, #tpu.memory_space<vmem>>, vector<1x1x1x56x56xf32>
        %233 = vector.shape_cast %232 : vector<1x1x1x56x56xf32> to vector<56x56xf32>
        %234 = vector.broadcast %221 : f32 to vector<56x56xf32>
        %235 = arith.mulf %234, %224 : vector<56x56xf32>
        %236 = arith.addf %208, %235 : vector<56x56xf32>
        %237 = vector.broadcast %221 : f32 to vector<56x56xf32>
        %238 = arith.mulf %237, %227 : vector<56x56xf32>
        %239 = arith.addf %211, %238 : vector<56x56xf32>
        %240 = vector.broadcast %221 : f32 to vector<56x56xf32>
        %241 = arith.mulf %240, %230 : vector<56x56xf32>
        %242 = arith.addf %214, %241 : vector<56x56xf32>
        %243 = vector.broadcast %221 : f32 to vector<56x56xf32>
        %244 = arith.mulf %243, %233 : vector<56x56xf32>
        %245 = arith.addf %217, %244 : vector<56x56xf32>
        %c6_i32_148 = arith.constant 6 : i32
        %246 = arith.addi %21, %c6_i32_148 : i32
        %c2_i32_149 = arith.constant 2 : i32
        %247 = arith.addi %246, %c2_i32_149 : i32
        %248 = arith.index_cast %247 : i32 to index
        %249 = memref.load %arg2[%248] : memref<4050xf32, #tpu.memory_space<smem>>
        %c0_150 = arith.constant 0 : index
        %250 = arith.index_cast %arg6 : i32 to index
        %c0_151 = arith.constant 0 : index
        %c1_152 = arith.constant 1 : index
        %c1_153 = arith.constant 1 : index
        %251 = vector.load %arg1[%c0_150, %250, %c0_151, %c1_152, %c1_153] : memref<1x30x4x57x57xf32, #tpu.memory_space<vmem>>, vector<1x1x1x56x56xf32>
        %252 = vector.shape_cast %251 : vector<1x1x1x56x56xf32> to vector<56x56xf32>
        %c0_154 = arith.constant 0 : index
        %253 = arith.index_cast %arg6 : i32 to index
        %c1_155 = arith.constant 1 : index
        %c1_156 = arith.constant 1 : index
        %c1_157 = arith.constant 1 : index
        %254 = vector.load %arg1[%c0_154, %253, %c1_155, %c1_156, %c1_157] : memref<1x30x4x57x57xf32, #tpu.memory_space<vmem>>, vector<1x1x1x56x56xf32>
        %255 = vector.shape_cast %254 : vector<1x1x1x56x56xf32> to vector<56x56xf32>
        %c0_158 = arith.constant 0 : index
        %256 = arith.index_cast %arg6 : i32 to index
        %c2_159 = arith.constant 2 : index
        %c1_160 = arith.constant 1 : index
        %c1_161 = arith.constant 1 : index
        %257 = vector.load %arg1[%c0_158, %256, %c2_159, %c1_160, %c1_161] : memref<1x30x4x57x57xf32, #tpu.memory_space<vmem>>, vector<1x1x1x56x56xf32>
        %258 = vector.shape_cast %257 : vector<1x1x1x56x56xf32> to vector<56x56xf32>
        %c0_162 = arith.constant 0 : index
        %259 = arith.index_cast %arg6 : i32 to index
        %c3_163 = arith.constant 3 : index
        %c1_164 = arith.constant 1 : index
        %c1_165 = arith.constant 1 : index
        %260 = vector.load %arg1[%c0_162, %259, %c3_163, %c1_164, %c1_165] : memref<1x30x4x57x57xf32, #tpu.memory_space<vmem>>, vector<1x1x1x56x56xf32>
        %261 = vector.shape_cast %260 : vector<1x1x1x56x56xf32> to vector<56x56xf32>
        %262 = vector.broadcast %249 : f32 to vector<56x56xf32>
        %263 = arith.mulf %262, %252 : vector<56x56xf32>
        %264 = arith.addf %236, %263 : vector<56x56xf32>
        %265 = vector.broadcast %249 : f32 to vector<56x56xf32>
        %266 = arith.mulf %265, %255 : vector<56x56xf32>
        %267 = arith.addf %239, %266 : vector<56x56xf32>
        %268 = vector.broadcast %249 : f32 to vector<56x56xf32>
        %269 = arith.mulf %268, %258 : vector<56x56xf32>
        %270 = arith.addf %242, %269 : vector<56x56xf32>
        %271 = vector.broadcast %249 : f32 to vector<56x56xf32>
        %272 = arith.mulf %271, %261 : vector<56x56xf32>
        %273 = arith.addf %245, %272 : vector<56x56xf32>
        scf.yield %264, %267, %270, %273 : vector<56x56xf32>, vector<56x56xf32>, vector<56x56xf32>, vector<56x56xf32>
      }
      %c30_i32_5 = arith.constant 30 : i32
      %6 = arith.maximumf %5#0, %5#1 : vector<56x56xf32>
      %7 = arith.maximumf %5#2, %5#3 : vector<56x56xf32>
      %8 = arith.maximumf %6, %7 : vector<56x56xf32>
      %9 = arith.index_cast %2 : i32 to index
      %10 = memref.load %arg3[%9] : memref<15xf32, #tpu.memory_space<smem>>
      %11 = vector.broadcast %10 : f32 to vector<56x56xf32>
      %12 = arith.addf %8, %11 : vector<56x56xf32>
      %cst_6 = arith.constant 0.000000e+00 : f32
      %13 = vector.broadcast %cst_6 : f32 to vector<56x56xf32>
      %14 = arith.maximumf %12, %13 : vector<56x56xf32>
      %c0 = arith.constant 0 : index
      %15 = arith.index_cast %2 : i32 to index
      %c0_7 = arith.constant 0 : index
      %c0_8 = arith.constant 0 : index
      %16 = vector.load %arg4[%c0, %15, %c0_7, %c0_8] : memref<1x15x56x56xf32, #tpu.memory_space<vmem>>, vector<1x1x56x56xf32>
      %17 = vector.shape_cast %16 : vector<1x1x56x56xf32> to vector<56x56xf32>
      %18 = vector.shape_cast %14 : vector<56x56xf32> to vector<1x1x56x56xf32>
      tpu.vector_store %arg4[%c0, %15, %c0_7, %c0_8], %18 {strides = array<i32>} : memref<1x15x56x56xf32, #tpu.memory_space<vmem>>, vector<1x1x56x56xf32>,
    }
    %c15_i32_0 = arith.constant 15 : i32
    return
  }
  func.func @transform_0(%arg0: i32) -> (i32, i32, i32, i32, i32) {
    %c0_i32 = arith.constant 0 : i32
    %c0_i32_0 = arith.constant 0 : i32
    %c0_i32_1 = arith.constant 0 : i32
    %c0_i32_2 = arith.constant 0 : i32
    %c0_i32_3 = arith.constant 0 : i32
    return %arg0, %c0_i32, %c0_i32_0, %c0_i32_1, %c0_i32_2 : i32, i32, i32, i32, i32
  }
  func.func @transform_1(%arg0: i32) -> i32 {
    %c0_i32 = arith.constant 0 : i32
    %c0_i32_0 = arith.constant 0 : i32
    return %c0_i32 : i32
  }
  func.func @transform_2(%arg0: i32) -> i32 {
    %c0_i32 = arith.constant 0 : i32
    %c0_i32_0 = arith.constant 0 : i32
    return %c0_i32 : i32
  }
  func.func @transform_3(%arg0: i32) -> (i32, i32, i32, i32) {
    %c0_i32 = arith.constant 0 : i32
    %c0_i32_0 = arith.constant 0 : i32
    %c0_i32_1 = arith.constant 0 : i32
    %c0_i32_2 = arith.constant 0 : i32
    return %arg0, %c0_i32, %c0_i32_0, %c0_i32_1 : i32, i32, i32, i32
  }
}

module attributes {stable_mosaic.version = 11 : i64} {
  func.func @_mlp_kernel(%arg0: i32, %arg1: memref<2x5888xbf16, #tpu.memory_space<vmem>>, %arg2: memref<5888x128xbf16, #tpu.memory_space<vmem>>, %arg3: memref<1x128xf32, #tpu.memory_space<vmem>>, %arg4: memref<128x50xf32, #tpu.memory_space<vmem>>, %arg5: memref<1x50xf32, #tpu.memory_space<vmem>>, %arg6: memref<50x345xf32, #tpu.memory_space<vmem>>, %arg7: memref<1x345xf32, #tpu.memory_space<vmem>>, %arg8: memref<2x345xf32, #tpu.memory_space<vmem>>, %arg9: memref<2x128xf32, #tpu.memory_space<vmem>>) attributes {dimension_semantics = [#tpu.dimension_semantics<arbitrary>], iteration_bounds = array<i64: 8>, scalar_prefetch = 0 : i64, scratch_operands = 1 : i64, tpu.core_type = #tpu.core_type<tc>, window_params = [{transform_indices = @transform_0, window_bounds = array<i64: 2, 5888>}, {transform_indices = @transform_1, window_bounds = array<i64: 5888, 128>}, {pipeline_mode = #tpu.pipeline_mode<synchronous>, transform_indices = @transform_2, window_bounds = array<i64: 1, 128>}, {pipeline_mode = #tpu.pipeline_mode<synchronous>, transform_indices = @transform_3, window_bounds = array<i64: 128, 50>}, {pipeline_mode = #tpu.pipeline_mode<synchronous>, transform_indices = @transform_4, window_bounds = array<i64: 1, 50>}, {pipeline_mode = #tpu.pipeline_mode<synchronous>, transform_indices = @transform_5, window_bounds = array<i64: 50, 345>}, {pipeline_mode = #tpu.pipeline_mode<synchronous>, transform_indices = @transform_6, window_bounds = array<i64: 1, 345>}, {pipeline_mode = #tpu.pipeline_mode<synchronous>, transform_indices = @transform_7, window_bounds = array<i64: 2, 345>}]} {
    %c0_i32 = arith.constant 0 : i32
    %0 = arith.cmpi eq, %arg0, %c0_i32 : i32
    %1 = arith.extui %0 : i1 to i32
    %c0_i32_0 = arith.constant 0 : i32
    %2 = arith.cmpi ne, %1, %c0_i32_0 : i32
    scf.if %2 {
      %cst_9 = arith.constant 0.000000e+00 : f32
      %12 = vector.broadcast %cst_9 : f32 to vector<2x128xf32>
      %c0_10 = arith.constant 0 : index
      %c0_11 = arith.constant 0 : index
      %13 = vector.load %arg9[%c0_10, %c0_11] : memref<2x128xf32, #tpu.memory_space<vmem>>, vector<2x128xf32>
      tpu.vector_store %arg9[%c0_10, %c0_11], %12 {strides = array<i32>} : memref<2x128xf32, #tpu.memory_space<vmem>>, vector<2x128xf32>,
    } else {
    }
    %c0 = arith.constant 0 : index
    %c0_1 = arith.constant 0 : index
    %3 = vector.load %arg9[%c0, %c0_1] : memref<2x128xf32, #tpu.memory_space<vmem>>, vector<2x128xf32>
    %c0_2 = arith.constant 0 : index
    %c0_3 = arith.constant 0 : index
    %4 = vector.load %arg1[%c0_2, %c0_3] : memref<2x5888xbf16, #tpu.memory_space<vmem>>, vector<2x5888xbf16>
    %c0_4 = arith.constant 0 : index
    %c0_5 = arith.constant 0 : index
    %5 = vector.load %arg2[%c0_4, %c0_5] : memref<5888x128xbf16, #tpu.memory_space<vmem>>, vector<5888x128xbf16>
    %cst = arith.constant dense<0.000000e+00> : vector<2x128xf32>
    %6 = tpu.matmul %4, %5, %cst {dimension_numbers = #tpu.dot_dimension_numbers<[1], [0], [0], [1], [0, 0, 1, 1], [], []>} : vector<2x5888xbf16>, vector<5888x128xbf16>, vector<2x128xf32> -> vector<2x128xf32>
    %7 = arith.addf %3, %6 : vector<2x128xf32>
    %c0_6 = arith.constant 0 : index
    %c0_7 = arith.constant 0 : index
    %8 = vector.load %arg9[%c0_6, %c0_7] : memref<2x128xf32, #tpu.memory_space<vmem>>, vector<2x128xf32>
    tpu.vector_store %arg9[%c0_6, %c0_7], %7 {strides = array<i32>} : memref<2x128xf32, #tpu.memory_space<vmem>>, vector<2x128xf32>,
    %c7_i32 = arith.constant 7 : i32
    %9 = arith.cmpi eq, %arg0, %c7_i32 : i32
    %10 = arith.extui %9 : i1 to i32
    %c0_i32_8 = arith.constant 0 : i32
    %11 = arith.cmpi ne, %10, %c0_i32_8 : i32
    scf.if %11 {
      %c0_9 = arith.constant 0 : index
      %c0_10 = arith.constant 0 : index
      %12 = vector.load %arg9[%c0_9, %c0_10] : memref<2x128xf32, #tpu.memory_space<vmem>>, vector<2x128xf32>
      %c0_11 = arith.constant 0 : index
      %c0_12 = arith.constant 0 : index
      %13 = vector.load %arg3[%c0_11, %c0_12] : memref<1x128xf32, #tpu.memory_space<vmem>>, vector<1x128xf32>
      %14 = vector.broadcast %13 : vector<1x128xf32> to vector<2x128xf32>
      %15 = arith.addf %12, %14 : vector<2x128xf32>
      %cst_13 = arith.constant 0.000000e+00 : f32
      %16 = vector.broadcast %cst_13 : f32 to vector<2x128xf32>
      %17 = arith.maximumf %15, %16 : vector<2x128xf32>
      %c0_14 = arith.constant 0 : index
      %c0_15 = arith.constant 0 : index
      %18 = vector.load %arg4[%c0_14, %c0_15] : memref<128x50xf32, #tpu.memory_space<vmem>>, vector<128x50xf32>
      %cst_16 = arith.constant dense<0.000000e+00> : vector<2x50xf32>
      %19 = tpu.matmul %17, %18, %cst_16 {dimension_numbers = #tpu.dot_dimension_numbers<[1], [0], [0], [1], [0, 0, 1, 1], [], []>} : vector<2x128xf32>, vector<128x50xf32>, vector<2x50xf32> -> vector<2x50xf32>
      %c0_17 = arith.constant 0 : index
      %c0_18 = arith.constant 0 : index
      %20 = vector.load %arg5[%c0_17, %c0_18] : memref<1x50xf32, #tpu.memory_space<vmem>>, vector<1x50xf32>
      %21 = vector.broadcast %20 : vector<1x50xf32> to vector<2x50xf32>
      %22 = arith.addf %19, %21 : vector<2x50xf32>
      %cst_19 = arith.constant 0.000000e+00 : f32
      %23 = vector.broadcast %cst_19 : f32 to vector<2x50xf32>
      %24 = arith.maximumf %22, %23 : vector<2x50xf32>
      %c0_20 = arith.constant 0 : index
      %c0_21 = arith.constant 0 : index
      %25 = vector.load %arg6[%c0_20, %c0_21] : memref<50x345xf32, #tpu.memory_space<vmem>>, vector<50x345xf32>
      %cst_22 = arith.constant dense<0.000000e+00> : vector<2x345xf32>
      %26 = tpu.matmul %24, %25, %cst_22 {dimension_numbers = #tpu.dot_dimension_numbers<[1], [0], [0], [1], [0, 0, 1, 1], [], []>} : vector<2x50xf32>, vector<50x345xf32>, vector<2x345xf32> -> vector<2x345xf32>
      %c0_23 = arith.constant 0 : index
      %c0_24 = arith.constant 0 : index
      %27 = vector.load %arg7[%c0_23, %c0_24] : memref<1x345xf32, #tpu.memory_space<vmem>>, vector<1x345xf32>
      %28 = vector.broadcast %27 : vector<1x345xf32> to vector<2x345xf32>
      %29 = arith.addf %26, %28 : vector<2x345xf32>
      %c0_25 = arith.constant 0 : index
      %c0_26 = arith.constant 0 : index
      %30 = vector.load %arg8[%c0_25, %c0_26] : memref<2x345xf32, #tpu.memory_space<vmem>>, vector<2x345xf32>
      tpu.vector_store %arg8[%c0_25, %c0_26], %29 {strides = array<i32>} : memref<2x345xf32, #tpu.memory_space<vmem>>, vector<2x345xf32>,
    } else {
    }
    return
  }
  func.func @transform_0(%arg0: i32) -> (i32, i32) {
    %c0_i32 = arith.constant 0 : i32
    %c0_i32_0 = arith.constant 0 : i32
    return %c0_i32, %arg0 : i32, i32
  }
  func.func @transform_1(%arg0: i32) -> (i32, i32) {
    %c0_i32 = arith.constant 0 : i32
    %c0_i32_0 = arith.constant 0 : i32
    return %arg0, %c0_i32 : i32, i32
  }
  func.func @transform_2(%arg0: i32) -> (i32, i32) {
    %c0_i32 = arith.constant 0 : i32
    %c0_i32_0 = arith.constant 0 : i32
    %c0_i32_1 = arith.constant 0 : i32
    return %c0_i32, %c0_i32_0 : i32, i32
  }
  func.func @transform_3(%arg0: i32) -> (i32, i32) {
    %c0_i32 = arith.constant 0 : i32
    %c0_i32_0 = arith.constant 0 : i32
    %c0_i32_1 = arith.constant 0 : i32
    return %c0_i32, %c0_i32_0 : i32, i32
  }
  func.func @transform_4(%arg0: i32) -> (i32, i32) {
    %c0_i32 = arith.constant 0 : i32
    %c0_i32_0 = arith.constant 0 : i32
    %c0_i32_1 = arith.constant 0 : i32
    return %c0_i32, %c0_i32_0 : i32, i32
  }
  func.func @transform_5(%arg0: i32) -> (i32, i32) {
    %c0_i32 = arith.constant 0 : i32
    %c0_i32_0 = arith.constant 0 : i32
    %c0_i32_1 = arith.constant 0 : i32
    return %c0_i32, %c0_i32_0 : i32, i32
  }
  func.func @transform_6(%arg0: i32) -> (i32, i32) {
    %c0_i32 = arith.constant 0 : i32
    %c0_i32_0 = arith.constant 0 : i32
    %c0_i32_1 = arith.constant 0 : i32
    return %c0_i32, %c0_i32_0 : i32, i32
  }
  func.func @transform_7(%arg0: i32) -> (i32, i32) {
    %c0_i32 = arith.constant 0 : i32
    %c0_i32_0 = arith.constant 0 : i32
    %c0_i32_1 = arith.constant 0 : i32
    return %c0_i32, %c0_i32_0 : i32, i32
  }
}

</mosaic_0001>

<llo_original>
// kernel: cnn_forward.3
$region0: #{cnn_forward.3}
  #allocation0 [shape = 'u32[]', space=smem, size = 0x4, offset = 0x4, fixed_abs, tag = 'smem constant byte address 0x4 - core index']
  #allocation1 [shape = 'u32[144,128]{1,0:T(1,128)}', space=vmem, size = 0x12000, scoped, tag = 'internal scratch']
  #allocation2 [shape = 'f32[6,6,16,112]{3,2,1,0:T(8,128)}', space=vmem, size = 0x48000, scoped, tag = 'scratch operand']
  %s0 = inlined_call_operand.vmem [shape: f32[2,4,114,114], index: 0, kind: input, shape index: {}]
  %s1 = inlined_call_operand.vmem [shape: f32[750], index: 1, kind: input, shape index: {}]
  %s2 = inlined_call_operand.hbm [shape: f32[30], index: 2, kind: input, shape index: {}]
  %s3 = inlined_call_operand.vmem [shape: f32[2,30,112,112], index: 3, kind: output, shape index: {}]
  %s4 = sld [smem:[#allocation0]]
  $region94: #{cnn_forward.3} parent=0
    _
  %s6 = ssub.s32 1, %s4
  %s7 = scalar_select 0, %s6, %s4
  $region1: #{cnn_forward.3} parent=0
    #allocation3 [shape = 'u8[3072]{0}', space=smem, size = 0xc00, scoped, tag = 'input window, operand 1, single buffered']
    #allocation4 [shape = 's32[2]{0}', space=sflag, size = 0x8, scoped, tag = 'scoped memory for cnn_forward.3']
    #allocation5 [shape = 's32[2]{0}', space=sflag, size = 0x8, scoped, tag = 'scoped memory for cnn_forward.3']
    #allocation6 [shape = 'u8[512]{0}', space=smem, size = 0x200, scoped, tag = 'input window, operand 2, single buffered']
    #allocation7 [shape = 'u8[491520]{0}', space=vmem, size = 0x78000, scoped, tag = 'output window, operand 0']
    %8 = vsyncpa [#allocation5], 0
    %9 = vsyncpa [#allocation4], 0
    loop: start=0, step=1, limit=16
    $region2: #{cnn_forward.3} parent=1 // loop_pre_header
      _
    $region3: #{cnn_forward.3} parent=1 // loop_header
      %s11 = sphi 0, %s15
      %p12 = scmp.ge.s32.totalorder %s11, 16
      %s18 = sphi 0, %s30
      %s19 = sphi 0, %s26
      %s20 = sphi 0, %s18
      %s21 = sphi 0, %s19
      %s22 = sphi 0, %s20
      %s23 = sphi 0, %s21
      %s33 = sphi 0, %s35
      %s36 = sphi 0, %s33
      %s37 = sphi 0, %s36
      %s53 = sphi 0, %s37
      %s57 = sphi 0, %s57
      %s59 = sphi 0, %s57
      %s60 = sphi 0, %s59
      %s74 = sphi 0, %s60
      %s78 = sphi 0, %s78
      %s80 = sphi 0, %s78
      %s81 = sphi 0, %s80
      %s95 = sphi 0, %s81
      %s103 = sphi 0, %s105
      %s106 = sphi 0, %s103
      %s107 = sphi 0, %s106
      %s123 = sphi 0, %s107
    $region4: #{cnn_forward.3} parent=1 // loop_header_branch
      %14 = sbr.rel (%p12) target = $region8
    $region5: #{cnn_forward.3} parent=1 // loop_body
      %s16 = ssub.s32 %s11, 1
      %s17 = ssub.s32 %s11, 2
      %s24 = sadd.s32 1, %s19
      %p25 = scmp.ge.s32.totalorder %s24, 7
      %s26 = scalar_select %p25, 0, %s24
      %s27 = sadd.s32 1, %s18
      %s28 = scalar_select %p25, %s27, %s18
      %p29 = scmp.ge.s32.totalorder %s28, 2
      %s30 = scalar_select %p29, 0, %s28
      %s31 = ssub.s32 %s18, %s30
      %p32 = scmp.eq.s32.totalorder %s31, 0
      %s34 = sadd.s32 %s33, 1
      %s35 = scalar_select %p32, %s33, %s34
      %p38 = pneg %p32
      %p39 = scmp.eq.s32.totalorder %s11, 13
      %p40 = por %p38, %p39
      %p41 = scmp.ne.s32.totalorder %s33, %s36
      %p42 = scmp.eq.s32.totalorder %s11, 0
      %p43 = por %p41, %p42
      %p44 = scmp.ne.s32.totalorder %s33, %s36
      %p45 = scmp.eq.s32.totalorder %s16, 13
      %p46 = por %p44, %p45
      %p47 = scmp.ne.s32.totalorder %s36, %s37
      %p48 = scmp.eq.s32.totalorder %s16, 0
      %p49 = por %p47, %p48
      %p50 = scmp.ne.s32.totalorder %s36, %s37
      %p51 = scmp.eq.s32.totalorder %s17, 13
      %p52 = por %p50, %p51
      %p54 = scmp.ne.s32.totalorder %s37, %s53
      %p55 = scmp.eq.s32.totalorder %s17, 0
      %p56 = por %p54, %p55
      %s58 = sadd.s32 %s57, 1
      %p61 = scmp.eq.s32.totalorder %s11, 13
      %p62 = scmp.ne.s32.totalorder %s57, %s59
      %p63 = scmp.eq.s32.totalorder %s11, 0
      %p64 = por %p62, %p63
      %p65 = scmp.ne.s32.totalorder %s57, %s59
      %p66 = scmp.eq.s32.totalorder %s16, 13
      %p67 = por %p65, %p66
      %p68 = scmp.ne.s32.totalorder %s59, %s60
      %p69 = scmp.eq.s32.totalorder %s16, 0
      %p70 = por %p68, %p69
      %p71 = scmp.ne.s32.totalorder %s59, %s60
      %p72 = scmp.eq.s32.totalorder %s17, 13
      %p73 = por %p71, %p72
      %p75 = scmp.ne.s32.totalorder %s60, %s74
      %p76 = scmp.eq.s32.totalorder %s17, 0
      %p77 = por %p75, %p76
      %s79 = sadd.s32 %s78, 1
      %p82 = scmp.eq.s32.totalorder %s11, 13
      %p83 = scmp.ne.s32.totalorder %s78, %s80
      %p84 = scmp.eq.s32.totalorder %s11, 0
      %p85 = por %p83, %p84
      %p86 = scmp.ne.s32.totalorder %s78, %s80
      %p87 = scmp.eq.s32.totalorder %s16, 13
      %p88 = por %p86, %p87
      %p89 = scmp.ne.s32.totalorder %s80, %s81
      %p90 = scmp.eq.s32.totalorder %s16, 0
      %p91 = por %p89, %p90
      %p92 = scmp.ne.s32.totalorder %s80, %s81
      %p93 = scmp.eq.s32.totalorder %s17, 13
      %p94 = por %p92, %p93
      %p96 = scmp.ne.s32.totalorder %s81, %s95
      %p97 = scmp.eq.s32.totalorder %s17, 0
      %p98 = por %p96, %p97
      %s99 = ssub.s32 %s18, %s30
      %s100 = ssub.s32 %s19, %s26
      %s101 = sor.u32 %s99, %s100
      %p102 = scmp.eq.s32.totalorder %s101, 0
      %s104 = sadd.s32 %s103, 1
      %s105 = scalar_select %p102, %s103, %s104
      %p108 = pneg %p102
      %p109 = scmp.eq.s32.totalorder %s11, 13
      %p110 = por %p108, %p109
      %p111 = scmp.ne.s32.totalorder %s103, %s106
      %p112 = scmp.eq.s32.totalorder %s11, 0
      %p113 = por %p111, %p112
      %p114 = scmp.ne.s32.totalorder %s103, %s106
      %p115 = scmp.eq.s32.totalorder %s16, 13
      %p116 = por %p114, %p115
      %p117 = scmp.ne.s32.totalorder %s106, %s107
      %p118 = scmp.eq.s32.totalorder %s16, 0
      %p119 = por %p117, %p118
      %p120 = scmp.ne.s32.totalorder %s106, %s107
      %p121 = scmp.eq.s32.totalorder %s17, 13
      %p122 = por %p120, %p121
      %p124 = scmp.ne.s32.totalorder %s107, %s123
      %p125 = scmp.eq.s32.totalorder %s17, 0
      %p126 = por %p124, %p125
      %p127 = scmp.le.s32.totalorder 1, %s11
      %p128 = scmp.lt.s32.totalorder %s11, 15
      %p129 = pnand %p127, %p128
      %p130 = pneg %p129
      // Predicated region
      $region9: #{cnn_forward.3} parent=5 // pred_check
        _
      $region10: #{cnn_forward.3} parent=5 // pred_check_branch
        %132 = sbr.rel (%p129) target = $region12
      $region11: #{cnn_forward.3} parent=5 // pred_region
        %s133 = ssub.s32 %s11, 1
        // Predicated region
        $region13: #{cnn_forward.3} parent=11 // pred_check
          %p134 = pneg %p70
        $region14: #{cnn_forward.3} parent=11 // pred_check_branch
          %136 = sbr.rel (%p134) target = $region16
        $region15: #{cnn_forward.3} parent=11 // pred_region
          %s138 = ssub.s32 96, 96
          %139 = vsyncadd [#allocation5], %s138
          %s141 = sshll.u32 %s1, 4
          %s142 = int_to_ptr.vmem [resolvable:$true] %s141
          %144 = dma.vmem_to_smem %s142, 96, [#allocation3], [#allocation5]
        $region16: #{cnn_forward.3} parent=11 // pred_fallthru
          _
        // Predicated region
        $region17: #{cnn_forward.3} parent=11 // pred_check
          %p145 = pneg %p91
        $region18: #{cnn_forward.3} parent=11 // pred_check_branch
          %147 = sbr.rel (%p145) target = $region20
        $region19: #{cnn_forward.3} parent=11 // pred_region
          %s149 = ssub.s32 16, 16
          %150 = vsyncadd [#allocation4], %s149
          %153 = dma.hbm_to_smem %s2, 16, [#allocation6], [#allocation4]
        $region20: #{cnn_forward.3} parent=11 // pred_fallthru
          _
      $region12: #{cnn_forward.3} parent=5 // pred_fallthru
        _
      %p154 = scmp.lt.s32.totalorder %s11, 14
      // Predicated region
      $region21: #{cnn_forward.3} parent=5 // pred_check
        %p155 = pneg %p154
      $region22: #{cnn_forward.3} parent=5 // pred_check_branch
        %157 = sbr.rel (%p155) target = $region24
      $region23: #{cnn_forward.3} parent=5 // pred_region
        // Predicated region
        $region25: #{cnn_forward.3} parent=23 // pred_check
          %p158 = pneg %p43
        $region26: #{cnn_forward.3} parent=23 // pred_check_branch
          %160 = sbr.rel (%p158) target = $region28
        $region27: #{cnn_forward.3} parent=23 // pred_region
          %p161 = scmp.lt.s32.totalorder %s18, 1
          %s162 = scalar_select %p161, %s18, 1
          %s163 = smul.addr %s162, 60
          %s164 = smul.addr %s163, 8
          %s165 = scalar_lea.vmem %s0, %s164
        $region28: #{cnn_forward.3} parent=23 // pred_fallthru
          _
      $region24: #{cnn_forward.3} parent=5 // pred_fallthru
        _
      %p166 = scmp.le.s32.totalorder 1, %s11
      %p167 = scmp.lt.s32.totalorder %s11, 15
      %p168 = pnand %p166, %p167
      %p169 = pneg %p168
      // Predicated region
      $region29: #{cnn_forward.3} parent=5 // pred_check
        _
      $region30: #{cnn_forward.3} parent=5 // pred_check_branch
        %171 = sbr.rel (%p168) target = $region32
      $region31: #{cnn_forward.3} parent=5 // pred_region
        %s172 = ssub.s32 %s11, 1
        // Predicated region
        $region33: #{cnn_forward.3} parent=31 // pred_check
          %p173 = pneg %p70
        $region34: #{cnn_forward.3} parent=31 // pred_check_branch
          %175 = sbr.rel (%p173) target = $region36
        $region35: #{cnn_forward.3} parent=31 // pred_region
          %176 = dma.done [#allocation5], 96
        $region36: #{cnn_forward.3} parent=31 // pred_fallthru
          _
        // Predicated region
        $region37: #{cnn_forward.3} parent=31 // pred_check
          %p177 = pneg %p91
        $region38: #{cnn_forward.3} parent=31 // pred_check_branch
          %179 = sbr.rel (%p177) target = $region40
        $region39: #{cnn_forward.3} parent=31 // pred_region
          %180 = dma.done [#allocation4], 16
        $region40: #{cnn_forward.3} parent=31 // pred_fallthru
          _
        %181 = sfence
        %p182 = scmp.lt.s32.totalorder %s20, 1
        %s183 = scalar_select %p182, %s20, 1
        %s184 = smul.addr %s183, 60
        %s185 = smul.addr %s184, 8
        %s186 = scalar_lea.vmem %s0, %s185
        %p187 = pneg %p49
        %p188 = pneg %p46
        %p189 = pneg %p70
        %p190 = pneg %p67
        %p191 = pneg %p91
        %p192 = pneg %p88
        %p193 = pneg %p119
        %p194 = pneg %p116
        %s195 = sand.u32 %s106, 1
        %s196 = sand.u32 %s106, 1
        %s197 = smul.addr %s196, 480
        %s198 = scalar_lea.vmem [#allocation7], %s197
        %p199 = scmp.lt.s32.totalorder %s20, 1
        %s200 = scalar_select %p199, %s20, 1
        %s201 = smul.addr %s200, 60
        %s202 = smul.addr %s201, 8
        %s203 = scalar_lea.vmem %s0, %s202
        %s204 = smul.u32 2, %s21
        %s205 = smul.u32 %s21, 16
        %s206 = scalar_lea.vmem %s203, %s205
        %v207 = vld [vmem:[%s206] sm:$0xff]
        %v208 = vld [vmem:[%s206 + $0x8] sm:$0xff]
        %vm209 = vcmask 916480
        %210 = vst.msk [vmem:[#allocation2] sm:$0xff] %vm209, %v207
        %211 = vst.msk [vmem:[#allocation2 + $0x8] sm:$0xff] %vm209, %v208
        %s212 = sadd.s32 %s205, 120
        %s213 = scalar_lea.vmem %s203, %s212
        %v214 = vld [vmem:[%s213] sm:$0xff]
        %v215 = vld [vmem:[%s213 + $0x8] sm:$0xff]
        %s216 = scalar_lea.vmem [#allocation2], 16
        %217 = vst.msk [vmem:[%s216] sm:$0xff] %vm209, %v214
        %218 = vst.msk [vmem:[%s216 + $0x8] sm:$0xff] %vm209, %v215
        %v219 = vld [vmem:[%s206] sm:$0xff]
        %v220 = vld [vmem:[%s206 + $0x8] sm:$0xff]
        %223 = vrot.lane.b32.xlu0 %v219, 127
        %v224 = vpop.permute.xlu0 %223
        %225 = vrot.lane.b32.xlu0 %v220, 127
        %v226 = vpop.permute.xlu0 %225
        %s229 = scalar_lea.vmem [#allocation2], 32
        %230 = vst.msk [vmem:[%s229] sm:$0xff] %vm209, %v224
        %231 = vst.msk [vmem:[%s229 + $0x8] sm:$0xff] %vm209, %v226
        %v232 = vld [vmem:[%s213] sm:$0xff]
        %v233 = vld [vmem:[%s213 + $0x8] sm:$0xff]
        %236 = vrot.lane.b32.xlu0 %v232, 127
        %v237 = vpop.permute.xlu0 %236
        %238 = vrot.lane.b32.xlu0 %v233, 127
        %v239 = vpop.permute.xlu0 %238
        %s242 = scalar_lea.vmem [#allocation2], 48
        %243 = vst.msk [vmem:[%s242] sm:$0xff] %vm209, %v237
        %244 = vst.msk [vmem:[%s242 + $0x8] sm:$0xff] %vm209, %v239
        %v245 = vld [vmem:[%s206] sm:$0xff]
        %v246 = vld [vmem:[%s206 + $0x8] sm:$0xff]
        %249 = vrot.lane.b32.xlu0 %v245, 126
        %v250 = vpop.permute.xlu0 %249
        %251 = vrot.lane.b32.xlu0 %v246, 126
        %v252 = vpop.permute.xlu0 %251
        %s255 = scalar_lea.vmem [#allocation2], 64
        %256 = vst.msk [vmem:[%s255] sm:$0xff] %vm209, %v250
        %257 = vst.msk [vmem:[%s255 + $0x8] sm:$0xff] %vm209, %v252
        %v258 = vld [vmem:[%s213] sm:$0xff]
        %v259 = vld [vmem:[%s213 + $0x8] sm:$0xff]
        %262 = vrot.lane.b32.xlu0 %v258, 126
        %v263 = vpop.permute.xlu0 %262
        %264 = vrot.lane.b32.xlu0 %v259, 126
        %v265 = vpop.permute.xlu0 %264
        %s268 = scalar_lea.vmem [#allocation2], 80
        %269 = vst.msk [vmem:[%s268] sm:$0xff] %vm209, %v263
        %270 = vst.msk [vmem:[%s268 + $0x8] sm:$0xff] %vm209, %v265
        %s271 = sadd.s32 %s205, 240
        %s272 = scalar_lea.vmem %s203, %s271
        %v273 = vld [vmem:[%s272] sm:$0xff]
        %v274 = vld [vmem:[%s272 + $0x8] sm:$0xff]
        %s275 = scalar_lea.vmem [#allocation2], 96
        %276 = vst.msk [vmem:[%s275] sm:$0xff] %vm209, %v273
        %277 = vst.msk [vmem:[%s275 + $0x8] sm:$0xff] %vm209, %v274
        %s278 = sadd.s32 %s205, 360
        %s279 = scalar_lea.vmem %s203, %s278
        %v280 = vld [vmem:[%s279] sm:$0xff]
        %v281 = vld [vmem:[%s279 + $0x8] sm:$0xff]
        %s282 = scalar_lea.vmem [#allocation2], 112
        %283 = vst.msk [vmem:[%s282] sm:$0xff] %vm209, %v280
        %284 = vst.msk [vmem:[%s282 + $0x8] sm:$0xff] %vm209, %v281
        %v285 = vld [vmem:[%s272] sm:$0xff]
        %v286 = vld [vmem:[%s272 + $0x8] sm:$0xff]
        %289 = vrot.lane.b32.xlu0 %v285, 127
        %v290 = vpop.permute.xlu0 %289
        %291 = vrot.lane.b32.xlu0 %v286, 127
        %v292 = vpop.permute.xlu0 %291
        %s295 = scalar_lea.vmem [#allocation2], 128
        %296 = vst.msk [vmem:[%s295] sm:$0xff] %vm209, %v290
        %297 = vst.msk [vmem:[%s295 + $0x8] sm:$0xff] %vm209, %v292
        %v298 = vld [vmem:[%s279] sm:$0xff]
        %v299 = vld [vmem:[%s279 + $0x8] sm:$0xff]
        %302 = vrot.lane.b32.xlu0 %v298, 127
        %v303 = vpop.permute.xlu0 %302
        %304 = vrot.lane.b32.xlu0 %v299, 127
        %v305 = vpop.permute.xlu0 %304
        %s308 = scalar_lea.vmem [#allocation2], 144
        %309 = vst.msk [vmem:[%s308] sm:$0xff] %vm209, %v303
        %310 = vst.msk [vmem:[%s308 + $0x8] sm:$0xff] %vm209, %v305
        %v311 = vld [vmem:[%s272] sm:$0xff]
        %v312 = vld [vmem:[%s272 + $0x8] sm:$0xff]
        %315 = vrot.lane.b32.xlu0 %v311, 126
        %v316 = vpop.permute.xlu0 %315
        %317 = vrot.lane.b32.xlu0 %v312, 126
        %v318 = vpop.permute.xlu0 %317
        %s321 = scalar_lea.vmem [#allocation2], 160
        %322 = vst.msk [vmem:[%s321] sm:$0xff] %vm209, %v316
        %323 = vst.msk [vmem:[%s321 + $0x8] sm:$0xff] %vm209, %v318
        %v324 = vld [vmem:[%s279] sm:$0xff]
        %v325 = vld [vmem:[%s279 + $0x8] sm:$0xff]
        %328 = vrot.lane.b32.xlu0 %v324, 126
        %v329 = vpop.permute.xlu0 %328
        %330 = vrot.lane.b32.xlu0 %v325, 126
        %v331 = vpop.permute.xlu0 %330
        %s334 = scalar_lea.vmem [#allocation2], 176
        %335 = vst.msk [vmem:[%s334] sm:$0xff] %vm209, %v329
        %336 = vst.msk [vmem:[%s334 + $0x8] sm:$0xff] %vm209, %v331
        %s337 = sadd.s32 %s205, 1
        %s338 = scalar_lea.vmem %s203, %s337
        %v339 = vld [vmem:[%s338] sm:$0xff]
        %v340 = vld [vmem:[%s338 + $0x8] sm:$0xff]
        %s341 = scalar_lea.vmem [#allocation2], 192
        %342 = vst.msk [vmem:[%s341] sm:$0xff] %vm209, %v339
        %343 = vst.msk [vmem:[%s341 + $0x8] sm:$0xff] %vm209, %v340
        %s344 = sadd.s32 %s337, 120
        %s345 = scalar_lea.vmem %s203, %s344
        %v346 = vld [vmem:[%s345] sm:$0xff]
        %v347 = vld [vmem:[%s345 + $0x8] sm:$0xff]
        %s348 = scalar_lea.vmem [#allocation2], 208
        %349 = vst.msk [vmem:[%s348] sm:$0xff] %vm209, %v346
        %350 = vst.msk [vmem:[%s348 + $0x8] sm:$0xff] %vm209, %v347
        %v351 = vld [vmem:[%s338] sm:$0xff]
        %v352 = vld [vmem:[%s338 + $0x8] sm:$0xff]
        %355 = vrot.lane.b32.xlu0 %v351, 127
        %v356 = vpop.permute.xlu0 %355
        %357 = vrot.lane.b32.xlu0 %v352, 127
        %v358 = vpop.permute.xlu0 %357
        %s361 = scalar_lea.vmem [#allocation2], 224
        %362 = vst.msk [vmem:[%s361] sm:$0xff] %vm209, %v356
        %363 = vst.msk [vmem:[%s361 + $0x8] sm:$0xff] %vm209, %v358
        %v364 = vld [vmem:[%s345] sm:$0xff]
        %v365 = vld [vmem:[%s345 + $0x8] sm:$0xff]
        %368 = vrot.lane.b32.xlu0 %v364, 127
        %v369 = vpop.permute.xlu0 %368
        %370 = vrot.lane.b32.xlu0 %v365, 127
        %v371 = vpop.permute.xlu0 %370
        %s374 = scalar_lea.vmem [#allocation2], 240
        %375 = vst.msk [vmem:[%s374] sm:$0xff] %vm209, %v369
        %376 = vst.msk [vmem:[%s374 + $0x8] sm:$0xff] %vm209, %v371
        %v377 = vld [vmem:[%s338] sm:$0xff]
        %v378 = vld [vmem:[%s338 + $0x8] sm:$0xff]
        %381 = vrot.lane.b32.xlu0 %v377, 126
        %v382 = vpop.permute.xlu0 %381
        %383 = vrot.lane.b32.xlu0 %v378, 126
        %v384 = vpop.permute.xlu0 %383
        %s387 = scalar_lea.vmem [#allocation2], 256
        %388 = vst.msk [vmem:[%s387] sm:$0xff] %vm209, %v382
        %389 = vst.msk [vmem:[%s387 + $0x8] sm:$0xff] %vm209, %v384
        %v390 = vld [vmem:[%s345] sm:$0xff]
        %v391 = vld [vmem:[%s345 + $0x8] sm:$0xff]
        %394 = vrot.lane.b32.xlu0 %v390, 126
        %v395 = vpop.permute.xlu0 %394
        %396 = vrot.lane.b32.xlu0 %v391, 126
        %v397 = vpop.permute.xlu0 %396
        %s400 = scalar_lea.vmem [#allocation2], 272
        %401 = vst.msk [vmem:[%s400] sm:$0xff] %vm209, %v395
        %402 = vst.msk [vmem:[%s400 + $0x8] sm:$0xff] %vm209, %v397
        %s403 = sadd.s32 %s337, 240
        %s404 = scalar_lea.vmem %s203, %s403
        %v405 = vld [vmem:[%s404] sm:$0xff]
        %v406 = vld [vmem:[%s404 + $0x8] sm:$0xff]
        %s407 = scalar_lea.vmem [#allocation2], 288
        %408 = vst.msk [vmem:[%s407] sm:$0xff] %vm209, %v405
        %409 = vst.msk [vmem:[%s407 + $0x8] sm:$0xff] %vm209, %v406
        %s410 = sadd.s32 %s337, 360
        %s411 = scalar_lea.vmem %s203, %s410
        %v412 = vld [vmem:[%s411] sm:$0xff]
        %v413 = vld [vmem:[%s411 + $0x8] sm:$0xff]
        %s414 = scalar_lea.vmem [#allocation2], 304
        %415 = vst.msk [vmem:[%s414] sm:$0xff] %vm209, %v412
        %416 = vst.msk [vmem:[%s414 + $0x8] sm:$0xff] %vm209, %v413
        %v417 = vld [vmem:[%s404] sm:$0xff]
        %v418 = vld [vmem:[%s404 + $0x8] sm:$0xff]
        %421 = vrot.lane.b32.xlu0 %v417, 127
        %v422 = vpop.permute.xlu0 %421
        %423 = vrot.lane.b32.xlu0 %v418, 127
        %v424 = vpop.permute.xlu0 %423
        %s427 = scalar_lea.vmem [#allocation2], 320
        %428 = vst.msk [vmem:[%s427] sm:$0xff] %vm209, %v422
        %429 = vst.msk [vmem:[%s427 + $0x8] sm:$0xff] %vm209, %v424
        %v430 = vld [vmem:[%s411] sm:$0xff]
        %v431 = vld [vmem:[%s411 + $0x8] sm:$0xff]
        %434 = vrot.lane.b32.xlu0 %v430, 127
        %v435 = vpop.permute.xlu0 %434
        %436 = vrot.lane.b32.xlu0 %v431, 127
        %v437 = vpop.permute.xlu0 %436
        %s440 = scalar_lea.vmem [#allocation2], 336
        %441 = vst.msk [vmem:[%s440] sm:$0xff] %vm209, %v435
        %442 = vst.msk [vmem:[%s440 + $0x8] sm:$0xff] %vm209, %v437
        %v443 = vld [vmem:[%s404] sm:$0xff]
        %v444 = vld [vmem:[%s404 + $0x8] sm:$0xff]
        %447 = vrot.lane.b32.xlu0 %v443, 126
        %v448 = vpop.permute.xlu0 %447
        %449 = vrot.lane.b32.xlu0 %v444, 126
        %v450 = vpop.permute.xlu0 %449
        %s453 = scalar_lea.vmem [#allocation2], 352
        %454 = vst.msk [vmem:[%s453] sm:$0xff] %vm209, %v448
        %455 = vst.msk [vmem:[%s453 + $0x8] sm:$0xff] %vm209, %v450
        %v456 = vld [vmem:[%s411] sm:$0xff]
        %v457 = vld [vmem:[%s411 + $0x8] sm:$0xff]
        %460 = vrot.lane.b32.xlu0 %v456, 126
        %v461 = vpop.permute.xlu0 %460
        %462 = vrot.lane.b32.xlu0 %v457, 126
        %v463 = vpop.permute.xlu0 %462
        %s466 = scalar_lea.vmem [#allocation2], 368
        %467 = vst.msk [vmem:[%s466] sm:$0xff] %vm209, %v461
        %468 = vst.msk [vmem:[%s466 + $0x8] sm:$0xff] %vm209, %v463
        %s469 = sadd.s32 %s205, 2
        %s470 = scalar_lea.vmem %s203, %s469
        %v471 = vld [vmem:[%s470] sm:$0xff]
        %v472 = vld [vmem:[%s470 + $0x8] sm:$0xff]
        %s473 = scalar_lea.vmem [#allocation2], 384
        %474 = vst.msk [vmem:[%s473] sm:$0xff] %vm209, %v471
        %475 = vst.msk [vmem:[%s473 + $0x8] sm:$0xff] %vm209, %v472
        %s476 = sadd.s32 %s469, 120
        %s477 = scalar_lea.vmem %s203, %s476
        %v478 = vld [vmem:[%s477] sm:$0xff]
        %v479 = vld [vmem:[%s477 + $0x8] sm:$0xff]
        %s480 = scalar_lea.vmem [#allocation2], 400
        %481 = vst.msk [vmem:[%s480] sm:$0xff] %vm209, %v478
        %482 = vst.msk [vmem:[%s480 + $0x8] sm:$0xff] %vm209, %v479
        %v483 = vld [vmem:[%s470] sm:$0xff]
        %v484 = vld [vmem:[%s470 + $0x8] sm:$0xff]
        %487 = vrot.lane.b32.xlu0 %v483, 127
        %v488 = vpop.permute.xlu0 %487
        %489 = vrot.lane.b32.xlu0 %v484, 127
        %v490 = vpop.permute.xlu0 %489
        %s493 = scalar_lea.vmem [#allocation2], 416
        %494 = vst.msk [vmem:[%s493] sm:$0xff] %vm209, %v488
        %495 = vst.msk [vmem:[%s493 + $0x8] sm:$0xff] %vm209, %v490
        %v496 = vld [vmem:[%s477] sm:$0xff]
        %v497 = vld [vmem:[%s477 + $0x8] sm:$0xff]
        %500 = vrot.lane.b32.xlu0 %v496, 127
        %v501 = vpop.permute.xlu0 %500
        %502 = vrot.lane.b32.xlu0 %v497, 127
        %v503 = vpop.permute.xlu0 %502
        %s506 = scalar_lea.vmem [#allocation2], 432
        %507 = vst.msk [vmem:[%s506] sm:$0xff] %vm209, %v501
        %508 = vst.msk [vmem:[%s506 + $0x8] sm:$0xff] %vm209, %v503
        %v509 = vld [vmem:[%s470] sm:$0xff]
        %v510 = vld [vmem:[%s470 + $0x8] sm:$0xff]
        %513 = vrot.lane.b32.xlu0 %v509, 126
        %v514 = vpop.permute.xlu0 %513
        %515 = vrot.lane.b32.xlu0 %v510, 126
        %v516 = vpop.permute.xlu0 %515
        %s519 = scalar_lea.vmem [#allocation2], 448
        %520 = vst.msk [vmem:[%s519] sm:$0xff] %vm209, %v514
        %521 = vst.msk [vmem:[%s519 + $0x8] sm:$0xff] %vm209, %v516
        %v522 = vld [vmem:[%s477] sm:$0xff]
        %v523 = vld [vmem:[%s477 + $0x8] sm:$0xff]
        %526 = vrot.lane.b32.xlu0 %v522, 126
        %v527 = vpop.permute.xlu0 %526
        %528 = vrot.lane.b32.xlu0 %v523, 126
        %v529 = vpop.permute.xlu0 %528
        %s532 = scalar_lea.vmem [#allocation2], 464
        %533 = vst.msk [vmem:[%s532] sm:$0xff] %vm209, %v527
        %534 = vst.msk [vmem:[%s532 + $0x8] sm:$0xff] %vm209, %v529
        %s535 = sadd.s32 %s469, 240
        %s536 = scalar_lea.vmem %s203, %s535
        %v537 = vld [vmem:[%s536] sm:$0xff]
        %v538 = vld [vmem:[%s536 + $0x8] sm:$0xff]
        %s539 = scalar_lea.vmem [#allocation2], 480
        %540 = vst.msk [vmem:[%s539] sm:$0xff] %vm209, %v537
        %541 = vst.msk [vmem:[%s539 + $0x8] sm:$0xff] %vm209, %v538
        %s542 = sadd.s32 %s469, 360
        %s543 = scalar_lea.vmem %s203, %s542
        %v544 = vld [vmem:[%s543] sm:$0xff]
        %v545 = vld [vmem:[%s543 + $0x8] sm:$0xff]
        %s546 = scalar_lea.vmem [#allocation2], 496
        %547 = vst.msk [vmem:[%s546] sm:$0xff] %vm209, %v544
        %548 = vst.msk [vmem:[%s546 + $0x8] sm:$0xff] %vm209, %v545
        %v549 = vld [vmem:[%s536] sm:$0xff]
        %v550 = vld [vmem:[%s536 + $0x8] sm:$0xff]
        %553 = vrot.lane.b32.xlu0 %v549, 127
        %v554 = vpop.permute.xlu0 %553
        %555 = vrot.lane.b32.xlu0 %v550, 127
        %v556 = vpop.permute.xlu0 %555
        %s559 = scalar_lea.vmem [#allocation2], 512
        %560 = vst.msk [vmem:[%s559] sm:$0xff] %vm209, %v554
        %561 = vst.msk [vmem:[%s559 + $0x8] sm:$0xff] %vm209, %v556
        %v562 = vld [vmem:[%s543] sm:$0xff]
        %v563 = vld [vmem:[%s543 + $0x8] sm:$0xff]
        %566 = vrot.lane.b32.xlu0 %v562, 127
        %v567 = vpop.permute.xlu0 %566
        %568 = vrot.lane.b32.xlu0 %v563, 127
        %v569 = vpop.permute.xlu0 %568
        %s572 = scalar_lea.vmem [#allocation2], 528
        %573 = vst.msk [vmem:[%s572] sm:$0xff] %vm209, %v567
        %574 = vst.msk [vmem:[%s572 + $0x8] sm:$0xff] %vm209, %v569
        %v575 = vld [vmem:[%s536] sm:$0xff]
        %v576 = vld [vmem:[%s536 + $0x8] sm:$0xff]
        %579 = vrot.lane.b32.xlu0 %v575, 126
        %v580 = vpop.permute.xlu0 %579
        %581 = vrot.lane.b32.xlu0 %v576, 126
        %v582 = vpop.permute.xlu0 %581
        %s585 = scalar_lea.vmem [#allocation2], 544
        %586 = vst.msk [vmem:[%s585] sm:$0xff] %vm209, %v580
        %587 = vst.msk [vmem:[%s585 + $0x8] sm:$0xff] %vm209, %v582
        %v588 = vld [vmem:[%s543] sm:$0xff]
        %v589 = vld [vmem:[%s543 + $0x8] sm:$0xff]
        %592 = vrot.lane.b32.xlu0 %v588, 126
        %v593 = vpop.permute.xlu0 %592
        %594 = vrot.lane.b32.xlu0 %v589, 126
        %v595 = vpop.permute.xlu0 %594
        %s598 = scalar_lea.vmem [#allocation2], 560
        %599 = vst.msk [vmem:[%s598] sm:$0xff] %vm209, %v593
        %600 = vst.msk [vmem:[%s598 + $0x8] sm:$0xff] %vm209, %v595
        loop: start=0, step=1, limit=30
        $region41: #{cnn_forward.3} parent=31 // loop_pre_header
          _
        $region42: #{cnn_forward.3} parent=31 // loop_header
          %s602 = sphi 0, %s606
          %p603 = scmp.ge.s32.totalorder %s602, 30
        $region43: #{cnn_forward.3} parent=31 // loop_header_branch
          %605 = sbr.rel (%p603) target = $region47
        $region44: #{cnn_forward.3} parent=31 // loop_body
          %s607 = smul.u32 %s602, 25
          %s608 = sld [smem:[#allocation3 + %s607]]
          %v609 = vld [vmem:[#allocation2] sm:$0xff]
          %v610 = vld [vmem:[#allocation2 + $0x8] sm:$0xff]
          %v611 = vstv %s608
          %v612 = vmul.f32 %v611, %v609
          %v613 = vmul.f32 %v611, %v610
          %v614 = vadd.f32 %v612, 0.0
          %v615 = vadd.f32 %v613, 0.0
          %v616 = vld [vmem:[%s216] sm:$0xff]
          %v617 = vld [vmem:[%s216 + $0x8] sm:$0xff]
          %v618 = vmul.f32 %v611, %v616
          %v619 = vmul.f32 %v611, %v617
          %v620 = vadd.f32 %v618, 0.0
          %v621 = vadd.f32 %v619, 0.0
          %v622 = vld [vmem:[%s275] sm:$0xff]
          %v623 = vld [vmem:[%s275 + $0x8] sm:$0xff]
          %v624 = vmul.f32 %v611, %v622
          %v625 = vmul.f32 %v611, %v623
          %v626 = vadd.f32 %v624, 0.0
          %v627 = vadd.f32 %v625, 0.0
          %v628 = vld [vmem:[%s282] sm:$0xff]
          %v629 = vld [vmem:[%s282 + $0x8] sm:$0xff]
          %v630 = vmul.f32 %v611, %v628
          %v631 = vmul.f32 %v611, %v629
          %v632 = vadd.f32 %v630, 0.0
          %v633 = vadd.f32 %v631, 0.0
          %s634 = sadd.s32 %s607, 1
          %s635 = sld [smem:[#allocation3 + %s634]]
          %v636 = vstv %s635
          %v637 = vmul.f32 %v636, %v616
          %v638 = vmul.f32 %v636, %v617
          %v639 = vadd.f32 %v614, %v637
          %v640 = vadd.f32 %v615, %v638
          %v641 = vld [vmem:[%s229] sm:$0xff]
          %v642 = vld [vmem:[%s229 + $0x8] sm:$0xff]
          %v643 = vmul.f32 %v636, %v641
          %v644 = vmul.f32 %v636, %v642
          %v645 = vadd.f32 %v620, %v643
          %v646 = vadd.f32 %v621, %v644
          %v647 = vmul.f32 %v636, %v628
          %v648 = vmul.f32 %v636, %v629
          %v649 = vadd.f32 %v626, %v647
          %v650 = vadd.f32 %v627, %v648
          %v651 = vld [vmem:[%s295] sm:$0xff]
          %v652 = vld [vmem:[%s295 + $0x8] sm:$0xff]
          %v653 = vmul.f32 %v636, %v651
          %v654 = vmul.f32 %v636, %v652
          %v655 = vadd.f32 %v632, %v653
          %v656 = vadd.f32 %v633, %v654
          %s657 = sadd.s32 %s607, 2
          %s658 = sld [smem:[#allocation3 + %s657]]
          %v659 = vstv %s658
          %v660 = vmul.f32 %v659, %v641
          %v661 = vmul.f32 %v659, %v642
          %v662 = vadd.f32 %v639, %v660
          %v663 = vadd.f32 %v640, %v661
          %v664 = vld [vmem:[%s242] sm:$0xff]
          %v665 = vld [vmem:[%s242 + $0x8] sm:$0xff]
          %v666 = vmul.f32 %v659, %v664
          %v667 = vmul.f32 %v659, %v665
          %v668 = vadd.f32 %v645, %v666
          %v669 = vadd.f32 %v646, %v667
          %v670 = vmul.f32 %v659, %v651
          %v671 = vmul.f32 %v659, %v652
          %v672 = vadd.f32 %v649, %v670
          %v673 = vadd.f32 %v650, %v671
          %v674 = vld [vmem:[%s308] sm:$0xff]
          %v675 = vld [vmem:[%s308 + $0x8] sm:$0xff]
          %v676 = vmul.f32 %v659, %v674
          %v677 = vmul.f32 %v659, %v675
          %v678 = vadd.f32 %v655, %v676
          %v679 = vadd.f32 %v656, %v677
          %s680 = sadd.s32 %s607, 3
          %s681 = sld [smem:[#allocation3 + %s680]]
          %v682 = vstv %s681
          %v683 = vmul.f32 %v682, %v664
          %v684 = vmul.f32 %v682, %v665
          %v685 = vadd.f32 %v662, %v683
          %v686 = vadd.f32 %v663, %v684
          %v687 = vld [vmem:[%s255] sm:$0xff]
          %v688 = vld [vmem:[%s255 + $0x8] sm:$0xff]
          %v689 = vmul.f32 %v682, %v687
          %v690 = vmul.f32 %v682, %v688
          %v691 = vadd.f32 %v668, %v689
          %v692 = vadd.f32 %v669, %v690
          %v693 = vmul.f32 %v682, %v674
          %v694 = vmul.f32 %v682, %v675
          %v695 = vadd.f32 %v672, %v693
          %v696 = vadd.f32 %v673, %v694
          %v697 = vld [vmem:[%s321] sm:$0xff]
          %v698 = vld [vmem:[%s321 + $0x8] sm:$0xff]
          %v699 = vmul.f32 %v682, %v697
          %v700 = vmul.f32 %v682, %v698
          %v701 = vadd.f32 %v678, %v699
          %v702 = vadd.f32 %v679, %v700
          %s703 = sadd.s32 %s607, 4
          %s704 = sld [smem:[#allocation3 + %s703]]
          %v705 = vstv %s704
          %v706 = vmul.f32 %v705, %v687
          %v707 = vmul.f32 %v705, %v688
          %v708 = vadd.f32 %v685, %v706
          %v709 = vadd.f32 %v686, %v707
          %v710 = vld [vmem:[%s268] sm:$0xff]
          %v711 = vld [vmem:[%s268 + $0x8] sm:$0xff]
          %v712 = vmul.f32 %v705, %v710
          %v713 = vmul.f32 %v705, %v711
          %v714 = vadd.f32 %v691, %v712
          %v715 = vadd.f32 %v692, %v713
          %v716 = vmul.f32 %v705, %v697
          %v717 = vmul.f32 %v705, %v698
          %v718 = vadd.f32 %v695, %v716
          %v719 = vadd.f32 %v696, %v717
          %v720 = vld [vmem:[%s334] sm:$0xff]
          %v721 = vld [vmem:[%s334 + $0x8] sm:$0xff]
          %v722 = vmul.f32 %v705, %v720
          %v723 = vmul.f32 %v705, %v721
          %v724 = vadd.f32 %v701, %v722
          %v725 = vadd.f32 %v702, %v723
          %s726 = sadd.s32 %s607, 5
          %s727 = sld [smem:[#allocation3 + %s726]]
          %v728 = vstv %s727
          %v729 = vmul.f32 %v728, %v622
          %v730 = vmul.f32 %v728, %v623
          %v731 = vadd.f32 %v708, %v729
          %v732 = vadd.f32 %v709, %v730
          %v733 = vmul.f32 %v728, %v628
          %v734 = vmul.f32 %v728, %v629
          %v735 = vadd.f32 %v714, %v733
          %v736 = vadd.f32 %v715, %v734
          %v737 = vld [vmem:[%s341] sm:$0xff]
          %v738 = vld [vmem:[%s341 + $0x8] sm:$0xff]
          %v739 = vmul.f32 %v728, %v737
          %v740 = vmul.f32 %v728, %v738
          %v741 = vadd.f32 %v718, %v739
          %v742 = vadd.f32 %v719, %v740
          %v743 = vld [vmem:[%s348] sm:$0xff]
          %v744 = vld [vmem:[%s348 + $0x8] sm:$0xff]
          %v745 = vmul.f32 %v728, %v743
          %v746 = vmul.f32 %v728, %v744
          %v747 = vadd.f32 %v724, %v745
          %v748 = vadd.f32 %v725, %v746
          %s749 = sadd.s32 %s607, 6
          %s750 = sld [smem:[#allocation3 + %s749]]
          %v751 = vstv %s750
          %v752 = vmul.f32 %v751, %v628
          %v753 = vmul.f32 %v751, %v629
          %v754 = vadd.f32 %v731, %v752
          %v755 = vadd.f32 %v732, %v753
          %v756 = vmul.f32 %v751, %v651
          %v757 = vmul.f32 %v751, %v652
          %v758 = vadd.f32 %v735, %v756
          %v759 = vadd.f32 %v736, %v757
          %v760 = vmul.f32 %v751, %v743
          %v761 = vmul.f32 %v751, %v744
          %v762 = vadd.f32 %v741, %v760
          %v763 = vadd.f32 %v742, %v761
          %v764 = vld [vmem:[%s361] sm:$0xff]
          %v765 = vld [vmem:[%s361 + $0x8] sm:$0xff]
          %v766 = vmul.f32 %v751, %v764
          %v767 = vmul.f32 %v751, %v765
          %v768 = vadd.f32 %v747, %v766
          %v769 = vadd.f32 %v748, %v767
          %s770 = sadd.s32 %s607, 7
          %s771 = sld [smem:[#allocation3 + %s770]]
          %v772 = vstv %s771
          %v773 = vmul.f32 %v772, %v651
          %v774 = vmul.f32 %v772, %v652
          %v775 = vadd.f32 %v754, %v773
          %v776 = vadd.f32 %v755, %v774
          %v777 = vmul.f32 %v772, %v674
          %v778 = vmul.f32 %v772, %v675
          %v779 = vadd.f32 %v758, %v777
          %v780 = vadd.f32 %v759, %v778
          %v781 = vmul.f32 %v772, %v764
          %v782 = vmul.f32 %v772, %v765
          %v783 = vadd.f32 %v762, %v781
          %v784 = vadd.f32 %v763, %v782
          %v785 = vld [vmem:[%s374] sm:$0xff]
          %v786 = vld [vmem:[%s374 + $0x8] sm:$0xff]
          %v787 = vmul.f32 %v772, %v785
          %v788 = vmul.f32 %v772, %v786
          %v789 = vadd.f32 %v768, %v787
          %v790 = vadd.f32 %v769, %v788
          %s791 = sadd.s32 %s607, 8
          %s792 = sld [smem:[#allocation3 + %s791]]
          %v793 = vstv %s792
          %v794 = vmul.f32 %v793, %v674
          %v795 = vmul.f32 %v793, %v675
          %v796 = vadd.f32 %v775, %v794
          %v797 = vadd.f32 %v776, %v795
          %v798 = vmul.f32 %v793, %v697
          %v799 = vmul.f32 %v793, %v698
          %v800 = vadd.f32 %v779, %v798
          %v801 = vadd.f32 %v780, %v799
          %v802 = vmul.f32 %v793, %v785
          %v803 = vmul.f32 %v793, %v786
          %v804 = vadd.f32 %v783, %v802
          %v805 = vadd.f32 %v784, %v803
          %v806 = vld [vmem:[%s387] sm:$0xff]
          %v807 = vld [vmem:[%s387 + $0x8] sm:$0xff]
          %v808 = vmul.f32 %v793, %v806
          %v809 = vmul.f32 %v793, %v807
          %v810 = vadd.f32 %v789, %v808
          %v811 = vadd.f32 %v790, %v809
          %s812 = sadd.s32 %s607, 9
          %s813 = sld [smem:[#allocation3 + %s812]]
          %v814 = vstv %s813
          %v815 = vmul.f32 %v814, %v697
          %v816 = vmul.f32 %v814, %v698
          %v817 = vadd.f32 %v796, %v815
          %v818 = vadd.f32 %v797, %v816
          %v819 = vmul.f32 %v814, %v720
          %v820 = vmul.f32 %v814, %v721
          %v821 = vadd.f32 %v800, %v819
          %v822 = vadd.f32 %v801, %v820
          %v823 = vmul.f32 %v814, %v806
          %v824 = vmul.f32 %v814, %v807
          %v825 = vadd.f32 %v804, %v823
          %v826 = vadd.f32 %v805, %v824
          %v827 = vld [vmem:[%s400] sm:$0xff]
          %v828 = vld [vmem:[%s400 + $0x8] sm:$0xff]
          %v829 = vmul.f32 %v814, %v827
          %v830 = vmul.f32 %v814, %v828
          %v831 = vadd.f32 %v810, %v829
          %v832 = vadd.f32 %v811, %v830
          %s833 = sadd.s32 %s607, 10
          %s834 = sld [smem:[#allocation3 + %s833]]
          %v835 = vstv %s834
          %v836 = vmul.f32 %v835, %v737
          %v837 = vmul.f32 %v835, %v738
          %v838 = vadd.f32 %v817, %v836
          %v839 = vadd.f32 %v818, %v837
          %v840 = vmul.f32 %v835, %v743
          %v841 = vmul.f32 %v835, %v744
          %v842 = vadd.f32 %v821, %v840
          %v843 = vadd.f32 %v822, %v841
          %v844 = vld [vmem:[%s407] sm:$0xff]
          %v845 = vld [vmem:[%s407 + $0x8] sm:$0xff]
          %v846 = vmul.f32 %v835, %v844
          %v847 = vmul.f32 %v835, %v845
          %v848 = vadd.f32 %v825, %v846
          %v849 = vadd.f32 %v826, %v847
          %v850 = vld [vmem:[%s414] sm:$0xff]
          %v851 = vld [vmem:[%s414 + $0x8] sm:$0xff]
          %v852 = vmul.f32 %v835, %v850
          %v853 = vmul.f32 %v835, %v851
          %v854 = vadd.f32 %v831, %v852
          %v855 = vadd.f32 %v832, %v853
          %s856 = sadd.s32 %s607, 11
          %s857 = sld [smem:[#allocation3 + %s856]]
          %v858 = vstv %s857
          %v859 = vmul.f32 %v858, %v743
          %v860 = vmul.f32 %v858, %v744
          %v861 = vadd.f32 %v838, %v859
          %v862 = vadd.f32 %v839, %v860
          %v863 = vmul.f32 %v858, %v764
          %v864 = vmul.f32 %v858, %v765
          %v865 = vadd.f32 %v842, %v863
          %v866 = vadd.f32 %v843, %v864
          %v867 = vmul.f32 %v858, %v850
          %v868 = vmul.f32 %v858, %v851
          %v869 = vadd.f32 %v848, %v867
          %v870 = vadd.f32 %v849, %v868
          %v871 = vld [vmem:[%s427] sm:$0xff]
          %v872 = vld [vmem:[%s427 + $0x8] sm:$0xff]
          %v873 = vmul.f32 %v858, %v871
          %v874 = vmul.f32 %v858, %v872
          %v875 = vadd.f32 %v854, %v873
          %v876 = vadd.f32 %v855, %v874
          %s877 = sadd.s32 %s607, 12
          %s878 = sld [smem:[#allocation3 + %s877]]
          %v879 = vstv %s878
          %v880 = vmul.f32 %v879, %v764
          %v881 = vmul.f32 %v879, %v765
          %v882 = vadd.f32 %v861, %v880
          %v883 = vadd.f32 %v862, %v881
          %v884 = vmul.f32 %v879, %v785
          %v885 = vmul.f32 %v879, %v786
          %v886 = vadd.f32 %v865, %v884
          %v887 = vadd.f32 %v866, %v885
          %v888 = vmul.f32 %v879, %v871
          %v889 = vmul.f32 %v879, %v872
          %v890 = vadd.f32 %v869, %v888
          %v891 = vadd.f32 %v870, %v889
          %v892 = vld [vmem:[%s440] sm:$0xff]
          %v893 = vld [vmem:[%s440 + $0x8] sm:$0xff]
          %v894 = vmul.f32 %v879, %v892
          %v895 = vmul.f32 %v879, %v893
          %v896 = vadd.f32 %v875, %v894
          %v897 = vadd.f32 %v876, %v895
          %s898 = sadd.s32 %s607, 13
          %s899 = sld [smem:[#allocation3 + %s898]]
          %v900 = vstv %s899
          %v901 = vmul.f32 %v900, %v785
          %v902 = vmul.f32 %v900, %v786
          %v903 = vadd.f32 %v882, %v901
          %v904 = vadd.f32 %v883, %v902
          %v905 = vmul.f32 %v900, %v806
          %v906 = vmul.f32 %v900, %v807
          %v907 = vadd.f32 %v886, %v905
          %v908 = vadd.f32 %v887, %v906
          %v909 = vmul.f32 %v900, %v892
          %v910 = vmul.f32 %v900, %v893
          %v911 = vadd.f32 %v890, %v909
          %v912 = vadd.f32 %v891, %v910
          %v913 = vld [vmem:[%s453] sm:$0xff]
          %v914 = vld [vmem:[%s453 + $0x8] sm:$0xff]
          %v915 = vmul.f32 %v900, %v913
          %v916 = vmul.f32 %v900, %v914
          %v917 = vadd.f32 %v896, %v915
          %v918 = vadd.f32 %v897, %v916
          %s919 = sadd.s32 %s607, 14
          %s920 = sld [smem:[#allocation3 + %s919]]
          %v921 = vstv %s920
          %v922 = vmul.f32 %v921, %v806
          %v923 = vmul.f32 %v921, %v807
          %v924 = vadd.f32 %v903, %v922
          %v925 = vadd.f32 %v904, %v923
          %v926 = vmul.f32 %v921, %v827
          %v927 = vmul.f32 %v921, %v828
          %v928 = vadd.f32 %v907, %v926
          %v929 = vadd.f32 %v908, %v927
          %v930 = vmul.f32 %v921, %v913
          %v931 = vmul.f32 %v921, %v914
          %v932 = vadd.f32 %v911, %v930
          %v933 = vadd.f32 %v912, %v931
          %v934 = vld [vmem:[%s466] sm:$0xff]
          %v935 = vld [vmem:[%s466 + $0x8] sm:$0xff]
          %v936 = vmul.f32 %v921, %v934
          %v937 = vmul.f32 %v921, %v935
          %v938 = vadd.f32 %v917, %v936
          %v939 = vadd.f32 %v918, %v937
          %s940 = sadd.s32 %s607, 15
          %s941 = sld [smem:[#allocation3 + %s940]]
          %v942 = vstv %s941
          %v943 = vmul.f32 %v942, %v844
          %v944 = vmul.f32 %v942, %v845
          %v945 = vadd.f32 %v924, %v943
          %v946 = vadd.f32 %v925, %v944
          %v947 = vmul.f32 %v942, %v850
          %v948 = vmul.f32 %v942, %v851
          %v949 = vadd.f32 %v928, %v947
          %v950 = vadd.f32 %v929, %v948
          %v951 = vld [vmem:[%s473] sm:$0xff]
          %v952 = vld [vmem:[%s473 + $0x8] sm:$0xff]
          %v953 = vmul.f32 %v942, %v951
          %v954 = vmul.f32 %v942, %v952
          %v955 = vadd.f32 %v932, %v953
          %v956 = vadd.f32 %v933, %v954
          %v957 = vld [vmem:[%s480] sm:$0xff]
          %v958 = vld [vmem:[%s480 + $0x8] sm:$0xff]
          %v959 = vmul.f32 %v942, %v957
          %v960 = vmul.f32 %v942, %v958
          %v961 = vadd.f32 %v938, %v959
          %v962 = vadd.f32 %v939, %v960
          %s963 = sadd.s32 %s607, 16
          %s964 = sld [smem:[#allocation3 + %s963]]
          %v965 = vstv %s964
          %v966 = vmul.f32 %v965, %v850
          %v967 = vmul.f32 %v965, %v851
          %v968 = vadd.f32 %v945, %v966
          %v969 = vadd.f32 %v946, %v967
          %v970 = vmul.f32 %v965, %v871
          %v971 = vmul.f32 %v965, %v872
          %v972 = vadd.f32 %v949, %v970
          %v973 = vadd.f32 %v950, %v971
          %v974 = vmul.f32 %v965, %v957
          %v975 = vmul.f32 %v965, %v958
          %v976 = vadd.f32 %v955, %v974
          %v977 = vadd.f32 %v956, %v975
          %v978 = vld [vmem:[%s493] sm:$0xff]
          %v979 = vld [vmem:[%s493 + $0x8] sm:$0xff]
          %v980 = vmul.f32 %v965, %v978
          %v981 = vmul.f32 %v965, %v979
          %v982 = vadd.f32 %v961, %v980
          %v983 = vadd.f32 %v962, %v981
          %s984 = sadd.s32 %s607, 17
          %s985 = sld [smem:[#allocation3 + %s984]]
          %v986 = vstv %s985
          %v987 = vmul.f32 %v986, %v871
          %v988 = vmul.f32 %v986, %v872
          %v989 = vadd.f32 %v968, %v987
          %v990 = vadd.f32 %v969, %v988
          %v991 = vmul.f32 %v986, %v892
          %v992 = vmul.f32 %v986, %v893
          %v993 = vadd.f32 %v972, %v991
          %v994 = vadd.f32 %v973, %v992
          %v995 = vmul.f32 %v986, %v978
          %v996 = vmul.f32 %v986, %v979
          %v997 = vadd.f32 %v976, %v995
          %v998 = vadd.f32 %v977, %v996
          %v999 = vld [vmem:[%s506] sm:$0xff]
          %v1000 = vld [vmem:[%s506 + $0x8] sm:$0xff]
          %v1001 = vmul.f32 %v986, %v999
          %v1002 = vmul.f32 %v986, %v1000
          %v1003 = vadd.f32 %v982, %v1001
          %v1004 = vadd.f32 %v983, %v1002
          %s1005 = sadd.s32 %s607, 18
          %s1006 = sld [smem:[#allocation3 + %s1005]]
          %v1007 = vstv %s1006
          %v1008 = vmul.f32 %v1007, %v892
          %v1009 = vmul.f32 %v1007, %v893
          %v1010 = vadd.f32 %v989, %v1008
          %v1011 = vadd.f32 %v990, %v1009
          %v1012 = vmul.f32 %v1007, %v913
          %v1013 = vmul.f32 %v1007, %v914
          %v1014 = vadd.f32 %v993, %v1012
          %v1015 = vadd.f32 %v994, %v1013
          %v1016 = vmul.f32 %v1007, %v999
          %v1017 = vmul.f32 %v1007, %v1000
          %v1018 = vadd.f32 %v997, %v1016
          %v1019 = vadd.f32 %v998, %v1017
          %v1020 = vld [vmem:[%s519] sm:$0xff]
          %v1021 = vld [vmem:[%s519 + $0x8] sm:$0xff]
          %v1022 = vmul.f32 %v1007, %v1020
          %v1023 = vmul.f32 %v1007, %v1021
          %v1024 = vadd.f32 %v1003, %v1022
          %v1025 = vadd.f32 %v1004, %v1023
          %s1026 = sadd.s32 %s607, 19
          %s1027 = sld [smem:[#allocation3 + %s1026]]
          %v1028 = vstv %s1027
          %v1029 = vmul.f32 %v1028, %v913
          %v1030 = vmul.f32 %v1028, %v914
          %v1031 = vadd.f32 %v1010, %v1029
          %v1032 = vadd.f32 %v1011, %v1030
          %v1033 = vmul.f32 %v1028, %v934
          %v1034 = vmul.f32 %v1028, %v935
          %v1035 = vadd.f32 %v1014, %v1033
          %v1036 = vadd.f32 %v1015, %v1034
          %v1037 = vmul.f32 %v1028, %v1020
          %v1038 = vmul.f32 %v1028, %v1021
          %v1039 = vadd.f32 %v1018, %v1037
          %v1040 = vadd.f32 %v1019, %v1038
          %v1041 = vld [vmem:[%s532] sm:$0xff]
          %v1042 = vld [vmem:[%s532 + $0x8] sm:$0xff]
          %v1043 = vmul.f32 %v1028, %v1041
          %v1044 = vmul.f32 %v1028, %v1042
          %v1045 = vadd.f32 %v1024, %v1043
          %v1046 = vadd.f32 %v1025, %v1044
          %s1047 = sadd.s32 %s607, 20
          %s1048 = sld [smem:[#allocation3 + %s1047]]
          %v1049 = vstv %s1048
          %v1050 = vmul.f32 %v1049, %v951
          %v1051 = vmul.f32 %v1049, %v952
          %v1052 = vadd.f32 %v1031, %v1050
          %v1053 = vadd.f32 %v1032, %v1051
          %v1054 = vmul.f32 %v1049, %v957
          %v1055 = vmul.f32 %v1049, %v958
          %v1056 = vadd.f32 %v1035, %v1054
          %v1057 = vadd.f32 %v1036, %v1055
          %v1058 = vld [vmem:[%s539] sm:$0xff]
          %v1059 = vld [vmem:[%s539 + $0x8] sm:$0xff]
          %v1060 = vmul.f32 %v1049, %v1058
          %v1061 = vmul.f32 %v1049, %v1059
          %v1062 = vadd.f32 %v1039, %v1060
          %v1063 = vadd.f32 %v1040, %v1061
          %v1064 = vld [vmem:[%s546] sm:$0xff]
          %v1065 = vld [vmem:[%s546 + $0x8] sm:$0xff]
          %v1066 = vmul.f32 %v1049, %v1064
          %v1067 = vmul.f32 %v1049, %v1065
          %v1068 = vadd.f32 %v1045, %v1066
          %v1069 = vadd.f32 %v1046, %v1067
          %s1070 = sadd.s32 %s607, 21
          %s1071 = sld [smem:[#allocation3 + %s1070]]
          %v1072 = vstv %s1071
          %v1073 = vmul.f32 %v1072, %v957
          %v1074 = vmul.f32 %v1072, %v958
          %v1075 = vadd.f32 %v1052, %v1073
          %v1076 = vadd.f32 %v1053, %v1074
          %v1077 = vmul.f32 %v1072, %v978
          %v1078 = vmul.f32 %v1072, %v979
          %v1079 = vadd.f32 %v1056, %v1077
          %v1080 = vadd.f32 %v1057, %v1078
          %v1081 = vmul.f32 %v1072, %v1064
          %v1082 = vmul.f32 %v1072, %v1065
          %v1083 = vadd.f32 %v1062, %v1081
          %v1084 = vadd.f32 %v1063, %v1082
          %v1085 = vld [vmem:[%s559] sm:$0xff]
          %v1086 = vld [vmem:[%s559 + $0x8] sm:$0xff]
          %v1087 = vmul.f32 %v1072, %v1085
          %v1088 = vmul.f32 %v1072, %v1086
          %v1089 = vadd.f32 %v1068, %v1087
          %v1090 = vadd.f32 %v1069, %v1088
          %s1091 = sadd.s32 %s607, 22
          %s1092 = sld [smem:[#allocation3 + %s1091]]
          %v1093 = vstv %s1092
          %v1094 = vmul.f32 %v1093, %v978
          %v1095 = vmul.f32 %v1093, %v979
          %v1096 = vadd.f32 %v1075, %v1094
          %v1097 = vadd.f32 %v1076, %v1095
          %v1098 = vmul.f32 %v1093, %v999
          %v1099 = vmul.f32 %v1093, %v1000
          %v1100 = vadd.f32 %v1079, %v1098
          %v1101 = vadd.f32 %v1080, %v1099
          %v1102 = vmul.f32 %v1093, %v1085
          %v1103 = vmul.f32 %v1093, %v1086
          %v1104 = vadd.f32 %v1083, %v1102
          %v1105 = vadd.f32 %v1084, %v1103
          %v1106 = vld [vmem:[%s572] sm:$0xff]
          %v1107 = vld [vmem:[%s572 + $0x8] sm:$0xff]
          %v1108 = vmul.f32 %v1093, %v1106
          %v1109 = vmul.f32 %v1093, %v1107
          %v1110 = vadd.f32 %v1089, %v1108
          %v1111 = vadd.f32 %v1090, %v1109
          %s1112 = sadd.s32 %s607, 23
          %s1113 = sld [smem:[#allocation3 + %s1112]]
          %v1114 = vstv %s1113
          %v1115 = vmul.f32 %v1114, %v999
          %v1116 = vmul.f32 %v1114, %v1000
          %v1117 = vadd.f32 %v1096, %v1115
          %v1118 = vadd.f32 %v1097, %v1116
          %v1119 = vmul.f32 %v1114, %v1020
          %v1120 = vmul.f32 %v1114, %v1021
          %v1121 = vadd.f32 %v1100, %v1119
          %v1122 = vadd.f32 %v1101, %v1120
          %v1123 = vmul.f32 %v1114, %v1106
          %v1124 = vmul.f32 %v1114, %v1107
          %v1125 = vadd.f32 %v1104, %v1123
          %v1126 = vadd.f32 %v1105, %v1124
          %v1127 = vld [vmem:[%s585] sm:$0xff]
          %v1128 = vld [vmem:[%s585 + $0x8] sm:$0xff]
          %v1129 = vmul.f32 %v1114, %v1127
          %v1130 = vmul.f32 %v1114, %v1128
          %v1131 = vadd.f32 %v1110, %v1129
          %v1132 = vadd.f32 %v1111, %v1130
          %s1133 = sadd.s32 %s607, 24
          %s1134 = sld [smem:[#allocation3 + %s1133]]
          %v1135 = vstv %s1134
          %v1136 = vmul.f32 %v1135, %v1020
          %v1137 = vmul.f32 %v1135, %v1021
          %v1138 = vadd.f32 %v1117, %v1136
          %v1139 = vadd.f32 %v1118, %v1137
          %v1140 = vmul.f32 %v1135, %v1041
          %v1141 = vmul.f32 %v1135, %v1042
          %v1142 = vadd.f32 %v1121, %v1140
          %v1143 = vadd.f32 %v1122, %v1141
          %v1144 = vmul.f32 %v1135, %v1127
          %v1145 = vmul.f32 %v1135, %v1128
          %v1146 = vadd.f32 %v1125, %v1144
          %v1147 = vadd.f32 %v1126, %v1145
          %v1148 = vld [vmem:[%s598] sm:$0xff]
          %v1149 = vld [vmem:[%s598 + $0x8] sm:$0xff]
          %v1150 = vmul.f32 %v1135, %v1148
          %v1151 = vmul.f32 %v1135, %v1149
          %v1152 = vadd.f32 %v1131, %v1150
          %v1153 = vadd.f32 %v1132, %v1151
          %v1154 = vmax.f32 %v1138, %v1142
          %v1155 = vmax.f32 %v1139, %v1143
          %v1156 = vmax.f32 %v1146, %v1152
          %v1157 = vmax.f32 %v1147, %v1153
          %v1158 = vmax.f32 %v1154, %v1156
          %v1159 = vmax.f32 %v1155, %v1157
          %s1160 = sld [smem:[#allocation6 + %s602]]
          %v1161 = vstv %s1160
          %v1162 = vadd.f32 %v1158, %v1161
          %v1163 = vadd.f32 %v1159, %v1161
          %v1164 = vmax.f32 %v1162, 0.0
          %v1165 = vmax.f32 %v1163, 0.0
          %s1166 = smul.u32 %s602, 16
          %s1167 = scalar_lea.vmem %s198, %s1166 [#allocation7]
          %1168 = vst.msk [vmem:[%s1167] sm:$0xff] %vm209, %v1164
          %1169 = vst.msk [vmem:[%s1167 + $0x8] sm:$0xff] %vm209, %v1165
        $region45: #{cnn_forward.3} parent=31 // loop_footer
          %s606 = sadd.s32 1, %s602
        $region46: #{cnn_forward.3} parent=31 // loop_footer_branch
          %601 = sbr.rel target = $region42
        $region47: #{cnn_forward.3} parent=31 // loop_exit
          _
        %s1170 = sand.u32 %s106, 1
        %s1171 = sand.u32 %s106, 1
        %s1172 = smul.addr %s1171, 480
        %s1173 = scalar_lea.vmem [#allocation7], %s1172
        // Predicated region
        $region48: #{cnn_forward.3} parent=31 // pred_check
          %p1174 = pneg %p116
        $region49: #{cnn_forward.3} parent=31 // pred_check_branch
          %1176 = sbr.rel (%p1174) target = $region51
        $region50: #{cnn_forward.3} parent=31 // pred_region
          %s1177 = smul.u32 2, %s21
          %s1178 = smul.addr %s20, 420
          %s1179 = sadd.s32 %s1177, %s1178
          %s1180 = smul.addr %s1179, 8
          %s1181 = scalar_lea.vmem %s3, %s1180
          // Predicated region
          $region52: #{cnn_forward.3} parent=50 // pred_check
            _
          $region53: #{cnn_forward.3} parent=50 // pred_check_branch
            %1183 = sbr.rel (0) target = $region55
          $region54: #{cnn_forward.3} parent=50 // pred_region
            // Predicated region
            $region56: #{cnn_forward.3} parent=54 // pred_check
              _
            $region57: #{cnn_forward.3} parent=54 // pred_check_branch
              %1185 = sbr.rel (0) target = $region59
            $region58: #{cnn_forward.3} parent=54 // pred_region
              // Predicated region
              $region71: #{cnn_forward.3} parent=58 // pred_check
                _
              $region72: #{cnn_forward.3} parent=58 // pred_check_branch
                %1319 = sbr.rel (0) target = $region74
              $region73: #{cnn_forward.3} parent=58 // pred_region
                loop: start=0, step=1, limit=1
                $region75: #{cnn_forward.3} parent=73 // loop_pre_header
                  _
                $region76: #{cnn_forward.3} parent=73 // loop_header
                  %s1321 = sphi 0, %s1325
                  %p1322 = scmp.ge.s32.totalorder %s1321, 1
                  %s1326 = sphi %s1173, %s1173
                  %s1327 = sphi %s1181, %s1181
                $region77: #{cnn_forward.3} parent=73 // loop_header_branch
                  %1324 = sbr.rel (%p1322) target = $region81
                $region78: #{cnn_forward.3} parent=73 // loop_body
                  %v1328 = vld [vmem:[%s1326] sm:$0xff]
                  %1329 = vst [vmem:[%s1327] sm:$0xff] %v1328
                  %v1330 = vld [vmem:[%s1326 + $0x8] sm:$0xff]
                  %1331 = vst [vmem:[%s1327 + $0x8] sm:$0xff] %v1330
                  %v1332 = vld [vmem:[%s1326 + $0x10] sm:$0xff]
                  %1333 = vst [vmem:[%s1327 + $0x70] sm:$0xff] %v1332
                  %v1334 = vld [vmem:[%s1326 + $0x18] sm:$0xff]
                  %1335 = vst [vmem:[%s1327 + $0x78] sm:$0xff] %v1334
                  %v1336 = vld [vmem:[%s1326 + $0x20] sm:$0xff]
                  %1337 = vst [vmem:[%s1327 + $0xe0] sm:$0xff] %v1336
                  %v1338 = vld [vmem:[%s1326 + $0x28] sm:$0xff]
                  %1339 = vst [vmem:[%s1327 + $0xe8] sm:$0xff] %v1338
                  %v1340 = vld [vmem:[%s1326 + $0x30] sm:$0xff]
                  %1341 = vst [vmem:[%s1327 + $0x150] sm:$0xff] %v1340
                  %v1342 = vld [vmem:[%s1326 + $0x38] sm:$0xff]
                  %1343 = vst [vmem:[%s1327 + $0x158] sm:$0xff] %v1342
                  %v1344 = vld [vmem:[%s1326 + $0x40] sm:$0xff]
                  %1345 = vst [vmem:[%s1327 + $0x1c0] sm:$0xff] %v1344
                  %v1346 = vld [vmem:[%s1326 + $0x48] sm:$0xff]
                  %1347 = vst [vmem:[%s1327 + $0x1c8] sm:$0xff] %v1346
                  %v1348 = vld [vmem:[%s1326 + $0x50] sm:$0xff]
                  %1349 = vst [vmem:[%s1327 + $0x230] sm:$0xff] %v1348
                  %v1350 = vld [vmem:[%s1326 + $0x58] sm:$0xff]
                  %1351 = vst [vmem:[%s1327 + $0x238] sm:$0xff] %v1350
                  %v1352 = vld [vmem:[%s1326 + $0x60] sm:$0xff]
                  %1353 = vst [vmem:[%s1327 + $0x2a0] sm:$0xff] %v1352
                  %v1354 = vld [vmem:[%s1326 + $0x68] sm:$0xff]
                  %1355 = vst [vmem:[%s1327 + $0x2a8] sm:$0xff] %v1354
                  %v1356 = vld [vmem:[%s1326 + $0x70] sm:$0xff]
                  %1357 = vst [vmem:[%s1327 + $0x310] sm:$0xff] %v1356
                  %v1358 = vld [vmem:[%s1326 + $0x78] sm:$0xff]
                  %1359 = vst [vmem:[%s1327 + $0x318] sm:$0xff] %v1358
                  %v1360 = vld [vmem:[%s1326 + $0x80] sm:$0xff]
                  %1361 = vst [vmem:[%s1327 + $0x380] sm:$0xff] %v1360
                  %v1362 = vld [vmem:[%s1326 + $0x88] sm:$0xff]
                  %1363 = vst [vmem:[%s1327 + $0x388] sm:$0xff] %v1362
                  %v1364 = vld [vmem:[%s1326 + $0x90] sm:$0xff]
                  %1365 = vst [vmem:[%s1327 + $0x3f0] sm:$0xff] %v1364
                  %v1366 = vld [vmem:[%s1326 + $0x98] sm:$0xff]
                  %1367 = vst [vmem:[%s1327 + $0x3f8] sm:$0xff] %v1366
                  %v1368 = vld [vmem:[%s1326 + $0xa0] sm:$0xff]
                  %1369 = vst [vmem:[%s1327 + $0x460] sm:$0xff] %v1368
                  %v1370 = vld [vmem:[%s1326 + $0xa8] sm:$0xff]
                  %1371 = vst [vmem:[%s1327 + $0x468] sm:$0xff] %v1370
                  %v1372 = vld [vmem:[%s1326 + $0xb0] sm:$0xff]
                  %1373 = vst [vmem:[%s1327 + $0x4d0] sm:$0xff] %v1372
                  %v1374 = vld [vmem:[%s1326 + $0xb8] sm:$0xff]
                  %1375 = vst [vmem:[%s1327 + $0x4d8] sm:$0xff] %v1374
                  %v1376 = vld [vmem:[%s1326 + $0xc0] sm:$0xff]
                  %1377 = vst [vmem:[%s1327 + $0x540] sm:$0xff] %v1376
                  %v1378 = vld [vmem:[%s1326 + $0xc8] sm:$0xff]
                  %1379 = vst [vmem:[%s1327 + $0x548] sm:$0xff] %v1378
                  %v1380 = vld [vmem:[%s1326 + $0xd0] sm:$0xff]
                  %1381 = vst [vmem:[%s1327 + $0x5b0] sm:$0xff] %v1380
                  %v1382 = vld [vmem:[%s1326 + $0xd8] sm:$0xff]
                  %1383 = vst [vmem:[%s1327 + $0x5b8] sm:$0xff] %v1382
                  %v1384 = vld [vmem:[%s1326 + $0xe0] sm:$0xff]
                  %1385 = vst [vmem:[%s1327 + $0x620] sm:$0xff] %v1384
                  %v1386 = vld [vmem:[%s1326 + $0xe8] sm:$0xff]
                  %1387 = vst [vmem:[%s1327 + $0x628] sm:$0xff] %v1386
                  %v1388 = vld [vmem:[%s1326 + $0xf0] sm:$0xff]
                  %1389 = vst [vmem:[%s1327 + $0x690] sm:$0xff] %v1388
                  %v1390 = vld [vmem:[%s1326 + $0xf8] sm:$0xff]
                  %1391 = vst [vmem:[%s1327 + $0x698] sm:$0xff] %v1390
                  %v1392 = vld [vmem:[%s1326 + $0x100] sm:$0xff]
                  %1393 = vst [vmem:[%s1327 + $0x700] sm:$0xff] %v1392
                  %v1394 = vld [vmem:[%s1326 + $0x108] sm:$0xff]
                  %1395 = vst [vmem:[%s1327 + $0x708] sm:$0xff] %v1394
                  %v1396 = vld [vmem:[%s1326 + $0x110] sm:$0xff]
                  %1397 = vst [vmem:[%s1327 + $0x770] sm:$0xff] %v1396
                  %v1398 = vld [vmem:[%s1326 + $0x118] sm:$0xff]
                  %1399 = vst [vmem:[%s1327 + $0x778] sm:$0xff] %v1398
                  %v1400 = vld [vmem:[%s1326 + $0x120] sm:$0xff]
                  %1401 = vst [vmem:[%s1327 + $0x7e0] sm:$0xff] %v1400
                  %v1402 = vld [vmem:[%s1326 + $0x128] sm:$0xff]
                  %1403 = vst [vmem:[%s1327 + $0x7e8] sm:$0xff] %v1402
                  %v1404 = vld [vmem:[%s1326 + $0x130] sm:$0xff]
                  %1405 = vst [vmem:[%s1327 + $0x850] sm:$0xff] %v1404
                  %v1406 = vld [vmem:[%s1326 + $0x138] sm:$0xff]
                  %1407 = vst [vmem:[%s1327 + $0x858] sm:$0xff] %v1406
                  %v1408 = vld [vmem:[%s1326 + $0x140] sm:$0xff]
                  %1409 = vst [vmem:[%s1327 + $0x8c0] sm:$0xff] %v1408
                  %v1410 = vld [vmem:[%s1326 + $0x148] sm:$0xff]
                  %1411 = vst [vmem:[%s1327 + $0x8c8] sm:$0xff] %v1410
                  %v1412 = vld [vmem:[%s1326 + $0x150] sm:$0xff]
                  %1413 = vst [vmem:[%s1327 + $0x930] sm:$0xff] %v1412
                  %v1414 = vld [vmem:[%s1326 + $0x158] sm:$0xff]
                  %1415 = vst [vmem:[%s1327 + $0x938] sm:$0xff] %v1414
                  %v1416 = vld [vmem:[%s1326 + $0x160] sm:$0xff]
                  %1417 = vst [vmem:[%s1327 + $0x9a0] sm:$0xff] %v1416
                  %v1418 = vld [vmem:[%s1326 + $0x168] sm:$0xff]
                  %1419 = vst [vmem:[%s1327 + $0x9a8] sm:$0xff] %v1418
                  %v1420 = vld [vmem:[%s1326 + $0x170] sm:$0xff]
                  %1421 = vst [vmem:[%s1327 + $0xa10] sm:$0xff] %v1420
                  %v1422 = vld [vmem:[%s1326 + $0x178] sm:$0xff]
                  %1423 = vst [vmem:[%s1327 + $0xa18] sm:$0xff] %v1422
                  %v1424 = vld [vmem:[%s1326 + $0x180] sm:$0xff]
                  %1425 = vst [vmem:[%s1327 + $0xa80] sm:$0xff] %v1424
                  %v1426 = vld [vmem:[%s1326 + $0x188] sm:$0xff]
                  %1427 = vst [vmem:[%s1327 + $0xa88] sm:$0xff] %v1426
                  %v1428 = vld [vmem:[%s1326 + $0x190] sm:$0xff]
                  %1429 = vst [vmem:[%s1327 + $0xaf0] sm:$0xff] %v1428
                  %v1430 = vld [vmem:[%s1326 + $0x198] sm:$0xff]
                  %1431 = vst [vmem:[%s1327 + $0xaf8] sm:$0xff] %v1430
                  %v1432 = vld [vmem:[%s1326 + $0x1a0] sm:$0xff]
                  %1433 = vst [vmem:[%s1327 + $0xb60] sm:$0xff] %v1432
                  %v1434 = vld [vmem:[%s1326 + $0x1a8] sm:$0xff]
                  %1435 = vst [vmem:[%s1327 + $0xb68] sm:$0xff] %v1434
                  %v1436 = vld [vmem:[%s1326 + $0x1b0] sm:$0xff]
                  %1437 = vst [vmem:[%s1327 + $0xbd0] sm:$0xff] %v1436
                  %v1438 = vld [vmem:[%s1326 + $0x1b8] sm:$0xff]
                  %1439 = vst [vmem:[%s1327 + $0xbd8] sm:$0xff] %v1438
                  %v1440 = vld [vmem:[%s1326 + $0x1c0] sm:$0xff]
                  %1441 = vst [vmem:[%s1327 + $0xc40] sm:$0xff] %v1440
                  %v1442 = vld [vmem:[%s1326 + $0x1c8] sm:$0xff]
                  %1443 = vst [vmem:[%s1327 + $0xc48] sm:$0xff] %v1442
                  %v1444 = vld [vmem:[%s1326 + $0x1d0] sm:$0xff]
                  %1445 = vst [vmem:[%s1327 + $0xcb0] sm:$0xff] %v1444
                  %v1446 = vld [vmem:[%s1326 + $0x1d8] sm:$0xff]
                  %1447 = vst [vmem:[%s1327 + $0xcb8] sm:$0xff] %v1446
                $region79: #{cnn_forward.3} parent=73 // loop_footer
                  %s1325 = sadd.s32 1, %s1321
                $region80: #{cnn_forward.3} parent=73 // loop_footer_branch
                  %1320 = sbr.rel target = $region76
                $region81: #{cnn_forward.3} parent=73 // loop_exit
                  _
              $region74: #{cnn_forward.3} parent=58 // pred_fallthru
                _
              // Predicated region
              $region82: #{cnn_forward.3} parent=58 // pred_check
                _
              $region83: #{cnn_forward.3} parent=58 // pred_check_branch
                %1449 = sbr.rel target = $region85
              $region84: #{cnn_forward.3} parent=58 // pred_region
                _
              $region85: #{cnn_forward.3} parent=58 // pred_fallthru
                _
            $region59: #{cnn_forward.3} parent=54 // pred_fallthru
              _
            // Predicated region
            $region60: #{cnn_forward.3} parent=54 // pred_check
              _
            $region61: #{cnn_forward.3} parent=54 // pred_check_branch
              %1187 = sbr.rel target = $region63
            $region62: #{cnn_forward.3} parent=54 // pred_region
              %s1189 = ssub.s32 256, 1
              loop: start=0, step=1, limit=1
              $region64: #{cnn_forward.3} parent=62 // loop_pre_header
                _
              $region65: #{cnn_forward.3} parent=62 // loop_header
                %s1191 = sphi 0, %s1195
                %p1192 = scmp.ge.s32.totalorder %s1191, 1
                %s1196 = sphi %s1173, %s1173
                %s1197 = sphi %s1181, %s1181
              $region66: #{cnn_forward.3} parent=62 // loop_header_branch
                %1194 = sbr.rel (%p1192) target = $region70
              $region67: #{cnn_forward.3} parent=62 // loop_body
                %v1198 = vld [vmem:[%s1196] sm:%s1189]
                %1199 = vst [vmem:[%s1197] sm:%s1189] %v1198
                %v1200 = vld [vmem:[%s1196 + $0x8] sm:%s1189]
                %1201 = vst [vmem:[%s1197 + $0x8] sm:%s1189] %v1200
                %v1202 = vld [vmem:[%s1196 + $0x10] sm:%s1189]
                %1203 = vst [vmem:[%s1197 + $0x70] sm:%s1189] %v1202
                %v1204 = vld [vmem:[%s1196 + $0x18] sm:%s1189]
                %1205 = vst [vmem:[%s1197 + $0x78] sm:%s1189] %v1204
                %v1206 = vld [vmem:[%s1196 + $0x20] sm:%s1189]
                %1207 = vst [vmem:[%s1197 + $0xe0] sm:%s1189] %v1206
                %v1208 = vld [vmem:[%s1196 + $0x28] sm:%s1189]
                %1209 = vst [vmem:[%s1197 + $0xe8] sm:%s1189] %v1208
                %v1210 = vld [vmem:[%s1196 + $0x30] sm:%s1189]
                %1211 = vst [vmem:[%s1197 + $0x150] sm:%s1189] %v1210
                %v1212 = vld [vmem:[%s1196 + $0x38] sm:%s1189]
                %1213 = vst [vmem:[%s1197 + $0x158] sm:%s1189] %v1212
                %v1214 = vld [vmem:[%s1196 + $0x40] sm:%s1189]
                %1215 = vst [vmem:[%s1197 + $0x1c0] sm:%s1189] %v1214
                %v1216 = vld [vmem:[%s1196 + $0x48] sm:%s1189]
                %1217 = vst [vmem:[%s1197 + $0x1c8] sm:%s1189] %v1216
                %v1218 = vld [vmem:[%s1196 + $0x50] sm:%s1189]
                %1219 = vst [vmem:[%s1197 + $0x230] sm:%s1189] %v1218
                %v1220 = vld [vmem:[%s1196 + $0x58] sm:%s1189]
                %1221 = vst [vmem:[%s1197 + $0x238] sm:%s1189] %v1220
                %v1222 = vld [vmem:[%s1196 + $0x60] sm:%s1189]
                %1223 = vst [vmem:[%s1197 + $0x2a0] sm:%s1189] %v1222
                %v1224 = vld [vmem:[%s1196 + $0x68] sm:%s1189]
                %1225 = vst [vmem:[%s1197 + $0x2a8] sm:%s1189] %v1224
                %v1226 = vld [vmem:[%s1196 + $0x70] sm:%s1189]
                %1227 = vst [vmem:[%s1197 + $0x310] sm:%s1189] %v1226
                %v1228 = vld [vmem:[%s1196 + $0x78] sm:%s1189]
                %1229 = vst [vmem:[%s1197 + $0x318] sm:%s1189] %v1228
                %v1230 = vld [vmem:[%s1196 + $0x80] sm:%s1189]
                %1231 = vst [vmem:[%s1197 + $0x380] sm:%s1189] %v1230
                %v1232 = vld [vmem:[%s1196 + $0x88] sm:%s1189]
                %1233 = vst [vmem:[%s1197 + $0x388] sm:%s1189] %v1232
                %v1234 = vld [vmem:[%s1196 + $0x90] sm:%s1189]
                %1235 = vst [vmem:[%s1197 + $0x3f0] sm:%s1189] %v1234
                %v1236 = vld [vmem:[%s1196 + $0x98] sm:%s1189]
                %1237 = vst [vmem:[%s1197 + $0x3f8] sm:%s1189] %v1236
                %v1238 = vld [vmem:[%s1196 + $0xa0] sm:%s1189]
                %1239 = vst [vmem:[%s1197 + $0x460] sm:%s1189] %v1238
                %v1240 = vld [vmem:[%s1196 + $0xa8] sm:%s1189]
                %1241 = vst [vmem:[%s1197 + $0x468] sm:%s1189] %v1240
                %v1242 = vld [vmem:[%s1196 + $0xb0] sm:%s1189]
                %1243 = vst [vmem:[%s1197 + $0x4d0] sm:%s1189] %v1242
                %v1244 = vld [vmem:[%s1196 + $0xb8] sm:%s1189]
                %1245 = vst [vmem:[%s1197 + $0x4d8] sm:%s1189] %v1244
                %v1246 = vld [vmem:[%s1196 + $0xc0] sm:%s1189]
                %1247 = vst [vmem:[%s1197 + $0x540] sm:%s1189] %v1246
                %v1248 = vld [vmem:[%s1196 + $0xc8] sm:%s1189]
                %1249 = vst [vmem:[%s1197 + $0x548] sm:%s1189] %v1248
                %v1250 = vld [vmem:[%s1196 + $0xd0] sm:%s1189]
                %1251 = vst [vmem:[%s1197 + $0x5b0] sm:%s1189] %v1250
                %v1252 = vld [vmem:[%s1196 + $0xd8] sm:%s1189]
                %1253 = vst [vmem:[%s1197 + $0x5b8] sm:%s1189] %v1252
                %v1254 = vld [vmem:[%s1196 + $0xe0] sm:%s1189]
                %1255 = vst [vmem:[%s1197 + $0x620] sm:%s1189] %v1254
                %v1256 = vld [vmem:[%s1196 + $0xe8] sm:%s1189]
                %1257 = vst [vmem:[%s1197 + $0x628] sm:%s1189] %v1256
                %v1258 = vld [vmem:[%s1196 + $0xf0] sm:%s1189]
                %1259 = vst [vmem:[%s1197 + $0x690] sm:%s1189] %v1258
                %v1260 = vld [vmem:[%s1196 + $0xf8] sm:%s1189]
                %1261 = vst [vmem:[%s1197 + $0x698] sm:%s1189] %v1260
                %v1262 = vld [vmem:[%s1196 + $0x100] sm:%s1189]
                %1263 = vst [vmem:[%s1197 + $0x700] sm:%s1189] %v1262
                %v1264 = vld [vmem:[%s1196 + $0x108] sm:%s1189]
                %1265 = vst [vmem:[%s1197 + $0x708] sm:%s1189] %v1264
                %v1266 = vld [vmem:[%s1196 + $0x110] sm:%s1189]
                %1267 = vst [vmem:[%s1197 + $0x770] sm:%s1189] %v1266
                %v1268 = vld [vmem:[%s1196 + $0x118] sm:%s1189]
                %1269 = vst [vmem:[%s1197 + $0x778] sm:%s1189] %v1268
                %v1270 = vld [vmem:[%s1196 + $0x120] sm:%s1189]
                %1271 = vst [vmem:[%s1197 + $0x7e0] sm:%s1189] %v1270
                %v1272 = vld [vmem:[%s1196 + $0x128] sm:%s1189]
                %1273 = vst [vmem:[%s1197 + $0x7e8] sm:%s1189] %v1272
                %v1274 = vld [vmem:[%s1196 + $0x130] sm:%s1189]
                %1275 = vst [vmem:[%s1197 + $0x850] sm:%s1189] %v1274
                %v1276 = vld [vmem:[%s1196 + $0x138] sm:%s1189]
                %1277 = vst [vmem:[%s1197 + $0x858] sm:%s1189] %v1276
                %v1278 = vld [vmem:[%s1196 + $0x140] sm:%s1189]
                %1279 = vst [vmem:[%s1197 + $0x8c0] sm:%s1189] %v1278
                %v1280 = vld [vmem:[%s1196 + $0x148] sm:%s1189]
                %1281 = vst [vmem:[%s1197 + $0x8c8] sm:%s1189] %v1280
                %v1282 = vld [vmem:[%s1196 + $0x150] sm:%s1189]
                %1283 = vst [vmem:[%s1197 + $0x930] sm:%s1189] %v1282
                %v1284 = vld [vmem:[%s1196 + $0x158] sm:%s1189]
                %1285 = vst [vmem:[%s1197 + $0x938] sm:%s1189] %v1284
                %v1286 = vld [vmem:[%s1196 + $0x160] sm:%s1189]
                %1287 = vst [vmem:[%s1197 + $0x9a0] sm:%s1189] %v1286
                %v1288 = vld [vmem:[%s1196 + $0x168] sm:%s1189]
                %1289 = vst [vmem:[%s1197 + $0x9a8] sm:%s1189] %v1288
                %v1290 = vld [vmem:[%s1196 + $0x170] sm:%s1189]
                %1291 = vst [vmem:[%s1197 + $0xa10] sm:%s1189] %v1290
                %v1292 = vld [vmem:[%s1196 + $0x178] sm:%s1189]
                %1293 = vst [vmem:[%s1197 + $0xa18] sm:%s1189] %v1292
                %v1294 = vld [vmem:[%s1196 + $0x180] sm:%s1189]
                %1295 = vst [vmem:[%s1197 + $0xa80] sm:%s1189] %v1294
                %v1296 = vld [vmem:[%s1196 + $0x188] sm:%s1189]
                %1297 = vst [vmem:[%s1197 + $0xa88] sm:%s1189] %v1296
                %v1298 = vld [vmem:[%s1196 + $0x190] sm:%s1189]
                %1299 = vst [vmem:[%s1197 + $0xaf0] sm:%s1189] %v1298
                %v1300 = vld [vmem:[%s1196 + $0x198] sm:%s1189]
                %1301 = vst [vmem:[%s1197 + $0xaf8] sm:%s1189] %v1300
                %v1302 = vld [vmem:[%s1196 + $0x1a0] sm:%s1189]
                %1303 = vst [vmem:[%s1197 + $0xb60] sm:%s1189] %v1302
                %v1304 = vld [vmem:[%s1196 + $0x1a8] sm:%s1189]
                %1305 = vst [vmem:[%s1197 + $0xb68] sm:%s1189] %v1304
                %v1306 = vld [vmem:[%s1196 + $0x1b0] sm:%s1189]
                %1307 = vst [vmem:[%s1197 + $0xbd0] sm:%s1189] %v1306
                %v1308 = vld [vmem:[%s1196 + $0x1b8] sm:%s1189]
                %1309 = vst [vmem:[%s1197 + $0xbd8] sm:%s1189] %v1308
                %v1310 = vld [vmem:[%s1196 + $0x1c0] sm:%s1189]
                %1311 = vst [vmem:[%s1197 + $0xc40] sm:%s1189] %v1310
                %v1312 = vld [vmem:[%s1196 + $0x1c8] sm:%s1189]
                %1313 = vst [vmem:[%s1197 + $0xc48] sm:%s1189] %v1312
                %v1314 = vld [vmem:[%s1196 + $0x1d0] sm:%s1189]
                %1315 = vst [vmem:[%s1197 + $0xcb0] sm:%s1189] %v1314
                %v1316 = vld [vmem:[%s1196 + $0x1d8] sm:%s1189]
                %1317 = vst [vmem:[%s1197 + $0xcb8] sm:%s1189] %v1316
              $region68: #{cnn_forward.3} parent=62 // loop_footer
                %s1195 = sadd.s32 1, %s1191
              $region69: #{cnn_forward.3} parent=62 // loop_footer_branch
                %1190 = sbr.rel target = $region65
              $region70: #{cnn_forward.3} parent=62 // loop_exit
                _
            $region63: #{cnn_forward.3} parent=54 // pred_fallthru
              _
          $region55: #{cnn_forward.3} parent=50 // pred_fallthru
            _
          %1450 = vnop
        $region51: #{cnn_forward.3} parent=31 // pred_fallthru
          _
      $region32: #{cnn_forward.3} parent=5 // pred_fallthru
        _
      %p1451 = scmp.le.s32.totalorder 2, %s11
      // Predicated region
      $region86: #{cnn_forward.3} parent=5 // pred_check
        %p1452 = pneg %p1451
      $region87: #{cnn_forward.3} parent=5 // pred_check_branch
        %1454 = sbr.rel (%p1452) target = $region89
      $region88: #{cnn_forward.3} parent=5 // pred_region
        %s1455 = ssub.s32 %s11, 2
        // Predicated region
        $region90: #{cnn_forward.3} parent=88 // pred_check
          %p1456 = pneg %p122
        $region91: #{cnn_forward.3} parent=88 // pred_check_branch
          %1458 = sbr.rel (%p1456) target = $region93
        $region92: #{cnn_forward.3} parent=88 // pred_region
          %s1459 = sand.u32 %s107, 1
          %s1460 = sand.u32 %s107, 1
          %s1461 = smul.addr %s1460, 480
          %s1462 = scalar_lea.vmem [#allocation7], %s1461
        $region93: #{cnn_forward.3} parent=88 // pred_fallthru
          _
      $region89: #{cnn_forward.3} parent=5 // pred_fallthru
        _
    $region6: #{cnn_forward.3} parent=1 // loop_footer
      %s15 = sadd.s32 1, %s11
    $region7: #{cnn_forward.3} parent=1 // loop_footer_branch
      %10 = sbr.rel target = $region3
    $region8: #{cnn_forward.3} parent=1 // loop_exit
      _
    %1463 = vsyncpa [#allocation4], 1
    %s1464 = scalar_lea.sflag [#allocation4], 1
    %1465 = vsyncpa %s1464, 1
    %1466 = vsyncpa [#allocation5], 1
    %s1467 = scalar_lea.sflag [#allocation5], 1
    %1468 = vsyncpa %s1467, 1

// kernel: cnn_forward.4
$region0: #{cnn_forward.4}
  #allocation0 [shape = 'u32[]', space=smem, size = 0x4, offset = 0x4, fixed_abs, tag = 'smem constant byte address 0x4 - core index']
  #allocation1 [shape = 'u32[144,128]{1,0:T(1,128)}', space=vmem, size = 0x12000, scoped, tag = 'internal scratch']
  %s0 = inlined_call_operand.vmem [shape: f32[2,30,4,57,57], index: 0, kind: input, shape index: {}]
  %s1 = inlined_call_operand.vmem [shape: f32[4050], index: 1, kind: input, shape index: {}]
  %s2 = inlined_call_operand.vmem [shape: f32[15], index: 2, kind: input, shape index: {}]
  %s3 = inlined_call_operand.vmem [shape: f32[2,15,56,56], index: 3, kind: output, shape index: {}]
  %s4 = sld [smem:[#allocation0]]
  $region67: #{cnn_forward.4} parent=0
    _
  %s6 = ssub.s32 1, %s4
  %s7 = scalar_select 0, %s6, %s4
  $region1: #{cnn_forward.4} parent=0
    #allocation2 [shape = 'u8[16384]{0}', space=smem, size = 0x4000, scoped, tag = 'input window, operand 1, single buffered']
    #allocation3 [shape = 's32[2]{0}', space=sflag, size = 0x8, scoped, tag = 'scoped memory for cnn_forward.4']
    #allocation4 [shape = 'u8[512]{0}', space=smem, size = 0x200, scoped, tag = 'input window, operand 2, single buffered']
    #allocation5 [shape = 's32[1]{0}', space=sflag, size = 0x4, scoped, tag = 'scoped memory for cnn_forward.4']
    %8 = vsyncpa [#allocation3], 0
    %9 = vsyncpa [#allocation5], 0
    loop: start=0, step=1, limit=4
    $region2: #{cnn_forward.4} parent=1 // loop_pre_header
      _
    $region3: #{cnn_forward.4} parent=1 // loop_header
      %s11 = sphi 0, %s15
      %p12 = scmp.ge.s32.totalorder %s11, 4
      %s21 = sphi 0, %s23
      %s24 = sphi 0, %s21
      %s25 = sphi 0, %s24
      %s41 = sphi 0, %s25
      %s45 = sphi 0, %s45
      %s47 = sphi 0, %s45
      %s48 = sphi 0, %s47
      %s62 = sphi 0, %s48
      %s66 = sphi 0, %s66
      %s68 = sphi 0, %s66
      %s69 = sphi 0, %s68
      %s83 = sphi 0, %s69
      %s89 = sphi 0, %s91
      %s92 = sphi 0, %s89
      %s93 = sphi 0, %s92
      %s109 = sphi 0, %s93
    $region4: #{cnn_forward.4} parent=1 // loop_header_branch
      %14 = sbr.rel (%p12) target = $region8
    $region5: #{cnn_forward.4} parent=1 // loop_body
      %s16 = ssub.s32 %s11, 1
      %s17 = ssub.s32 %s11, 2
      %s18 = sadd.s32 %s11, 1
      %s19 = ssub.s32 %s11, %s18
      %p20 = scmp.eq.s32.totalorder %s19, 0
      %s22 = sadd.s32 %s21, 1
      %s23 = scalar_select %p20, %s21, %s22
      %p26 = pneg %p20
      %p27 = scmp.eq.s32.totalorder %s11, 1
      %p28 = por %p26, %p27
      %p29 = scmp.ne.s32.totalorder %s21, %s24
      %p30 = scmp.eq.s32.totalorder %s11, 0
      %p31 = por %p29, %p30
      %p32 = scmp.ne.s32.totalorder %s21, %s24
      %p33 = scmp.eq.s32.totalorder %s16, 1
      %p34 = por %p32, %p33
      %p35 = scmp.ne.s32.totalorder %s24, %s25
      %p36 = scmp.eq.s32.totalorder %s16, 0
      %p37 = por %p35, %p36
      %p38 = scmp.ne.s32.totalorder %s24, %s25
      %p39 = scmp.eq.s32.totalorder %s17, 1
      %p40 = por %p38, %p39
      %p42 = scmp.ne.s32.totalorder %s25, %s41
      %p43 = scmp.eq.s32.totalorder %s17, 0
      %p44 = por %p42, %p43
      %s46 = sadd.s32 %s45, 1
      %p49 = scmp.eq.s32.totalorder %s11, 1
      %p50 = scmp.ne.s32.totalorder %s45, %s47
      %p51 = scmp.eq.s32.totalorder %s11, 0
      %p52 = por %p50, %p51
      %p53 = scmp.ne.s32.totalorder %s45, %s47
      %p54 = scmp.eq.s32.totalorder %s16, 1
      %p55 = por %p53, %p54
      %p56 = scmp.ne.s32.totalorder %s47, %s48
      %p57 = scmp.eq.s32.totalorder %s16, 0
      %p58 = por %p56, %p57
      %p59 = scmp.ne.s32.totalorder %s47, %s48
      %p60 = scmp.eq.s32.totalorder %s17, 1
      %p61 = por %p59, %p60
      %p63 = scmp.ne.s32.totalorder %s48, %s62
      %p64 = scmp.eq.s32.totalorder %s17, 0
      %p65 = por %p63, %p64
      %s67 = sadd.s32 %s66, 1
      %p70 = scmp.eq.s32.totalorder %s11, 1
      %p71 = scmp.ne.s32.totalorder %s66, %s68
      %p72 = scmp.eq.s32.totalorder %s11, 0
      %p73 = por %p71, %p72
      %p74 = scmp.ne.s32.totalorder %s66, %s68
      %p75 = scmp.eq.s32.totalorder %s16, 1
      %p76 = por %p74, %p75
      %p77 = scmp.ne.s32.totalorder %s68, %s69
      %p78 = scmp.eq.s32.totalorder %s16, 0
      %p79 = por %p77, %p78
      %p80 = scmp.ne.s32.totalorder %s68, %s69
      %p81 = scmp.eq.s32.totalorder %s17, 1
      %p82 = por %p80, %p81
      %p84 = scmp.ne.s32.totalorder %s69, %s83
      %p85 = scmp.eq.s32.totalorder %s17, 0
      %p86 = por %p84, %p85
      %s87 = ssub.s32 %s11, %s18
      %p88 = scmp.eq.s32.totalorder %s87, 0
      %s90 = sadd.s32 %s89, 1
      %s91 = scalar_select %p88, %s89, %s90
      %p94 = pneg %p88
      %p95 = scmp.eq.s32.totalorder %s11, 1
      %p96 = por %p94, %p95
      %p97 = scmp.ne.s32.totalorder %s89, %s92
      %p98 = scmp.eq.s32.totalorder %s11, 0
      %p99 = por %p97, %p98
      %p100 = scmp.ne.s32.totalorder %s89, %s92
      %p101 = scmp.eq.s32.totalorder %s16, 1
      %p102 = por %p100, %p101
      %p103 = scmp.ne.s32.totalorder %s92, %s93
      %p104 = scmp.eq.s32.totalorder %s16, 0
      %p105 = por %p103, %p104
      %p106 = scmp.ne.s32.totalorder %s92, %s93
      %p107 = scmp.eq.s32.totalorder %s17, 1
      %p108 = por %p106, %p107
      %p110 = scmp.ne.s32.totalorder %s93, %s109
      %p111 = scmp.eq.s32.totalorder %s17, 0
      %p112 = por %p110, %p111
      %p113 = scmp.le.s32.totalorder 1, %s11
      %p114 = scmp.lt.s32.totalorder %s11, 3
      %p115 = pnand %p113, %p114
      %p116 = pneg %p115
      // Predicated region
      $region9: #{cnn_forward.4} parent=5 // pred_check
        _
      $region10: #{cnn_forward.4} parent=5 // pred_check_branch
        %118 = sbr.rel (%p115) target = $region12
      $region11: #{cnn_forward.4} parent=5 // pred_region
        %s119 = ssub.s32 %s11, 1
        // Predicated region
        $region13: #{cnn_forward.4} parent=11 // pred_check
          %p120 = pneg %p58
        $region14: #{cnn_forward.4} parent=11 // pred_check_branch
          %122 = sbr.rel (%p120) target = $region16
        $region15: #{cnn_forward.4} parent=11 // pred_region
          %s124 = ssub.s32 512, 512
          %125 = vsyncadd [#allocation3], %s124
          %s127 = sshll.u32 %s1, 4
          %s128 = int_to_ptr.vmem [resolvable:$true] %s127
          %130 = dma.vmem_to_smem %s128, 512, [#allocation2], [#allocation3]
        $region16: #{cnn_forward.4} parent=11 // pred_fallthru
          _
        // Predicated region
        $region17: #{cnn_forward.4} parent=11 // pred_check
          %p131 = pneg %p79
        $region18: #{cnn_forward.4} parent=11 // pred_check_branch
          %133 = sbr.rel (%p131) target = $region20
        $region19: #{cnn_forward.4} parent=11 // pred_region
          %s135 = ssub.s32 16, 16
          %136 = vsyncadd [#allocation5], %s135
          %s138 = sshll.u32 %s2, 4
          %s139 = int_to_ptr.vmem [resolvable:$true] %s138
          %141 = dma.vmem_to_smem %s139, 16, [#allocation4], [#allocation5]
        $region20: #{cnn_forward.4} parent=11 // pred_fallthru
          _
      $region12: #{cnn_forward.4} parent=5 // pred_fallthru
        _
      %p142 = scmp.lt.s32.totalorder %s11, 2
      // Predicated region
      $region21: #{cnn_forward.4} parent=5 // pred_check
        %p143 = pneg %p142
      $region22: #{cnn_forward.4} parent=5 // pred_check_branch
        %145 = sbr.rel (%p143) target = $region24
      $region23: #{cnn_forward.4} parent=5 // pred_region
        // Predicated region
        $region25: #{cnn_forward.4} parent=23 // pred_check
          %p146 = pneg %p31
        $region26: #{cnn_forward.4} parent=23 // pred_check_branch
          %148 = sbr.rel (%p146) target = $region28
        $region27: #{cnn_forward.4} parent=23 // pred_region
          %p149 = scmp.lt.s32.totalorder %s11, 1
          %s150 = scalar_select %p149, %s11, 1
          %s151 = smul.addr %s150, 960
          %s152 = smul.addr %s151, 8
          %s153 = scalar_lea.vmem %s0, %s152
        $region28: #{cnn_forward.4} parent=23 // pred_fallthru
          _
      $region24: #{cnn_forward.4} parent=5 // pred_fallthru
        _
      %p154 = scmp.le.s32.totalorder 1, %s11
      %p155 = scmp.lt.s32.totalorder %s11, 3
      %p156 = pnand %p154, %p155
      %p157 = pneg %p156
      // Predicated region
      $region29: #{cnn_forward.4} parent=5 // pred_check
        _
      $region30: #{cnn_forward.4} parent=5 // pred_check_branch
        %159 = sbr.rel (%p156) target = $region32
      $region31: #{cnn_forward.4} parent=5 // pred_region
        %s160 = ssub.s32 %s11, 1
        // Predicated region
        $region33: #{cnn_forward.4} parent=31 // pred_check
          %p161 = pneg %p58
        $region34: #{cnn_forward.4} parent=31 // pred_check_branch
          %163 = sbr.rel (%p161) target = $region36
        $region35: #{cnn_forward.4} parent=31 // pred_region
          %164 = dma.done [#allocation3], 512
        $region36: #{cnn_forward.4} parent=31 // pred_fallthru
          _
        // Predicated region
        $region37: #{cnn_forward.4} parent=31 // pred_check
          %p165 = pneg %p79
        $region38: #{cnn_forward.4} parent=31 // pred_check_branch
          %167 = sbr.rel (%p165) target = $region40
        $region39: #{cnn_forward.4} parent=31 // pred_region
          %168 = dma.done [#allocation5], 16
        $region40: #{cnn_forward.4} parent=31 // pred_fallthru
          _
        %169 = sfence
        %p170 = scmp.lt.s32.totalorder %s16, 1
        %s171 = scalar_select %p170, %s16, 1
        %s172 = smul.addr %s171, 960
        %s173 = smul.addr %s172, 8
        %s174 = scalar_lea.vmem %s0, %s173
        %p175 = pneg %p37
        %p176 = pneg %p34
        %p177 = pneg %p58
        %p178 = pneg %p55
        %p179 = pneg %p79
        %p180 = pneg %p76
        %p181 = pneg %p105
        %p182 = pneg %p102
        %p183 = scmp.lt.s32.totalorder %s16, 1
        %s184 = scalar_select %p183, %s16, 1
        %s185 = smul.addr %s184, 105
        %s186 = smul.addr %s185, 8
        %s187 = scalar_lea.vmem %s3, %s186
        %p188 = scmp.lt.s32.totalorder %s16, 1
        %s189 = scalar_select %p188, %s16, 1
        %s190 = smul.addr %s189, 960
        %s191 = smul.addr %s190, 8
        %s192 = scalar_lea.vmem %s0, %s191
        %p193 = scmp.lt.s32.totalorder %s16, 1
        %s194 = scalar_select %p193, %s16, 1
        %s195 = smul.addr %s194, 105
        %s196 = smul.addr %s195, 8
        %s197 = scalar_lea.vmem %s3, %s196
        loop: start=0, step=1, limit=15
        $region41: #{cnn_forward.4} parent=31 // loop_pre_header
          _
        $region42: #{cnn_forward.4} parent=31 // loop_header
          %s199 = sphi 0, %s203
          %p200 = scmp.ge.s32.totalorder %s199, 15
        $region43: #{cnn_forward.4} parent=31 // loop_header_branch
          %202 = sbr.rel (%p200) target = $region47
        $region44: #{cnn_forward.4} parent=31 // loop_body
          loop: start=0, step=1, limit=30
          $region48: #{cnn_forward.4} parent=44 // loop_pre_header
            _
          $region49: #{cnn_forward.4} parent=44 // loop_header
            %s205 = sphi 0, %s209
            %p206 = scmp.ge.s32.totalorder %s205, 30
            %v210 = vphi 0.0, %v1206
            %v211 = vphi 0.0, %v1207
            %v212 = vphi 0.0, %v1208
            %v213 = vphi 0.0, %v1209
            %v214 = vphi 0.0, %v1210
            %v215 = vphi 0.0, %v1211
            %v216 = vphi 0.0, %v1212
            %v217 = vphi 0.0, %v1248
            %v218 = vphi 0.0, %v1249
            %v219 = vphi 0.0, %v1250
            %v220 = vphi 0.0, %v1251
            %v221 = vphi 0.0, %v1252
            %v222 = vphi 0.0, %v1253
            %v223 = vphi 0.0, %v1254
            %v224 = vphi 0.0, %v1290
            %v225 = vphi 0.0, %v1291
            %v226 = vphi 0.0, %v1292
            %v227 = vphi 0.0, %v1293
            %v228 = vphi 0.0, %v1294
            %v229 = vphi 0.0, %v1295
            %v230 = vphi 0.0, %v1296
            %v231 = vphi 0.0, %v1332
            %v232 = vphi 0.0, %v1333
            %v233 = vphi 0.0, %v1334
            %v234 = vphi 0.0, %v1335
            %v235 = vphi 0.0, %v1336
            %v236 = vphi 0.0, %v1337
            %v237 = vphi 0.0, %v1338
          $region50: #{cnn_forward.4} parent=44 // loop_header_branch
            %208 = sbr.rel (%p206) target = $region54
          $region51: #{cnn_forward.4} parent=44 // loop_body
            %s238 = smul.u32 %s199, 30
            %s239 = sadd.s32 %s238, %s205
            %s240 = smul.u32 %s239, 9
            %s241 = sld [smem:[#allocation2 + %s240]]
            %s242 = smul.u32 %s205, 256
            %s243 = scalar_lea.vmem %s192, %s242
            %v244 = vld [vmem:[%s243] sm:$0xff]
            %v245 = vld [vmem:[%s243 + $0x8] sm:$0xff]
            %v246 = vld [vmem:[%s243 + $0x10] sm:$0xff]
            %v247 = vld [vmem:[%s243 + $0x18] sm:$0xff]
            %v248 = vld [vmem:[%s243 + $0x20] sm:$0xff]
            %v249 = vld [vmem:[%s243 + $0x28] sm:$0xff]
            %v250 = vld [vmem:[%s243 + $0x30] sm:$0xff]
            %s251 = sadd.s32 64, %s242
            %s252 = scalar_lea.vmem %s192, %s251
            %v253 = vld [vmem:[%s252] sm:$0xff]
            %v254 = vld [vmem:[%s252 + $0x8] sm:$0xff]
            %v255 = vld [vmem:[%s252 + $0x10] sm:$0xff]
            %v256 = vld [vmem:[%s252 + $0x18] sm:$0xff]
            %v257 = vld [vmem:[%s252 + $0x20] sm:$0xff]
            %v258 = vld [vmem:[%s252 + $0x28] sm:$0xff]
            %v259 = vld [vmem:[%s252 + $0x30] sm:$0xff]
            %s260 = sadd.s32 128, %s242
            %s261 = scalar_lea.vmem %s192, %s260
            %v262 = vld [vmem:[%s261] sm:$0xff]
            %v263 = vld [vmem:[%s261 + $0x8] sm:$0xff]
            %v264 = vld [vmem:[%s261 + $0x10] sm:$0xff]
            %v265 = vld [vmem:[%s261 + $0x18] sm:$0xff]
            %v266 = vld [vmem:[%s261 + $0x20] sm:$0xff]
            %v267 = vld [vmem:[%s261 + $0x28] sm:$0xff]
            %v268 = vld [vmem:[%s261 + $0x30] sm:$0xff]
            %s269 = sadd.s32 192, %s242
            %s270 = scalar_lea.vmem %s192, %s269
            %v271 = vld [vmem:[%s270] sm:$0xff]
            %v272 = vld [vmem:[%s270 + $0x8] sm:$0xff]
            %v273 = vld [vmem:[%s270 + $0x10] sm:$0xff]
            %v274 = vld [vmem:[%s270 + $0x18] sm:$0xff]
            %v275 = vld [vmem:[%s270 + $0x20] sm:$0xff]
            %v276 = vld [vmem:[%s270 + $0x28] sm:$0xff]
            %v277 = vld [vmem:[%s270 + $0x30] sm:$0xff]
            %v278 = vstv %s241
            %v279 = vmul.f32 %v278, %v244
            %v280 = vmul.f32 %v278, %v245
            %v281 = vmul.f32 %v278, %v246
            %v282 = vmul.f32 %v278, %v247
            %v283 = vmul.f32 %v278, %v248
            %v284 = vmul.f32 %v278, %v249
            %v285 = vmul.f32 %v278, %v250
            %v286 = vadd.f32 %v210, %v279
            %v287 = vadd.f32 %v211, %v280
            %v288 = vadd.f32 %v212, %v281
            %v289 = vadd.f32 %v213, %v282
            %v290 = vadd.f32 %v214, %v283
            %v291 = vadd.f32 %v215, %v284
            %v292 = vadd.f32 %v216, %v285
            %v293 = vmul.f32 %v278, %v253
            %v294 = vmul.f32 %v278, %v254
            %v295 = vmul.f32 %v278, %v255
            %v296 = vmul.f32 %v278, %v256
            %v297 = vmul.f32 %v278, %v257
            %v298 = vmul.f32 %v278, %v258
            %v299 = vmul.f32 %v278, %v259
            %v300 = vadd.f32 %v217, %v293
            %v301 = vadd.f32 %v218, %v294
            %v302 = vadd.f32 %v219, %v295
            %v303 = vadd.f32 %v220, %v296
            %v304 = vadd.f32 %v221, %v297
            %v305 = vadd.f32 %v222, %v298
            %v306 = vadd.f32 %v223, %v299
            %v307 = vmul.f32 %v278, %v262
            %v308 = vmul.f32 %v278, %v263
            %v309 = vmul.f32 %v278, %v264
            %v310 = vmul.f32 %v278, %v265
            %v311 = vmul.f32 %v278, %v266
            %v312 = vmul.f32 %v278, %v267
            %v313 = vmul.f32 %v278, %v268
            %v314 = vadd.f32 %v224, %v307
            %v315 = vadd.f32 %v225, %v308
            %v316 = vadd.f32 %v226, %v309
            %v317 = vadd.f32 %v227, %v310
            %v318 = vadd.f32 %v228, %v311
            %v319 = vadd.f32 %v229, %v312
            %v320 = vadd.f32 %v230, %v313
            %v321 = vmul.f32 %v278, %v271
            %v322 = vmul.f32 %v278, %v272
            %v323 = vmul.f32 %v278, %v273
            %v324 = vmul.f32 %v278, %v274
            %v325 = vmul.f32 %v278, %v275
            %v326 = vmul.f32 %v278, %v276
            %v327 = vmul.f32 %v278, %v277
            %v328 = vadd.f32 %v231, %v321
            %v329 = vadd.f32 %v232, %v322
            %v330 = vadd.f32 %v233, %v323
            %v331 = vadd.f32 %v234, %v324
            %v332 = vadd.f32 %v235, %v325
            %v333 = vadd.f32 %v236, %v326
            %v334 = vadd.f32 %v237, %v327
            %s335 = sadd.s32 %s240, 1
            %s336 = sld [smem:[#allocation2 + %s335]]
            %v337 = vstv %s336
            %v338 = vmul.f32 %v337, %v253
            %v339 = vmul.f32 %v337, %v254
            %v340 = vmul.f32 %v337, %v255
            %v341 = vmul.f32 %v337, %v256
            %v342 = vmul.f32 %v337, %v257
            %v343 = vmul.f32 %v337, %v258
            %v344 = vmul.f32 %v337, %v259
            %v345 = vadd.f32 %v286, %v338
            %v346 = vadd.f32 %v287, %v339
            %v347 = vadd.f32 %v288, %v340
            %v348 = vadd.f32 %v289, %v341
            %v349 = vadd.f32 %v290, %v342
            %v350 = vadd.f32 %v291, %v343
            %v351 = vadd.f32 %v292, %v344
            %v352 = vmul.f32 %v337, %v244
            %v353 = vmul.f32 %v337, %v245
            %v354 = vmul.f32 %v337, %v246
            %v355 = vmul.f32 %v337, %v247
            %v356 = vmul.f32 %v337, %v248
            %v357 = vmul.f32 %v337, %v249
            %v358 = vmul.f32 %v337, %v250
            %366 = vrot.lane.b32.xlu0 %v352, 127
            %v367 = vpop.permute.xlu0 %366
            %368 = vrot.lane.b32.xlu0 %v353, 127
            %v369 = vpop.permute.xlu0 %368
            %370 = vrot.lane.b32.xlu0 %v354, 127
            %v371 = vpop.permute.xlu0 %370
            %372 = vrot.lane.b32.xlu0 %v355, 127
            %v373 = vpop.permute.xlu0 %372
            %374 = vrot.lane.b32.xlu0 %v356, 127
            %v375 = vpop.permute.xlu0 %374
            %376 = vrot.lane.b32.xlu0 %v357, 127
            %v377 = vpop.permute.xlu0 %376
            %378 = vrot.lane.b32.xlu0 %v358, 127
            %v379 = vpop.permute.xlu0 %378
            %v387 = vadd.f32 %v300, %v367
            %v388 = vadd.f32 %v301, %v369
            %v389 = vadd.f32 %v302, %v371
            %v390 = vadd.f32 %v303, %v373
            %v391 = vadd.f32 %v304, %v375
            %v392 = vadd.f32 %v305, %v377
            %v393 = vadd.f32 %v306, %v379
            %v394 = vmul.f32 %v337, %v271
            %v395 = vmul.f32 %v337, %v272
            %v396 = vmul.f32 %v337, %v273
            %v397 = vmul.f32 %v337, %v274
            %v398 = vmul.f32 %v337, %v275
            %v399 = vmul.f32 %v337, %v276
            %v400 = vmul.f32 %v337, %v277
            %v401 = vadd.f32 %v314, %v394
            %v402 = vadd.f32 %v315, %v395
            %v403 = vadd.f32 %v316, %v396
            %v404 = vadd.f32 %v317, %v397
            %v405 = vadd.f32 %v318, %v398
            %v406 = vadd.f32 %v319, %v399
            %v407 = vadd.f32 %v320, %v400
            %v408 = vmul.f32 %v337, %v262
            %v409 = vmul.f32 %v337, %v263
            %v410 = vmul.f32 %v337, %v264
            %v411 = vmul.f32 %v337, %v265
            %v412 = vmul.f32 %v337, %v266
            %v413 = vmul.f32 %v337, %v267
            %v414 = vmul.f32 %v337, %v268
            %422 = vrot.lane.b32.xlu0 %v408, 127
            %v423 = vpop.permute.xlu0 %422
            %424 = vrot.lane.b32.xlu0 %v409, 127
            %v425 = vpop.permute.xlu0 %424
            %426 = vrot.lane.b32.xlu0 %v410, 127
            %v427 = vpop.permute.xlu0 %426
            %428 = vrot.lane.b32.xlu0 %v411, 127
            %v429 = vpop.permute.xlu0 %428
            %430 = vrot.lane.b32.xlu0 %v412, 127
            %v431 = vpop.permute.xlu0 %430
            %432 = vrot.lane.b32.xlu0 %v413, 127
            %v433 = vpop.permute.xlu0 %432
            %434 = vrot.lane.b32.xlu0 %v414, 127
            %v435 = vpop.permute.xlu0 %434
            %v443 = vadd.f32 %v328, %v423
            %v444 = vadd.f32 %v329, %v425
            %v445 = vadd.f32 %v330, %v427
            %v446 = vadd.f32 %v331, %v429
            %v447 = vadd.f32 %v332, %v431
            %v448 = vadd.f32 %v333, %v433
            %v449 = vadd.f32 %v334, %v435
            %s450 = sadd.s32 %s240, 2
            %s451 = sld [smem:[#allocation2 + %s450]]
            %v452 = vstv %s451
            %v453 = vmul.f32 %v452, %v244
            %v454 = vmul.f32 %v452, %v245
            %v455 = vmul.f32 %v452, %v246
            %v456 = vmul.f32 %v452, %v247
            %v457 = vmul.f32 %v452, %v248
            %v458 = vmul.f32 %v452, %v249
            %v459 = vmul.f32 %v452, %v250
            %467 = vrot.lane.b32.xlu0 %v453, 127
            %v468 = vpop.permute.xlu0 %467
            %469 = vrot.lane.b32.xlu0 %v454, 127
            %v470 = vpop.permute.xlu0 %469
            %471 = vrot.lane.b32.xlu0 %v455, 127
            %v472 = vpop.permute.xlu0 %471
            %473 = vrot.lane.b32.xlu0 %v456, 127
            %v474 = vpop.permute.xlu0 %473
            %475 = vrot.lane.b32.xlu0 %v457, 127
            %v476 = vpop.permute.xlu0 %475
            %477 = vrot.lane.b32.xlu0 %v458, 127
            %v478 = vpop.permute.xlu0 %477
            %479 = vrot.lane.b32.xlu0 %v459, 127
            %v480 = vpop.permute.xlu0 %479
            %v488 = vadd.f32 %v345, %v468
            %v489 = vadd.f32 %v346, %v470
            %v490 = vadd.f32 %v347, %v472
            %v491 = vadd.f32 %v348, %v474
            %v492 = vadd.f32 %v349, %v476
            %v493 = vadd.f32 %v350, %v478
            %v494 = vadd.f32 %v351, %v480
            %v495 = vmul.f32 %v452, %v253
            %v496 = vmul.f32 %v452, %v254
            %v497 = vmul.f32 %v452, %v255
            %v498 = vmul.f32 %v452, %v256
            %v499 = vmul.f32 %v452, %v257
            %v500 = vmul.f32 %v452, %v258
            %v501 = vmul.f32 %v452, %v259
            %509 = vrot.lane.b32.xlu0 %v495, 127
            %v510 = vpop.permute.xlu0 %509
            %511 = vrot.lane.b32.xlu0 %v496, 127
            %v512 = vpop.permute.xlu0 %511
            %513 = vrot.lane.b32.xlu0 %v497, 127
            %v514 = vpop.permute.xlu0 %513
            %515 = vrot.lane.b32.xlu0 %v498, 127
            %v516 = vpop.permute.xlu0 %515
            %517 = vrot.lane.b32.xlu0 %v499, 127
            %v518 = vpop.permute.xlu0 %517
            %519 = vrot.lane.b32.xlu0 %v500, 127
            %v520 = vpop.permute.xlu0 %519
            %521 = vrot.lane.b32.xlu0 %v501, 127
            %v522 = vpop.permute.xlu0 %521
            %v530 = vadd.f32 %v387, %v510
            %v531 = vadd.f32 %v388, %v512
            %v532 = vadd.f32 %v389, %v514
            %v533 = vadd.f32 %v390, %v516
            %v534 = vadd.f32 %v391, %v518
            %v535 = vadd.f32 %v392, %v520
            %v536 = vadd.f32 %v393, %v522
            %v537 = vmul.f32 %v452, %v262
            %v538 = vmul.f32 %v452, %v263
            %v539 = vmul.f32 %v452, %v264
            %v540 = vmul.f32 %v452, %v265
            %v541 = vmul.f32 %v452, %v266
            %v542 = vmul.f32 %v452, %v267
            %v543 = vmul.f32 %v452, %v268
            %551 = vrot.lane.b32.xlu0 %v537, 127
            %v552 = vpop.permute.xlu0 %551
            %553 = vrot.lane.b32.xlu0 %v538, 127
            %v554 = vpop.permute.xlu0 %553
            %555 = vrot.lane.b32.xlu0 %v539, 127
            %v556 = vpop.permute.xlu0 %555
            %557 = vrot.lane.b32.xlu0 %v540, 127
            %v558 = vpop.permute.xlu0 %557
            %559 = vrot.lane.b32.xlu0 %v541, 127
            %v560 = vpop.permute.xlu0 %559
            %561 = vrot.lane.b32.xlu0 %v542, 127
            %v562 = vpop.permute.xlu0 %561
            %563 = vrot.lane.b32.xlu0 %v543, 127
            %v564 = vpop.permute.xlu0 %563
            %v572 = vadd.f32 %v401, %v552
            %v573 = vadd.f32 %v402, %v554
            %v574 = vadd.f32 %v403, %v556
            %v575 = vadd.f32 %v404, %v558
            %v576 = vadd.f32 %v405, %v560
            %v577 = vadd.f32 %v406, %v562
            %v578 = vadd.f32 %v407, %v564
            %v579 = vmul.f32 %v452, %v271
            %v580 = vmul.f32 %v452, %v272
            %v581 = vmul.f32 %v452, %v273
            %v582 = vmul.f32 %v452, %v274
            %v583 = vmul.f32 %v452, %v275
            %v584 = vmul.f32 %v452, %v276
            %v585 = vmul.f32 %v452, %v277
            %593 = vrot.lane.b32.xlu0 %v579, 127
            %v594 = vpop.permute.xlu0 %593
            %595 = vrot.lane.b32.xlu0 %v580, 127
            %v596 = vpop.permute.xlu0 %595
            %597 = vrot.lane.b32.xlu0 %v581, 127
            %v598 = vpop.permute.xlu0 %597
            %599 = vrot.lane.b32.xlu0 %v582, 127
            %v600 = vpop.permute.xlu0 %599
            %601 = vrot.lane.b32.xlu0 %v583, 127
            %v602 = vpop.permute.xlu0 %601
            %603 = vrot.lane.b32.xlu0 %v584, 127
            %v604 = vpop.permute.xlu0 %603
            %605 = vrot.lane.b32.xlu0 %v585, 127
            %v606 = vpop.permute.xlu0 %605
            %v614 = vadd.f32 %v443, %v594
            %v615 = vadd.f32 %v444, %v596
            %v616 = vadd.f32 %v445, %v598
            %v617 = vadd.f32 %v446, %v600
            %v618 = vadd.f32 %v447, %v602
            %v619 = vadd.f32 %v448, %v604
            %v620 = vadd.f32 %v449, %v606
            %s621 = sadd.s32 %s240, 3
            %s622 = sld [smem:[#allocation2 + %s621]]
            %v623 = vld [vmem:[%s243 + $0x1] sm:$0xff]
            %v624 = vld [vmem:[%s243 + $0x9] sm:$0xff]
            %v625 = vld [vmem:[%s243 + $0x11] sm:$0xff]
            %v626 = vld [vmem:[%s243 + $0x19] sm:$0xff]
            %v627 = vld [vmem:[%s243 + $0x21] sm:$0xff]
            %v628 = vld [vmem:[%s243 + $0x29] sm:$0xff]
            %v629 = vld [vmem:[%s243 + $0x31] sm:$0xff]
            %v630 = vld [vmem:[%s252 + $0x1] sm:$0xff]
            %v631 = vld [vmem:[%s252 + $0x9] sm:$0xff]
            %v632 = vld [vmem:[%s252 + $0x11] sm:$0xff]
            %v633 = vld [vmem:[%s252 + $0x19] sm:$0xff]
            %v634 = vld [vmem:[%s252 + $0x21] sm:$0xff]
            %v635 = vld [vmem:[%s252 + $0x29] sm:$0xff]
            %v636 = vld [vmem:[%s252 + $0x31] sm:$0xff]
            %v637 = vstv %s622
            %v638 = vmul.f32 %v637, %v262
            %v639 = vmul.f32 %v637, %v263
            %v640 = vmul.f32 %v637, %v264
            %v641 = vmul.f32 %v637, %v265
            %v642 = vmul.f32 %v637, %v266
            %v643 = vmul.f32 %v637, %v267
            %v644 = vmul.f32 %v637, %v268
            %v645 = vadd.f32 %v488, %v638
            %v646 = vadd.f32 %v489, %v639
            %v647 = vadd.f32 %v490, %v640
            %v648 = vadd.f32 %v491, %v641
            %v649 = vadd.f32 %v492, %v642
            %v650 = vadd.f32 %v493, %v643
            %v651 = vadd.f32 %v494, %v644
            %v652 = vmul.f32 %v637, %v271
            %v653 = vmul.f32 %v637, %v272
            %v654 = vmul.f32 %v637, %v273
            %v655 = vmul.f32 %v637, %v274
            %v656 = vmul.f32 %v637, %v275
            %v657 = vmul.f32 %v637, %v276
            %v658 = vmul.f32 %v637, %v277
            %v659 = vadd.f32 %v530, %v652
            %v660 = vadd.f32 %v531, %v653
            %v661 = vadd.f32 %v532, %v654
            %v662 = vadd.f32 %v533, %v655
            %v663 = vadd.f32 %v534, %v656
            %v664 = vadd.f32 %v535, %v657
            %v665 = vadd.f32 %v536, %v658
            %v666 = vmul.f32 %v637, %v623
            %v667 = vmul.f32 %v637, %v624
            %v668 = vmul.f32 %v637, %v625
            %v669 = vmul.f32 %v637, %v626
            %v670 = vmul.f32 %v637, %v627
            %v671 = vmul.f32 %v637, %v628
            %v672 = vmul.f32 %v637, %v629
            %v673 = vadd.f32 %v572, %v666
            %v674 = vadd.f32 %v573, %v667
            %v675 = vadd.f32 %v574, %v668
            %v676 = vadd.f32 %v575, %v669
            %v677 = vadd.f32 %v576, %v670
            %v678 = vadd.f32 %v577, %v671
            %v679 = vadd.f32 %v578, %v672
            %v680 = vmul.f32 %v637, %v630
            %v681 = vmul.f32 %v637, %v631
            %v682 = vmul.f32 %v637, %v632
            %v683 = vmul.f32 %v637, %v633
            %v684 = vmul.f32 %v637, %v634
            %v685 = vmul.f32 %v637, %v635
            %v686 = vmul.f32 %v637, %v636
            %v687 = vadd.f32 %v614, %v680
            %v688 = vadd.f32 %v615, %v681
            %v689 = vadd.f32 %v616, %v682
            %v690 = vadd.f32 %v617, %v683
            %v691 = vadd.f32 %v618, %v684
            %v692 = vadd.f32 %v619, %v685
            %v693 = vadd.f32 %v620, %v686
            %s694 = sadd.s32 %s240, 4
            %s695 = sld [smem:[#allocation2 + %s694]]
            %v696 = vstv %s695
            %v697 = vmul.f32 %v696, %v271
            %v698 = vmul.f32 %v696, %v272
            %v699 = vmul.f32 %v696, %v273
            %v700 = vmul.f32 %v696, %v274
            %v701 = vmul.f32 %v696, %v275
            %v702 = vmul.f32 %v696, %v276
            %v703 = vmul.f32 %v696, %v277
            %v704 = vadd.f32 %v645, %v697
            %v705 = vadd.f32 %v646, %v698
            %v706 = vadd.f32 %v647, %v699
            %v707 = vadd.f32 %v648, %v700
            %v708 = vadd.f32 %v649, %v701
            %v709 = vadd.f32 %v650, %v702
            %v710 = vadd.f32 %v651, %v703
            %v711 = vmul.f32 %v696, %v262
            %v712 = vmul.f32 %v696, %v263
            %v713 = vmul.f32 %v696, %v264
            %v714 = vmul.f32 %v696, %v265
            %v715 = vmul.f32 %v696, %v266
            %v716 = vmul.f32 %v696, %v267
            %v717 = vmul.f32 %v696, %v268
            %725 = vrot.lane.b32.xlu0 %v711, 127
            %v726 = vpop.permute.xlu0 %725
            %727 = vrot.lane.b32.xlu0 %v712, 127
            %v728 = vpop.permute.xlu0 %727
            %729 = vrot.lane.b32.xlu0 %v713, 127
            %v730 = vpop.permute.xlu0 %729
            %731 = vrot.lane.b32.xlu0 %v714, 127
            %v732 = vpop.permute.xlu0 %731
            %733 = vrot.lane.b32.xlu0 %v715, 127
            %v734 = vpop.permute.xlu0 %733
            %735 = vrot.lane.b32.xlu0 %v716, 127
            %v736 = vpop.permute.xlu0 %735
            %737 = vrot.lane.b32.xlu0 %v717, 127
            %v738 = vpop.permute.xlu0 %737
            %v746 = vadd.f32 %v659, %v726
            %v747 = vadd.f32 %v660, %v728
            %v748 = vadd.f32 %v661, %v730
            %v749 = vadd.f32 %v662, %v732
            %v750 = vadd.f32 %v663, %v734
            %v751 = vadd.f32 %v664, %v736
            %v752 = vadd.f32 %v665, %v738
            %v753 = vmul.f32 %v696, %v630
            %v754 = vmul.f32 %v696, %v631
            %v755 = vmul.f32 %v696, %v632
            %v756 = vmul.f32 %v696, %v633
            %v757 = vmul.f32 %v696, %v634
            %v758 = vmul.f32 %v696, %v635
            %v759 = vmul.f32 %v696, %v636
            %v760 = vadd.f32 %v673, %v753
            %v761 = vadd.f32 %v674, %v754
            %v762 = vadd.f32 %v675, %v755
            %v763 = vadd.f32 %v676, %v756
            %v764 = vadd.f32 %v677, %v757
            %v765 = vadd.f32 %v678, %v758
            %v766 = vadd.f32 %v679, %v759
            %v767 = vmul.f32 %v696, %v623
            %v768 = vmul.f32 %v696, %v624
            %v769 = vmul.f32 %v696, %v625
            %v770 = vmul.f32 %v696, %v626
            %v771 = vmul.f32 %v696, %v627
            %v772 = vmul.f32 %v696, %v628
            %v773 = vmul.f32 %v696, %v629
            %781 = vrot.lane.b32.xlu0 %v767, 127
            %v782 = vpop.permute.xlu0 %781
            %783 = vrot.lane.b32.xlu0 %v768, 127
            %v784 = vpop.permute.xlu0 %783
            %785 = vrot.lane.b32.xlu0 %v769, 127
            %v786 = vpop.permute.xlu0 %785
            %787 = vrot.lane.b32.xlu0 %v770, 127
            %v788 = vpop.permute.xlu0 %787
            %789 = vrot.lane.b32.xlu0 %v771, 127
            %v790 = vpop.permute.xlu0 %789
            %791 = vrot.lane.b32.xlu0 %v772, 127
            %v792 = vpop.permute.xlu0 %791
            %793 = vrot.lane.b32.xlu0 %v773, 127
            %v794 = vpop.permute.xlu0 %793
            %v802 = vadd.f32 %v687, %v782
            %v803 = vadd.f32 %v688, %v784
            %v804 = vadd.f32 %v689, %v786
            %v805 = vadd.f32 %v690, %v788
            %v806 = vadd.f32 %v691, %v790
            %v807 = vadd.f32 %v692, %v792
            %v808 = vadd.f32 %v693, %v794
            %s809 = sadd.s32 %s240, 5
            %s810 = sld [smem:[#allocation2 + %s809]]
            %v811 = vstv %s810
            %v812 = vmul.f32 %v811, %v262
            %v813 = vmul.f32 %v811, %v263
            %v814 = vmul.f32 %v811, %v264
            %v815 = vmul.f32 %v811, %v265
            %v816 = vmul.f32 %v811, %v266
            %v817 = vmul.f32 %v811, %v267
            %v818 = vmul.f32 %v811, %v268
            %826 = vrot.lane.b32.xlu0 %v812, 127
            %v827 = vpop.permute.xlu0 %826
            %828 = vrot.lane.b32.xlu0 %v813, 127
            %v829 = vpop.permute.xlu0 %828
            %830 = vrot.lane.b32.xlu0 %v814, 127
            %v831 = vpop.permute.xlu0 %830
            %832 = vrot.lane.b32.xlu0 %v815, 127
            %v833 = vpop.permute.xlu0 %832
            %834 = vrot.lane.b32.xlu0 %v816, 127
            %v835 = vpop.permute.xlu0 %834
            %836 = vrot.lane.b32.xlu0 %v817, 127
            %v837 = vpop.permute.xlu0 %836
            %838 = vrot.lane.b32.xlu0 %v818, 127
            %v839 = vpop.permute.xlu0 %838
            %v847 = vadd.f32 %v704, %v827
            %v848 = vadd.f32 %v705, %v829
            %v849 = vadd.f32 %v706, %v831
            %v850 = vadd.f32 %v707, %v833
            %v851 = vadd.f32 %v708, %v835
            %v852 = vadd.f32 %v709, %v837
            %v853 = vadd.f32 %v710, %v839
            %v854 = vmul.f32 %v811, %v271
            %v855 = vmul.f32 %v811, %v272
            %v856 = vmul.f32 %v811, %v273
            %v857 = vmul.f32 %v811, %v274
            %v858 = vmul.f32 %v811, %v275
            %v859 = vmul.f32 %v811, %v276
            %v860 = vmul.f32 %v811, %v277
            %868 = vrot.lane.b32.xlu0 %v854, 127
            %v869 = vpop.permute.xlu0 %868
            %870 = vrot.lane.b32.xlu0 %v855, 127
            %v871 = vpop.permute.xlu0 %870
            %872 = vrot.lane.b32.xlu0 %v856, 127
            %v873 = vpop.permute.xlu0 %872
            %874 = vrot.lane.b32.xlu0 %v857, 127
            %v875 = vpop.permute.xlu0 %874
            %876 = vrot.lane.b32.xlu0 %v858, 127
            %v877 = vpop.permute.xlu0 %876
            %878 = vrot.lane.b32.xlu0 %v859, 127
            %v879 = vpop.permute.xlu0 %878
            %880 = vrot.lane.b32.xlu0 %v860, 127
            %v881 = vpop.permute.xlu0 %880
            %v889 = vadd.f32 %v746, %v869
            %v890 = vadd.f32 %v747, %v871
            %v891 = vadd.f32 %v748, %v873
            %v892 = vadd.f32 %v749, %v875
            %v893 = vadd.f32 %v750, %v877
            %v894 = vadd.f32 %v751, %v879
            %v895 = vadd.f32 %v752, %v881
            %v896 = vmul.f32 %v811, %v623
            %v897 = vmul.f32 %v811, %v624
            %v898 = vmul.f32 %v811, %v625
            %v899 = vmul.f32 %v811, %v626
            %v900 = vmul.f32 %v811, %v627
            %v901 = vmul.f32 %v811, %v628
            %v902 = vmul.f32 %v811, %v629
            %910 = vrot.lane.b32.xlu0 %v896, 127
            %v911 = vpop.permute.xlu0 %910
            %912 = vrot.lane.b32.xlu0 %v897, 127
            %v913 = vpop.permute.xlu0 %912
            %914 = vrot.lane.b32.xlu0 %v898, 127
            %v915 = vpop.permute.xlu0 %914
            %916 = vrot.lane.b32.xlu0 %v899, 127
            %v917 = vpop.permute.xlu0 %916
            %918 = vrot.lane.b32.xlu0 %v900, 127
            %v919 = vpop.permute.xlu0 %918
            %920 = vrot.lane.b32.xlu0 %v901, 127
            %v921 = vpop.permute.xlu0 %920
            %922 = vrot.lane.b32.xlu0 %v902, 127
            %v923 = vpop.permute.xlu0 %922
            %v931 = vadd.f32 %v760, %v911
            %v932 = vadd.f32 %v761, %v913
            %v933 = vadd.f32 %v762, %v915
            %v934 = vadd.f32 %v763, %v917
            %v935 = vadd.f32 %v764, %v919
            %v936 = vadd.f32 %v765, %v921
            %v937 = vadd.f32 %v766, %v923
            %v938 = vmul.f32 %v811, %v630
            %v939 = vmul.f32 %v811, %v631
            %v940 = vmul.f32 %v811, %v632
            %v941 = vmul.f32 %v811, %v633
            %v942 = vmul.f32 %v811, %v634
            %v943 = vmul.f32 %v811, %v635
            %v944 = vmul.f32 %v811, %v636
            %952 = vrot.lane.b32.xlu0 %v938, 127
            %v953 = vpop.permute.xlu0 %952
            %954 = vrot.lane.b32.xlu0 %v939, 127
            %v955 = vpop.permute.xlu0 %954
            %956 = vrot.lane.b32.xlu0 %v940, 127
            %v957 = vpop.permute.xlu0 %956
            %958 = vrot.lane.b32.xlu0 %v941, 127
            %v959 = vpop.permute.xlu0 %958
            %960 = vrot.lane.b32.xlu0 %v942, 127
            %v961 = vpop.permute.xlu0 %960
            %962 = vrot.lane.b32.xlu0 %v943, 127
            %v963 = vpop.permute.xlu0 %962
            %964 = vrot.lane.b32.xlu0 %v944, 127
            %v965 = vpop.permute.xlu0 %964
            %v973 = vadd.f32 %v802, %v953
            %v974 = vadd.f32 %v803, %v955
            %v975 = vadd.f32 %v804, %v957
            %v976 = vadd.f32 %v805, %v959
            %v977 = vadd.f32 %v806, %v961
            %v978 = vadd.f32 %v807, %v963
            %v979 = vadd.f32 %v808, %v965
            %s980 = sadd.s32 %s240, 6
            %s981 = sld [smem:[#allocation2 + %s980]]
            %v982 = vld [vmem:[%s261 + $0x1] sm:$0xff]
            %v983 = vld [vmem:[%s261 + $0x9] sm:$0xff]
            %v984 = vld [vmem:[%s261 + $0x11] sm:$0xff]
            %v985 = vld [vmem:[%s261 + $0x19] sm:$0xff]
            %v986 = vld [vmem:[%s261 + $0x21] sm:$0xff]
            %v987 = vld [vmem:[%s261 + $0x29] sm:$0xff]
            %v988 = vld [vmem:[%s261 + $0x31] sm:$0xff]
            %v989 = vld [vmem:[%s270 + $0x1] sm:$0xff]
            %v990 = vld [vmem:[%s270 + $0x9] sm:$0xff]
            %v991 = vld [vmem:[%s270 + $0x11] sm:$0xff]
            %v992 = vld [vmem:[%s270 + $0x19] sm:$0xff]
            %v993 = vld [vmem:[%s270 + $0x21] sm:$0xff]
            %v994 = vld [vmem:[%s270 + $0x29] sm:$0xff]
            %v995 = vld [vmem:[%s270 + $0x31] sm:$0xff]
            %v996 = vstv %s981
            %v997 = vmul.f32 %v996, %v623
            %v998 = vmul.f32 %v996, %v624
            %v999 = vmul.f32 %v996, %v625
            %v1000 = vmul.f32 %v996, %v626
            %v1001 = vmul.f32 %v996, %v627
            %v1002 = vmul.f32 %v996, %v628
            %v1003 = vmul.f32 %v996, %v629
            %v1004 = vadd.f32 %v847, %v997
            %v1005 = vadd.f32 %v848, %v998
            %v1006 = vadd.f32 %v849, %v999
            %v1007 = vadd.f32 %v850, %v1000
            %v1008 = vadd.f32 %v851, %v1001
            %v1009 = vadd.f32 %v852, %v1002
            %v1010 = vadd.f32 %v853, %v1003
            %v1011 = vmul.f32 %v996, %v630
            %v1012 = vmul.f32 %v996, %v631
            %v1013 = vmul.f32 %v996, %v632
            %v1014 = vmul.f32 %v996, %v633
            %v1015 = vmul.f32 %v996, %v634
            %v1016 = vmul.f32 %v996, %v635
            %v1017 = vmul.f32 %v996, %v636
            %v1018 = vadd.f32 %v889, %v1011
            %v1019 = vadd.f32 %v890, %v1012
            %v1020 = vadd.f32 %v891, %v1013
            %v1021 = vadd.f32 %v892, %v1014
            %v1022 = vadd.f32 %v893, %v1015
            %v1023 = vadd.f32 %v894, %v1016
            %v1024 = vadd.f32 %v895, %v1017
            %v1025 = vmul.f32 %v996, %v982
            %v1026 = vmul.f32 %v996, %v983
            %v1027 = vmul.f32 %v996, %v984
            %v1028 = vmul.f32 %v996, %v985
            %v1029 = vmul.f32 %v996, %v986
            %v1030 = vmul.f32 %v996, %v987
            %v1031 = vmul.f32 %v996, %v988
            %v1032 = vadd.f32 %v931, %v1025
            %v1033 = vadd.f32 %v932, %v1026
            %v1034 = vadd.f32 %v933, %v1027
            %v1035 = vadd.f32 %v934, %v1028
            %v1036 = vadd.f32 %v935, %v1029
            %v1037 = vadd.f32 %v936, %v1030
            %v1038 = vadd.f32 %v937, %v1031
            %v1039 = vmul.f32 %v996, %v989
            %v1040 = vmul.f32 %v996, %v990
            %v1041 = vmul.f32 %v996, %v991
            %v1042 = vmul.f32 %v996, %v992
            %v1043 = vmul.f32 %v996, %v993
            %v1044 = vmul.f32 %v996, %v994
            %v1045 = vmul.f32 %v996, %v995
            %v1046 = vadd.f32 %v973, %v1039
            %v1047 = vadd.f32 %v974, %v1040
            %v1048 = vadd.f32 %v975, %v1041
            %v1049 = vadd.f32 %v976, %v1042
            %v1050 = vadd.f32 %v977, %v1043
            %v1051 = vadd.f32 %v978, %v1044
            %v1052 = vadd.f32 %v979, %v1045
            %s1053 = sadd.s32 %s240, 7
            %s1054 = sld [smem:[#allocation2 + %s1053]]
            %v1055 = vstv %s1054
            %v1056 = vmul.f32 %v1055, %v630
            %v1057 = vmul.f32 %v1055, %v631
            %v1058 = vmul.f32 %v1055, %v632
            %v1059 = vmul.f32 %v1055, %v633
            %v1060 = vmul.f32 %v1055, %v634
            %v1061 = vmul.f32 %v1055, %v635
            %v1062 = vmul.f32 %v1055, %v636
            %v1063 = vadd.f32 %v1004, %v1056
            %v1064 = vadd.f32 %v1005, %v1057
            %v1065 = vadd.f32 %v1006, %v1058
            %v1066 = vadd.f32 %v1007, %v1059
            %v1067 = vadd.f32 %v1008, %v1060
            %v1068 = vadd.f32 %v1009, %v1061
            %v1069 = vadd.f32 %v1010, %v1062
            %v1070 = vmul.f32 %v1055, %v623
            %v1071 = vmul.f32 %v1055, %v624
            %v1072 = vmul.f32 %v1055, %v625
            %v1073 = vmul.f32 %v1055, %v626
            %v1074 = vmul.f32 %v1055, %v627
            %v1075 = vmul.f32 %v1055, %v628
            %v1076 = vmul.f32 %v1055, %v629
            %1084 = vrot.lane.b32.xlu0 %v1070, 127
            %v1085 = vpop.permute.xlu0 %1084
            %1086 = vrot.lane.b32.xlu0 %v1071, 127
            %v1087 = vpop.permute.xlu0 %1086
            %1088 = vrot.lane.b32.xlu0 %v1072, 127
            %v1089 = vpop.permute.xlu0 %1088
            %1090 = vrot.lane.b32.xlu0 %v1073, 127
            %v1091 = vpop.permute.xlu0 %1090
            %1092 = vrot.lane.b32.xlu0 %v1074, 127
            %v1093 = vpop.permute.xlu0 %1092
            %1094 = vrot.lane.b32.xlu0 %v1075, 127
            %v1095 = vpop.permute.xlu0 %1094
            %1096 = vrot.lane.b32.xlu0 %v1076, 127
            %v1097 = vpop.permute.xlu0 %1096
            %v1105 = vadd.f32 %v1018, %v1085
            %v1106 = vadd.f32 %v1019, %v1087
            %v1107 = vadd.f32 %v1020, %v1089
            %v1108 = vadd.f32 %v1021, %v1091
            %v1109 = vadd.f32 %v1022, %v1093
            %v1110 = vadd.f32 %v1023, %v1095
            %v1111 = vadd.f32 %v1024, %v1097
            %v1112 = vmul.f32 %v1055, %v989
            %v1113 = vmul.f32 %v1055, %v990
            %v1114 = vmul.f32 %v1055, %v991
            %v1115 = vmul.f32 %v1055, %v992
            %v1116 = vmul.f32 %v1055, %v993
            %v1117 = vmul.f32 %v1055, %v994
            %v1118 = vmul.f32 %v1055, %v995
            %v1119 = vadd.f32 %v1032, %v1112
            %v1120 = vadd.f32 %v1033, %v1113
            %v1121 = vadd.f32 %v1034, %v1114
            %v1122 = vadd.f32 %v1035, %v1115
            %v1123 = vadd.f32 %v1036, %v1116
            %v1124 = vadd.f32 %v1037, %v1117
            %v1125 = vadd.f32 %v1038, %v1118
            %v1126 = vmul.f32 %v1055, %v982
            %v1127 = vmul.f32 %v1055, %v983
            %v1128 = vmul.f32 %v1055, %v984
            %v1129 = vmul.f32 %v1055, %v985
            %v1130 = vmul.f32 %v1055, %v986
            %v1131 = vmul.f32 %v1055, %v987
            %v1132 = vmul.f32 %v1055, %v988
            %1140 = vrot.lane.b32.xlu0 %v1126, 127
            %v1141 = vpop.permute.xlu0 %1140
            %1142 = vrot.lane.b32.xlu0 %v1127, 127
            %v1143 = vpop.permute.xlu0 %1142
            %1144 = vrot.lane.b32.xlu0 %v1128, 127
            %v1145 = vpop.permute.xlu0 %1144
            %1146 = vrot.lane.b32.xlu0 %v1129, 127
            %v1147 = vpop.permute.xlu0 %1146
            %1148 = vrot.lane.b32.xlu0 %v1130, 127
            %v1149 = vpop.permute.xlu0 %1148
            %1150 = vrot.lane.b32.xlu0 %v1131, 127
            %v1151 = vpop.permute.xlu0 %1150
            %1152 = vrot.lane.b32.xlu0 %v1132, 127
            %v1153 = vpop.permute.xlu0 %1152
            %v1161 = vadd.f32 %v1046, %v1141
            %v1162 = vadd.f32 %v1047, %v1143
            %v1163 = vadd.f32 %v1048, %v1145
            %v1164 = vadd.f32 %v1049, %v1147
            %v1165 = vadd.f32 %v1050, %v1149
            %v1166 = vadd.f32 %v1051, %v1151
            %v1167 = vadd.f32 %v1052, %v1153
            %s1168 = sadd.s32 %s240, 8
            %s1169 = sld [smem:[#allocation2 + %s1168]]
            %v1170 = vstv %s1169
            %v1171 = vmul.f32 %v1170, %v623
            %v1172 = vmul.f32 %v1170, %v624
            %v1173 = vmul.f32 %v1170, %v625
            %v1174 = vmul.f32 %v1170, %v626
            %v1175 = vmul.f32 %v1170, %v627
            %v1176 = vmul.f32 %v1170, %v628
            %v1177 = vmul.f32 %v1170, %v629
            %1185 = vrot.lane.b32.xlu0 %v1171, 127
            %v1186 = vpop.permute.xlu0 %1185
            %1187 = vrot.lane.b32.xlu0 %v1172, 127
            %v1188 = vpop.permute.xlu0 %1187
            %1189 = vrot.lane.b32.xlu0 %v1173, 127
            %v1190 = vpop.permute.xlu0 %1189
            %1191 = vrot.lane.b32.xlu0 %v1174, 127
            %v1192 = vpop.permute.xlu0 %1191
            %1193 = vrot.lane.b32.xlu0 %v1175, 127
            %v1194 = vpop.permute.xlu0 %1193
            %1195 = vrot.lane.b32.xlu0 %v1176, 127
            %v1196 = vpop.permute.xlu0 %1195
            %1197 = vrot.lane.b32.xlu0 %v1177, 127
            %v1198 = vpop.permute.xlu0 %1197
            %v1206 = vadd.f32 %v1063, %v1186
            %v1207 = vadd.f32 %v1064, %v1188
            %v1208 = vadd.f32 %v1065, %v1190
            %v1209 = vadd.f32 %v1066, %v1192
            %v1210 = vadd.f32 %v1067, %v1194
            %v1211 = vadd.f32 %v1068, %v1196
            %v1212 = vadd.f32 %v1069, %v1198
            %v1213 = vmul.f32 %v1170, %v630
            %v1214 = vmul.f32 %v1170, %v631
            %v1215 = vmul.f32 %v1170, %v632
            %v1216 = vmul.f32 %v1170, %v633
            %v1217 = vmul.f32 %v1170, %v634
            %v1218 = vmul.f32 %v1170, %v635
            %v1219 = vmul.f32 %v1170, %v636
            %1227 = vrot.lane.b32.xlu0 %v1213, 127
            %v1228 = vpop.permute.xlu0 %1227
            %1229 = vrot.lane.b32.xlu0 %v1214, 127
            %v1230 = vpop.permute.xlu0 %1229
            %1231 = vrot.lane.b32.xlu0 %v1215, 127
            %v1232 = vpop.permute.xlu0 %1231
            %1233 = vrot.lane.b32.xlu0 %v1216, 127
            %v1234 = vpop.permute.xlu0 %1233
            %1235 = vrot.lane.b32.xlu0 %v1217, 127
            %v1236 = vpop.permute.xlu0 %1235
            %1237 = vrot.lane.b32.xlu0 %v1218, 127
            %v1238 = vpop.permute.xlu0 %1237
            %1239 = vrot.lane.b32.xlu0 %v1219, 127
            %v1240 = vpop.permute.xlu0 %1239
            %v1248 = vadd.f32 %v1105, %v1228
            %v1249 = vadd.f32 %v1106, %v1230
            %v1250 = vadd.f32 %v1107, %v1232
            %v1251 = vadd.f32 %v1108, %v1234
            %v1252 = vadd.f32 %v1109, %v1236
            %v1253 = vadd.f32 %v1110, %v1238
            %v1254 = vadd.f32 %v1111, %v1240
            %v1255 = vmul.f32 %v1170, %v982
            %v1256 = vmul.f32 %v1170, %v983
            %v1257 = vmul.f32 %v1170, %v984
            %v1258 = vmul.f32 %v1170, %v985
            %v1259 = vmul.f32 %v1170, %v986
            %v1260 = vmul.f32 %v1170, %v987
            %v1261 = vmul.f32 %v1170, %v988
            %1269 = vrot.lane.b32.xlu0 %v1255, 127
            %v1270 = vpop.permute.xlu0 %1269
            %1271 = vrot.lane.b32.xlu0 %v1256, 127
            %v1272 = vpop.permute.xlu0 %1271
            %1273 = vrot.lane.b32.xlu0 %v1257, 127
            %v1274 = vpop.permute.xlu0 %1273
            %1275 = vrot.lane.b32.xlu0 %v1258, 127
            %v1276 = vpop.permute.xlu0 %1275
            %1277 = vrot.lane.b32.xlu0 %v1259, 127
            %v1278 = vpop.permute.xlu0 %1277
            %1279 = vrot.lane.b32.xlu0 %v1260, 127
            %v1280 = vpop.permute.xlu0 %1279
            %1281 = vrot.lane.b32.xlu0 %v1261, 127
            %v1282 = vpop.permute.xlu0 %1281
            %v1290 = vadd.f32 %v1119, %v1270
            %v1291 = vadd.f32 %v1120, %v1272
            %v1292 = vadd.f32 %v1121, %v1274
            %v1293 = vadd.f32 %v1122, %v1276
            %v1294 = vadd.f32 %v1123, %v1278
            %v1295 = vadd.f32 %v1124, %v1280
            %v1296 = vadd.f32 %v1125, %v1282
            %v1297 = vmul.f32 %v1170, %v989
            %v1298 = vmul.f32 %v1170, %v990
            %v1299 = vmul.f32 %v1170, %v991
            %v1300 = vmul.f32 %v1170, %v992
            %v1301 = vmul.f32 %v1170, %v993
            %v1302 = vmul.f32 %v1170, %v994
            %v1303 = vmul.f32 %v1170, %v995
            %1311 = vrot.lane.b32.xlu0 %v1297, 127
            %v1312 = vpop.permute.xlu0 %1311
            %1313 = vrot.lane.b32.xlu0 %v1298, 127
            %v1314 = vpop.permute.xlu0 %1313
            %1315 = vrot.lane.b32.xlu0 %v1299, 127
            %v1316 = vpop.permute.xlu0 %1315
            %1317 = vrot.lane.b32.xlu0 %v1300, 127
            %v1318 = vpop.permute.xlu0 %1317
            %1319 = vrot.lane.b32.xlu0 %v1301, 127
            %v1320 = vpop.permute.xlu0 %1319
            %1321 = vrot.lane.b32.xlu0 %v1302, 127
            %v1322 = vpop.permute.xlu0 %1321
            %1323 = vrot.lane.b32.xlu0 %v1303, 127
            %v1324 = vpop.permute.xlu0 %1323
            %v1332 = vadd.f32 %v1161, %v1312
            %v1333 = vadd.f32 %v1162, %v1314
            %v1334 = vadd.f32 %v1163, %v1316
            %v1335 = vadd.f32 %v1164, %v1318
            %v1336 = vadd.f32 %v1165, %v1320
            %v1337 = vadd.f32 %v1166, %v1322
            %v1338 = vadd.f32 %v1167, %v1324
          $region52: #{cnn_forward.4} parent=44 // loop_footer
            %s209 = sadd.s32 1, %s205
          $region53: #{cnn_forward.4} parent=44 // loop_footer_branch
            %204 = sbr.rel target = $region49
          $region54: #{cnn_forward.4} parent=44 // loop_exit
            _
          %v1339 = vmax.f32 %v210, %v217
          %v1340 = vmax.f32 %v211, %v218
          %v1341 = vmax.f32 %v212, %v219
          %v1342 = vmax.f32 %v213, %v220
          %v1343 = vmax.f32 %v214, %v221
          %v1344 = vmax.f32 %v215, %v222
          %v1345 = vmax.f32 %v216, %v223
          %v1346 = vmax.f32 %v224, %v231
          %v1347 = vmax.f32 %v225, %v232
          %v1348 = vmax.f32 %v226, %v233
          %v1349 = vmax.f32 %v227, %v234
          %v1350 = vmax.f32 %v228, %v235
          %v1351 = vmax.f32 %v229, %v236
          %v1352 = vmax.f32 %v230, %v237
          %v1353 = vmax.f32 %v1339, %v1346
          %v1354 = vmax.f32 %v1340, %v1347
          %v1355 = vmax.f32 %v1341, %v1348
          %v1356 = vmax.f32 %v1342, %v1349
          %v1357 = vmax.f32 %v1343, %v1350
          %v1358 = vmax.f32 %v1344, %v1351
          %v1359 = vmax.f32 %v1345, %v1352
          %s1360 = sld [smem:[#allocation4 + %s199]]
          %v1361 = vstv %s1360
          %v1362 = vadd.f32 %v1353, %v1361
          %v1363 = vadd.f32 %v1354, %v1361
          %v1364 = vadd.f32 %v1355, %v1361
          %v1365 = vadd.f32 %v1356, %v1361
          %v1366 = vadd.f32 %v1357, %v1361
          %v1367 = vadd.f32 %v1358, %v1361
          %v1368 = vadd.f32 %v1359, %v1361
          %v1369 = vmax.f32 %v1362, 0.0
          %v1370 = vmax.f32 %v1363, 0.0
          %v1371 = vmax.f32 %v1364, 0.0
          %v1372 = vmax.f32 %v1365, 0.0
          %v1373 = vmax.f32 %v1366, 0.0
          %v1374 = vmax.f32 %v1367, 0.0
          %v1375 = vmax.f32 %v1368, 0.0
          %s1376 = smul.u32 %s199, 56
          %s1377 = scalar_lea.vmem %s197, %s1376
          %vm1378 = vcmask 457728
          %1379 = vst.msk [vmem:[%s1377] sm:$0xff] %vm1378, %v1369
          %1380 = vst.msk [vmem:[%s1377 + $0x8] sm:$0xff] %vm1378, %v1370
          %1381 = vst.msk [vmem:[%s1377 + $0x10] sm:$0xff] %vm1378, %v1371
          %1382 = vst.msk [vmem:[%s1377 + $0x18] sm:$0xff] %vm1378, %v1372
          %1383 = vst.msk [vmem:[%s1377 + $0x20] sm:$0xff] %vm1378, %v1373
          %1384 = vst.msk [vmem:[%s1377 + $0x28] sm:$0xff] %vm1378, %v1374
          %1385 = vst.msk [vmem:[%s1377 + $0x30] sm:$0xff] %vm1378, %v1375
        $region45: #{cnn_forward.4} parent=31 // loop_footer
          %s203 = sadd.s32 1, %s199
        $region46: #{cnn_forward.4} parent=31 // loop_footer_branch
          %198 = sbr.rel target = $region42
        $region47: #{cnn_forward.4} parent=31 // loop_exit
          _
        %p1386 = scmp.lt.s32.totalorder %s16, 1
        %s1387 = scalar_select %p1386, %s16, 1
        %s1388 = smul.addr %s1387, 105
        %s1389 = smul.addr %s1388, 8
        %s1390 = scalar_lea.vmem %s3, %s1389
        // Predicated region
        $region55: #{cnn_forward.4} parent=31 // pred_check
          %p1391 = pneg %p102
        $region56: #{cnn_forward.4} parent=31 // pred_check_branch
          %1393 = sbr.rel (%p1391) target = $region58
        $region57: #{cnn_forward.4} parent=31 // pred_region
          _
        $region58: #{cnn_forward.4} parent=31 // pred_fallthru
          _
      $region32: #{cnn_forward.4} parent=5 // pred_fallthru
        _
      %p1394 = scmp.le.s32.totalorder 2, %s11
      // Predicated region
      $region59: #{cnn_forward.4} parent=5 // pred_check
        %p1395 = pneg %p1394
      $region60: #{cnn_forward.4} parent=5 // pred_check_branch
        %1397 = sbr.rel (%p1395) target = $region62
      $region61: #{cnn_forward.4} parent=5 // pred_region
        %s1398 = ssub.s32 %s11, 2
        // Predicated region
        $region63: #{cnn_forward.4} parent=61 // pred_check
          %p1399 = pneg %p108
        $region64: #{cnn_forward.4} parent=61 // pred_check_branch
          %1401 = sbr.rel (%p1399) target = $region66
        $region65: #{cnn_forward.4} parent=61 // pred_region
          %p1402 = scmp.lt.s32.totalorder %s17, 1
          %s1403 = scalar_select %p1402, %s17, 1
          %s1404 = smul.addr %s1403, 105
          %s1405 = smul.addr %s1404, 8
          %s1406 = scalar_lea.vmem %s3, %s1405
        $region66: #{cnn_forward.4} parent=61 // pred_fallthru
          _
      $region62: #{cnn_forward.4} parent=5 // pred_fallthru
        _
    $region6: #{cnn_forward.4} parent=1 // loop_footer
      %s15 = sadd.s32 1, %s11
    $region7: #{cnn_forward.4} parent=1 // loop_footer_branch
      %10 = sbr.rel target = $region3
    $region8: #{cnn_forward.4} parent=1 // loop_exit
      _
    %1407 = vsyncpa [#allocation3], 1
    %s1408 = scalar_lea.sflag [#allocation3], 1
    %1409 = vsyncpa %s1408, 1
    %1410 = vsyncpa [#allocation5], 1

// kernel: cnn_forward.5
$region0: #{cnn_forward.5}
  #allocation0 [shape = 'u32[]', space=smem, size = 0x4, offset = 0x4, fixed_abs, tag = 'smem constant byte address 0x4 - core index']
  #allocation1 [shape = 'u32[144,128]{1,0:T(1,128)}', space=vmem, size = 0x12000, scoped, tag = 'internal scratch']
  #allocation2 [shape = 'f32[2,128]{1,0:T(2,128)}', space=vmem, size = 0x400, scoped, tag = 'scratch operand']
  %s0 = inlined_call_operand.vmem [shape: bf16[2,47104], index: 0, kind: input, shape index: {}]
  %s1 = inlined_call_operand.vmem [shape: bf16[47104,128], index: 1, kind: input, shape index: {}]
  %s2 = inlined_call_operand.vmem [shape: f32[1,128], index: 2, kind: input, shape index: {}]
  %s3 = inlined_call_operand.vmem [shape: f32[128,50], index: 3, kind: input, shape index: {}]
  %s4 = inlined_call_operand.vmem [shape: f32[1,50], index: 4, kind: input, shape index: {}]
  %s5 = inlined_call_operand.vmem [shape: f32[50,345], index: 5, kind: input, shape index: {}]
  %s6 = inlined_call_operand.vmem [shape: f32[1,345], index: 6, kind: input, shape index: {}]
  %s7 = inlined_call_operand.hbm [shape: f32[2,345], index: 7, kind: output, shape index: {}]
  %s8 = sld [smem:[#allocation0]]
  $region69: #{cnn_forward.5} parent=0
    _
  %s10 = ssub.s32 1, %s8
  %s11 = scalar_select 0, %s10, %s8
  $region1: #{cnn_forward.5} parent=0
    #allocation3 [shape = 'u8[3072]{0}', space=vmem, size = 0xc00, scoped, tag = 'output window, operand 0, single buffered']
    #allocation4 [shape = 's32[2]{0}', space=sflag, size = 0x8, scoped, tag = 'scoped memory for cnn_forward.5']
    %12 = vsyncpa [#allocation4], 0
    loop: start=0, step=1, limit=10
    $region2: #{cnn_forward.5} parent=1 // loop_pre_header
      _
    $region3: #{cnn_forward.5} parent=1 // loop_header
      %s14 = sphi 0, %s18
      %p15 = scmp.ge.s32.totalorder %s14, 10
      %s24 = sphi 0, %s26
      %s27 = sphi 0, %s24
      %s28 = sphi 0, %s27
      %s44 = sphi 0, %s28
      %s50 = sphi 0, %s52
      %s53 = sphi 0, %s50
      %s54 = sphi 0, %s53
      %s70 = sphi 0, %s54
      %s74 = sphi 0, %s74
      %s76 = sphi 0, %s74
      %s77 = sphi 0, %s76
      %s91 = sphi 0, %s77
      %s95 = sphi 0, %s95
      %s97 = sphi 0, %s95
      %s98 = sphi 0, %s97
      %s112 = sphi 0, %s98
      %s116 = sphi 0, %s116
      %s118 = sphi 0, %s116
      %s119 = sphi 0, %s118
      %s133 = sphi 0, %s119
      %s137 = sphi 0, %s137
      %s139 = sphi 0, %s137
      %s140 = sphi 0, %s139
      %s154 = sphi 0, %s140
      %s158 = sphi 0, %s158
      %s160 = sphi 0, %s158
      %s161 = sphi 0, %s160
      %s175 = sphi 0, %s161
      %s179 = sphi 0, %s179
      %s181 = sphi 0, %s179
      %s182 = sphi 0, %s181
      %s196 = sphi 0, %s182
    $region4: #{cnn_forward.5} parent=1 // loop_header_branch
      %17 = sbr.rel (%p15) target = $region8
    $region5: #{cnn_forward.5} parent=1 // loop_body
      %s19 = ssub.s32 %s14, 1
      %s20 = ssub.s32 %s14, 2
      %s21 = sadd.s32 %s14, 1
      %s22 = ssub.s32 %s14, %s21
      %p23 = scmp.eq.s32.totalorder %s22, 0
      %s25 = sadd.s32 %s24, 1
      %s26 = scalar_select %p23, %s24, %s25
      %p29 = pneg %p23
      %p30 = scmp.eq.s32.totalorder %s14, 7
      %p31 = por %p29, %p30
      %p32 = scmp.ne.s32.totalorder %s24, %s27
      %p33 = scmp.eq.s32.totalorder %s14, 0
      %p34 = por %p32, %p33
      %p35 = scmp.ne.s32.totalorder %s24, %s27
      %p36 = scmp.eq.s32.totalorder %s19, 7
      %p37 = por %p35, %p36
      %p38 = scmp.ne.s32.totalorder %s27, %s28
      %p39 = scmp.eq.s32.totalorder %s19, 0
      %p40 = por %p38, %p39
      %p41 = scmp.ne.s32.totalorder %s27, %s28
      %p42 = scmp.eq.s32.totalorder %s20, 7
      %p43 = por %p41, %p42
      %p45 = scmp.ne.s32.totalorder %s28, %s44
      %p46 = scmp.eq.s32.totalorder %s20, 0
      %p47 = por %p45, %p46
      %s48 = ssub.s32 %s14, %s21
      %p49 = scmp.eq.s32.totalorder %s48, 0
      %s51 = sadd.s32 %s50, 1
      %s52 = scalar_select %p49, %s50, %s51
      %p55 = pneg %p49
      %p56 = scmp.eq.s32.totalorder %s14, 7
      %p57 = por %p55, %p56
      %p58 = scmp.ne.s32.totalorder %s50, %s53
      %p59 = scmp.eq.s32.totalorder %s14, 0
      %p60 = por %p58, %p59
      %p61 = scmp.ne.s32.totalorder %s50, %s53
      %p62 = scmp.eq.s32.totalorder %s19, 7
      %p63 = por %p61, %p62
      %p64 = scmp.ne.s32.totalorder %s53, %s54
      %p65 = scmp.eq.s32.totalorder %s19, 0
      %p66 = por %p64, %p65
      %p67 = scmp.ne.s32.totalorder %s53, %s54
      %p68 = scmp.eq.s32.totalorder %s20, 7
      %p69 = por %p67, %p68
      %p71 = scmp.ne.s32.totalorder %s54, %s70
      %p72 = scmp.eq.s32.totalorder %s20, 0
      %p73 = por %p71, %p72
      %s75 = sadd.s32 %s74, 1
      %p78 = scmp.eq.s32.totalorder %s14, 7
      %p79 = scmp.ne.s32.totalorder %s74, %s76
      %p80 = scmp.eq.s32.totalorder %s14, 0
      %p81 = por %p79, %p80
      %p82 = scmp.ne.s32.totalorder %s74, %s76
      %p83 = scmp.eq.s32.totalorder %s19, 7
      %p84 = por %p82, %p83
      %p85 = scmp.ne.s32.totalorder %s76, %s77
      %p86 = scmp.eq.s32.totalorder %s19, 0
      %p87 = por %p85, %p86
      %p88 = scmp.ne.s32.totalorder %s76, %s77
      %p89 = scmp.eq.s32.totalorder %s20, 7
      %p90 = por %p88, %p89
      %p92 = scmp.ne.s32.totalorder %s77, %s91
      %p93 = scmp.eq.s32.totalorder %s20, 0
      %p94 = por %p92, %p93
      %s96 = sadd.s32 %s95, 1
      %p99 = scmp.eq.s32.totalorder %s14, 7
      %p100 = scmp.ne.s32.totalorder %s95, %s97
      %p101 = scmp.eq.s32.totalorder %s14, 0
      %p102 = por %p100, %p101
      %p103 = scmp.ne.s32.totalorder %s95, %s97
      %p104 = scmp.eq.s32.totalorder %s19, 7
      %p105 = por %p103, %p104
      %p106 = scmp.ne.s32.totalorder %s97, %s98
      %p107 = scmp.eq.s32.totalorder %s19, 0
      %p108 = por %p106, %p107
      %p109 = scmp.ne.s32.totalorder %s97, %s98
      %p110 = scmp.eq.s32.totalorder %s20, 7
      %p111 = por %p109, %p110
      %p113 = scmp.ne.s32.totalorder %s98, %s112
      %p114 = scmp.eq.s32.totalorder %s20, 0
      %p115 = por %p113, %p114
      %s117 = sadd.s32 %s116, 1
      %p120 = scmp.eq.s32.totalorder %s14, 7
      %p121 = scmp.ne.s32.totalorder %s116, %s118
      %p122 = scmp.eq.s32.totalorder %s14, 0
      %p123 = por %p121, %p122
      %p124 = scmp.ne.s32.totalorder %s116, %s118
      %p125 = scmp.eq.s32.totalorder %s19, 7
      %p126 = por %p124, %p125
      %p127 = scmp.ne.s32.totalorder %s118, %s119
      %p128 = scmp.eq.s32.totalorder %s19, 0
      %p129 = por %p127, %p128
      %p130 = scmp.ne.s32.totalorder %s118, %s119
      %p131 = scmp.eq.s32.totalorder %s20, 7
      %p132 = por %p130, %p131
      %p134 = scmp.ne.s32.totalorder %s119, %s133
      %p135 = scmp.eq.s32.totalorder %s20, 0
      %p136 = por %p134, %p135
      %s138 = sadd.s32 %s137, 1
      %p141 = scmp.eq.s32.totalorder %s14, 7
      %p142 = scmp.ne.s32.totalorder %s137, %s139
      %p143 = scmp.eq.s32.totalorder %s14, 0
      %p144 = por %p142, %p143
      %p145 = scmp.ne.s32.totalorder %s137, %s139
      %p146 = scmp.eq.s32.totalorder %s19, 7
      %p147 = por %p145, %p146
      %p148 = scmp.ne.s32.totalorder %s139, %s140
      %p149 = scmp.eq.s32.totalorder %s19, 0
      %p150 = por %p148, %p149
      %p151 = scmp.ne.s32.totalorder %s139, %s140
      %p152 = scmp.eq.s32.totalorder %s20, 7
      %p153 = por %p151, %p152
      %p155 = scmp.ne.s32.totalorder %s140, %s154
      %p156 = scmp.eq.s32.totalorder %s20, 0
      %p157 = por %p155, %p156
      %s159 = sadd.s32 %s158, 1
      %p162 = scmp.eq.s32.totalorder %s14, 7
      %p163 = scmp.ne.s32.totalorder %s158, %s160
      %p164 = scmp.eq.s32.totalorder %s14, 0
      %p165 = por %p163, %p164
      %p166 = scmp.ne.s32.totalorder %s158, %s160
      %p167 = scmp.eq.s32.totalorder %s19, 7
      %p168 = por %p166, %p167
      %p169 = scmp.ne.s32.totalorder %s160, %s161
      %p170 = scmp.eq.s32.totalorder %s19, 0
      %p171 = por %p169, %p170
      %p172 = scmp.ne.s32.totalorder %s160, %s161
      %p173 = scmp.eq.s32.totalorder %s20, 7
      %p174 = por %p172, %p173
      %p176 = scmp.ne.s32.totalorder %s161, %s175
      %p177 = scmp.eq.s32.totalorder %s20, 0
      %p178 = por %p176, %p177
      %s180 = sadd.s32 %s179, 1
      %p183 = scmp.eq.s32.totalorder %s14, 7
      %p184 = scmp.ne.s32.totalorder %s179, %s181
      %p185 = scmp.eq.s32.totalorder %s14, 0
      %p186 = por %p184, %p185
      %p187 = scmp.ne.s32.totalorder %s179, %s181
      %p188 = scmp.eq.s32.totalorder %s19, 7
      %p189 = por %p187, %p188
      %p190 = scmp.ne.s32.totalorder %s181, %s182
      %p191 = scmp.eq.s32.totalorder %s19, 0
      %p192 = por %p190, %p191
      %p193 = scmp.ne.s32.totalorder %s181, %s182
      %p194 = scmp.eq.s32.totalorder %s20, 7
      %p195 = por %p193, %p194
      %p197 = scmp.ne.s32.totalorder %s182, %s196
      %p198 = scmp.eq.s32.totalorder %s20, 0
      %p199 = por %p197, %p198
      %p200 = scmp.le.s32.totalorder 1, %s14
      %p201 = scmp.lt.s32.totalorder %s14, 9
      %p202 = pnand %p200, %p201
      %p203 = pneg %p202
      // Predicated region
      $region9: #{cnn_forward.5} parent=5 // pred_check
        _
      $region10: #{cnn_forward.5} parent=5 // pred_check_branch
        %205 = sbr.rel (%p202) target = $region12
      $region11: #{cnn_forward.5} parent=5 // pred_region
        %s206 = ssub.s32 %s14, 1
        // Predicated region
        $region13: #{cnn_forward.5} parent=11 // pred_check
          %p207 = pneg %p87
        $region14: #{cnn_forward.5} parent=11 // pred_check_branch
          %209 = sbr.rel (%p207) target = $region16
        $region15: #{cnn_forward.5} parent=11 // pred_region
          _
        $region16: #{cnn_forward.5} parent=11 // pred_fallthru
          _
        // Predicated region
        $region17: #{cnn_forward.5} parent=11 // pred_check
          %p210 = pneg %p108
        $region18: #{cnn_forward.5} parent=11 // pred_check_branch
          %212 = sbr.rel (%p210) target = $region20
        $region19: #{cnn_forward.5} parent=11 // pred_region
          _
        $region20: #{cnn_forward.5} parent=11 // pred_fallthru
          _
        // Predicated region
        $region21: #{cnn_forward.5} parent=11 // pred_check
          %p213 = pneg %p129
        $region22: #{cnn_forward.5} parent=11 // pred_check_branch
          %215 = sbr.rel (%p213) target = $region24
        $region23: #{cnn_forward.5} parent=11 // pred_region
          _
        $region24: #{cnn_forward.5} parent=11 // pred_fallthru
          _
        // Predicated region
        $region25: #{cnn_forward.5} parent=11 // pred_check
          %p216 = pneg %p150
        $region26: #{cnn_forward.5} parent=11 // pred_check_branch
          %218 = sbr.rel (%p216) target = $region28
        $region27: #{cnn_forward.5} parent=11 // pred_region
          _
        $region28: #{cnn_forward.5} parent=11 // pred_fallthru
          _
        // Predicated region
        $region29: #{cnn_forward.5} parent=11 // pred_check
          %p219 = pneg %p171
        $region30: #{cnn_forward.5} parent=11 // pred_check_branch
          %221 = sbr.rel (%p219) target = $region32
        $region31: #{cnn_forward.5} parent=11 // pred_region
          _
        $region32: #{cnn_forward.5} parent=11 // pred_fallthru
          _
      $region12: #{cnn_forward.5} parent=5 // pred_fallthru
        _
      %p222 = scmp.lt.s32.totalorder %s14, 8
      // Predicated region
      $region33: #{cnn_forward.5} parent=5 // pred_check
        %p223 = pneg %p222
      $region34: #{cnn_forward.5} parent=5 // pred_check_branch
        %225 = sbr.rel (%p223) target = $region36
      $region35: #{cnn_forward.5} parent=5 // pred_region
        // Predicated region
        $region37: #{cnn_forward.5} parent=35 // pred_check
          %p226 = pneg %p34
        $region38: #{cnn_forward.5} parent=35 // pred_check_branch
          %228 = sbr.rel (%p226) target = $region40
        $region39: #{cnn_forward.5} parent=35 // pred_region
          %s229 = smul.u32 46, %s14
          %p230 = scmp.lt.s32.totalorder %s229, 367
          %s231 = scalar_select %p230, %s229, 367
          %s232 = scalar_lea.vmem %s0, %s231
          %s233 = smul.u32 46, %s14
        $region40: #{cnn_forward.5} parent=35 // pred_fallthru
          _
        // Predicated region
        $region41: #{cnn_forward.5} parent=35 // pred_check
          %p234 = pneg %p60
        $region42: #{cnn_forward.5} parent=35 // pred_check_branch
          %236 = sbr.rel (%p234) target = $region44
        $region43: #{cnn_forward.5} parent=35 // pred_region
          %s237 = smul.u32 736, %s14
          %p238 = scmp.lt.s32.totalorder %s237, 5887
          %s239 = scalar_select %p238, %s237, 5887
          %s240 = smul.addr %s239, 4
          %s241 = scalar_lea.vmem %s1, %s240
          %s242 = smul.u32 736, %s14
        $region44: #{cnn_forward.5} parent=35 // pred_fallthru
          _
      $region36: #{cnn_forward.5} parent=5 // pred_fallthru
        _
      %p243 = scmp.le.s32.totalorder 1, %s14
      %p244 = scmp.lt.s32.totalorder %s14, 9
      %p245 = pnand %p243, %p244
      %p246 = pneg %p245
      // Predicated region
      $region45: #{cnn_forward.5} parent=5 // pred_check
        _
      $region46: #{cnn_forward.5} parent=5 // pred_check_branch
        %248 = sbr.rel (%p245) target = $region48
      $region47: #{cnn_forward.5} parent=5 // pred_region
        %s249 = ssub.s32 %s14, 1
        %s250 = smul.u32 46, %s19
        %p251 = scmp.lt.s32.totalorder %s250, 367
        %s252 = scalar_select %p251, %s250, 367
        %s253 = scalar_lea.vmem %s0, %s252
        %p254 = pneg %p40
        %p255 = pneg %p37
        %s256 = smul.u32 736, %s19
        %p257 = scmp.lt.s32.totalorder %s256, 5887
        %s258 = scalar_select %p257, %s256, 5887
        %s259 = smul.addr %s258, 4
        %s260 = scalar_lea.vmem %s1, %s259
        %p261 = pneg %p66
        %p262 = pneg %p63
        %p263 = pneg %p87
        %p264 = pneg %p84
        %p265 = pneg %p108
        %p266 = pneg %p105
        %p267 = pneg %p129
        %p268 = pneg %p126
        %p269 = pneg %p150
        %p270 = pneg %p147
        %p271 = pneg %p171
        %p272 = pneg %p168
        %p273 = pneg %p192
        %p274 = pneg %p189
        %s275 = smul.u32 46, %s19
        %p276 = scmp.lt.s32.totalorder %s275, 367
        %s277 = scalar_select %p276, %s275, 367
        %s278 = scalar_lea.vmem %s0, %s277
        %s279 = smul.u32 46, %s19
        %s280 = smul.u32 736, %s19
        %p281 = scmp.lt.s32.totalorder %s280, 5887
        %s282 = scalar_select %p281, %s280, 5887
        %s283 = smul.addr %s282, 4
        %s284 = scalar_lea.vmem %s1, %s283
        %s285 = smul.u32 736, %s19
        %p287 = scmp.eq.s32.totalorder %s19, 0
        // Predicated region
        $region49: #{cnn_forward.5} parent=47 // pred_check
          %p288 = pneg %p287
        $region50: #{cnn_forward.5} parent=47 // pred_check_branch
          %290 = sbr.rel (%p288) target = $region52
        $region51: #{cnn_forward.5} parent=47 // pred_region
          %291 = vst [vmem:[#allocation2] sm:$0x3] 0.0
        $region52: #{cnn_forward.5} parent=47 // pred_fallthru
          _
        %v292 = vld [vmem:[#allocation2] sm:$0x3]
        %v293 = vld [vmem:[%s278] sm:$0xff]
        %v294 = vld [vmem:[%s278 + $0x8] sm:$0xff]
        %v295 = vld [vmem:[%s278 + $0x10] sm:$0xff]
        %v296 = vld [vmem:[%s278 + $0x18] sm:$0xff]
        %v297 = vld [vmem:[%s278 + $0x20] sm:$0xff]
        %v298 = vld [vmem:[%s278 + $0x28] sm:$0x3f]
        %v299 = vld [vmem:[%s284] sm:$0xf]
        %v300 = vld [vmem:[%s284 + $0x4] sm:$0xf]
        %v301 = vld [vmem:[%s284 + $0x8] sm:$0xf]
        %v302 = vld [vmem:[%s284 + $0xc] sm:$0xf]
        %v303 = vld [vmem:[%s284 + $0x10] sm:$0xf]
        %v304 = vld [vmem:[%s284 + $0x14] sm:$0xf]
        %v305 = vld [vmem:[%s284 + $0x18] sm:$0xf]
        %v306 = vld [vmem:[%s284 + $0x1c] sm:$0xf]
        %v307 = vld [vmem:[%s284 + $0x20] sm:$0xf]
        %v308 = vld [vmem:[%s284 + $0x24] sm:$0xf]
        %v309 = vld [vmem:[%s284 + $0x28] sm:$0xf]
        %v310 = vld [vmem:[%s284 + $0x2c] sm:$0xf]
        %v311 = vld [vmem:[%s284 + $0x30] sm:$0xf]
        %v312 = vld [vmem:[%s284 + $0x34] sm:$0xf]
        %v313 = vld [vmem:[%s284 + $0x38] sm:$0xf]
        %v314 = vld [vmem:[%s284 + $0x3c] sm:$0xf]
        %v315 = vld [vmem:[%s284 + $0x40] sm:$0xf]
        %v316 = vld [vmem:[%s284 + $0x44] sm:$0xf]
        %v317 = vld [vmem:[%s284 + $0x48] sm:$0xf]
        %v318 = vld [vmem:[%s284 + $0x4c] sm:$0xf]
        %v319 = vld [vmem:[%s284 + $0x50] sm:$0xf]
        %v320 = vld [vmem:[%s284 + $0x54] sm:$0xf]
        %v321 = vld [vmem:[%s284 + $0x58] sm:$0xf]
        %v322 = vld [vmem:[%s284 + $0x5c] sm:$0xf]
        %v323 = vld [vmem:[%s284 + $0x60] sm:$0xf]
        %v324 = vld [vmem:[%s284 + $0x64] sm:$0xf]
        %v325 = vld [vmem:[%s284 + $0x68] sm:$0xf]
        %v326 = vld [vmem:[%s284 + $0x6c] sm:$0xf]
        %v327 = vld [vmem:[%s284 + $0x70] sm:$0xf]
        %v328 = vld [vmem:[%s284 + $0x74] sm:$0xf]
        %v329 = vld [vmem:[%s284 + $0x78] sm:$0xf]
        %v330 = vld [vmem:[%s284 + $0x7c] sm:$0xf]
        %v331 = vld [vmem:[%s284 + $0x80] sm:$0xf]
        %v332 = vld [vmem:[%s284 + $0x84] sm:$0xf]
        %v333 = vld [vmem:[%s284 + $0x88] sm:$0xf]
        %v334 = vld [vmem:[%s284 + $0x8c] sm:$0xf]
        %v335 = vld [vmem:[%s284 + $0x90] sm:$0xf]
        %v336 = vld [vmem:[%s284 + $0x94] sm:$0xf]
        %v337 = vld [vmem:[%s284 + $0x98] sm:$0xf]
        %v338 = vld [vmem:[%s284 + $0x9c] sm:$0xf]
        %v339 = vld [vmem:[%s284 + $0xa0] sm:$0xf]
        %v340 = vld [vmem:[%s284 + $0xa4] sm:$0xf]
        %v341 = vld [vmem:[%s284 + $0xa8] sm:$0xf]
        %v342 = vld [vmem:[%s284 + $0xac] sm:$0xf]
        %v343 = vld [vmem:[%s284 + $0xb0] sm:$0xf]
        %v344 = vld [vmem:[%s284 + $0xb4] sm:$0xf]
        %v345 = vld [vmem:[%s284 + $0xb8] sm:$0xf]
        %v346 = vld [vmem:[%s284 + $0xbc] sm:$0xf]
        %v347 = vld [vmem:[%s284 + $0xc0] sm:$0xf]
        %v348 = vld [vmem:[%s284 + $0xc4] sm:$0xf]
        %v349 = vld [vmem:[%s284 + $0xc8] sm:$0xf]
        %v350 = vld [vmem:[%s284 + $0xcc] sm:$0xf]
        %v351 = vld [vmem:[%s284 + $0xd0] sm:$0xf]
        %v352 = vld [vmem:[%s284 + $0xd4] sm:$0xf]
        %v353 = vld [vmem:[%s284 + $0xd8] sm:$0xf]
        %v354 = vld [vmem:[%s284 + $0xdc] sm:$0xf]
        %v355 = vld [vmem:[%s284 + $0xe0] sm:$0xf]
        %v356 = vld [vmem:[%s284 + $0xe4] sm:$0xf]
        %v357 = vld [vmem:[%s284 + $0xe8] sm:$0xf]
        %v358 = vld [vmem:[%s284 + $0xec] sm:$0xf]
        %v359 = vld [vmem:[%s284 + $0xf0] sm:$0xf]
        %v360 = vld [vmem:[%s284 + $0xf4] sm:$0xf]
        %v361 = vld [vmem:[%s284 + $0xf8] sm:$0xf]
        %v362 = vld [vmem:[%s284 + $0xfc] sm:$0xf]
        %v363 = vld [vmem:[%s284 + $0x100] sm:$0xf]
        %v364 = vld [vmem:[%s284 + $0x104] sm:$0xf]
        %v365 = vld [vmem:[%s284 + $0x108] sm:$0xf]
        %v366 = vld [vmem:[%s284 + $0x10c] sm:$0xf]
        %v367 = vld [vmem:[%s284 + $0x110] sm:$0xf]
        %v368 = vld [vmem:[%s284 + $0x114] sm:$0xf]
        %v369 = vld [vmem:[%s284 + $0x118] sm:$0xf]
        %v370 = vld [vmem:[%s284 + $0x11c] sm:$0xf]
        %v371 = vld [vmem:[%s284 + $0x120] sm:$0xf]
        %v372 = vld [vmem:[%s284 + $0x124] sm:$0xf]
        %v373 = vld [vmem:[%s284 + $0x128] sm:$0xf]
        %v374 = vld [vmem:[%s284 + $0x12c] sm:$0xf]
        %v375 = vld [vmem:[%s284 + $0x130] sm:$0xf]
        %v376 = vld [vmem:[%s284 + $0x134] sm:$0xf]
        %v377 = vld [vmem:[%s284 + $0x138] sm:$0xf]
        %v378 = vld [vmem:[%s284 + $0x13c] sm:$0xf]
        %v379 = vld [vmem:[%s284 + $0x140] sm:$0xf]
        %v380 = vld [vmem:[%s284 + $0x144] sm:$0xf]
        %v381 = vld [vmem:[%s284 + $0x148] sm:$0xf]
        %v382 = vld [vmem:[%s284 + $0x14c] sm:$0xf]
        %v383 = vld [vmem:[%s284 + $0x150] sm:$0xf]
        %v384 = vld [vmem:[%s284 + $0x154] sm:$0xf]
        %v385 = vld [vmem:[%s284 + $0x158] sm:$0xf]
        %v386 = vld [vmem:[%s284 + $0x15c] sm:$0xf]
        %v387 = vld [vmem:[%s284 + $0x160] sm:$0xf]
        %v388 = vld [vmem:[%s284 + $0x164] sm:$0xf]
        %v389 = vld [vmem:[%s284 + $0x168] sm:$0xf]
        %v390 = vld [vmem:[%s284 + $0x16c] sm:$0xf]
        %v391 = vld [vmem:[%s284 + $0x170] sm:$0xf]
        %v392 = vld [vmem:[%s284 + $0x174] sm:$0xf]
        %v393 = vld [vmem:[%s284 + $0x178] sm:$0xf]
        %v394 = vld [vmem:[%s284 + $0x17c] sm:$0xf]
        %v395 = vld [vmem:[%s284 + $0x180] sm:$0xf]
        %v396 = vld [vmem:[%s284 + $0x184] sm:$0xf]
        %v397 = vld [vmem:[%s284 + $0x188] sm:$0xf]
        %v398 = vld [vmem:[%s284 + $0x18c] sm:$0xf]
        %v399 = vld [vmem:[%s284 + $0x190] sm:$0xf]
        %v400 = vld [vmem:[%s284 + $0x194] sm:$0xf]
        %v401 = vld [vmem:[%s284 + $0x198] sm:$0xf]
        %v402 = vld [vmem:[%s284 + $0x19c] sm:$0xf]
        %v403 = vld [vmem:[%s284 + $0x1a0] sm:$0xf]
        %v404 = vld [vmem:[%s284 + $0x1a4] sm:$0xf]
        %v405 = vld [vmem:[%s284 + $0x1a8] sm:$0xf]
        %v406 = vld [vmem:[%s284 + $0x1ac] sm:$0xf]
        %v407 = vld [vmem:[%s284 + $0x1b0] sm:$0xf]
        %v408 = vld [vmem:[%s284 + $0x1b4] sm:$0xf]
        %v409 = vld [vmem:[%s284 + $0x1b8] sm:$0xf]
        %v410 = vld [vmem:[%s284 + $0x1bc] sm:$0xf]
        %v411 = vld [vmem:[%s284 + $0x1c0] sm:$0xf]
        %v412 = vld [vmem:[%s284 + $0x1c4] sm:$0xf]
        %v413 = vld [vmem:[%s284 + $0x1c8] sm:$0xf]
        %v414 = vld [vmem:[%s284 + $0x1cc] sm:$0xf]
        %v415 = vld [vmem:[%s284 + $0x1d0] sm:$0xf]
        %v416 = vld [vmem:[%s284 + $0x1d4] sm:$0xf]
        %v417 = vld [vmem:[%s284 + $0x1d8] sm:$0xf]
        %v418 = vld [vmem:[%s284 + $0x1dc] sm:$0xf]
        %v419 = vld [vmem:[%s284 + $0x1e0] sm:$0xf]
        %v420 = vld [vmem:[%s284 + $0x1e4] sm:$0xf]
        %v421 = vld [vmem:[%s284 + $0x1e8] sm:$0xf]
        %v422 = vld [vmem:[%s284 + $0x1ec] sm:$0xf]
        %v423 = vld [vmem:[%s284 + $0x1f0] sm:$0xf]
        %v424 = vld [vmem:[%s284 + $0x1f4] sm:$0xf]
        %v425 = vld [vmem:[%s284 + $0x1f8] sm:$0xf]
        %v426 = vld [vmem:[%s284 + $0x1fc] sm:$0xf]
        %v427 = vld [vmem:[%s284 + $0x200] sm:$0xf]
        %v428 = vld [vmem:[%s284 + $0x204] sm:$0xf]
        %v429 = vld [vmem:[%s284 + $0x208] sm:$0xf]
        %v430 = vld [vmem:[%s284 + $0x20c] sm:$0xf]
        %v431 = vld [vmem:[%s284 + $0x210] sm:$0xf]
        %v432 = vld [vmem:[%s284 + $0x214] sm:$0xf]
        %v433 = vld [vmem:[%s284 + $0x218] sm:$0xf]
        %v434 = vld [vmem:[%s284 + $0x21c] sm:$0xf]
        %v435 = vld [vmem:[%s284 + $0x220] sm:$0xf]
        %v436 = vld [vmem:[%s284 + $0x224] sm:$0xf]
        %v437 = vld [vmem:[%s284 + $0x228] sm:$0xf]
        %v438 = vld [vmem:[%s284 + $0x22c] sm:$0xf]
        %v439 = vld [vmem:[%s284 + $0x230] sm:$0xf]
        %v440 = vld [vmem:[%s284 + $0x234] sm:$0xf]
        %v441 = vld [vmem:[%s284 + $0x238] sm:$0xf]
        %v442 = vld [vmem:[%s284 + $0x23c] sm:$0xf]
        %v443 = vld [vmem:[%s284 + $0x240] sm:$0xf]
        %v444 = vld [vmem:[%s284 + $0x244] sm:$0xf]
        %v445 = vld [vmem:[%s284 + $0x248] sm:$0xf]
        %v446 = vld [vmem:[%s284 + $0x24c] sm:$0xf]
        %v447 = vld [vmem:[%s284 + $0x250] sm:$0xf]
        %v448 = vld [vmem:[%s284 + $0x254] sm:$0xf]
        %v449 = vld [vmem:[%s284 + $0x258] sm:$0xf]
        %v450 = vld [vmem:[%s284 + $0x25c] sm:$0xf]
        %v451 = vld [vmem:[%s284 + $0x260] sm:$0xf]
        %v452 = vld [vmem:[%s284 + $0x264] sm:$0xf]
        %v453 = vld [vmem:[%s284 + $0x268] sm:$0xf]
        %v454 = vld [vmem:[%s284 + $0x26c] sm:$0xf]
        %v455 = vld [vmem:[%s284 + $0x270] sm:$0xf]
        %v456 = vld [vmem:[%s284 + $0x274] sm:$0xf]
        %v457 = vld [vmem:[%s284 + $0x278] sm:$0xf]
        %v458 = vld [vmem:[%s284 + $0x27c] sm:$0xf]
        %v459 = vld [vmem:[%s284 + $0x280] sm:$0xf]
        %v460 = vld [vmem:[%s284 + $0x284] sm:$0xf]
        %v461 = vld [vmem:[%s284 + $0x288] sm:$0xf]
        %v462 = vld [vmem:[%s284 + $0x28c] sm:$0xf]
        %v463 = vld [vmem:[%s284 + $0x290] sm:$0xf]
        %v464 = vld [vmem:[%s284 + $0x294] sm:$0xf]
        %v465 = vld [vmem:[%s284 + $0x298] sm:$0xf]
        %v466 = vld [vmem:[%s284 + $0x29c] sm:$0xf]
        %v467 = vld [vmem:[%s284 + $0x2a0] sm:$0xf]
        %v468 = vld [vmem:[%s284 + $0x2a4] sm:$0xf]
        %v469 = vld [vmem:[%s284 + $0x2a8] sm:$0xf]
        %v470 = vld [vmem:[%s284 + $0x2ac] sm:$0xf]
        %v471 = vld [vmem:[%s284 + $0x2b0] sm:$0xf]
        %v472 = vld [vmem:[%s284 + $0x2b4] sm:$0xf]
        %v473 = vld [vmem:[%s284 + $0x2b8] sm:$0xf]
        %v474 = vld [vmem:[%s284 + $0x2bc] sm:$0xf]
        %v475 = vld [vmem:[%s284 + $0x2c0] sm:$0xf]
        %v476 = vld [vmem:[%s284 + $0x2c4] sm:$0xf]
        %v477 = vld [vmem:[%s284 + $0x2c8] sm:$0xf]
        %v478 = vld [vmem:[%s284 + $0x2cc] sm:$0xf]
        %v479 = vld [vmem:[%s284 + $0x2d0] sm:$0xf]
        %v480 = vld [vmem:[%s284 + $0x2d4] sm:$0xf]
        %v481 = vld [vmem:[%s284 + $0x2d8] sm:$0xf]
        %v482 = vld [vmem:[%s284 + $0x2dc] sm:$0xf]
        %v483 = vld [vmem:[%s284 + $0x2e0] sm:$0xf]
        %v484 = vld [vmem:[%s284 + $0x2e4] sm:$0xf]
        %v485 = vld [vmem:[%s284 + $0x2e8] sm:$0xf]
        %v486 = vld [vmem:[%s284 + $0x2ec] sm:$0xf]
        %v487 = vld [vmem:[%s284 + $0x2f0] sm:$0xf]
        %v488 = vld [vmem:[%s284 + $0x2f4] sm:$0xf]
        %v489 = vld [vmem:[%s284 + $0x2f8] sm:$0xf]
        %v490 = vld [vmem:[%s284 + $0x2fc] sm:$0xf]
        %v491 = vld [vmem:[%s284 + $0x300] sm:$0xf]
        %v492 = vld [vmem:[%s284 + $0x304] sm:$0xf]
        %v493 = vld [vmem:[%s284 + $0x308] sm:$0xf]
        %v494 = vld [vmem:[%s284 + $0x30c] sm:$0xf]
        %v495 = vld [vmem:[%s284 + $0x310] sm:$0xf]
        %v496 = vld [vmem:[%s284 + $0x314] sm:$0xf]
        %v497 = vld [vmem:[%s284 + $0x318] sm:$0xf]
        %v498 = vld [vmem:[%s284 + $0x31c] sm:$0xf]
        %v499 = vld [vmem:[%s284 + $0x320] sm:$0xf]
        %v500 = vld [vmem:[%s284 + $0x324] sm:$0xf]
        %v501 = vld [vmem:[%s284 + $0x328] sm:$0xf]
        %v502 = vld [vmem:[%s284 + $0x32c] sm:$0xf]
        %v503 = vld [vmem:[%s284 + $0x330] sm:$0xf]
        %v504 = vld [vmem:[%s284 + $0x334] sm:$0xf]
        %v505 = vld [vmem:[%s284 + $0x338] sm:$0xf]
        %v506 = vld [vmem:[%s284 + $0x33c] sm:$0xf]
        %v507 = vld [vmem:[%s284 + $0x340] sm:$0xf]
        %v508 = vld [vmem:[%s284 + $0x344] sm:$0xf]
        %v509 = vld [vmem:[%s284 + $0x348] sm:$0xf]
        %v510 = vld [vmem:[%s284 + $0x34c] sm:$0xf]
        %v511 = vld [vmem:[%s284 + $0x350] sm:$0xf]
        %v512 = vld [vmem:[%s284 + $0x354] sm:$0xf]
        %v513 = vld [vmem:[%s284 + $0x358] sm:$0xf]
        %v514 = vld [vmem:[%s284 + $0x35c] sm:$0xf]
        %v515 = vld [vmem:[%s284 + $0x360] sm:$0xf]
        %v516 = vld [vmem:[%s284 + $0x364] sm:$0xf]
        %v517 = vld [vmem:[%s284 + $0x368] sm:$0xf]
        %v518 = vld [vmem:[%s284 + $0x36c] sm:$0xf]
        %v519 = vld [vmem:[%s284 + $0x370] sm:$0xf]
        %v520 = vld [vmem:[%s284 + $0x374] sm:$0xf]
        %v521 = vld [vmem:[%s284 + $0x378] sm:$0xf]
        %v522 = vld [vmem:[%s284 + $0x37c] sm:$0xf]
        %v523 = vld [vmem:[%s284 + $0x380] sm:$0xf]
        %v524 = vld [vmem:[%s284 + $0x384] sm:$0xf]
        %v525 = vld [vmem:[%s284 + $0x388] sm:$0xf]
        %v526 = vld [vmem:[%s284 + $0x38c] sm:$0xf]
        %v527 = vld [vmem:[%s284 + $0x390] sm:$0xf]
        %v528 = vld [vmem:[%s284 + $0x394] sm:$0xf]
        %v529 = vld [vmem:[%s284 + $0x398] sm:$0xf]
        %v530 = vld [vmem:[%s284 + $0x39c] sm:$0xf]
        %v531 = vld [vmem:[%s284 + $0x3a0] sm:$0xf]
        %v532 = vld [vmem:[%s284 + $0x3a4] sm:$0xf]
        %v533 = vld [vmem:[%s284 + $0x3a8] sm:$0xf]
        %v534 = vld [vmem:[%s284 + $0x3ac] sm:$0xf]
        %v535 = vld [vmem:[%s284 + $0x3b0] sm:$0xf]
        %v536 = vld [vmem:[%s284 + $0x3b4] sm:$0xf]
        %v537 = vld [vmem:[%s284 + $0x3b8] sm:$0xf]
        %v538 = vld [vmem:[%s284 + $0x3bc] sm:$0xf]
        %v539 = vld [vmem:[%s284 + $0x3c0] sm:$0xf]
        %v540 = vld [vmem:[%s284 + $0x3c4] sm:$0xf]
        %v541 = vld [vmem:[%s284 + $0x3c8] sm:$0xf]
        %v542 = vld [vmem:[%s284 + $0x3cc] sm:$0xf]
        %v543 = vld [vmem:[%s284 + $0x3d0] sm:$0xf]
        %v544 = vld [vmem:[%s284 + $0x3d4] sm:$0xf]
        %v545 = vld [vmem:[%s284 + $0x3d8] sm:$0xf]
        %v546 = vld [vmem:[%s284 + $0x3dc] sm:$0xf]
        %v547 = vld [vmem:[%s284 + $0x3e0] sm:$0xf]
        %v548 = vld [vmem:[%s284 + $0x3e4] sm:$0xf]
        %v549 = vld [vmem:[%s284 + $0x3e8] sm:$0xf]
        %v550 = vld [vmem:[%s284 + $0x3ec] sm:$0xf]
        %v551 = vld [vmem:[%s284 + $0x3f0] sm:$0xf]
        %v552 = vld [vmem:[%s284 + $0x3f4] sm:$0xf]
        %v553 = vld [vmem:[%s284 + $0x3f8] sm:$0xf]
        %v554 = vld [vmem:[%s284 + $0x3fc] sm:$0xf]
        %v555 = vld [vmem:[%s284 + $0x400] sm:$0xf]
        %v556 = vld [vmem:[%s284 + $0x404] sm:$0xf]
        %v557 = vld [vmem:[%s284 + $0x408] sm:$0xf]
        %v558 = vld [vmem:[%s284 + $0x40c] sm:$0xf]
        %v559 = vld [vmem:[%s284 + $0x410] sm:$0xf]
        %v560 = vld [vmem:[%s284 + $0x414] sm:$0xf]
        %v561 = vld [vmem:[%s284 + $0x418] sm:$0xf]
        %v562 = vld [vmem:[%s284 + $0x41c] sm:$0xf]
        %v563 = vld [vmem:[%s284 + $0x420] sm:$0xf]
        %v564 = vld [vmem:[%s284 + $0x424] sm:$0xf]
        %v565 = vld [vmem:[%s284 + $0x428] sm:$0xf]
        %v566 = vld [vmem:[%s284 + $0x42c] sm:$0xf]
        %v567 = vld [vmem:[%s284 + $0x430] sm:$0xf]
        %v568 = vld [vmem:[%s284 + $0x434] sm:$0xf]
        %v569 = vld [vmem:[%s284 + $0x438] sm:$0xf]
        %v570 = vld [vmem:[%s284 + $0x43c] sm:$0xf]
        %v571 = vld [vmem:[%s284 + $0x440] sm:$0xf]
        %v572 = vld [vmem:[%s284 + $0x444] sm:$0xf]
        %v573 = vld [vmem:[%s284 + $0x448] sm:$0xf]
        %v574 = vld [vmem:[%s284 + $0x44c] sm:$0xf]
        %v575 = vld [vmem:[%s284 + $0x450] sm:$0xf]
        %v576 = vld [vmem:[%s284 + $0x454] sm:$0xf]
        %v577 = vld [vmem:[%s284 + $0x458] sm:$0xf]
        %v578 = vld [vmem:[%s284 + $0x45c] sm:$0xf]
        %v579 = vld [vmem:[%s284 + $0x460] sm:$0xf]
        %v580 = vld [vmem:[%s284 + $0x464] sm:$0xf]
        %v581 = vld [vmem:[%s284 + $0x468] sm:$0xf]
        %v582 = vld [vmem:[%s284 + $0x46c] sm:$0xf]
        %v583 = vld [vmem:[%s284 + $0x470] sm:$0xf]
        %v584 = vld [vmem:[%s284 + $0x474] sm:$0xf]
        %v585 = vld [vmem:[%s284 + $0x478] sm:$0xf]
        %v586 = vld [vmem:[%s284 + $0x47c] sm:$0xf]
        %v587 = vld [vmem:[%s284 + $0x480] sm:$0xf]
        %v588 = vld [vmem:[%s284 + $0x484] sm:$0xf]
        %v589 = vld [vmem:[%s284 + $0x488] sm:$0xf]
        %v590 = vld [vmem:[%s284 + $0x48c] sm:$0xf]
        %v591 = vld [vmem:[%s284 + $0x490] sm:$0xf]
        %v592 = vld [vmem:[%s284 + $0x494] sm:$0xf]
        %v593 = vld [vmem:[%s284 + $0x498] sm:$0xf]
        %v594 = vld [vmem:[%s284 + $0x49c] sm:$0xf]
        %v595 = vld [vmem:[%s284 + $0x4a0] sm:$0xf]
        %v596 = vld [vmem:[%s284 + $0x4a4] sm:$0xf]
        %v597 = vld [vmem:[%s284 + $0x4a8] sm:$0xf]
        %v598 = vld [vmem:[%s284 + $0x4ac] sm:$0xf]
        %v599 = vld [vmem:[%s284 + $0x4b0] sm:$0xf]
        %v600 = vld [vmem:[%s284 + $0x4b4] sm:$0xf]
        %v601 = vld [vmem:[%s284 + $0x4b8] sm:$0xf]
        %v602 = vld [vmem:[%s284 + $0x4bc] sm:$0xf]
        %v603 = vld [vmem:[%s284 + $0x4c0] sm:$0xf]
        %v604 = vld [vmem:[%s284 + $0x4c4] sm:$0xf]
        %v605 = vld [vmem:[%s284 + $0x4c8] sm:$0xf]
        %v606 = vld [vmem:[%s284 + $0x4cc] sm:$0xf]
        %v607 = vld [vmem:[%s284 + $0x4d0] sm:$0xf]
        %v608 = vld [vmem:[%s284 + $0x4d4] sm:$0xf]
        %v609 = vld [vmem:[%s284 + $0x4d8] sm:$0xf]
        %v610 = vld [vmem:[%s284 + $0x4dc] sm:$0xf]
        %v611 = vld [vmem:[%s284 + $0x4e0] sm:$0xf]
        %v612 = vld [vmem:[%s284 + $0x4e4] sm:$0xf]
        %v613 = vld [vmem:[%s284 + $0x4e8] sm:$0xf]
        %v614 = vld [vmem:[%s284 + $0x4ec] sm:$0xf]
        %v615 = vld [vmem:[%s284 + $0x4f0] sm:$0xf]
        %v616 = vld [vmem:[%s284 + $0x4f4] sm:$0xf]
        %v617 = vld [vmem:[%s284 + $0x4f8] sm:$0xf]
        %v618 = vld [vmem:[%s284 + $0x4fc] sm:$0xf]
        %v619 = vld [vmem:[%s284 + $0x500] sm:$0xf]
        %v620 = vld [vmem:[%s284 + $0x504] sm:$0xf]
        %v621 = vld [vmem:[%s284 + $0x508] sm:$0xf]
        %v622 = vld [vmem:[%s284 + $0x50c] sm:$0xf]
        %v623 = vld [vmem:[%s284 + $0x510] sm:$0xf]
        %v624 = vld [vmem:[%s284 + $0x514] sm:$0xf]
        %v625 = vld [vmem:[%s284 + $0x518] sm:$0xf]
        %v626 = vld [vmem:[%s284 + $0x51c] sm:$0xf]
        %v627 = vld [vmem:[%s284 + $0x520] sm:$0xf]
        %v628 = vld [vmem:[%s284 + $0x524] sm:$0xf]
        %v629 = vld [vmem:[%s284 + $0x528] sm:$0xf]
        %v630 = vld [vmem:[%s284 + $0x52c] sm:$0xf]
        %v631 = vld [vmem:[%s284 + $0x530] sm:$0xf]
        %v632 = vld [vmem:[%s284 + $0x534] sm:$0xf]
        %v633 = vld [vmem:[%s284 + $0x538] sm:$0xf]
        %v634 = vld [vmem:[%s284 + $0x53c] sm:$0xf]
        %v635 = vld [vmem:[%s284 + $0x540] sm:$0xf]
        %v636 = vld [vmem:[%s284 + $0x544] sm:$0xf]
        %v637 = vld [vmem:[%s284 + $0x548] sm:$0xf]
        %v638 = vld [vmem:[%s284 + $0x54c] sm:$0xf]
        %v639 = vld [vmem:[%s284 + $0x550] sm:$0xf]
        %v640 = vld [vmem:[%s284 + $0x554] sm:$0xf]
        %v641 = vld [vmem:[%s284 + $0x558] sm:$0xf]
        %v642 = vld [vmem:[%s284 + $0x55c] sm:$0xf]
        %v643 = vld [vmem:[%s284 + $0x560] sm:$0xf]
        %v644 = vld [vmem:[%s284 + $0x564] sm:$0xf]
        %v645 = vld [vmem:[%s284 + $0x568] sm:$0xf]
        %v646 = vld [vmem:[%s284 + $0x56c] sm:$0xf]
        %v647 = vld [vmem:[%s284 + $0x570] sm:$0xf]
        %v648 = vld [vmem:[%s284 + $0x574] sm:$0xf]
        %v649 = vld [vmem:[%s284 + $0x578] sm:$0xf]
        %v650 = vld [vmem:[%s284 + $0x57c] sm:$0xf]
        %v651 = vld [vmem:[%s284 + $0x580] sm:$0xf]
        %v652 = vld [vmem:[%s284 + $0x584] sm:$0xf]
        %v653 = vld [vmem:[%s284 + $0x588] sm:$0xf]
        %v654 = vld [vmem:[%s284 + $0x58c] sm:$0xf]
        %v655 = vld [vmem:[%s284 + $0x590] sm:$0xf]
        %v656 = vld [vmem:[%s284 + $0x594] sm:$0xf]
        %v657 = vld [vmem:[%s284 + $0x598] sm:$0xf]
        %v658 = vld [vmem:[%s284 + $0x59c] sm:$0xf]
        %v659 = vld [vmem:[%s284 + $0x5a0] sm:$0xf]
        %v660 = vld [vmem:[%s284 + $0x5a4] sm:$0xf]
        %v661 = vld [vmem:[%s284 + $0x5a8] sm:$0xf]
        %v662 = vld [vmem:[%s284 + $0x5ac] sm:$0xf]
        %v663 = vld [vmem:[%s284 + $0x5b0] sm:$0xf]
        %v664 = vld [vmem:[%s284 + $0x5b4] sm:$0xf]
        %v665 = vld [vmem:[%s284 + $0x5b8] sm:$0xf]
        %v666 = vld [vmem:[%s284 + $0x5bc] sm:$0xf]
        %v667 = vld [vmem:[%s284 + $0x5c0] sm:$0xf]
        %v668 = vld [vmem:[%s284 + $0x5c4] sm:$0xf]
        %v669 = vld [vmem:[%s284 + $0x5c8] sm:$0xf]
        %v670 = vld [vmem:[%s284 + $0x5cc] sm:$0xf]
        %v671 = vld [vmem:[%s284 + $0x5d0] sm:$0xf]
        %v672 = vld [vmem:[%s284 + $0x5d4] sm:$0xf]
        %v673 = vld [vmem:[%s284 + $0x5d8] sm:$0xf]
        %v674 = vld [vmem:[%s284 + $0x5dc] sm:$0xf]
        %v675 = vld [vmem:[%s284 + $0x5e0] sm:$0xf]
        %v676 = vld [vmem:[%s284 + $0x5e4] sm:$0xf]
        %v677 = vld [vmem:[%s284 + $0x5e8] sm:$0xf]
        %v678 = vld [vmem:[%s284 + $0x5ec] sm:$0xf]
        %v679 = vld [vmem:[%s284 + $0x5f0] sm:$0xf]
        %v680 = vld [vmem:[%s284 + $0x5f4] sm:$0xf]
        %v681 = vld [vmem:[%s284 + $0x5f8] sm:$0xf]
        %v682 = vld [vmem:[%s284 + $0x5fc] sm:$0xf]
        %v683 = vld [vmem:[%s284 + $0x600] sm:$0xf]
        %v684 = vld [vmem:[%s284 + $0x604] sm:$0xf]
        %v685 = vld [vmem:[%s284 + $0x608] sm:$0xf]
        %v686 = vld [vmem:[%s284 + $0x60c] sm:$0xf]
        %v687 = vld [vmem:[%s284 + $0x610] sm:$0xf]
        %v688 = vld [vmem:[%s284 + $0x614] sm:$0xf]
        %v689 = vld [vmem:[%s284 + $0x618] sm:$0xf]
        %v690 = vld [vmem:[%s284 + $0x61c] sm:$0xf]
        %v691 = vld [vmem:[%s284 + $0x620] sm:$0xf]
        %v692 = vld [vmem:[%s284 + $0x624] sm:$0xf]
        %v693 = vld [vmem:[%s284 + $0x628] sm:$0xf]
        %v694 = vld [vmem:[%s284 + $0x62c] sm:$0xf]
        %v695 = vld [vmem:[%s284 + $0x630] sm:$0xf]
        %v696 = vld [vmem:[%s284 + $0x634] sm:$0xf]
        %v697 = vld [vmem:[%s284 + $0x638] sm:$0xf]
        %v698 = vld [vmem:[%s284 + $0x63c] sm:$0xf]
        %v699 = vld [vmem:[%s284 + $0x640] sm:$0xf]
        %v700 = vld [vmem:[%s284 + $0x644] sm:$0xf]
        %v701 = vld [vmem:[%s284 + $0x648] sm:$0xf]
        %v702 = vld [vmem:[%s284 + $0x64c] sm:$0xf]
        %v703 = vld [vmem:[%s284 + $0x650] sm:$0xf]
        %v704 = vld [vmem:[%s284 + $0x654] sm:$0xf]
        %v705 = vld [vmem:[%s284 + $0x658] sm:$0xf]
        %v706 = vld [vmem:[%s284 + $0x65c] sm:$0xf]
        %v707 = vld [vmem:[%s284 + $0x660] sm:$0xf]
        %v708 = vld [vmem:[%s284 + $0x664] sm:$0xf]
        %v709 = vld [vmem:[%s284 + $0x668] sm:$0xf]
        %v710 = vld [vmem:[%s284 + $0x66c] sm:$0xf]
        %v711 = vld [vmem:[%s284 + $0x670] sm:$0xf]
        %v712 = vld [vmem:[%s284 + $0x674] sm:$0xf]
        %v713 = vld [vmem:[%s284 + $0x678] sm:$0xf]
        %v714 = vld [vmem:[%s284 + $0x67c] sm:$0xf]
        %v715 = vld [vmem:[%s284 + $0x680] sm:$0xf]
        %v716 = vld [vmem:[%s284 + $0x684] sm:$0xf]
        %v717 = vld [vmem:[%s284 + $0x688] sm:$0xf]
        %v718 = vld [vmem:[%s284 + $0x68c] sm:$0xf]
        %v719 = vld [vmem:[%s284 + $0x690] sm:$0xf]
        %v720 = vld [vmem:[%s284 + $0x694] sm:$0xf]
        %v721 = vld [vmem:[%s284 + $0x698] sm:$0xf]
        %v722 = vld [vmem:[%s284 + $0x69c] sm:$0xf]
        %v723 = vld [vmem:[%s284 + $0x6a0] sm:$0xf]
        %v724 = vld [vmem:[%s284 + $0x6a4] sm:$0xf]
        %v725 = vld [vmem:[%s284 + $0x6a8] sm:$0xf]
        %v726 = vld [vmem:[%s284 + $0x6ac] sm:$0xf]
        %v727 = vld [vmem:[%s284 + $0x6b0] sm:$0xf]
        %v728 = vld [vmem:[%s284 + $0x6b4] sm:$0xf]
        %v729 = vld [vmem:[%s284 + $0x6b8] sm:$0xf]
        %v730 = vld [vmem:[%s284 + $0x6bc] sm:$0xf]
        %v731 = vld [vmem:[%s284 + $0x6c0] sm:$0xf]
        %v732 = vld [vmem:[%s284 + $0x6c4] sm:$0xf]
        %v733 = vld [vmem:[%s284 + $0x6c8] sm:$0xf]
        %v734 = vld [vmem:[%s284 + $0x6cc] sm:$0xf]
        %v735 = vld [vmem:[%s284 + $0x6d0] sm:$0xf]
        %v736 = vld [vmem:[%s284 + $0x6d4] sm:$0xf]
        %v737 = vld [vmem:[%s284 + $0x6d8] sm:$0xf]
        %v738 = vld [vmem:[%s284 + $0x6dc] sm:$0xf]
        %v739 = vld [vmem:[%s284 + $0x6e0] sm:$0xf]
        %v740 = vld [vmem:[%s284 + $0x6e4] sm:$0xf]
        %v741 = vld [vmem:[%s284 + $0x6e8] sm:$0xf]
        %v742 = vld [vmem:[%s284 + $0x6ec] sm:$0xf]
        %v743 = vld [vmem:[%s284 + $0x6f0] sm:$0xf]
        %v744 = vld [vmem:[%s284 + $0x6f4] sm:$0xf]
        %v745 = vld [vmem:[%s284 + $0x6f8] sm:$0xf]
        %v746 = vld [vmem:[%s284 + $0x6fc] sm:$0xf]
        %v747 = vld [vmem:[%s284 + $0x700] sm:$0xf]
        %v748 = vld [vmem:[%s284 + $0x704] sm:$0xf]
        %v749 = vld [vmem:[%s284 + $0x708] sm:$0xf]
        %v750 = vld [vmem:[%s284 + $0x70c] sm:$0xf]
        %v751 = vld [vmem:[%s284 + $0x710] sm:$0xf]
        %v752 = vld [vmem:[%s284 + $0x714] sm:$0xf]
        %v753 = vld [vmem:[%s284 + $0x718] sm:$0xf]
        %v754 = vld [vmem:[%s284 + $0x71c] sm:$0xf]
        %v755 = vld [vmem:[%s284 + $0x720] sm:$0xf]
        %v756 = vld [vmem:[%s284 + $0x724] sm:$0xf]
        %v757 = vld [vmem:[%s284 + $0x728] sm:$0xf]
        %v758 = vld [vmem:[%s284 + $0x72c] sm:$0xf]
        %v759 = vld [vmem:[%s284 + $0x730] sm:$0xf]
        %v760 = vld [vmem:[%s284 + $0x734] sm:$0xf]
        %v761 = vld [vmem:[%s284 + $0x738] sm:$0xf]
        %v762 = vld [vmem:[%s284 + $0x73c] sm:$0xf]
        %v763 = vld [vmem:[%s284 + $0x740] sm:$0xf]
        %v764 = vld [vmem:[%s284 + $0x744] sm:$0xf]
        %v765 = vld [vmem:[%s284 + $0x748] sm:$0xf]
        %v766 = vld [vmem:[%s284 + $0x74c] sm:$0xf]
        %v767 = vld [vmem:[%s284 + $0x750] sm:$0xf]
        %v768 = vld [vmem:[%s284 + $0x754] sm:$0xf]
        %v769 = vld [vmem:[%s284 + $0x758] sm:$0xf]
        %v770 = vld [vmem:[%s284 + $0x75c] sm:$0xf]
        %v771 = vld [vmem:[%s284 + $0x760] sm:$0xf]
        %v772 = vld [vmem:[%s284 + $0x764] sm:$0xf]
        %v773 = vld [vmem:[%s284 + $0x768] sm:$0xf]
        %v774 = vld [vmem:[%s284 + $0x76c] sm:$0xf]
        %v775 = vld [vmem:[%s284 + $0x770] sm:$0xf]
        %v776 = vld [vmem:[%s284 + $0x774] sm:$0xf]
        %v777 = vld [vmem:[%s284 + $0x778] sm:$0xf]
        %v778 = vld [vmem:[%s284 + $0x77c] sm:$0xf]
        %v779 = vld [vmem:[%s284 + $0x780] sm:$0xf]
        %v780 = vld [vmem:[%s284 + $0x784] sm:$0xf]
        %v781 = vld [vmem:[%s284 + $0x788] sm:$0xf]
        %v782 = vld [vmem:[%s284 + $0x78c] sm:$0xf]
        %v783 = vld [vmem:[%s284 + $0x790] sm:$0xf]
        %v784 = vld [vmem:[%s284 + $0x794] sm:$0xf]
        %v785 = vld [vmem:[%s284 + $0x798] sm:$0xf]
        %v786 = vld [vmem:[%s284 + $0x79c] sm:$0xf]
        %v787 = vld [vmem:[%s284 + $0x7a0] sm:$0xf]
        %v788 = vld [vmem:[%s284 + $0x7a4] sm:$0xf]
        %v789 = vld [vmem:[%s284 + $0x7a8] sm:$0xf]
        %v790 = vld [vmem:[%s284 + $0x7ac] sm:$0xf]
        %v791 = vld [vmem:[%s284 + $0x7b0] sm:$0xf]
        %v792 = vld [vmem:[%s284 + $0x7b4] sm:$0xf]
        %v793 = vld [vmem:[%s284 + $0x7b8] sm:$0xf]
        %v794 = vld [vmem:[%s284 + $0x7bc] sm:$0xf]
        %v795 = vld [vmem:[%s284 + $0x7c0] sm:$0xf]
        %v796 = vld [vmem:[%s284 + $0x7c4] sm:$0xf]
        %v797 = vld [vmem:[%s284 + $0x7c8] sm:$0xf]
        %v798 = vld [vmem:[%s284 + $0x7cc] sm:$0xf]
        %v799 = vld [vmem:[%s284 + $0x7d0] sm:$0xf]
        %v800 = vld [vmem:[%s284 + $0x7d4] sm:$0xf]
        %v801 = vld [vmem:[%s284 + $0x7d8] sm:$0xf]
        %v802 = vld [vmem:[%s284 + $0x7dc] sm:$0xf]
        %v803 = vld [vmem:[%s284 + $0x7e0] sm:$0xf]
        %v804 = vld [vmem:[%s284 + $0x7e4] sm:$0xf]
        %v805 = vld [vmem:[%s284 + $0x7e8] sm:$0xf]
        %v806 = vld [vmem:[%s284 + $0x7ec] sm:$0xf]
        %v807 = vld [vmem:[%s284 + $0x7f0] sm:$0xf]
        %v808 = vld [vmem:[%s284 + $0x7f4] sm:$0xf]
        %v809 = vld [vmem:[%s284 + $0x7f8] sm:$0xf]
        %v810 = vld [vmem:[%s284 + $0x7fc] sm:$0xf]
        %v811 = vld [vmem:[%s284 + $0x800] sm:$0xf]
        %v812 = vld [vmem:[%s284 + $0x804] sm:$0xf]
        %v813 = vld [vmem:[%s284 + $0x808] sm:$0xf]
        %v814 = vld [vmem:[%s284 + $0x80c] sm:$0xf]
        %v815 = vld [vmem:[%s284 + $0x810] sm:$0xf]
        %v816 = vld [vmem:[%s284 + $0x814] sm:$0xf]
        %v817 = vld [vmem:[%s284 + $0x818] sm:$0xf]
        %v818 = vld [vmem:[%s284 + $0x81c] sm:$0xf]
        %v819 = vld [vmem:[%s284 + $0x820] sm:$0xf]
        %v820 = vld [vmem:[%s284 + $0x824] sm:$0xf]
        %v821 = vld [vmem:[%s284 + $0x828] sm:$0xf]
        %v822 = vld [vmem:[%s284 + $0x82c] sm:$0xf]
        %v823 = vld [vmem:[%s284 + $0x830] sm:$0xf]
        %v824 = vld [vmem:[%s284 + $0x834] sm:$0xf]
        %v825 = vld [vmem:[%s284 + $0x838] sm:$0xf]
        %v826 = vld [vmem:[%s284 + $0x83c] sm:$0xf]
        %v827 = vld [vmem:[%s284 + $0x840] sm:$0xf]
        %v828 = vld [vmem:[%s284 + $0x844] sm:$0xf]
        %v829 = vld [vmem:[%s284 + $0x848] sm:$0xf]
        %v830 = vld [vmem:[%s284 + $0x84c] sm:$0xf]
        %v831 = vld [vmem:[%s284 + $0x850] sm:$0xf]
        %v832 = vld [vmem:[%s284 + $0x854] sm:$0xf]
        %v833 = vld [vmem:[%s284 + $0x858] sm:$0xf]
        %v834 = vld [vmem:[%s284 + $0x85c] sm:$0xf]
        %v835 = vld [vmem:[%s284 + $0x860] sm:$0xf]
        %v836 = vld [vmem:[%s284 + $0x864] sm:$0xf]
        %v837 = vld [vmem:[%s284 + $0x868] sm:$0xf]
        %v838 = vld [vmem:[%s284 + $0x86c] sm:$0xf]
        %v839 = vld [vmem:[%s284 + $0x870] sm:$0xf]
        %v840 = vld [vmem:[%s284 + $0x874] sm:$0xf]
        %v841 = vld [vmem:[%s284 + $0x878] sm:$0xf]
        %v842 = vld [vmem:[%s284 + $0x87c] sm:$0xf]
        %v843 = vld [vmem:[%s284 + $0x880] sm:$0xf]
        %v844 = vld [vmem:[%s284 + $0x884] sm:$0xf]
        %v845 = vld [vmem:[%s284 + $0x888] sm:$0xf]
        %v846 = vld [vmem:[%s284 + $0x88c] sm:$0xf]
        %v847 = vld [vmem:[%s284 + $0x890] sm:$0xf]
        %v848 = vld [vmem:[%s284 + $0x894] sm:$0xf]
        %v849 = vld [vmem:[%s284 + $0x898] sm:$0xf]
        %v850 = vld [vmem:[%s284 + $0x89c] sm:$0xf]
        %v851 = vld [vmem:[%s284 + $0x8a0] sm:$0xf]
        %v852 = vld [vmem:[%s284 + $0x8a4] sm:$0xf]
        %v853 = vld [vmem:[%s284 + $0x8a8] sm:$0xf]
        %v854 = vld [vmem:[%s284 + $0x8ac] sm:$0xf]
        %v855 = vld [vmem:[%s284 + $0x8b0] sm:$0xf]
        %v856 = vld [vmem:[%s284 + $0x8b4] sm:$0xf]
        %v857 = vld [vmem:[%s284 + $0x8b8] sm:$0xf]
        %v858 = vld [vmem:[%s284 + $0x8bc] sm:$0xf]
        %v859 = vld [vmem:[%s284 + $0x8c0] sm:$0xf]
        %v860 = vld [vmem:[%s284 + $0x8c4] sm:$0xf]
        %v861 = vld [vmem:[%s284 + $0x8c8] sm:$0xf]
        %v862 = vld [vmem:[%s284 + $0x8cc] sm:$0xf]
        %v863 = vld [vmem:[%s284 + $0x8d0] sm:$0xf]
        %v864 = vld [vmem:[%s284 + $0x8d4] sm:$0xf]
        %v865 = vld [vmem:[%s284 + $0x8d8] sm:$0xf]
        %v866 = vld [vmem:[%s284 + $0x8dc] sm:$0xf]
        %v867 = vld [vmem:[%s284 + $0x8e0] sm:$0xf]
        %v868 = vld [vmem:[%s284 + $0x8e4] sm:$0xf]
        %v869 = vld [vmem:[%s284 + $0x8e8] sm:$0xf]
        %v870 = vld [vmem:[%s284 + $0x8ec] sm:$0xf]
        %v871 = vld [vmem:[%s284 + $0x8f0] sm:$0xf]
        %v872 = vld [vmem:[%s284 + $0x8f4] sm:$0xf]
        %v873 = vld [vmem:[%s284 + $0x8f8] sm:$0xf]
        %v874 = vld [vmem:[%s284 + $0x8fc] sm:$0xf]
        %v875 = vld [vmem:[%s284 + $0x900] sm:$0xf]
        %v876 = vld [vmem:[%s284 + $0x904] sm:$0xf]
        %v877 = vld [vmem:[%s284 + $0x908] sm:$0xf]
        %v878 = vld [vmem:[%s284 + $0x90c] sm:$0xf]
        %v879 = vld [vmem:[%s284 + $0x910] sm:$0xf]
        %v880 = vld [vmem:[%s284 + $0x914] sm:$0xf]
        %v881 = vld [vmem:[%s284 + $0x918] sm:$0xf]
        %v882 = vld [vmem:[%s284 + $0x91c] sm:$0xf]
        %v883 = vld [vmem:[%s284 + $0x920] sm:$0xf]
        %v884 = vld [vmem:[%s284 + $0x924] sm:$0xf]
        %v885 = vld [vmem:[%s284 + $0x928] sm:$0xf]
        %v886 = vld [vmem:[%s284 + $0x92c] sm:$0xf]
        %v887 = vld [vmem:[%s284 + $0x930] sm:$0xf]
        %v888 = vld [vmem:[%s284 + $0x934] sm:$0xf]
        %v889 = vld [vmem:[%s284 + $0x938] sm:$0xf]
        %v890 = vld [vmem:[%s284 + $0x93c] sm:$0xf]
        %v891 = vld [vmem:[%s284 + $0x940] sm:$0xf]
        %v892 = vld [vmem:[%s284 + $0x944] sm:$0xf]
        %v893 = vld [vmem:[%s284 + $0x948] sm:$0xf]
        %v894 = vld [vmem:[%s284 + $0x94c] sm:$0xf]
        %v895 = vld [vmem:[%s284 + $0x950] sm:$0xf]
        %v896 = vld [vmem:[%s284 + $0x954] sm:$0xf]
        %v897 = vld [vmem:[%s284 + $0x958] sm:$0xf]
        %v898 = vld [vmem:[%s284 + $0x95c] sm:$0xf]
        %v899 = vld [vmem:[%s284 + $0x960] sm:$0xf]
        %v900 = vld [vmem:[%s284 + $0x964] sm:$0xf]
        %v901 = vld [vmem:[%s284 + $0x968] sm:$0xf]
        %v902 = vld [vmem:[%s284 + $0x96c] sm:$0xf]
        %v903 = vld [vmem:[%s284 + $0x970] sm:$0xf]
        %v904 = vld [vmem:[%s284 + $0x974] sm:$0xf]
        %v905 = vld [vmem:[%s284 + $0x978] sm:$0xf]
        %v906 = vld [vmem:[%s284 + $0x97c] sm:$0xf]
        %v907 = vld [vmem:[%s284 + $0x980] sm:$0xf]
        %v908 = vld [vmem:[%s284 + $0x984] sm:$0xf]
        %v909 = vld [vmem:[%s284 + $0x988] sm:$0xf]
        %v910 = vld [vmem:[%s284 + $0x98c] sm:$0xf]
        %v911 = vld [vmem:[%s284 + $0x990] sm:$0xf]
        %v912 = vld [vmem:[%s284 + $0x994] sm:$0xf]
        %v913 = vld [vmem:[%s284 + $0x998] sm:$0xf]
        %v914 = vld [vmem:[%s284 + $0x99c] sm:$0xf]
        %v915 = vld [vmem:[%s284 + $0x9a0] sm:$0xf]
        %v916 = vld [vmem:[%s284 + $0x9a4] sm:$0xf]
        %v917 = vld [vmem:[%s284 + $0x9a8] sm:$0xf]
        %v918 = vld [vmem:[%s284 + $0x9ac] sm:$0xf]
        %v919 = vld [vmem:[%s284 + $0x9b0] sm:$0xf]
        %v920 = vld [vmem:[%s284 + $0x9b4] sm:$0xf]
        %v921 = vld [vmem:[%s284 + $0x9b8] sm:$0xf]
        %v922 = vld [vmem:[%s284 + $0x9bc] sm:$0xf]
        %v923 = vld [vmem:[%s284 + $0x9c0] sm:$0xf]
        %v924 = vld [vmem:[%s284 + $0x9c4] sm:$0xf]
        %v925 = vld [vmem:[%s284 + $0x9c8] sm:$0xf]
        %v926 = vld [vmem:[%s284 + $0x9cc] sm:$0xf]
        %v927 = vld [vmem:[%s284 + $0x9d0] sm:$0xf]
        %v928 = vld [vmem:[%s284 + $0x9d4] sm:$0xf]
        %v929 = vld [vmem:[%s284 + $0x9d8] sm:$0xf]
        %v930 = vld [vmem:[%s284 + $0x9dc] sm:$0xf]
        %v931 = vld [vmem:[%s284 + $0x9e0] sm:$0xf]
        %v932 = vld [vmem:[%s284 + $0x9e4] sm:$0xf]
        %v933 = vld [vmem:[%s284 + $0x9e8] sm:$0xf]
        %v934 = vld [vmem:[%s284 + $0x9ec] sm:$0xf]
        %v935 = vld [vmem:[%s284 + $0x9f0] sm:$0xf]
        %v936 = vld [vmem:[%s284 + $0x9f4] sm:$0xf]
        %v937 = vld [vmem:[%s284 + $0x9f8] sm:$0xf]
        %v938 = vld [vmem:[%s284 + $0x9fc] sm:$0xf]
        %v939 = vld [vmem:[%s284 + $0xa00] sm:$0xf]
        %v940 = vld [vmem:[%s284 + $0xa04] sm:$0xf]
        %v941 = vld [vmem:[%s284 + $0xa08] sm:$0xf]
        %v942 = vld [vmem:[%s284 + $0xa0c] sm:$0xf]
        %v943 = vld [vmem:[%s284 + $0xa10] sm:$0xf]
        %v944 = vld [vmem:[%s284 + $0xa14] sm:$0xf]
        %v945 = vld [vmem:[%s284 + $0xa18] sm:$0xf]
        %v946 = vld [vmem:[%s284 + $0xa1c] sm:$0xf]
        %v947 = vld [vmem:[%s284 + $0xa20] sm:$0xf]
        %v948 = vld [vmem:[%s284 + $0xa24] sm:$0xf]
        %v949 = vld [vmem:[%s284 + $0xa28] sm:$0xf]
        %v950 = vld [vmem:[%s284 + $0xa2c] sm:$0xf]
        %v951 = vld [vmem:[%s284 + $0xa30] sm:$0xf]
        %v952 = vld [vmem:[%s284 + $0xa34] sm:$0xf]
        %v953 = vld [vmem:[%s284 + $0xa38] sm:$0xf]
        %v954 = vld [vmem:[%s284 + $0xa3c] sm:$0xf]
        %v955 = vld [vmem:[%s284 + $0xa40] sm:$0xf]
        %v956 = vld [vmem:[%s284 + $0xa44] sm:$0xf]
        %v957 = vld [vmem:[%s284 + $0xa48] sm:$0xf]
        %v958 = vld [vmem:[%s284 + $0xa4c] sm:$0xf]
        %v959 = vld [vmem:[%s284 + $0xa50] sm:$0xf]
        %v960 = vld [vmem:[%s284 + $0xa54] sm:$0xf]
        %v961 = vld [vmem:[%s284 + $0xa58] sm:$0xf]
        %v962 = vld [vmem:[%s284 + $0xa5c] sm:$0xf]
        %v963 = vld [vmem:[%s284 + $0xa60] sm:$0xf]
        %v964 = vld [vmem:[%s284 + $0xa64] sm:$0xf]
        %v965 = vld [vmem:[%s284 + $0xa68] sm:$0xf]
        %v966 = vld [vmem:[%s284 + $0xa6c] sm:$0xf]
        %v967 = vld [vmem:[%s284 + $0xa70] sm:$0xf]
        %v968 = vld [vmem:[%s284 + $0xa74] sm:$0xf]
        %v969 = vld [vmem:[%s284 + $0xa78] sm:$0xf]
        %v970 = vld [vmem:[%s284 + $0xa7c] sm:$0xf]
        %v971 = vld [vmem:[%s284 + $0xa80] sm:$0xf]
        %v972 = vld [vmem:[%s284 + $0xa84] sm:$0xf]
        %v973 = vld [vmem:[%s284 + $0xa88] sm:$0xf]
        %v974 = vld [vmem:[%s284 + $0xa8c] sm:$0xf]
        %v975 = vld [vmem:[%s284 + $0xa90] sm:$0xf]
        %v976 = vld [vmem:[%s284 + $0xa94] sm:$0xf]
        %v977 = vld [vmem:[%s284 + $0xa98] sm:$0xf]
        %v978 = vld [vmem:[%s284 + $0xa9c] sm:$0xf]
        %v979 = vld [vmem:[%s284 + $0xaa0] sm:$0xf]
        %v980 = vld [vmem:[%s284 + $0xaa4] sm:$0xf]
        %v981 = vld [vmem:[%s284 + $0xaa8] sm:$0xf]
        %v982 = vld [vmem:[%s284 + $0xaac] sm:$0xf]
        %v983 = vld [vmem:[%s284 + $0xab0] sm:$0xf]
        %v984 = vld [vmem:[%s284 + $0xab4] sm:$0xf]
        %v985 = vld [vmem:[%s284 + $0xab8] sm:$0xf]
        %v986 = vld [vmem:[%s284 + $0xabc] sm:$0xf]
        %v987 = vld [vmem:[%s284 + $0xac0] sm:$0xf]
        %v988 = vld [vmem:[%s284 + $0xac4] sm:$0xf]
        %v989 = vld [vmem:[%s284 + $0xac8] sm:$0xf]
        %v990 = vld [vmem:[%s284 + $0xacc] sm:$0xf]
        %v991 = vld [vmem:[%s284 + $0xad0] sm:$0xf]
        %v992 = vld [vmem:[%s284 + $0xad4] sm:$0xf]
        %v993 = vld [vmem:[%s284 + $0xad8] sm:$0xf]
        %v994 = vld [vmem:[%s284 + $0xadc] sm:$0xf]
        %v995 = vld [vmem:[%s284 + $0xae0] sm:$0xf]
        %v996 = vld [vmem:[%s284 + $0xae4] sm:$0xf]
        %v997 = vld [vmem:[%s284 + $0xae8] sm:$0xf]
        %v998 = vld [vmem:[%s284 + $0xaec] sm:$0xf]
        %v999 = vld [vmem:[%s284 + $0xaf0] sm:$0xf]
        %v1000 = vld [vmem:[%s284 + $0xaf4] sm:$0xf]
        %v1001 = vld [vmem:[%s284 + $0xaf8] sm:$0xf]
        %v1002 = vld [vmem:[%s284 + $0xafc] sm:$0xf]
        %v1003 = vld [vmem:[%s284 + $0xb00] sm:$0xf]
        %v1004 = vld [vmem:[%s284 + $0xb04] sm:$0xf]
        %v1005 = vld [vmem:[%s284 + $0xb08] sm:$0xf]
        %v1006 = vld [vmem:[%s284 + $0xb0c] sm:$0xf]
        %v1007 = vld [vmem:[%s284 + $0xb10] sm:$0xf]
        %v1008 = vld [vmem:[%s284 + $0xb14] sm:$0xf]
        %v1009 = vld [vmem:[%s284 + $0xb18] sm:$0xf]
        %v1010 = vld [vmem:[%s284 + $0xb1c] sm:$0xf]
        %v1011 = vld [vmem:[%s284 + $0xb20] sm:$0xf]
        %v1012 = vld [vmem:[%s284 + $0xb24] sm:$0xf]
        %v1013 = vld [vmem:[%s284 + $0xb28] sm:$0xf]
        %v1014 = vld [vmem:[%s284 + $0xb2c] sm:$0xf]
        %v1015 = vld [vmem:[%s284 + $0xb30] sm:$0xf]
        %v1016 = vld [vmem:[%s284 + $0xb34] sm:$0xf]
        %v1017 = vld [vmem:[%s284 + $0xb38] sm:$0xf]
        %v1018 = vld [vmem:[%s284 + $0xb3c] sm:$0xf]
        %v1019 = vld [vmem:[%s284 + $0xb40] sm:$0xf]
        %v1020 = vld [vmem:[%s284 + $0xb44] sm:$0xf]
        %v1021 = vld [vmem:[%s284 + $0xb48] sm:$0xf]
        %v1022 = vld [vmem:[%s284 + $0xb4c] sm:$0xf]
        %v1023 = vld [vmem:[%s284 + $0xb50] sm:$0xf]
        %v1024 = vld [vmem:[%s284 + $0xb54] sm:$0xf]
        %v1025 = vld [vmem:[%s284 + $0xb58] sm:$0xf]
        %v1026 = vld [vmem:[%s284 + $0xb5c] sm:$0xf]
        %v1027 = vld [vmem:[%s284 + $0xb60] sm:$0xf]
        %v1028 = vld [vmem:[%s284 + $0xb64] sm:$0xf]
        %v1029 = vld [vmem:[%s284 + $0xb68] sm:$0xf]
        %v1030 = vld [vmem:[%s284 + $0xb6c] sm:$0xf]
        %v1031 = vld [vmem:[%s284 + $0xb70] sm:$0xf]
        %v1032 = vld [vmem:[%s284 + $0xb74] sm:$0xf]
        %v1033 = vld [vmem:[%s284 + $0xb78] sm:$0xf]
        %v1034 = vld [vmem:[%s284 + $0xb7c] sm:$0xf]
        %v1041 = vcombine.high %v293, %v293
        %v1043 = vunpack.c.l.s4 1966171168
        %v1044 = vunpack.c.0.s8 %v1043
        %v1045 = vlaneseq
        %v1046 = vshrl.u32 %v1045, 7
        %v1047 = vsub.s32 %v1044, %v1046
        %v1048 = vrot.slane %v293, %v1047
        %v1050 = vunpack.c.l.s4 1966171168
        %v1051 = vunpack.c.0.s8 %v1050
        %v1052 = vlaneseq
        %v1053 = vshrl.u32 %v1052, 7
        %v1054 = vsub.s32 %v1051, %v1053
        %v1055 = vrot.slane %v1041, %v1054
        %v1056 = vcombine.high %v1048, %v1048
        %v1057 = vcombine.high %v1055, %v1055
        %v1059 = vunpack.c.l.s4 1966171168
        %v1060 = vunpack.c.0.s8 %v1059
        %v1061 = vlaneseq
        %v1062 = vshrl.u32 %v1061, 7
        %v1063 = vsub.s32 %v1060, %v1062
        %v1064 = vrot.slane %v1048, %v1063
        %v1066 = vunpack.c.l.s4 1966171168
        %v1067 = vunpack.c.0.s8 %v1066
        %v1068 = vlaneseq
        %v1069 = vshrl.u32 %v1068, 7
        %v1070 = vsub.s32 %v1067, %v1069
        %v1071 = vrot.slane %v1055, %v1070
        %v1073 = vunpack.c.l.s4 1966171168
        %v1074 = vunpack.c.0.s8 %v1073
        %v1075 = vlaneseq
        %v1076 = vshrl.u32 %v1075, 7
        %v1077 = vsub.s32 %v1074, %v1076
        %v1078 = vrot.slane %v1056, %v1077
        %v1080 = vunpack.c.l.s4 1966171168
        %v1081 = vunpack.c.0.s8 %v1080
        %v1082 = vlaneseq
        %v1083 = vshrl.u32 %v1082, 7
        %v1084 = vsub.s32 %v1081, %v1083
        %v1085 = vrot.slane %v1057, %v1084
        %v1086 = vcombine.high %v1064, %v1064
        %v1087 = vcombine.high %v1071, %v1071
        %v1088 = vcombine.high %v1078, %v1078
        %v1089 = vcombine.high %v1085, %v1085
        %v1090 = vcombine.high %v294, %v294
        %v1092 = vunpack.c.l.s4 1966171168
        %v1093 = vunpack.c.0.s8 %v1092
        %v1094 = vlaneseq
        %v1095 = vshrl.u32 %v1094, 7
        %v1096 = vsub.s32 %v1093, %v1095
        %v1097 = vrot.slane %v294, %v1096
        %v1099 = vunpack.c.l.s4 1966171168
        %v1100 = vunpack.c.0.s8 %v1099
        %v1101 = vlaneseq
        %v1102 = vshrl.u32 %v1101, 7
        %v1103 = vsub.s32 %v1100, %v1102
        %v1104 = vrot.slane %v1090, %v1103
        %v1105 = vcombine.high %v1097, %v1097
        %v1106 = vcombine.high %v1104, %v1104
        %v1108 = vunpack.c.l.s4 1966171168
        %v1109 = vunpack.c.0.s8 %v1108
        %v1110 = vlaneseq
        %v1111 = vshrl.u32 %v1110, 7
        %v1112 = vsub.s32 %v1109, %v1111
        %v1113 = vrot.slane %v1097, %v1112
        %v1115 = vunpack.c.l.s4 1966171168
        %v1116 = vunpack.c.0.s8 %v1115
        %v1117 = vlaneseq
        %v1118 = vshrl.u32 %v1117, 7
        %v1119 = vsub.s32 %v1116, %v1118
        %v1120 = vrot.slane %v1104, %v1119
        %v1122 = vunpack.c.l.s4 1966171168
        %v1123 = vunpack.c.0.s8 %v1122
        %v1124 = vlaneseq
        %v1125 = vshrl.u32 %v1124, 7
        %v1126 = vsub.s32 %v1123, %v1125
        %v1127 = vrot.slane %v1105, %v1126
        %v1129 = vunpack.c.l.s4 1966171168
        %v1130 = vunpack.c.0.s8 %v1129
        %v1131 = vlaneseq
        %v1132 = vshrl.u32 %v1131, 7
        %v1133 = vsub.s32 %v1130, %v1132
        %v1134 = vrot.slane %v1106, %v1133
        %v1135 = vcombine.high %v1113, %v1113
        %v1136 = vcombine.high %v1120, %v1120
        %v1137 = vcombine.high %v1127, %v1127
        %v1138 = vcombine.high %v1134, %v1134
        %v1139 = vcombine.high %v295, %v295
        %v1141 = vunpack.c.l.s4 1966171168
        %v1142 = vunpack.c.0.s8 %v1141
        %v1143 = vlaneseq
        %v1144 = vshrl.u32 %v1143, 7
        %v1145 = vsub.s32 %v1142, %v1144
        %v1146 = vrot.slane %v295, %v1145
        %v1148 = vunpack.c.l.s4 1966171168
        %v1149 = vunpack.c.0.s8 %v1148
        %v1150 = vlaneseq
        %v1151 = vshrl.u32 %v1150, 7
        %v1152 = vsub.s32 %v1149, %v1151
        %v1153 = vrot.slane %v1139, %v1152
        %v1154 = vcombine.high %v1146, %v1146
        %v1155 = vcombine.high %v1153, %v1153
        %v1157 = vunpack.c.l.s4 1966171168
        %v1158 = vunpack.c.0.s8 %v1157
        %v1159 = vlaneseq
        %v1160 = vshrl.u32 %v1159, 7
        %v1161 = vsub.s32 %v1158, %v1160
        %v1162 = vrot.slane %v1146, %v1161
        %v1164 = vunpack.c.l.s4 1966171168
        %v1165 = vunpack.c.0.s8 %v1164
        %v1166 = vlaneseq
        %v1167 = vshrl.u32 %v1166, 7
        %v1168 = vsub.s32 %v1165, %v1167
        %v1169 = vrot.slane %v1153, %v1168
        %v1171 = vunpack.c.l.s4 1966171168
        %v1172 = vunpack.c.0.s8 %v1171
        %v1173 = vlaneseq
        %v1174 = vshrl.u32 %v1173, 7
        %v1175 = vsub.s32 %v1172, %v1174
        %v1176 = vrot.slane %v1154, %v1175
        %v1178 = vunpack.c.l.s4 1966171168
        %v1179 = vunpack.c.0.s8 %v1178
        %v1180 = vlaneseq
        %v1181 = vshrl.u32 %v1180, 7
        %v1182 = vsub.s32 %v1179, %v1181
        %v1183 = vrot.slane %v1155, %v1182
        %v1184 = vcombine.high %v1162, %v1162
        %v1185 = vcombine.high %v1169, %v1169
        %v1186 = vcombine.high %v1176, %v1176
        %v1187 = vcombine.high %v1183, %v1183
        %v1188 = vcombine.high %v296, %v296
        %v1190 = vunpack.c.l.s4 1966171168
        %v1191 = vunpack.c.0.s8 %v1190
        %v1192 = vlaneseq
        %v1193 = vshrl.u32 %v1192, 7
        %v1194 = vsub.s32 %v1191, %v1193
        %v1195 = vrot.slane %v296, %v1194
        %v1197 = vunpack.c.l.s4 1966171168
        %v1198 = vunpack.c.0.s8 %v1197
        %v1199 = vlaneseq
        %v1200 = vshrl.u32 %v1199, 7
        %v1201 = vsub.s32 %v1198, %v1200
        %v1202 = vrot.slane %v1188, %v1201
        %v1203 = vcombine.high %v1195, %v1195
        %v1204 = vcombine.high %v1202, %v1202
        %v1206 = vunpack.c.l.s4 1966171168
        %v1207 = vunpack.c.0.s8 %v1206
        %v1208 = vlaneseq
        %v1209 = vshrl.u32 %v1208, 7
        %v1210 = vsub.s32 %v1207, %v1209
        %v1211 = vrot.slane %v1195, %v1210
        %v1213 = vunpack.c.l.s4 1966171168
        %v1214 = vunpack.c.0.s8 %v1213
        %v1215 = vlaneseq
        %v1216 = vshrl.u32 %v1215, 7
        %v1217 = vsub.s32 %v1214, %v1216
        %v1218 = vrot.slane %v1202, %v1217
        %v1220 = vunpack.c.l.s4 1966171168
        %v1221 = vunpack.c.0.s8 %v1220
        %v1222 = vlaneseq
        %v1223 = vshrl.u32 %v1222, 7
        %v1224 = vsub.s32 %v1221, %v1223
        %v1225 = vrot.slane %v1203, %v1224
        %v1227 = vunpack.c.l.s4 1966171168
        %v1228 = vunpack.c.0.s8 %v1227
        %v1229 = vlaneseq
        %v1230 = vshrl.u32 %v1229, 7
        %v1231 = vsub.s32 %v1228, %v1230
        %v1232 = vrot.slane %v1204, %v1231
        %v1233 = vcombine.high %v1211, %v1211
        %v1234 = vcombine.high %v1218, %v1218
        %v1235 = vcombine.high %v1225, %v1225
        %v1236 = vcombine.high %v1232, %v1232
        %v1237 = vcombine.high %v297, %v297
        %v1239 = vunpack.c.l.s4 1966171168
        %v1240 = vunpack.c.0.s8 %v1239
        %v1241 = vlaneseq
        %v1242 = vshrl.u32 %v1241, 7
        %v1243 = vsub.s32 %v1240, %v1242
        %v1244 = vrot.slane %v297, %v1243
        %v1246 = vunpack.c.l.s4 1966171168
        %v1247 = vunpack.c.0.s8 %v1246
        %v1248 = vlaneseq
        %v1249 = vshrl.u32 %v1248, 7
        %v1250 = vsub.s32 %v1247, %v1249
        %v1251 = vrot.slane %v1237, %v1250
        %v1252 = vcombine.high %v1244, %v1244
        %v1253 = vcombine.high %v1251, %v1251
        %v1255 = vunpack.c.l.s4 1966171168
        %v1256 = vunpack.c.0.s8 %v1255
        %v1257 = vlaneseq
        %v1258 = vshrl.u32 %v1257, 7
        %v1259 = vsub.s32 %v1256, %v1258
        %v1260 = vrot.slane %v1244, %v1259
        %v1262 = vunpack.c.l.s4 1966171168
        %v1263 = vunpack.c.0.s8 %v1262
        %v1264 = vlaneseq
        %v1265 = vshrl.u32 %v1264, 7
        %v1266 = vsub.s32 %v1263, %v1265
        %v1267 = vrot.slane %v1251, %v1266
        %v1269 = vunpack.c.l.s4 1966171168
        %v1270 = vunpack.c.0.s8 %v1269
        %v1271 = vlaneseq
        %v1272 = vshrl.u32 %v1271, 7
        %v1273 = vsub.s32 %v1270, %v1272
        %v1274 = vrot.slane %v1252, %v1273
        %v1276 = vunpack.c.l.s4 1966171168
        %v1277 = vunpack.c.0.s8 %v1276
        %v1278 = vlaneseq
        %v1279 = vshrl.u32 %v1278, 7
        %v1280 = vsub.s32 %v1277, %v1279
        %v1281 = vrot.slane %v1253, %v1280
        %v1282 = vcombine.high %v1260, %v1260
        %v1283 = vcombine.high %v1267, %v1267
        %v1284 = vcombine.high %v1274, %v1274
        %v1285 = vcombine.high %v1281, %v1281
        %v1286 = vcombine.high %v298, %v298
        %v1288 = vunpack.c.l.s4 1966171168
        %v1289 = vunpack.c.0.s8 %v1288
        %v1290 = vlaneseq
        %v1291 = vshrl.u32 %v1290, 7
        %v1292 = vsub.s32 %v1289, %v1291
        %v1293 = vrot.slane %v298, %v1292
        %v1295 = vunpack.c.l.s4 1966171168
        %v1296 = vunpack.c.0.s8 %v1295
        %v1297 = vlaneseq
        %v1298 = vshrl.u32 %v1297, 7
        %v1299 = vsub.s32 %v1296, %v1298
        %v1300 = vrot.slane %v1286, %v1299
        %v1301 = vcombine.high %v1293, %v1293
        %v1302 = vcombine.high %v1300, %v1300
        %v1304 = vunpack.c.l.s4 1966171168
        %v1305 = vunpack.c.0.s8 %v1304
        %v1306 = vlaneseq
        %v1307 = vshrl.u32 %v1306, 7
        %v1308 = vsub.s32 %v1305, %v1307
        %v1309 = vrot.slane %v1293, %v1308
        %v1311 = vunpack.c.l.s4 1966171168
        %v1312 = vunpack.c.0.s8 %v1311
        %v1313 = vlaneseq
        %v1314 = vshrl.u32 %v1313, 7
        %v1315 = vsub.s32 %v1312, %v1314
        %v1316 = vrot.slane %v1300, %v1315
        %v1318 = vunpack.c.l.s4 1966171168
        %v1319 = vunpack.c.0.s8 %v1318
        %v1320 = vlaneseq
        %v1321 = vshrl.u32 %v1320, 7
        %v1322 = vsub.s32 %v1319, %v1321
        %v1323 = vrot.slane %v1301, %v1322
        %v1325 = vunpack.c.l.s4 1966171168
        %v1326 = vunpack.c.0.s8 %v1325
        %v1327 = vlaneseq
        %v1328 = vshrl.u32 %v1327, 7
        %v1329 = vsub.s32 %v1326, %v1328
        %v1330 = vrot.slane %v1302, %v1329
        %v1331 = vcombine.high %v1309, %v1309
        %v1332 = vcombine.high %v1323, %v1323
        %v2115 = vunpack.c.l.b16 %v299
        %v2116 = vunpack.c.l.b16 %v300
        %v2117 = vunpack.c.l.b16 %v301
        %v2118 = vunpack.c.l.b16 %v302
        %v2119 = vunpack.c.l.b16 %v303
        %v2120 = vunpack.c.l.b16 %v304
        %v2121 = vunpack.c.l.b16 %v305
        %v2122 = vunpack.c.l.b16 %v306
        %v2123 = vunpack.c.l.b16 %v307
        %v2124 = vunpack.c.l.b16 %v308
        %v2125 = vunpack.c.l.b16 %v309
        %v2126 = vunpack.c.l.b16 %v310
        %v2127 = vunpack.c.l.b16 %v311
        %v2128 = vunpack.c.l.b16 %v312
        %v2129 = vunpack.c.l.b16 %v313
        %v2130 = vunpack.c.l.b16 %v314
        %v2131 = vunpack.c.l.b16 %v315
        %v2132 = vunpack.c.l.b16 %v316
        %v2133 = vunpack.c.l.b16 %v317
        %v2134 = vunpack.c.l.b16 %v318
        %v2135 = vunpack.c.l.b16 %v319
        %v2136 = vunpack.c.l.b16 %v320
        %v2137 = vunpack.c.l.b16 %v321
        %v2138 = vunpack.c.l.b16 %v322
        %v2139 = vunpack.c.l.b16 %v323
        %v2140 = vunpack.c.l.b16 %v324
        %v2141 = vunpack.c.l.b16 %v325
        %v2142 = vunpack.c.l.b16 %v326
        %v2143 = vunpack.c.l.b16 %v327
        %v2144 = vunpack.c.l.b16 %v328
        %v2145 = vunpack.c.l.b16 %v329
        %v2146 = vunpack.c.l.b16 %v330
        %v2147 = vunpack.c.l.b16 %v331
        %v2148 = vunpack.c.l.b16 %v332
        %v2149 = vunpack.c.l.b16 %v333
        %v2150 = vunpack.c.l.b16 %v334
        %v2151 = vunpack.c.l.b16 %v335
        %v2152 = vunpack.c.l.b16 %v336
        %v2153 = vunpack.c.l.b16 %v337
        %v2154 = vunpack.c.l.b16 %v338
        %v2155 = vunpack.c.l.b16 %v339
        %v2156 = vunpack.c.l.b16 %v340
        %v2157 = vunpack.c.l.b16 %v341
        %v2158 = vunpack.c.l.b16 %v342
        %v2159 = vunpack.c.l.b16 %v343
        %v2160 = vunpack.c.l.b16 %v344
        %v2161 = vunpack.c.l.b16 %v345
        %v2162 = vunpack.c.l.b16 %v346
        %v2163 = vunpack.c.l.b16 %v347
        %v2164 = vunpack.c.l.b16 %v348
        %v2165 = vunpack.c.l.b16 %v349
        %v2166 = vunpack.c.l.b16 %v350
        %v2167 = vunpack.c.l.b16 %v351
        %v2168 = vunpack.c.l.b16 %v352
        %v2169 = vunpack.c.l.b16 %v353
        %v2170 = vunpack.c.l.b16 %v354
        %v2171 = vunpack.c.l.b16 %v355
        %v2172 = vunpack.c.l.b16 %v356
        %v2173 = vunpack.c.l.b16 %v357
        %v2174 = vunpack.c.l.b16 %v358
        %v2175 = vunpack.c.l.b16 %v359
        %v2176 = vunpack.c.l.b16 %v360
        %v2177 = vunpack.c.l.b16 %v361
        %v2178 = vunpack.c.l.b16 %v362
        %v2179 = vunpack.c.l.b16 %v363
        %v2180 = vunpack.c.l.b16 %v364
        %v2181 = vunpack.c.l.b16 %v365
        %v2182 = vunpack.c.l.b16 %v366
        %v2183 = vunpack.c.l.b16 %v367
        %v2184 = vunpack.c.l.b16 %v368
        %v2185 = vunpack.c.l.b16 %v369
        %v2186 = vunpack.c.l.b16 %v370
        %v2187 = vunpack.c.l.b16 %v371
        %v2188 = vunpack.c.l.b16 %v372
        %v2189 = vunpack.c.l.b16 %v373
        %v2190 = vunpack.c.l.b16 %v374
        %v2191 = vunpack.c.l.b16 %v375
        %v2192 = vunpack.c.l.b16 %v376
        %v2193 = vunpack.c.l.b16 %v377
        %v2194 = vunpack.c.l.b16 %v378
        %v2195 = vunpack.c.l.b16 %v379
        %v2196 = vunpack.c.l.b16 %v380
        %v2197 = vunpack.c.l.b16 %v381
        %v2198 = vunpack.c.l.b16 %v382
        %v2199 = vunpack.c.l.b16 %v383
        %v2200 = vunpack.c.l.b16 %v384
        %v2201 = vunpack.c.l.b16 %v385
        %v2202 = vunpack.c.l.b16 %v386
        %v2203 = vunpack.c.l.b16 %v387
        %v2204 = vunpack.c.l.b16 %v388
        %v2205 = vunpack.c.l.b16 %v389
        %v2206 = vunpack.c.l.b16 %v390
        %v2207 = vunpack.c.l.b16 %v391
        %v2208 = vunpack.c.l.b16 %v392
        %v2209 = vunpack.c.l.b16 %v393
        %v2210 = vunpack.c.l.b16 %v394
        %v2211 = vunpack.c.l.b16 %v395
        %v2212 = vunpack.c.l.b16 %v396
        %v2213 = vunpack.c.l.b16 %v397
        %v2214 = vunpack.c.l.b16 %v398
        %v2215 = vunpack.c.l.b16 %v399
        %v2216 = vunpack.c.l.b16 %v400
        %v2217 = vunpack.c.l.b16 %v401
        %v2218 = vunpack.c.l.b16 %v402
        %v2219 = vunpack.c.l.b16 %v403
        %v2220 = vunpack.c.l.b16 %v404
        %v2221 = vunpack.c.l.b16 %v405
        %v2222 = vunpack.c.l.b16 %v406
        %v2223 = vunpack.c.l.b16 %v407
        %v2224 = vunpack.c.l.b16 %v408
        %v2225 = vunpack.c.l.b16 %v409
        %v2226 = vunpack.c.l.b16 %v410
        %v2227 = vunpack.c.l.b16 %v411
        %v2228 = vunpack.c.l.b16 %v412
        %v2229 = vunpack.c.l.b16 %v413
        %v2230 = vunpack.c.l.b16 %v414
        %v2231 = vunpack.c.l.b16 %v415
        %v2232 = vunpack.c.l.b16 %v416
        %v2233 = vunpack.c.l.b16 %v417
        %v2234 = vunpack.c.l.b16 %v418
        %v2235 = vunpack.c.l.b16 %v419
        %v2236 = vunpack.c.l.b16 %v420
        %v2237 = vunpack.c.l.b16 %v421
        %v2238 = vunpack.c.l.b16 %v422
        %v2239 = vunpack.c.l.b16 %v423
        %v2240 = vunpack.c.l.b16 %v424
        %v2241 = vunpack.c.l.b16 %v425
        %v2242 = vunpack.c.l.b16 %v426
        %v2243 = vunpack.c.l.b16 %v427
        %v2244 = vunpack.c.l.b16 %v428
        %v2245 = vunpack.c.l.b16 %v429
        %v2246 = vunpack.c.l.b16 %v430
        %v2247 = vunpack.c.l.b16 %v431
        %v2248 = vunpack.c.l.b16 %v432
        %v2249 = vunpack.c.l.b16 %v433
        %v2250 = vunpack.c.l.b16 %v434
        %v2251 = vunpack.c.l.b16 %v435
        %v2252 = vunpack.c.l.b16 %v436
        %v2253 = vunpack.c.l.b16 %v437
        %v2254 = vunpack.c.l.b16 %v438
        %v2255 = vunpack.c.l.b16 %v439
        %v2256 = vunpack.c.l.b16 %v440
        %v2257 = vunpack.c.l.b16 %v441
        %v2258 = vunpack.c.l.b16 %v442
        %v2259 = vunpack.c.l.b16 %v443
        %v2260 = vunpack.c.l.b16 %v444
        %v2261 = vunpack.c.l.b16 %v445
        %v2262 = vunpack.c.l.b16 %v446
        %v2263 = vunpack.c.l.b16 %v447
        %v2264 = vunpack.c.l.b16 %v448
        %v2265 = vunpack.c.l.b16 %v449
        %v2266 = vunpack.c.l.b16 %v450
        %v2267 = vunpack.c.l.b16 %v451
        %v2268 = vunpack.c.l.b16 %v452
        %v2269 = vunpack.c.l.b16 %v453
        %v2270 = vunpack.c.l.b16 %v454
        %v2271 = vunpack.c.l.b16 %v455
        %v2272 = vunpack.c.l.b16 %v456
        %v2273 = vunpack.c.l.b16 %v457
        %v2274 = vunpack.c.l.b16 %v458
        %v2275 = vunpack.c.l.b16 %v459
        %v2276 = vunpack.c.l.b16 %v460
        %v2277 = vunpack.c.l.b16 %v461
        %v2278 = vunpack.c.l.b16 %v462
        %v2279 = vunpack.c.l.b16 %v463
        %v2280 = vunpack.c.l.b16 %v464
        %v2281 = vunpack.c.l.b16 %v465
        %v2282 = vunpack.c.l.b16 %v466
        %v2283 = vunpack.c.l.b16 %v467
        %v2284 = vunpack.c.l.b16 %v468
        %v2285 = vunpack.c.l.b16 %v469
        %v2286 = vunpack.c.l.b16 %v470
        %v2287 = vunpack.c.l.b16 %v471
        %v2288 = vunpack.c.l.b16 %v472
        %v2289 = vunpack.c.l.b16 %v473
        %v2290 = vunpack.c.l.b16 %v474
        %v2291 = vunpack.c.l.b16 %v475
        %v2292 = vunpack.c.l.b16 %v476
        %v2293 = vunpack.c.l.b16 %v477
        %v2294 = vunpack.c.l.b16 %v478
        %v2295 = vunpack.c.l.b16 %v479
        %v2296 = vunpack.c.l.b16 %v480
        %v2297 = vunpack.c.l.b16 %v481
        %v2298 = vunpack.c.l.b16 %v482
        %v2299 = vunpack.c.l.b16 %v483
        %v2300 = vunpack.c.l.b16 %v484
        %v2301 = vunpack.c.l.b16 %v485
        %v2302 = vunpack.c.l.b16 %v486
        %v2303 = vunpack.c.l.b16 %v487
        %v2304 = vunpack.c.l.b16 %v488
        %v2305 = vunpack.c.l.b16 %v489
        %v2306 = vunpack.c.l.b16 %v490
        %v2307 = vunpack.c.l.b16 %v491
        %v2308 = vunpack.c.l.b16 %v492
        %v2309 = vunpack.c.l.b16 %v493
        %v2310 = vunpack.c.l.b16 %v494
        %v2311 = vunpack.c.l.b16 %v495
        %v2312 = vunpack.c.l.b16 %v496
        %v2313 = vunpack.c.l.b16 %v497
        %v2314 = vunpack.c.l.b16 %v498
        %v2315 = vunpack.c.l.b16 %v499
        %v2316 = vunpack.c.l.b16 %v500
        %v2317 = vunpack.c.l.b16 %v501
        %v2318 = vunpack.c.l.b16 %v502
        %v2319 = vunpack.c.l.b16 %v503
        %v2320 = vunpack.c.l.b16 %v504
        %v2321 = vunpack.c.l.b16 %v505
        %v2322 = vunpack.c.l.b16 %v506
        %v2323 = vunpack.c.l.b16 %v507
        %v2324 = vunpack.c.l.b16 %v508
        %v2325 = vunpack.c.l.b16 %v509
        %v2326 = vunpack.c.l.b16 %v510
        %v2327 = vunpack.c.l.b16 %v511
        %v2328 = vunpack.c.l.b16 %v512
        %v2329 = vunpack.c.l.b16 %v513
        %v2330 = vunpack.c.l.b16 %v514
        %v2331 = vunpack.c.l.b16 %v515
        %v2332 = vunpack.c.l.b16 %v516
        %v2333 = vunpack.c.l.b16 %v517
        %v2334 = vunpack.c.l.b16 %v518
        %v2335 = vunpack.c.l.b16 %v519
        %v2336 = vunpack.c.l.b16 %v520
        %v2337 = vunpack.c.l.b16 %v521
        %v2338 = vunpack.c.l.b16 %v522
        %v2339 = vunpack.c.l.b16 %v523
        %v2340 = vunpack.c.l.b16 %v524
        %v2341 = vunpack.c.l.b16 %v525
        %v2342 = vunpack.c.l.b16 %v526
        %v2343 = vunpack.c.l.b16 %v527
        %v2344 = vunpack.c.l.b16 %v528
        %v2345 = vunpack.c.l.b16 %v529
        %v2346 = vunpack.c.l.b16 %v530
        %v2347 = vunpack.c.l.b16 %v531
        %v2348 = vunpack.c.l.b16 %v532
        %v2349 = vunpack.c.l.b16 %v533
        %v2350 = vunpack.c.l.b16 %v534
        %v2351 = vunpack.c.l.b16 %v535
        %v2352 = vunpack.c.l.b16 %v536
        %v2353 = vunpack.c.l.b16 %v537
        %v2354 = vunpack.c.l.b16 %v538
        %v2355 = vunpack.c.l.b16 %v539
        %v2356 = vunpack.c.l.b16 %v540
        %v2357 = vunpack.c.l.b16 %v541
        %v2358 = vunpack.c.l.b16 %v542
        %v2359 = vunpack.c.l.b16 %v543
        %v2360 = vunpack.c.l.b16 %v544
        %v2361 = vunpack.c.l.b16 %v545
        %v2362 = vunpack.c.l.b16 %v546
        %v2363 = vunpack.c.l.b16 %v547
        %v2364 = vunpack.c.l.b16 %v548
        %v2365 = vunpack.c.l.b16 %v549
        %v2366 = vunpack.c.l.b16 %v550
        %v2367 = vunpack.c.l.b16 %v551
        %v2368 = vunpack.c.l.b16 %v552
        %v2369 = vunpack.c.l.b16 %v553
        %v2370 = vunpack.c.l.b16 %v554
        %v2371 = vunpack.c.l.b16 %v555
        %v2372 = vunpack.c.l.b16 %v556
        %v2373 = vunpack.c.l.b16 %v557
        %v2374 = vunpack.c.l.b16 %v558
        %v2375 = vunpack.c.l.b16 %v559
        %v2376 = vunpack.c.l.b16 %v560
        %v2377 = vunpack.c.l.b16 %v561
        %v2378 = vunpack.c.l.b16 %v562
        %v2379 = vunpack.c.l.b16 %v563
        %v2380 = vunpack.c.l.b16 %v564
        %v2381 = vunpack.c.l.b16 %v565
        %v2382 = vunpack.c.l.b16 %v566
        %v2383 = vunpack.c.l.b16 %v567
        %v2384 = vunpack.c.l.b16 %v568
        %v2385 = vunpack.c.l.b16 %v569
        %v2386 = vunpack.c.l.b16 %v570
        %v2387 = vunpack.c.l.b16 %v571
        %v2388 = vunpack.c.l.b16 %v572
        %v2389 = vunpack.c.l.b16 %v573
        %v2390 = vunpack.c.l.b16 %v574
        %v2391 = vunpack.c.l.b16 %v575
        %v2392 = vunpack.c.l.b16 %v576
        %v2393 = vunpack.c.l.b16 %v577
        %v2394 = vunpack.c.l.b16 %v578
        %v2395 = vunpack.c.l.b16 %v579
        %v2396 = vunpack.c.l.b16 %v580
        %v2397 = vunpack.c.l.b16 %v581
        %v2398 = vunpack.c.l.b16 %v582
        %v2399 = vunpack.c.l.b16 %v583
        %v2400 = vunpack.c.l.b16 %v584
        %v2401 = vunpack.c.l.b16 %v585
        %v2402 = vunpack.c.l.b16 %v586
        %v2403 = vunpack.c.l.b16 %v587
        %v2404 = vunpack.c.l.b16 %v588
        %v2405 = vunpack.c.l.b16 %v589
        %v2406 = vunpack.c.l.b16 %v590
        %v2407 = vunpack.c.l.b16 %v591
        %v2408 = vunpack.c.l.b16 %v592
        %v2409 = vunpack.c.l.b16 %v593
        %v2410 = vunpack.c.l.b16 %v594
        %v2411 = vunpack.c.l.b16 %v595
        %v2412 = vunpack.c.l.b16 %v596
        %v2413 = vunpack.c.l.b16 %v597
        %v2414 = vunpack.c.l.b16 %v598
        %v2415 = vunpack.c.l.b16 %v599
        %v2416 = vunpack.c.l.b16 %v600
        %v2417 = vunpack.c.l.b16 %v601
        %v2418 = vunpack.c.l.b16 %v602
        %v2419 = vunpack.c.l.b16 %v603
        %v2420 = vunpack.c.l.b16 %v604
        %v2421 = vunpack.c.l.b16 %v605
        %v2422 = vunpack.c.l.b16 %v606
        %v2423 = vunpack.c.l.b16 %v607
        %v2424 = vunpack.c.l.b16 %v608
        %v2425 = vunpack.c.l.b16 %v609
        %v2426 = vunpack.c.l.b16 %v610
        %v2427 = vunpack.c.l.b16 %v611
        %v2428 = vunpack.c.l.b16 %v612
        %v2429 = vunpack.c.l.b16 %v613
        %v2430 = vunpack.c.l.b16 %v614
        %v2431 = vunpack.c.l.b16 %v615
        %v2432 = vunpack.c.l.b16 %v616
        %v2433 = vunpack.c.l.b16 %v617
        %v2434 = vunpack.c.l.b16 %v618
        %v2435 = vunpack.c.l.b16 %v619
        %v2436 = vunpack.c.l.b16 %v620
        %v2437 = vunpack.c.l.b16 %v621
        %v2438 = vunpack.c.l.b16 %v622
        %v2439 = vunpack.c.l.b16 %v623
        %v2440 = vunpack.c.l.b16 %v624
        %v2441 = vunpack.c.l.b16 %v625
        %v2442 = vunpack.c.l.b16 %v626
        %v2443 = vunpack.c.l.b16 %v627
        %v2444 = vunpack.c.l.b16 %v628
        %v2445 = vunpack.c.l.b16 %v629
        %v2446 = vunpack.c.l.b16 %v630
        %v2447 = vunpack.c.l.b16 %v631
        %v2448 = vunpack.c.l.b16 %v632
        %v2449 = vunpack.c.l.b16 %v633
        %v2450 = vunpack.c.l.b16 %v634
        %v2451 = vunpack.c.l.b16 %v635
        %v2452 = vunpack.c.l.b16 %v636
        %v2453 = vunpack.c.l.b16 %v637
        %v2454 = vunpack.c.l.b16 %v638
        %v2455 = vunpack.c.l.b16 %v639
        %v2456 = vunpack.c.l.b16 %v640
        %v2457 = vunpack.c.l.b16 %v641
        %v2458 = vunpack.c.l.b16 %v642
        %v2459 = vunpack.c.l.b16 %v643
        %v2460 = vunpack.c.l.b16 %v644
        %v2461 = vunpack.c.l.b16 %v645
        %v2462 = vunpack.c.l.b16 %v646
        %v2463 = vunpack.c.l.b16 %v647
        %v2464 = vunpack.c.l.b16 %v648
        %v2465 = vunpack.c.l.b16 %v649
        %v2466 = vunpack.c.l.b16 %v650
        %v2467 = vunpack.c.l.b16 %v651
        %v2468 = vunpack.c.l.b16 %v652
        %v2469 = vunpack.c.l.b16 %v653
        %v2470 = vunpack.c.l.b16 %v654
        %v2471 = vunpack.c.l.b16 %v655
        %v2472 = vunpack.c.l.b16 %v656
        %v2473 = vunpack.c.l.b16 %v657
        %v2474 = vunpack.c.l.b16 %v658
        %v2475 = vunpack.c.l.b16 %v659
        %v2476 = vunpack.c.l.b16 %v660
        %v2477 = vunpack.c.l.b16 %v661
        %v2478 = vunpack.c.l.b16 %v662
        %v2479 = vunpack.c.l.b16 %v663
        %v2480 = vunpack.c.l.b16 %v664
        %v2481 = vunpack.c.l.b16 %v665
        %v2482 = vunpack.c.l.b16 %v666
        %v2483 = vunpack.c.l.b16 %v667
        %v2484 = vunpack.c.l.b16 %v668
        %v2485 = vunpack.c.l.b16 %v669
        %v2486 = vunpack.c.l.b16 %v670
        %v2487 = vunpack.c.l.b16 %v671
        %v2488 = vunpack.c.l.b16 %v672
        %v2489 = vunpack.c.l.b16 %v673
        %v2490 = vunpack.c.l.b16 %v674
        %v2491 = vunpack.c.l.b16 %v675
        %v2492 = vunpack.c.l.b16 %v676
        %v2493 = vunpack.c.l.b16 %v677
        %v2494 = vunpack.c.l.b16 %v678
        %v2495 = vunpack.c.l.b16 %v679
        %v2496 = vunpack.c.l.b16 %v680
        %v2497 = vunpack.c.l.b16 %v681
        %v2498 = vunpack.c.l.b16 %v682
        %v2499 = vunpack.c.l.b16 %v683
        %v2500 = vunpack.c.l.b16 %v684
        %v2501 = vunpack.c.l.b16 %v685
        %v2502 = vunpack.c.l.b16 %v686
        %v2503 = vunpack.c.l.b16 %v687
        %v2504 = vunpack.c.l.b16 %v688
        %v2505 = vunpack.c.l.b16 %v689
        %v2506 = vunpack.c.l.b16 %v690
        %v2507 = vunpack.c.l.b16 %v691
        %v2508 = vunpack.c.l.b16 %v692
        %v2509 = vunpack.c.l.b16 %v693
        %v2510 = vunpack.c.l.b16 %v694
        %v2511 = vunpack.c.l.b16 %v695
        %v2512 = vunpack.c.l.b16 %v696
        %v2513 = vunpack.c.l.b16 %v697
        %v2514 = vunpack.c.l.b16 %v698
        %v2515 = vunpack.c.l.b16 %v699
        %v2516 = vunpack.c.l.b16 %v700
        %v2517 = vunpack.c.l.b16 %v701
        %v2518 = vunpack.c.l.b16 %v702
        %v2519 = vunpack.c.l.b16 %v703
        %v2520 = vunpack.c.l.b16 %v704
        %v2521 = vunpack.c.l.b16 %v705
        %v2522 = vunpack.c.l.b16 %v706
        %v2523 = vunpack.c.l.b16 %v707
        %v2524 = vunpack.c.l.b16 %v708
        %v2525 = vunpack.c.l.b16 %v709
        %v2526 = vunpack.c.l.b16 %v710
        %v2527 = vunpack.c.l.b16 %v711
        %v2528 = vunpack.c.l.b16 %v712
        %v2529 = vunpack.c.l.b16 %v713
        %v2530 = vunpack.c.l.b16 %v714
        %v2531 = vunpack.c.l.b16 %v715
        %v2532 = vunpack.c.l.b16 %v716
        %v2533 = vunpack.c.l.b16 %v717
        %v2534 = vunpack.c.l.b16 %v718
        %v2535 = vunpack.c.l.b16 %v719
        %v2536 = vunpack.c.l.b16 %v720
        %v2537 = vunpack.c.l.b16 %v721
        %v2538 = vunpack.c.l.b16 %v722
        %v2539 = vunpack.c.l.b16 %v723
        %v2540 = vunpack.c.l.b16 %v724
        %v2541 = vunpack.c.l.b16 %v725
        %v2542 = vunpack.c.l.b16 %v726
        %v2543 = vunpack.c.l.b16 %v727
        %v2544 = vunpack.c.l.b16 %v728
        %v2545 = vunpack.c.l.b16 %v729
        %v2546 = vunpack.c.l.b16 %v730
        %v2547 = vunpack.c.l.b16 %v731
        %v2548 = vunpack.c.l.b16 %v732
        %v2549 = vunpack.c.l.b16 %v733
        %v2550 = vunpack.c.l.b16 %v734
        %v2551 = vunpack.c.l.b16 %v735
        %v2552 = vunpack.c.l.b16 %v736
        %v2553 = vunpack.c.l.b16 %v737
        %v2554 = vunpack.c.l.b16 %v738
        %v2555 = vunpack.c.l.b16 %v739
        %v2556 = vunpack.c.l.b16 %v740
        %v2557 = vunpack.c.l.b16 %v741
        %v2558 = vunpack.c.l.b16 %v742
        %v2559 = vunpack.c.l.b16 %v743
        %v2560 = vunpack.c.l.b16 %v744
        %v2561 = vunpack.c.l.b16 %v745
        %v2562 = vunpack.c.l.b16 %v746
        %v2563 = vunpack.c.l.b16 %v747
        %v2564 = vunpack.c.l.b16 %v748
        %v2565 = vunpack.c.l.b16 %v749
        %v2566 = vunpack.c.l.b16 %v750
        %v2567 = vunpack.c.l.b16 %v751
        %v2568 = vunpack.c.l.b16 %v752
        %v2569 = vunpack.c.l.b16 %v753
        %v2570 = vunpack.c.l.b16 %v754
        %v2571 = vunpack.c.l.b16 %v755
        %v2572 = vunpack.c.l.b16 %v756
        %v2573 = vunpack.c.l.b16 %v757
        %v2574 = vunpack.c.l.b16 %v758
        %v2575 = vunpack.c.l.b16 %v759
        %v2576 = vunpack.c.l.b16 %v760
        %v2577 = vunpack.c.l.b16 %v761
        %v2578 = vunpack.c.l.b16 %v762
        %v2579 = vunpack.c.l.b16 %v763
        %v2580 = vunpack.c.l.b16 %v764
        %v2581 = vunpack.c.l.b16 %v765
        %v2582 = vunpack.c.l.b16 %v766
        %v2583 = vunpack.c.l.b16 %v767
        %v2584 = vunpack.c.l.b16 %v768
        %v2585 = vunpack.c.l.b16 %v769
        %v2586 = vunpack.c.l.b16 %v770
        %v2587 = vunpack.c.l.b16 %v771
        %v2588 = vunpack.c.l.b16 %v772
        %v2589 = vunpack.c.l.b16 %v773
        %v2590 = vunpack.c.l.b16 %v774
        %v2591 = vunpack.c.l.b16 %v775
        %v2592 = vunpack.c.l.b16 %v776
        %v2593 = vunpack.c.l.b16 %v777
        %v2594 = vunpack.c.l.b16 %v778
        %v2595 = vunpack.c.l.b16 %v779
        %v2596 = vunpack.c.l.b16 %v780
        %v2597 = vunpack.c.l.b16 %v781
        %v2598 = vunpack.c.l.b16 %v782
        %v2599 = vunpack.c.l.b16 %v783
        %v2600 = vunpack.c.l.b16 %v784
        %v2601 = vunpack.c.l.b16 %v785
        %v2602 = vunpack.c.l.b16 %v786
        %v2603 = vunpack.c.l.b16 %v787
        %v2604 = vunpack.c.l.b16 %v788
        %v2605 = vunpack.c.l.b16 %v789
        %v2606 = vunpack.c.l.b16 %v790
        %v2607 = vunpack.c.l.b16 %v791
        %v2608 = vunpack.c.l.b16 %v792
        %v2609 = vunpack.c.l.b16 %v793
        %v2610 = vunpack.c.l.b16 %v794
        %v2611 = vunpack.c.l.b16 %v795
        %v2612 = vunpack.c.l.b16 %v796
        %v2613 = vunpack.c.l.b16 %v797
        %v2614 = vunpack.c.l.b16 %v798
        %v2615 = vunpack.c.l.b16 %v799
        %v2616 = vunpack.c.l.b16 %v800
        %v2617 = vunpack.c.l.b16 %v801
        %v2618 = vunpack.c.l.b16 %v802
        %v2619 = vunpack.c.l.b16 %v803
        %v2620 = vunpack.c.l.b16 %v804
        %v2621 = vunpack.c.l.b16 %v805
        %v2622 = vunpack.c.l.b16 %v806
        %v2623 = vunpack.c.l.b16 %v807
        %v2624 = vunpack.c.l.b16 %v808
        %v2625 = vunpack.c.l.b16 %v809
        %v2626 = vunpack.c.l.b16 %v810
        %v2627 = vunpack.c.l.b16 %v811
        %v2628 = vunpack.c.l.b16 %v812
        %v2629 = vunpack.c.l.b16 %v813
        %v2630 = vunpack.c.l.b16 %v814
        %v2631 = vunpack.c.l.b16 %v815
        %v2632 = vunpack.c.l.b16 %v816
        %v2633 = vunpack.c.l.b16 %v817
        %v2634 = vunpack.c.l.b16 %v818
        %v2635 = vunpack.c.l.b16 %v819
        %v2636 = vunpack.c.l.b16 %v820
        %v2637 = vunpack.c.l.b16 %v821
        %v2638 = vunpack.c.l.b16 %v822
        %v2639 = vunpack.c.l.b16 %v823
        %v2640 = vunpack.c.l.b16 %v824
        %v2641 = vunpack.c.l.b16 %v825
        %v2642 = vunpack.c.l.b16 %v826
        %v2643 = vunpack.c.l.b16 %v827
        %v2644 = vunpack.c.l.b16 %v828
        %v2645 = vunpack.c.l.b16 %v829
        %v2646 = vunpack.c.l.b16 %v830
        %v2647 = vunpack.c.l.b16 %v831
        %v2648 = vunpack.c.l.b16 %v832
        %v2649 = vunpack.c.l.b16 %v833
        %v2650 = vunpack.c.l.b16 %v834
        %v2651 = vunpack.c.l.b16 %v835
        %v2652 = vunpack.c.l.b16 %v836
        %v2653 = vunpack.c.l.b16 %v837
        %v2654 = vunpack.c.l.b16 %v838
        %v2655 = vunpack.c.l.b16 %v839
        %v2656 = vunpack.c.l.b16 %v840
        %v2657 = vunpack.c.l.b16 %v841
        %v2658 = vunpack.c.l.b16 %v842
        %v2659 = vunpack.c.l.b16 %v843
        %v2660 = vunpack.c.l.b16 %v844
        %v2661 = vunpack.c.l.b16 %v845
        %v2662 = vunpack.c.l.b16 %v846
        %v2663 = vunpack.c.l.b16 %v847
        %v2664 = vunpack.c.l.b16 %v848
        %v2665 = vunpack.c.l.b16 %v849
        %v2666 = vunpack.c.l.b16 %v850
        %v2667 = vunpack.c.l.b16 %v851
        %v2668 = vunpack.c.l.b16 %v852
        %v2669 = vunpack.c.l.b16 %v853
        %v2670 = vunpack.c.l.b16 %v854
        %v2671 = vunpack.c.l.b16 %v855
        %v2672 = vunpack.c.l.b16 %v856
        %v2673 = vunpack.c.l.b16 %v857
        %v2674 = vunpack.c.l.b16 %v858
        %v2675 = vunpack.c.l.b16 %v859
        %v2676 = vunpack.c.l.b16 %v860
        %v2677 = vunpack.c.l.b16 %v861
        %v2678 = vunpack.c.l.b16 %v862
        %v2679 = vunpack.c.l.b16 %v863
        %v2680 = vunpack.c.l.b16 %v864
        %v2681 = vunpack.c.l.b16 %v865
        %v2682 = vunpack.c.l.b16 %v866
        %v2683 = vunpack.c.l.b16 %v867
        %v2684 = vunpack.c.l.b16 %v868
        %v2685 = vunpack.c.l.b16 %v869
        %v2686 = vunpack.c.l.b16 %v870
        %v2687 = vunpack.c.l.b16 %v871
        %v2688 = vunpack.c.l.b16 %v872
        %v2689 = vunpack.c.l.b16 %v873
        %v2690 = vunpack.c.l.b16 %v874
        %v2691 = vunpack.c.l.b16 %v875
        %v2692 = vunpack.c.l.b16 %v876
        %v2693 = vunpack.c.l.b16 %v877
        %v2694 = vunpack.c.l.b16 %v878
        %v2695 = vunpack.c.l.b16 %v879
        %v2696 = vunpack.c.l.b16 %v880
        %v2697 = vunpack.c.l.b16 %v881
        %v2698 = vunpack.c.l.b16 %v882
        %v2699 = vunpack.c.l.b16 %v883
        %v2700 = vunpack.c.l.b16 %v884
        %v2701 = vunpack.c.l.b16 %v885
        %v2702 = vunpack.c.l.b16 %v886
        %v2703 = vunpack.c.l.b16 %v887
        %v2704 = vunpack.c.l.b16 %v888
        %v2705 = vunpack.c.l.b16 %v889
        %v2706 = vunpack.c.l.b16 %v890
        %v2707 = vunpack.c.l.b16 %v891
        %v2708 = vunpack.c.l.b16 %v892
        %v2709 = vunpack.c.l.b16 %v893
        %v2710 = vunpack.c.l.b16 %v894
        %v2711 = vunpack.c.l.b16 %v895
        %v2712 = vunpack.c.l.b16 %v896
        %v2713 = vunpack.c.l.b16 %v897
        %v2714 = vunpack.c.l.b16 %v898
        %v2715 = vunpack.c.l.b16 %v899
        %v2716 = vunpack.c.l.b16 %v900
        %v2717 = vunpack.c.l.b16 %v901
        %v2718 = vunpack.c.l.b16 %v902
        %v2719 = vunpack.c.l.b16 %v903
        %v2720 = vunpack.c.l.b16 %v904
        %v2721 = vunpack.c.l.b16 %v905
        %v2722 = vunpack.c.l.b16 %v906
        %v2723 = vunpack.c.l.b16 %v907
        %v2724 = vunpack.c.l.b16 %v908
        %v2725 = vunpack.c.l.b16 %v909
        %v2726 = vunpack.c.l.b16 %v910
        %v2727 = vunpack.c.l.b16 %v911
        %v2728 = vunpack.c.l.b16 %v912
        %v2729 = vunpack.c.l.b16 %v913
        %v2730 = vunpack.c.l.b16 %v914
        %v2731 = vunpack.c.l.b16 %v915
        %v2732 = vunpack.c.l.b16 %v916
        %v2733 = vunpack.c.l.b16 %v917
        %v2734 = vunpack.c.l.b16 %v918
        %v2735 = vunpack.c.l.b16 %v919
        %v2736 = vunpack.c.l.b16 %v920
        %v2737 = vunpack.c.l.b16 %v921
        %v2738 = vunpack.c.l.b16 %v922
        %v2739 = vunpack.c.l.b16 %v923
        %v2740 = vunpack.c.l.b16 %v924
        %v2741 = vunpack.c.l.b16 %v925
        %v2742 = vunpack.c.l.b16 %v926
        %v2743 = vunpack.c.l.b16 %v927
        %v2744 = vunpack.c.l.b16 %v928
        %v2745 = vunpack.c.l.b16 %v929
        %v2746 = vunpack.c.l.b16 %v930
        %v2747 = vunpack.c.l.b16 %v931
        %v2748 = vunpack.c.l.b16 %v932
        %v2749 = vunpack.c.l.b16 %v933
        %v2750 = vunpack.c.l.b16 %v934
        %v2751 = vunpack.c.l.b16 %v935
        %v2752 = vunpack.c.l.b16 %v936
        %v2753 = vunpack.c.l.b16 %v937
        %v2754 = vunpack.c.l.b16 %v938
        %v2755 = vunpack.c.l.b16 %v939
        %v2756 = vunpack.c.l.b16 %v940
        %v2757 = vunpack.c.l.b16 %v941
        %v2758 = vunpack.c.l.b16 %v942
        %v2759 = vunpack.c.l.b16 %v943
        %v2760 = vunpack.c.l.b16 %v944
        %v2761 = vunpack.c.l.b16 %v945
        %v2762 = vunpack.c.l.b16 %v946
        %v2763 = vunpack.c.l.b16 %v947
        %v2764 = vunpack.c.l.b16 %v948
        %v2765 = vunpack.c.l.b16 %v949
        %v2766 = vunpack.c.l.b16 %v950
        %v2767 = vunpack.c.l.b16 %v951
        %v2768 = vunpack.c.l.b16 %v952
        %v2769 = vunpack.c.l.b16 %v953
        %v2770 = vunpack.c.l.b16 %v954
        %v2771 = vunpack.c.l.b16 %v955
        %v2772 = vunpack.c.l.b16 %v956
        %v2773 = vunpack.c.l.b16 %v957
        %v2774 = vunpack.c.l.b16 %v958
        %v2775 = vunpack.c.l.b16 %v959
        %v2776 = vunpack.c.l.b16 %v960
        %v2777 = vunpack.c.l.b16 %v961
        %v2778 = vunpack.c.l.b16 %v962
        %v2779 = vunpack.c.l.b16 %v963
        %v2780 = vunpack.c.l.b16 %v964
        %v2781 = vunpack.c.l.b16 %v965
        %v2782 = vunpack.c.l.b16 %v966
        %v2783 = vunpack.c.l.b16 %v967
        %v2784 = vunpack.c.l.b16 %v968
        %v2785 = vunpack.c.l.b16 %v969
        %v2786 = vunpack.c.l.b16 %v970
        %v2787 = vunpack.c.l.b16 %v971
        %v2788 = vunpack.c.l.b16 %v972
        %v2789 = vunpack.c.l.b16 %v973
        %v2790 = vunpack.c.l.b16 %v974
        %v2791 = vunpack.c.l.b16 %v975
        %v2792 = vunpack.c.l.b16 %v976
        %v2793 = vunpack.c.l.b16 %v977
        %v2794 = vunpack.c.l.b16 %v978
        %v2795 = vunpack.c.l.b16 %v979
        %v2796 = vunpack.c.l.b16 %v980
        %v2797 = vunpack.c.l.b16 %v981
        %v2798 = vunpack.c.l.b16 %v982
        %v2799 = vunpack.c.l.b16 %v983
        %v2800 = vunpack.c.l.b16 %v984
        %v2801 = vunpack.c.l.b16 %v985
        %v2802 = vunpack.c.l.b16 %v986
        %v2803 = vunpack.c.l.b16 %v987
        %v2804 = vunpack.c.l.b16 %v988
        %v2805 = vunpack.c.l.b16 %v989
        %v2806 = vunpack.c.l.b16 %v990
        %v2807 = vunpack.c.l.b16 %v991
        %v2808 = vunpack.c.l.b16 %v992
        %v2809 = vunpack.c.l.b16 %v993
        %v2810 = vunpack.c.l.b16 %v994
        %v2811 = vunpack.c.l.b16 %v995
        %v2812 = vunpack.c.l.b16 %v996
        %v2813 = vunpack.c.l.b16 %v997
        %v2814 = vunpack.c.l.b16 %v998
        %v2815 = vunpack.c.l.b16 %v999
        %v2816 = vunpack.c.l.b16 %v1000
        %v2817 = vunpack.c.l.b16 %v1001
        %v2818 = vunpack.c.l.b16 %v1002
        %v2819 = vunpack.c.l.b16 %v1003
        %v2820 = vunpack.c.l.b16 %v1004
        %v2821 = vunpack.c.l.b16 %v1005
        %v2822 = vunpack.c.l.b16 %v1006
        %v2823 = vunpack.c.l.b16 %v1007
        %v2824 = vunpack.c.l.b16 %v1008
        %v2825 = vunpack.c.l.b16 %v1009
        %v2826 = vunpack.c.l.b16 %v1010
        %v2827 = vunpack.c.l.b16 %v1011
        %v2828 = vunpack.c.l.b16 %v1012
        %v2829 = vunpack.c.l.b16 %v1013
        %v2830 = vunpack.c.l.b16 %v1014
        %v2831 = vunpack.c.l.b16 %v1015
        %v2832 = vunpack.c.l.b16 %v1016
        %v2833 = vunpack.c.l.b16 %v1017
        %v2834 = vunpack.c.l.b16 %v1018
        %v2835 = vunpack.c.l.b16 %v1019
        %v2836 = vunpack.c.l.b16 %v1020
        %v2837 = vunpack.c.l.b16 %v1021
        %v2838 = vunpack.c.l.b16 %v1022
        %v2839 = vunpack.c.l.b16 %v1023
        %v2840 = vunpack.c.l.b16 %v1024
        %v2841 = vunpack.c.l.b16 %v1025
        %v2842 = vunpack.c.l.b16 %v1026
        %v2843 = vunpack.c.l.b16 %v1027
        %v2844 = vunpack.c.l.b16 %v1028
        %v2845 = vunpack.c.l.b16 %v1029
        %v2846 = vunpack.c.l.b16 %v1030
        %v2847 = vunpack.c.l.b16 %v1031
        %v2848 = vunpack.c.l.b16 %v1032
        %v2849 = vunpack.c.l.b16 %v1033
        %v2850 = vunpack.c.l.b16 %v1034
        %v2851 = vpack.c.b16 %v2116, %v2115
        %v2852 = vpack.c.b16 %v2118, %v2117
        %v2853 = vpack.c.b16 %v2120, %v2119
        %v2854 = vpack.c.b16 %v2122, %v2121
        %v2855 = vpack.c.b16 %v2124, %v2123
        %v2856 = vpack.c.b16 %v2126, %v2125
        %v2857 = vpack.c.b16 %v2128, %v2127
        %v2858 = vpack.c.b16 %v2130, %v2129
        %v2859 = vpack.c.b16 %v2132, %v2131
        %v2860 = vpack.c.b16 %v2134, %v2133
        %v2861 = vpack.c.b16 %v2136, %v2135
        %v2862 = vpack.c.b16 %v2138, %v2137
        %v2863 = vpack.c.b16 %v2140, %v2139
        %v2864 = vpack.c.b16 %v2142, %v2141
        %v2865 = vpack.c.b16 %v2144, %v2143
        %v2866 = vpack.c.b16 %v2146, %v2145
        %v2867 = vpack.c.b16 %v2148, %v2147
        %v2868 = vpack.c.b16 %v2150, %v2149
        %v2869 = vpack.c.b16 %v2152, %v2151
        %v2870 = vpack.c.b16 %v2154, %v2153
        %v2871 = vpack.c.b16 %v2156, %v2155
        %v2872 = vpack.c.b16 %v2158, %v2157
        %v2873 = vpack.c.b16 %v2160, %v2159
        %v2874 = vpack.c.b16 %v2162, %v2161
        %v2875 = vpack.c.b16 %v2164, %v2163
        %v2876 = vpack.c.b16 %v2166, %v2165
        %v2877 = vpack.c.b16 %v2168, %v2167
        %v2878 = vpack.c.b16 %v2170, %v2169
        %v2879 = vpack.c.b16 %v2172, %v2171
        %v2880 = vpack.c.b16 %v2174, %v2173
        %v2881 = vpack.c.b16 %v2176, %v2175
        %v2882 = vpack.c.b16 %v2178, %v2177
        %v2883 = vpack.c.b16 %v2180, %v2179
        %v2884 = vpack.c.b16 %v2182, %v2181
        %v2885 = vpack.c.b16 %v2184, %v2183
        %v2886 = vpack.c.b16 %v2186, %v2185
        %v2887 = vpack.c.b16 %v2188, %v2187
        %v2888 = vpack.c.b16 %v2190, %v2189
        %v2889 = vpack.c.b16 %v2192, %v2191
        %v2890 = vpack.c.b16 %v2194, %v2193
        %v2891 = vpack.c.b16 %v2196, %v2195
        %v2892 = vpack.c.b16 %v2198, %v2197
        %v2893 = vpack.c.b16 %v2200, %v2199
        %v2894 = vpack.c.b16 %v2202, %v2201
        %v2895 = vpack.c.b16 %v2204, %v2203
        %v2896 = vpack.c.b16 %v2206, %v2205
        %v2897 = vpack.c.b16 %v2208, %v2207
        %v2898 = vpack.c.b16 %v2210, %v2209
        %v2899 = vpack.c.b16 %v2212, %v2211
        %v2900 = vpack.c.b16 %v2214, %v2213
        %v2901 = vpack.c.b16 %v2216, %v2215
        %v2902 = vpack.c.b16 %v2218, %v2217
        %v2903 = vpack.c.b16 %v2220, %v2219
        %v2904 = vpack.c.b16 %v2222, %v2221
        %v2905 = vpack.c.b16 %v2224, %v2223
        %v2906 = vpack.c.b16 %v2226, %v2225
        %v2907 = vpack.c.b16 %v2228, %v2227
        %v2908 = vpack.c.b16 %v2230, %v2229
        %v2909 = vpack.c.b16 %v2232, %v2231
        %v2910 = vpack.c.b16 %v2234, %v2233
        %v2911 = vpack.c.b16 %v2236, %v2235
        %v2912 = vpack.c.b16 %v2238, %v2237
        %v2913 = vpack.c.b16 %v2240, %v2239
        %v2914 = vpack.c.b16 %v2242, %v2241
        %v2915 = vpack.c.b16 %v2244, %v2243
        %v2916 = vpack.c.b16 %v2246, %v2245
        %v2917 = vpack.c.b16 %v2248, %v2247
        %v2918 = vpack.c.b16 %v2250, %v2249
        %v2919 = vpack.c.b16 %v2252, %v2251
        %v2920 = vpack.c.b16 %v2254, %v2253
        %v2921 = vpack.c.b16 %v2256, %v2255
        %v2922 = vpack.c.b16 %v2258, %v2257
        %v2923 = vpack.c.b16 %v2260, %v2259
        %v2924 = vpack.c.b16 %v2262, %v2261
        %v2925 = vpack.c.b16 %v2264, %v2263
        %v2926 = vpack.c.b16 %v2266, %v2265
        %v2927 = vpack.c.b16 %v2268, %v2267
        %v2928 = vpack.c.b16 %v2270, %v2269
        %v2929 = vpack.c.b16 %v2272, %v2271
        %v2930 = vpack.c.b16 %v2274, %v2273
        %v2931 = vpack.c.b16 %v2276, %v2275
        %v2932 = vpack.c.b16 %v2278, %v2277
        %v2933 = vpack.c.b16 %v2280, %v2279
        %v2934 = vpack.c.b16 %v2282, %v2281
        %v2935 = vpack.c.b16 %v2284, %v2283
        %v2936 = vpack.c.b16 %v2286, %v2285
        %v2937 = vpack.c.b16 %v2288, %v2287
        %v2938 = vpack.c.b16 %v2290, %v2289
        %v2939 = vpack.c.b16 %v2292, %v2291
        %v2940 = vpack.c.b16 %v2294, %v2293
        %v2941 = vpack.c.b16 %v2296, %v2295
        %v2942 = vpack.c.b16 %v2298, %v2297
        %v2943 = vpack.c.b16 %v2300, %v2299
        %v2944 = vpack.c.b16 %v2302, %v2301
        %v2945 = vpack.c.b16 %v2304, %v2303
        %v2946 = vpack.c.b16 %v2306, %v2305
        %v2947 = vpack.c.b16 %v2308, %v2307
        %v2948 = vpack.c.b16 %v2310, %v2309
        %v2949 = vpack.c.b16 %v2312, %v2311
        %v2950 = vpack.c.b16 %v2314, %v2313
        %v2951 = vpack.c.b16 %v2316, %v2315
        %v2952 = vpack.c.b16 %v2318, %v2317
        %v2953 = vpack.c.b16 %v2320, %v2319
        %v2954 = vpack.c.b16 %v2322, %v2321
        %v2955 = vpack.c.b16 %v2324, %v2323
        %v2956 = vpack.c.b16 %v2326, %v2325
        %v2957 = vpack.c.b16 %v2328, %v2327
        %v2958 = vpack.c.b16 %v2330, %v2329
        %v2959 = vpack.c.b16 %v2332, %v2331
        %v2960 = vpack.c.b16 %v2334, %v2333
        %v2961 = vpack.c.b16 %v2336, %v2335
        %v2962 = vpack.c.b16 %v2338, %v2337
        %v2963 = vpack.c.b16 %v2340, %v2339
        %v2964 = vpack.c.b16 %v2342, %v2341
        %v2965 = vpack.c.b16 %v2344, %v2343
        %v2966 = vpack.c.b16 %v2346, %v2345
        %v2967 = vpack.c.b16 %v2348, %v2347
        %v2968 = vpack.c.b16 %v2350, %v2349
        %v2969 = vpack.c.b16 %v2352, %v2351
        %v2970 = vpack.c.b16 %v2354, %v2353
        %v2971 = vpack.c.b16 %v2356, %v2355
        %v2972 = vpack.c.b16 %v2358, %v2357
        %v2973 = vpack.c.b16 %v2360, %v2359
        %v2974 = vpack.c.b16 %v2362, %v2361
        %v2975 = vpack.c.b16 %v2364, %v2363
        %v2976 = vpack.c.b16 %v2366, %v2365
        %v2977 = vpack.c.b16 %v2368, %v2367
        %v2978 = vpack.c.b16 %v2370, %v2369
        %v2979 = vpack.c.b16 %v2372, %v2371
        %v2980 = vpack.c.b16 %v2374, %v2373
        %v2981 = vpack.c.b16 %v2376, %v2375
        %v2982 = vpack.c.b16 %v2378, %v2377
        %v2983 = vpack.c.b16 %v2380, %v2379
        %v2984 = vpack.c.b16 %v2382, %v2381
        %v2985 = vpack.c.b16 %v2384, %v2383
        %v2986 = vpack.c.b16 %v2386, %v2385
        %v2987 = vpack.c.b16 %v2388, %v2387
        %v2988 = vpack.c.b16 %v2390, %v2389
        %v2989 = vpack.c.b16 %v2392, %v2391
        %v2990 = vpack.c.b16 %v2394, %v2393
        %v2991 = vpack.c.b16 %v2396, %v2395
        %v2992 = vpack.c.b16 %v2398, %v2397
        %v2993 = vpack.c.b16 %v2400, %v2399
        %v2994 = vpack.c.b16 %v2402, %v2401
        %v2995 = vpack.c.b16 %v2404, %v2403
        %v2996 = vpack.c.b16 %v2406, %v2405
        %v2997 = vpack.c.b16 %v2408, %v2407
        %v2998 = vpack.c.b16 %v2410, %v2409
        %v2999 = vpack.c.b16 %v2412, %v2411
        %v3000 = vpack.c.b16 %v2414, %v2413
        %v3001 = vpack.c.b16 %v2416, %v2415
        %v3002 = vpack.c.b16 %v2418, %v2417
        %v3003 = vpack.c.b16 %v2420, %v2419
        %v3004 = vpack.c.b16 %v2422, %v2421
        %v3005 = vpack.c.b16 %v2424, %v2423
        %v3006 = vpack.c.b16 %v2426, %v2425
        %v3007 = vpack.c.b16 %v2428, %v2427
        %v3008 = vpack.c.b16 %v2430, %v2429
        %v3009 = vpack.c.b16 %v2432, %v2431
        %v3010 = vpack.c.b16 %v2434, %v2433
        %v3011 = vpack.c.b16 %v2436, %v2435
        %v3012 = vpack.c.b16 %v2438, %v2437
        %v3013 = vpack.c.b16 %v2440, %v2439
        %v3014 = vpack.c.b16 %v2442, %v2441
        %v3015 = vpack.c.b16 %v2444, %v2443
        %v3016 = vpack.c.b16 %v2446, %v2445
        %v3017 = vpack.c.b16 %v2448, %v2447
        %v3018 = vpack.c.b16 %v2450, %v2449
        %v3019 = vpack.c.b16 %v2452, %v2451
        %v3020 = vpack.c.b16 %v2454, %v2453
        %v3021 = vpack.c.b16 %v2456, %v2455
        %v3022 = vpack.c.b16 %v2458, %v2457
        %v3023 = vpack.c.b16 %v2460, %v2459
        %v3024 = vpack.c.b16 %v2462, %v2461
        %v3025 = vpack.c.b16 %v2464, %v2463
        %v3026 = vpack.c.b16 %v2466, %v2465
        %v3027 = vpack.c.b16 %v2468, %v2467
        %v3028 = vpack.c.b16 %v2470, %v2469
        %v3029 = vpack.c.b16 %v2472, %v2471
        %v3030 = vpack.c.b16 %v2474, %v2473
        %v3031 = vpack.c.b16 %v2476, %v2475
        %v3032 = vpack.c.b16 %v2478, %v2477
        %v3033 = vpack.c.b16 %v2480, %v2479
        %v3034 = vpack.c.b16 %v2482, %v2481
        %v3035 = vpack.c.b16 %v2484, %v2483
        %v3036 = vpack.c.b16 %v2486, %v2485
        %v3037 = vpack.c.b16 %v2488, %v2487
        %v3038 = vpack.c.b16 %v2490, %v2489
        %v3039 = vpack.c.b16 %v2492, %v2491
        %v3040 = vpack.c.b16 %v2494, %v2493
        %v3041 = vpack.c.b16 %v2496, %v2495
        %v3042 = vpack.c.b16 %v2498, %v2497
        %v3043 = vpack.c.b16 %v2500, %v2499
        %v3044 = vpack.c.b16 %v2502, %v2501
        %v3045 = vpack.c.b16 %v2504, %v2503
        %v3046 = vpack.c.b16 %v2506, %v2505
        %v3047 = vpack.c.b16 %v2508, %v2507
        %v3048 = vpack.c.b16 %v2510, %v2509
        %v3049 = vpack.c.b16 %v2512, %v2511
        %v3050 = vpack.c.b16 %v2514, %v2513
        %v3051 = vpack.c.b16 %v2516, %v2515
        %v3052 = vpack.c.b16 %v2518, %v2517
        %v3053 = vpack.c.b16 %v2520, %v2519
        %v3054 = vpack.c.b16 %v2522, %v2521
        %v3055 = vpack.c.b16 %v2524, %v2523
        %v3056 = vpack.c.b16 %v2526, %v2525
        %v3057 = vpack.c.b16 %v2528, %v2527
        %v3058 = vpack.c.b16 %v2530, %v2529
        %v3059 = vpack.c.b16 %v2532, %v2531
        %v3060 = vpack.c.b16 %v2534, %v2533
        %v3061 = vpack.c.b16 %v2536, %v2535
        %v3062 = vpack.c.b16 %v2538, %v2537
        %v3063 = vpack.c.b16 %v2540, %v2539
        %v3064 = vpack.c.b16 %v2542, %v2541
        %v3065 = vpack.c.b16 %v2544, %v2543
        %v3066 = vpack.c.b16 %v2546, %v2545
        %v3067 = vpack.c.b16 %v2548, %v2547
        %v3068 = vpack.c.b16 %v2550, %v2549
        %v3069 = vpack.c.b16 %v2552, %v2551
        %v3070 = vpack.c.b16 %v2554, %v2553
        %v3071 = vpack.c.b16 %v2556, %v2555
        %v3072 = vpack.c.b16 %v2558, %v2557
        %v3073 = vpack.c.b16 %v2560, %v2559
        %v3074 = vpack.c.b16 %v2562, %v2561
        %v3075 = vpack.c.b16 %v2564, %v2563
        %v3076 = vpack.c.b16 %v2566, %v2565
        %v3077 = vpack.c.b16 %v2568, %v2567
        %v3078 = vpack.c.b16 %v2570, %v2569
        %v3079 = vpack.c.b16 %v2572, %v2571
        %v3080 = vpack.c.b16 %v2574, %v2573
        %v3081 = vpack.c.b16 %v2576, %v2575
        %v3082 = vpack.c.b16 %v2578, %v2577
        %v3083 = vpack.c.b16 %v2580, %v2579
        %v3084 = vpack.c.b16 %v2582, %v2581
        %v3085 = vpack.c.b16 %v2584, %v2583
        %v3086 = vpack.c.b16 %v2586, %v2585
        %v3087 = vpack.c.b16 %v2588, %v2587
        %v3088 = vpack.c.b16 %v2590, %v2589
        %v3089 = vpack.c.b16 %v2592, %v2591
        %v3090 = vpack.c.b16 %v2594, %v2593
        %v3091 = vpack.c.b16 %v2596, %v2595
        %v3092 = vpack.c.b16 %v2598, %v2597
        %v3093 = vpack.c.b16 %v2600, %v2599
        %v3094 = vpack.c.b16 %v2602, %v2601
        %v3095 = vpack.c.b16 %v2604, %v2603
        %v3096 = vpack.c.b16 %v2606, %v2605
        %v3097 = vpack.c.b16 %v2608, %v2607
        %v3098 = vpack.c.b16 %v2610, %v2609
        %v3099 = vpack.c.b16 %v2612, %v2611
        %v3100 = vpack.c.b16 %v2614, %v2613
        %v3101 = vpack.c.b16 %v2616, %v2615
        %v3102 = vpack.c.b16 %v2618, %v2617
        %v3103 = vpack.c.b16 %v2620, %v2619
        %v3104 = vpack.c.b16 %v2622, %v2621
        %v3105 = vpack.c.b16 %v2624, %v2623
        %v3106 = vpack.c.b16 %v2626, %v2625
        %v3107 = vpack.c.b16 %v2628, %v2627
        %v3108 = vpack.c.b16 %v2630, %v2629
        %v3109 = vpack.c.b16 %v2632, %v2631
        %v3110 = vpack.c.b16 %v2634, %v2633
        %v3111 = vpack.c.b16 %v2636, %v2635
        %v3112 = vpack.c.b16 %v2638, %v2637
        %v3113 = vpack.c.b16 %v2640, %v2639
        %v3114 = vpack.c.b16 %v2642, %v2641
        %v3115 = vpack.c.b16 %v2644, %v2643
        %v3116 = vpack.c.b16 %v2646, %v2645
        %v3117 = vpack.c.b16 %v2648, %v2647
        %v3118 = vpack.c.b16 %v2650, %v2649
        %v3119 = vpack.c.b16 %v2652, %v2651
        %v3120 = vpack.c.b16 %v2654, %v2653
        %v3121 = vpack.c.b16 %v2656, %v2655
        %v3122 = vpack.c.b16 %v2658, %v2657
        %v3123 = vpack.c.b16 %v2660, %v2659
        %v3124 = vpack.c.b16 %v2662, %v2661
        %v3125 = vpack.c.b16 %v2664, %v2663
        %v3126 = vpack.c.b16 %v2666, %v2665
        %v3127 = vpack.c.b16 %v2668, %v2667
        %v3128 = vpack.c.b16 %v2670, %v2669
        %v3129 = vpack.c.b16 %v2672, %v2671
        %v3130 = vpack.c.b16 %v2674, %v2673
        %v3131 = vpack.c.b16 %v2676, %v2675
        %v3132 = vpack.c.b16 %v2678, %v2677
        %v3133 = vpack.c.b16 %v2680, %v2679
        %v3134 = vpack.c.b16 %v2682, %v2681
        %v3135 = vpack.c.b16 %v2684, %v2683
        %v3136 = vpack.c.b16 %v2686, %v2685
        %v3137 = vpack.c.b16 %v2688, %v2687
        %v3138 = vpack.c.b16 %v2690, %v2689
        %v3139 = vpack.c.b16 %v2692, %v2691
        %v3140 = vpack.c.b16 %v2694, %v2693
        %v3141 = vpack.c.b16 %v2696, %v2695
        %v3142 = vpack.c.b16 %v2698, %v2697
        %v3143 = vpack.c.b16 %v2700, %v2699
        %v3144 = vpack.c.b16 %v2702, %v2701
        %v3145 = vpack.c.b16 %v2704, %v2703
        %v3146 = vpack.c.b16 %v2706, %v2705
        %v3147 = vpack.c.b16 %v2708, %v2707
        %v3148 = vpack.c.b16 %v2710, %v2709
        %v3149 = vpack.c.b16 %v2712, %v2711
        %v3150 = vpack.c.b16 %v2714, %v2713
        %v3151 = vpack.c.b16 %v2716, %v2715
        %v3152 = vpack.c.b16 %v2718, %v2717
        %v3153 = vpack.c.b16 %v2720, %v2719
        %v3154 = vpack.c.b16 %v2722, %v2721
        %v3155 = vpack.c.b16 %v2724, %v2723
        %v3156 = vpack.c.b16 %v2726, %v2725
        %v3157 = vpack.c.b16 %v2728, %v2727
        %v3158 = vpack.c.b16 %v2730, %v2729
        %v3159 = vpack.c.b16 %v2732, %v2731
        %v3160 = vpack.c.b16 %v2734, %v2733
        %v3161 = vpack.c.b16 %v2736, %v2735
        %v3162 = vpack.c.b16 %v2738, %v2737
        %v3163 = vpack.c.b16 %v2740, %v2739
        %v3164 = vpack.c.b16 %v2742, %v2741
        %v3165 = vpack.c.b16 %v2744, %v2743
        %v3166 = vpack.c.b16 %v2746, %v2745
        %v3167 = vpack.c.b16 %v2748, %v2747
        %v3168 = vpack.c.b16 %v2750, %v2749
        %v3169 = vpack.c.b16 %v2752, %v2751
        %v3170 = vpack.c.b16 %v2754, %v2753
        %v3171 = vpack.c.b16 %v2756, %v2755
        %v3172 = vpack.c.b16 %v2758, %v2757
        %v3173 = vpack.c.b16 %v2760, %v2759
        %v3174 = vpack.c.b16 %v2762, %v2761
        %v3175 = vpack.c.b16 %v2764, %v2763
        %v3176 = vpack.c.b16 %v2766, %v2765
        %v3177 = vpack.c.b16 %v2768, %v2767
        %v3178 = vpack.c.b16 %v2770, %v2769
        %v3179 = vpack.c.b16 %v2772, %v2771
        %v3180 = vpack.c.b16 %v2774, %v2773
        %v3181 = vpack.c.b16 %v2776, %v2775
        %v3182 = vpack.c.b16 %v2778, %v2777
        %v3183 = vpack.c.b16 %v2780, %v2779
        %v3184 = vpack.c.b16 %v2782, %v2781
        %v3185 = vpack.c.b16 %v2784, %v2783
        %v3186 = vpack.c.b16 %v2786, %v2785
        %v3187 = vpack.c.b16 %v2788, %v2787
        %v3188 = vpack.c.b16 %v2790, %v2789
        %v3189 = vpack.c.b16 %v2792, %v2791
        %v3190 = vpack.c.b16 %v2794, %v2793
        %v3191 = vpack.c.b16 %v2796, %v2795
        %v3192 = vpack.c.b16 %v2798, %v2797
        %v3193 = vpack.c.b16 %v2800, %v2799
        %v3194 = vpack.c.b16 %v2802, %v2801
        %v3195 = vpack.c.b16 %v2804, %v2803
        %v3196 = vpack.c.b16 %v2806, %v2805
        %v3197 = vpack.c.b16 %v2808, %v2807
        %v3198 = vpack.c.b16 %v2810, %v2809
        %v3199 = vpack.c.b16 %v2812, %v2811
        %v3200 = vpack.c.b16 %v2814, %v2813
        %v3201 = vpack.c.b16 %v2816, %v2815
        %v3202 = vpack.c.b16 %v2818, %v2817
        %v3203 = vpack.c.b16 %v2820, %v2819
        %v3204 = vpack.c.b16 %v2822, %v2821
        %v3205 = vpack.c.b16 %v2824, %v2823
        %v3206 = vpack.c.b16 %v2826, %v2825
        %v3207 = vpack.c.b16 %v2828, %v2827
        %v3208 = vpack.c.b16 %v2830, %v2829
        %v3209 = vpack.c.b16 %v2832, %v2831
        %v3210 = vpack.c.b16 %v2834, %v2833
        %v3211 = vpack.c.b16 %v2836, %v2835
        %v3212 = vpack.c.b16 %v2838, %v2837
        %v3213 = vpack.c.b16 %v2840, %v2839
        %v3214 = vpack.c.b16 %v2842, %v2841
        %v3215 = vpack.c.b16 %v2844, %v2843
        %v3216 = vpack.c.b16 %v2846, %v2845
        %v3217 = vpack.c.b16 %v2848, %v2847
        %v3218 = vpack.c.b16 %v2850, %v2849
        %3587 = vmatprep.subr.bf16.mxu0 0
        %3588 = vmatpush1.bf16.msra.mxu0 %v2858
        %3589 = vmatprep.subr.bf16.mxu0 0
        %3590 = vmatpush1.bf16.msra.mxu0 %v2857
        %3591 = vmatprep.subr.bf16.mxu0 0
        %3592 = vmatpush1.bf16.msra.mxu0 %v2856
        %3593 = vmatprep.subr.bf16.mxu0 0
        %3594 = vmatpush1.bf16.msra.mxu0 %v2855
        %3595 = vmatprep.subr.bf16.mxu0 0
        %3596 = vmatpush1.bf16.msra.mxu0 %v2854
        %3597 = vmatprep.subr.bf16.mxu0 0
        %3598 = vmatpush1.bf16.msra.mxu0 %v2853
        %3599 = vmatprep.subr.bf16.mxu0 0
        %3600 = vmatpush1.bf16.msra.mxu0 %v2852
        %3601 = vmatprep.subr.bf16.mxu0 0
        %3602 = vmatpush1.bf16.msra.mxu0 %v2851
        %3603 = vmatprep.subr.bf16.mxu0 0
        %3604 = vmatpush2.bf16.msra.mxu0 %v2866
        %3605 = vmatprep.subr.bf16.mxu0 0
        %3606 = vmatpush2.bf16.msra.mxu0 %v2865
        %3607 = vmatprep.subr.bf16.mxu0 0
        %3608 = vmatpush2.bf16.msra.mxu0 %v2864
        %3609 = vmatprep.subr.bf16.mxu0 0
        %3610 = vmatpush2.bf16.msra.mxu0 %v2863
        %3611 = vmatprep.subr.bf16.mxu0 0
        %3612 = vmatpush2.bf16.msra.mxu0 %v2862
        %3613 = vmatprep.subr.bf16.mxu0 0
        %3614 = vmatpush2.bf16.msra.mxu0 %v2861
        %3615 = vmatprep.subr.bf16.mxu0 0
        %3616 = vmatpush2.bf16.msra.mxu0 %v2860
        %3617 = vmatprep.subr.bf16.mxu0 0
        %3618 = vmatpush2.bf16.msra.mxu0 %v2859
        %3619 = vmatprep.mubr.bf16.mxu0 %v1078
        %3620 = vmatmul.mubr.bf16.gmra.mxu0 %v1064
        %v3621 = vpop.f32.mrf.mxu0
        %v3622 = vadd.f32 0.0, %v3621
        %v3623 = vpop.f32.mrf.mxu0
        %v3624 = vpop.f32.mrf.mxu0
        %v3625 = vpop.f32.mrf.mxu0
        %3626 = vdwg.mxu0
        %3627 = vmatprep.subr.bf16.mxu0 0
        %3628 = vmatpush1.bf16.msra.mxu0 %v2874
        %3629 = vmatprep.subr.bf16.mxu0 0
        %3630 = vmatpush1.bf16.msra.mxu0 %v2873
        %3631 = vmatprep.subr.bf16.mxu0 0
        %3632 = vmatpush1.bf16.msra.mxu0 %v2872
        %3633 = vmatprep.subr.bf16.mxu0 0
        %3634 = vmatpush1.bf16.msra.mxu0 %v2871
        %3635 = vmatprep.subr.bf16.mxu0 0
        %3636 = vmatpush1.bf16.msra.mxu0 %v2870
        %3637 = vmatprep.subr.bf16.mxu0 0
        %3638 = vmatpush1.bf16.msra.mxu0 %v2869
        %3639 = vmatprep.subr.bf16.mxu0 0
        %3640 = vmatpush1.bf16.msra.mxu0 %v2868
        %3641 = vmatprep.subr.bf16.mxu0 0
        %3642 = vmatpush1.bf16.msra.mxu0 %v2867
        %3643 = vmatprep.subr.bf16.mxu0 0
        %3644 = vmatpush2.bf16.msra.mxu0 %v2882
        %3645 = vmatprep.subr.bf16.mxu0 0
        %3646 = vmatpush2.bf16.msra.mxu0 %v2881
        %3647 = vmatprep.subr.bf16.mxu0 0
        %3648 = vmatpush2.bf16.msra.mxu0 %v2880
        %3649 = vmatprep.subr.bf16.mxu0 0
        %3650 = vmatpush2.bf16.msra.mxu0 %v2879
        %3651 = vmatprep.subr.bf16.mxu0 0
        %3652 = vmatpush2.bf16.msra.mxu0 %v2878
        %3653 = vmatprep.subr.bf16.mxu0 0
        %3654 = vmatpush2.bf16.msra.mxu0 %v2877
        %3655 = vmatprep.subr.bf16.mxu0 0
        %3656 = vmatpush2.bf16.msra.mxu0 %v2876
        %3657 = vmatprep.subr.bf16.mxu0 0
        %3658 = vmatpush2.bf16.msra.mxu0 %v2875
        %3659 = vmatprep.mubr.bf16.mxu0 %v1088
        %3660 = vmatmul.mubr.bf16.gmra.mxu0 %v1086
        %v3661 = vpop.f32.mrf.mxu0
        %v3662 = vadd.f32 %v3622, %v3661
        %v3663 = vpop.f32.mrf.mxu0
        %v3664 = vpop.f32.mrf.mxu0
        %v3665 = vpop.f32.mrf.mxu0
        %3666 = vdwg.mxu0
        %3667 = vmatprep.subr.bf16.mxu0 0
        %3668 = vmatpush1.bf16.msra.mxu0 %v2890
        %3669 = vmatprep.subr.bf16.mxu0 0
        %3670 = vmatpush1.bf16.msra.mxu0 %v2889
        %3671 = vmatprep.subr.bf16.mxu0 0
        %3672 = vmatpush1.bf16.msra.mxu0 %v2888
        %3673 = vmatprep.subr.bf16.mxu0 0
        %3674 = vmatpush1.bf16.msra.mxu0 %v2887
        %3675 = vmatprep.subr.bf16.mxu0 0
        %3676 = vmatpush1.bf16.msra.mxu0 %v2886
        %3677 = vmatprep.subr.bf16.mxu0 0
        %3678 = vmatpush1.bf16.msra.mxu0 %v2885
        %3679 = vmatprep.subr.bf16.mxu0 0
        %3680 = vmatpush1.bf16.msra.mxu0 %v2884
        %3681 = vmatprep.subr.bf16.mxu0 0
        %3682 = vmatpush1.bf16.msra.mxu0 %v2883
        %3683 = vmatprep.subr.bf16.mxu0 0
        %3684 = vmatpush2.bf16.msra.mxu0 %v2898
        %3685 = vmatprep.subr.bf16.mxu0 0
        %3686 = vmatpush2.bf16.msra.mxu0 %v2897
        %3687 = vmatprep.subr.bf16.mxu0 0
        %3688 = vmatpush2.bf16.msra.mxu0 %v2896
        %3689 = vmatprep.subr.bf16.mxu0 0
        %3690 = vmatpush2.bf16.msra.mxu0 %v2895
        %3691 = vmatprep.subr.bf16.mxu0 0
        %3692 = vmatpush2.bf16.msra.mxu0 %v2894
        %3693 = vmatprep.subr.bf16.mxu0 0
        %3694 = vmatpush2.bf16.msra.mxu0 %v2893
        %3695 = vmatprep.subr.bf16.mxu0 0
        %3696 = vmatpush2.bf16.msra.mxu0 %v2892
        %3697 = vmatprep.subr.bf16.mxu0 0
        %3698 = vmatpush2.bf16.msra.mxu0 %v2891
        %3699 = vmatprep.mubr.bf16.mxu0 %v1085
        %3700 = vmatmul.mubr.bf16.gmra.mxu0 %v1071
        %v3701 = vpop.f32.mrf.mxu0
        %v3702 = vadd.f32 %v3662, %v3701
        %v3703 = vpop.f32.mrf.mxu0
        %v3704 = vpop.f32.mrf.mxu0
        %v3705 = vpop.f32.mrf.mxu0
        %3706 = vdwg.mxu0
        %3707 = vmatprep.subr.bf16.mxu0 0
        %3708 = vmatpush1.bf16.msra.mxu0 %v2906
        %3709 = vmatprep.subr.bf16.mxu0 0
        %3710 = vmatpush1.bf16.msra.mxu0 %v2905
        %3711 = vmatprep.subr.bf16.mxu0 0
        %3712 = vmatpush1.bf16.msra.mxu0 %v2904
        %3713 = vmatprep.subr.bf16.mxu0 0
        %3714 = vmatpush1.bf16.msra.mxu0 %v2903
        %3715 = vmatprep.subr.bf16.mxu0 0
        %3716 = vmatpush1.bf16.msra.mxu0 %v2902
        %3717 = vmatprep.subr.bf16.mxu0 0
        %3718 = vmatpush1.bf16.msra.mxu0 %v2901
        %3719 = vmatprep.subr.bf16.mxu0 0
        %3720 = vmatpush1.bf16.msra.mxu0 %v2900
        %3721 = vmatprep.subr.bf16.mxu0 0
        %3722 = vmatpush1.bf16.msra.mxu0 %v2899
        %3723 = vmatprep.subr.bf16.mxu0 0
        %3724 = vmatpush2.bf16.msra.mxu0 %v2914
        %3725 = vmatprep.subr.bf16.mxu0 0
        %3726 = vmatpush2.bf16.msra.mxu0 %v2913
        %3727 = vmatprep.subr.bf16.mxu0 0
        %3728 = vmatpush2.bf16.msra.mxu0 %v2912
        %3729 = vmatprep.subr.bf16.mxu0 0
        %3730 = vmatpush2.bf16.msra.mxu0 %v2911
        %3731 = vmatprep.subr.bf16.mxu0 0
        %3732 = vmatpush2.bf16.msra.mxu0 %v2910
        %3733 = vmatprep.subr.bf16.mxu0 0
        %3734 = vmatpush2.bf16.msra.mxu0 %v2909
        %3735 = vmatprep.subr.bf16.mxu0 0
        %3736 = vmatpush2.bf16.msra.mxu0 %v2908
        %3737 = vmatprep.subr.bf16.mxu0 0
        %3738 = vmatpush2.bf16.msra.mxu0 %v2907
        %3739 = vmatprep.mubr.bf16.mxu0 %v1089
        %3740 = vmatmul.mubr.bf16.gmra.mxu0 %v1087
        %v3741 = vpop.f32.mrf.mxu0
        %v3742 = vadd.f32 %v3702, %v3741
        %v3743 = vpop.f32.mrf.mxu0
        %v3744 = vpop.f32.mrf.mxu0
        %v3745 = vpop.f32.mrf.mxu0
        %3746 = vdwg.mxu0
        %3747 = vmatprep.subr.bf16.mxu0 0
        %3748 = vmatpush1.bf16.msra.mxu0 %v2922
        %3749 = vmatprep.subr.bf16.mxu0 0
        %3750 = vmatpush1.bf16.msra.mxu0 %v2921
        %3751 = vmatprep.subr.bf16.mxu0 0
        %3752 = vmatpush1.bf16.msra.mxu0 %v2920
        %3753 = vmatprep.subr.bf16.mxu0 0
        %3754 = vmatpush1.bf16.msra.mxu0 %v2919
        %3755 = vmatprep.subr.bf16.mxu0 0
        %3756 = vmatpush1.bf16.msra.mxu0 %v2918
        %3757 = vmatprep.subr.bf16.mxu0 0
        %3758 = vmatpush1.bf16.msra.mxu0 %v2917
        %3759 = vmatprep.subr.bf16.mxu0 0
        %3760 = vmatpush1.bf16.msra.mxu0 %v2916
        %3761 = vmatprep.subr.bf16.mxu0 0
        %3762 = vmatpush1.bf16.msra.mxu0 %v2915
        %3763 = vmatprep.subr.bf16.mxu0 0
        %3764 = vmatpush2.bf16.msra.mxu0 %v2930
        %3765 = vmatprep.subr.bf16.mxu0 0
        %3766 = vmatpush2.bf16.msra.mxu0 %v2929
        %3767 = vmatprep.subr.bf16.mxu0 0
        %3768 = vmatpush2.bf16.msra.mxu0 %v2928
        %3769 = vmatprep.subr.bf16.mxu0 0
        %3770 = vmatpush2.bf16.msra.mxu0 %v2927
        %3771 = vmatprep.subr.bf16.mxu0 0
        %3772 = vmatpush2.bf16.msra.mxu0 %v2926
        %3773 = vmatprep.subr.bf16.mxu0 0
        %3774 = vmatpush2.bf16.msra.mxu0 %v2925
        %3775 = vmatprep.subr.bf16.mxu0 0
        %3776 = vmatpush2.bf16.msra.mxu0 %v2924
        %3777 = vmatprep.subr.bf16.mxu0 0
        %3778 = vmatpush2.bf16.msra.mxu0 %v2923
        %3779 = vmatprep.mubr.bf16.mxu0 %v1127
        %3780 = vmatmul.mubr.bf16.gmra.mxu0 %v1113
        %v3781 = vpop.f32.mrf.mxu0
        %v3782 = vadd.f32 %v3742, %v3781
        %v3783 = vpop.f32.mrf.mxu0
        %v3784 = vpop.f32.mrf.mxu0
        %v3785 = vpop.f32.mrf.mxu0
        %3786 = vdwg.mxu0
        %3787 = vmatprep.subr.bf16.mxu0 0
        %3788 = vmatpush1.bf16.msra.mxu0 %v2938
        %3789 = vmatprep.subr.bf16.mxu0 0
        %3790 = vmatpush1.bf16.msra.mxu0 %v2937
        %3791 = vmatprep.subr.bf16.mxu0 0
        %3792 = vmatpush1.bf16.msra.mxu0 %v2936
        %3793 = vmatprep.subr.bf16.mxu0 0
        %3794 = vmatpush1.bf16.msra.mxu0 %v2935
        %3795 = vmatprep.subr.bf16.mxu0 0
        %3796 = vmatpush1.bf16.msra.mxu0 %v2934
        %3797 = vmatprep.subr.bf16.mxu0 0
        %3798 = vmatpush1.bf16.msra.mxu0 %v2933
        %3799 = vmatprep.subr.bf16.mxu0 0
        %3800 = vmatpush1.bf16.msra.mxu0 %v2932
        %3801 = vmatprep.subr.bf16.mxu0 0
        %3802 = vmatpush1.bf16.msra.mxu0 %v2931
        %3803 = vmatprep.subr.bf16.mxu0 0
        %3804 = vmatpush2.bf16.msra.mxu0 %v2946
        %3805 = vmatprep.subr.bf16.mxu0 0
        %3806 = vmatpush2.bf16.msra.mxu0 %v2945
        %3807 = vmatprep.subr.bf16.mxu0 0
        %3808 = vmatpush2.bf16.msra.mxu0 %v2944
        %3809 = vmatprep.subr.bf16.mxu0 0
        %3810 = vmatpush2.bf16.msra.mxu0 %v2943
        %3811 = vmatprep.subr.bf16.mxu0 0
        %3812 = vmatpush2.bf16.msra.mxu0 %v2942
        %3813 = vmatprep.subr.bf16.mxu0 0
        %3814 = vmatpush2.bf16.msra.mxu0 %v2941
        %3815 = vmatprep.subr.bf16.mxu0 0
        %3816 = vmatpush2.bf16.msra.mxu0 %v2940
        %3817 = vmatprep.subr.bf16.mxu0 0
        %3818 = vmatpush2.bf16.msra.mxu0 %v2939
        %3819 = vmatprep.mubr.bf16.mxu0 %v1137
        %3820 = vmatmul.mubr.bf16.gmra.mxu0 %v1135
        %v3821 = vpop.f32.mrf.mxu0
        %v3822 = vadd.f32 %v3782, %v3821
        %v3823 = vpop.f32.mrf.mxu0
        %v3824 = vpop.f32.mrf.mxu0
        %v3825 = vpop.f32.mrf.mxu0
        %3826 = vdwg.mxu0
        %3827 = vmatprep.subr.bf16.mxu0 0
        %3828 = vmatpush1.bf16.msra.mxu0 %v2954
        %3829 = vmatprep.subr.bf16.mxu0 0
        %3830 = vmatpush1.bf16.msra.mxu0 %v2953
        %3831 = vmatprep.subr.bf16.mxu0 0
        %3832 = vmatpush1.bf16.msra.mxu0 %v2952
        %3833 = vmatprep.subr.bf16.mxu0 0
        %3834 = vmatpush1.bf16.msra.mxu0 %v2951
        %3835 = vmatprep.subr.bf16.mxu0 0
        %3836 = vmatpush1.bf16.msra.mxu0 %v2950
        %3837 = vmatprep.subr.bf16.mxu0 0
        %3838 = vmatpush1.bf16.msra.mxu0 %v2949
        %3839 = vmatprep.subr.bf16.mxu0 0
        %3840 = vmatpush1.bf16.msra.mxu0 %v2948
        %3841 = vmatprep.subr.bf16.mxu0 0
        %3842 = vmatpush1.bf16.msra.mxu0 %v2947
        %3843 = vmatprep.subr.bf16.mxu0 0
        %3844 = vmatpush2.bf16.msra.mxu0 %v2962
        %3845 = vmatprep.subr.bf16.mxu0 0
        %3846 = vmatpush2.bf16.msra.mxu0 %v2961
        %3847 = vmatprep.subr.bf16.mxu0 0
        %3848 = vmatpush2.bf16.msra.mxu0 %v2960
        %3849 = vmatprep.subr.bf16.mxu0 0
        %3850 = vmatpush2.bf16.msra.mxu0 %v2959
        %3851 = vmatprep.subr.bf16.mxu0 0
        %3852 = vmatpush2.bf16.msra.mxu0 %v2958
        %3853 = vmatprep.subr.bf16.mxu0 0
        %3854 = vmatpush2.bf16.msra.mxu0 %v2957
        %3855 = vmatprep.subr.bf16.mxu0 0
        %3856 = vmatpush2.bf16.msra.mxu0 %v2956
        %3857 = vmatprep.subr.bf16.mxu0 0
        %3858 = vmatpush2.bf16.msra.mxu0 %v2955
        %3859 = vmatprep.mubr.bf16.mxu0 %v1134
        %3860 = vmatmul.mubr.bf16.gmra.mxu0 %v1120
        %v3861 = vpop.f32.mrf.mxu0
        %v3862 = vadd.f32 %v3822, %v3861
        %v3863 = vpop.f32.mrf.mxu0
        %v3864 = vpop.f32.mrf.mxu0
        %v3865 = vpop.f32.mrf.mxu0
        %3866 = vdwg.mxu0
        %3867 = vmatprep.subr.bf16.mxu0 0
        %3868 = vmatpush1.bf16.msra.mxu0 %v2970
        %3869 = vmatprep.subr.bf16.mxu0 0
        %3870 = vmatpush1.bf16.msra.mxu0 %v2969
        %3871 = vmatprep.subr.bf16.mxu0 0
        %3872 = vmatpush1.bf16.msra.mxu0 %v2968
        %3873 = vmatprep.subr.bf16.mxu0 0
        %3874 = vmatpush1.bf16.msra.mxu0 %v2967
        %3875 = vmatprep.subr.bf16.mxu0 0
        %3876 = vmatpush1.bf16.msra.mxu0 %v2966
        %3877 = vmatprep.subr.bf16.mxu0 0
        %3878 = vmatpush1.bf16.msra.mxu0 %v2965
        %3879 = vmatprep.subr.bf16.mxu0 0
        %3880 = vmatpush1.bf16.msra.mxu0 %v2964
        %3881 = vmatprep.subr.bf16.mxu0 0
        %3882 = vmatpush1.bf16.msra.mxu0 %v2963
        %3883 = vmatprep.subr.bf16.mxu0 0
        %3884 = vmatpush2.bf16.msra.mxu0 %v2978
        %3885 = vmatprep.subr.bf16.mxu0 0
        %3886 = vmatpush2.bf16.msra.mxu0 %v2977
        %3887 = vmatprep.subr.bf16.mxu0 0
        %3888 = vmatpush2.bf16.msra.mxu0 %v2976
        %3889 = vmatprep.subr.bf16.mxu0 0
        %3890 = vmatpush2.bf16.msra.mxu0 %v2975
        %3891 = vmatprep.subr.bf16.mxu0 0
        %3892 = vmatpush2.bf16.msra.mxu0 %v2974
        %3893 = vmatprep.subr.bf16.mxu0 0
        %3894 = vmatpush2.bf16.msra.mxu0 %v2973
        %3895 = vmatprep.subr.bf16.mxu0 0
        %3896 = vmatpush2.bf16.msra.mxu0 %v2972
        %3897 = vmatprep.subr.bf16.mxu0 0
        %3898 = vmatpush2.bf16.msra.mxu0 %v2971
        %3899 = vmatprep.mubr.bf16.mxu0 %v1138
        %3900 = vmatmul.mubr.bf16.gmra.mxu0 %v1136
        %v3901 = vpop.f32.mrf.mxu0
        %v3902 = vadd.f32 %v3862, %v3901
        %v3903 = vpop.f32.mrf.mxu0
        %v3904 = vpop.f32.mrf.mxu0
        %v3905 = vpop.f32.mrf.mxu0
        %3906 = vdwg.mxu0
        %3907 = vmatprep.subr.bf16.mxu0 0
        %3908 = vmatpush1.bf16.msra.mxu0 %v2986
        %3909 = vmatprep.subr.bf16.mxu0 0
        %3910 = vmatpush1.bf16.msra.mxu0 %v2985
        %3911 = vmatprep.subr.bf16.mxu0 0
        %3912 = vmatpush1.bf16.msra.mxu0 %v2984
        %3913 = vmatprep.subr.bf16.mxu0 0
        %3914 = vmatpush1.bf16.msra.mxu0 %v2983
        %3915 = vmatprep.subr.bf16.mxu0 0
        %3916 = vmatpush1.bf16.msra.mxu0 %v2982
        %3917 = vmatprep.subr.bf16.mxu0 0
        %3918 = vmatpush1.bf16.msra.mxu0 %v2981
        %3919 = vmatprep.subr.bf16.mxu0 0
        %3920 = vmatpush1.bf16.msra.mxu0 %v2980
        %3921 = vmatprep.subr.bf16.mxu0 0
        %3922 = vmatpush1.bf16.msra.mxu0 %v2979
        %3923 = vmatprep.subr.bf16.mxu0 0
        %3924 = vmatpush2.bf16.msra.mxu0 %v2994
        %3925 = vmatprep.subr.bf16.mxu0 0
        %3926 = vmatpush2.bf16.msra.mxu0 %v2993
        %3927 = vmatprep.subr.bf16.mxu0 0
        %3928 = vmatpush2.bf16.msra.mxu0 %v2992
        %3929 = vmatprep.subr.bf16.mxu0 0
        %3930 = vmatpush2.bf16.msra.mxu0 %v2991
        %3931 = vmatprep.subr.bf16.mxu0 0
        %3932 = vmatpush2.bf16.msra.mxu0 %v2990
        %3933 = vmatprep.subr.bf16.mxu0 0
        %3934 = vmatpush2.bf16.msra.mxu0 %v2989
        %3935 = vmatprep.subr.bf16.mxu0 0
        %3936 = vmatpush2.bf16.msra.mxu0 %v2988
        %3937 = vmatprep.subr.bf16.mxu0 0
        %3938 = vmatpush2.bf16.msra.mxu0 %v2987
        %3939 = vmatprep.mubr.bf16.mxu0 %v1176
        %3940 = vmatmul.mubr.bf16.gmra.mxu0 %v1162
        %v3941 = vpop.f32.mrf.mxu0
        %v3942 = vadd.f32 %v3902, %v3941
        %v3943 = vpop.f32.mrf.mxu0
        %v3944 = vpop.f32.mrf.mxu0
        %v3945 = vpop.f32.mrf.mxu0
        %3946 = vdwg.mxu0
        %3947 = vmatprep.subr.bf16.mxu0 0
        %3948 = vmatpush1.bf16.msra.mxu0 %v3002
        %3949 = vmatprep.subr.bf16.mxu0 0
        %3950 = vmatpush1.bf16.msra.mxu0 %v3001
        %3951 = vmatprep.subr.bf16.mxu0 0
        %3952 = vmatpush1.bf16.msra.mxu0 %v3000
        %3953 = vmatprep.subr.bf16.mxu0 0
        %3954 = vmatpush1.bf16.msra.mxu0 %v2999
        %3955 = vmatprep.subr.bf16.mxu0 0
        %3956 = vmatpush1.bf16.msra.mxu0 %v2998
        %3957 = vmatprep.subr.bf16.mxu0 0
        %3958 = vmatpush1.bf16.msra.mxu0 %v2997
        %3959 = vmatprep.subr.bf16.mxu0 0
        %3960 = vmatpush1.bf16.msra.mxu0 %v2996
        %3961 = vmatprep.subr.bf16.mxu0 0
        %3962 = vmatpush1.bf16.msra.mxu0 %v2995
        %3963 = vmatprep.subr.bf16.mxu0 0
        %3964 = vmatpush2.bf16.msra.mxu0 %v3010
        %3965 = vmatprep.subr.bf16.mxu0 0
        %3966 = vmatpush2.bf16.msra.mxu0 %v3009
        %3967 = vmatprep.subr.bf16.mxu0 0
        %3968 = vmatpush2.bf16.msra.mxu0 %v3008
        %3969 = vmatprep.subr.bf16.mxu0 0
        %3970 = vmatpush2.bf16.msra.mxu0 %v3007
        %3971 = vmatprep.subr.bf16.mxu0 0
        %3972 = vmatpush2.bf16.msra.mxu0 %v3006
        %3973 = vmatprep.subr.bf16.mxu0 0
        %3974 = vmatpush2.bf16.msra.mxu0 %v3005
        %3975 = vmatprep.subr.bf16.mxu0 0
        %3976 = vmatpush2.bf16.msra.mxu0 %v3004
        %3977 = vmatprep.subr.bf16.mxu0 0
        %3978 = vmatpush2.bf16.msra.mxu0 %v3003
        %3979 = vmatprep.mubr.bf16.mxu0 %v1186
        %3980 = vmatmul.mubr.bf16.gmra.mxu0 %v1184
        %v3981 = vpop.f32.mrf.mxu0
        %v3982 = vadd.f32 %v3942, %v3981
        %v3983 = vpop.f32.mrf.mxu0
        %v3984 = vpop.f32.mrf.mxu0
        %v3985 = vpop.f32.mrf.mxu0
        %3986 = vdwg.mxu0
        %3987 = vmatprep.subr.bf16.mxu0 0
        %3988 = vmatpush1.bf16.msra.mxu0 %v3018
        %3989 = vmatprep.subr.bf16.mxu0 0
        %3990 = vmatpush1.bf16.msra.mxu0 %v3017
        %3991 = vmatprep.subr.bf16.mxu0 0
        %3992 = vmatpush1.bf16.msra.mxu0 %v3016
        %3993 = vmatprep.subr.bf16.mxu0 0
        %3994 = vmatpush1.bf16.msra.mxu0 %v3015
        %3995 = vmatprep.subr.bf16.mxu0 0
        %3996 = vmatpush1.bf16.msra.mxu0 %v3014
        %3997 = vmatprep.subr.bf16.mxu0 0
        %3998 = vmatpush1.bf16.msra.mxu0 %v3013
        %3999 = vmatprep.subr.bf16.mxu0 0
        %4000 = vmatpush1.bf16.msra.mxu0 %v3012
        %4001 = vmatprep.subr.bf16.mxu0 0
        %4002 = vmatpush1.bf16.msra.mxu0 %v3011
        %4003 = vmatprep.subr.bf16.mxu0 0
        %4004 = vmatpush2.bf16.msra.mxu0 %v3026
        %4005 = vmatprep.subr.bf16.mxu0 0
        %4006 = vmatpush2.bf16.msra.mxu0 %v3025
        %4007 = vmatprep.subr.bf16.mxu0 0
        %4008 = vmatpush2.bf16.msra.mxu0 %v3024
        %4009 = vmatprep.subr.bf16.mxu0 0
        %4010 = vmatpush2.bf16.msra.mxu0 %v3023
        %4011 = vmatprep.subr.bf16.mxu0 0
        %4012 = vmatpush2.bf16.msra.mxu0 %v3022
        %4013 = vmatprep.subr.bf16.mxu0 0
        %4014 = vmatpush2.bf16.msra.mxu0 %v3021
        %4015 = vmatprep.subr.bf16.mxu0 0
        %4016 = vmatpush2.bf16.msra.mxu0 %v3020
        %4017 = vmatprep.subr.bf16.mxu0 0
        %4018 = vmatpush2.bf16.msra.mxu0 %v3019
        %4019 = vmatprep.mubr.bf16.mxu0 %v1183
        %4020 = vmatmul.mubr.bf16.gmra.mxu0 %v1169
        %v4021 = vpop.f32.mrf.mxu0
        %v4022 = vadd.f32 %v3982, %v4021
        %v4023 = vpop.f32.mrf.mxu0
        %v4024 = vpop.f32.mrf.mxu0
        %v4025 = vpop.f32.mrf.mxu0
        %4026 = vdwg.mxu0
        %4027 = vmatprep.subr.bf16.mxu0 0
        %4028 = vmatpush1.bf16.msra.mxu0 %v3034
        %4029 = vmatprep.subr.bf16.mxu0 0
        %4030 = vmatpush1.bf16.msra.mxu0 %v3033
        %4031 = vmatprep.subr.bf16.mxu0 0
        %4032 = vmatpush1.bf16.msra.mxu0 %v3032
        %4033 = vmatprep.subr.bf16.mxu0 0
        %4034 = vmatpush1.bf16.msra.mxu0 %v3031
        %4035 = vmatprep.subr.bf16.mxu0 0
        %4036 = vmatpush1.bf16.msra.mxu0 %v3030
        %4037 = vmatprep.subr.bf16.mxu0 0
        %4038 = vmatpush1.bf16.msra.mxu0 %v3029
        %4039 = vmatprep.subr.bf16.mxu0 0
        %4040 = vmatpush1.bf16.msra.mxu0 %v3028
        %4041 = vmatprep.subr.bf16.mxu0 0
        %4042 = vmatpush1.bf16.msra.mxu0 %v3027
        %4043 = vmatprep.subr.bf16.mxu0 0
        %4044 = vmatpush2.bf16.msra.mxu0 %v3042
        %4045 = vmatprep.subr.bf16.mxu0 0
        %4046 = vmatpush2.bf16.msra.mxu0 %v3041
        %4047 = vmatprep.subr.bf16.mxu0 0
        %4048 = vmatpush2.bf16.msra.mxu0 %v3040
        %4049 = vmatprep.subr.bf16.mxu0 0
        %4050 = vmatpush2.bf16.msra.mxu0 %v3039
        %4051 = vmatprep.subr.bf16.mxu0 0
        %4052 = vmatpush2.bf16.msra.mxu0 %v3038
        %4053 = vmatprep.subr.bf16.mxu0 0
        %4054 = vmatpush2.bf16.msra.mxu0 %v3037
        %4055 = vmatprep.subr.bf16.mxu0 0
        %4056 = vmatpush2.bf16.msra.mxu0 %v3036
        %4057 = vmatprep.subr.bf16.mxu0 0
        %4058 = vmatpush2.bf16.msra.mxu0 %v3035
        %4059 = vmatprep.mubr.bf16.mxu0 %v1187
        %4060 = vmatmul.mubr.bf16.gmra.mxu0 %v1185
        %v4061 = vpop.f32.mrf.mxu0
        %v4062 = vadd.f32 %v4022, %v4061
        %v4063 = vpop.f32.mrf.mxu0
        %v4064 = vpop.f32.mrf.mxu0
        %v4065 = vpop.f32.mrf.mxu0
        %4066 = vdwg.mxu0
        %4067 = vmatprep.subr.bf16.mxu0 0
        %4068 = vmatpush1.bf16.msra.mxu0 %v3050
        %4069 = vmatprep.subr.bf16.mxu0 0
        %4070 = vmatpush1.bf16.msra.mxu0 %v3049
        %4071 = vmatprep.subr.bf16.mxu0 0
        %4072 = vmatpush1.bf16.msra.mxu0 %v3048
        %4073 = vmatprep.subr.bf16.mxu0 0
        %4074 = vmatpush1.bf16.msra.mxu0 %v3047
        %4075 = vmatprep.subr.bf16.mxu0 0
        %4076 = vmatpush1.bf16.msra.mxu0 %v3046
        %4077 = vmatprep.subr.bf16.mxu0 0
        %4078 = vmatpush1.bf16.msra.mxu0 %v3045
        %4079 = vmatprep.subr.bf16.mxu0 0
        %4080 = vmatpush1.bf16.msra.mxu0 %v3044
        %4081 = vmatprep.subr.bf16.mxu0 0
        %4082 = vmatpush1.bf16.msra.mxu0 %v3043
        %4083 = vmatprep.subr.bf16.mxu0 0
        %4084 = vmatpush2.bf16.msra.mxu0 %v3058
        %4085 = vmatprep.subr.bf16.mxu0 0
        %4086 = vmatpush2.bf16.msra.mxu0 %v3057
        %4087 = vmatprep.subr.bf16.mxu0 0
        %4088 = vmatpush2.bf16.msra.mxu0 %v3056
        %4089 = vmatprep.subr.bf16.mxu0 0
        %4090 = vmatpush2.bf16.msra.mxu0 %v3055
        %4091 = vmatprep.subr.bf16.mxu0 0
        %4092 = vmatpush2.bf16.msra.mxu0 %v3054
        %4093 = vmatprep.subr.bf16.mxu0 0
        %4094 = vmatpush2.bf16.msra.mxu0 %v3053
        %4095 = vmatprep.subr.bf16.mxu0 0
        %4096 = vmatpush2.bf16.msra.mxu0 %v3052
        %4097 = vmatprep.subr.bf16.mxu0 0
        %4098 = vmatpush2.bf16.msra.mxu0 %v3051
        %4099 = vmatprep.mubr.bf16.mxu0 %v1225
        %4100 = vmatmul.mubr.bf16.gmra.mxu0 %v1211
        %v4101 = vpop.f32.mrf.mxu0
        %v4102 = vadd.f32 %v4062, %v4101
        %v4103 = vpop.f32.mrf.mxu0
        %v4104 = vpop.f32.mrf.mxu0
        %v4105 = vpop.f32.mrf.mxu0
        %4106 = vdwg.mxu0
        %4107 = vmatprep.subr.bf16.mxu0 0
        %4108 = vmatpush1.bf16.msra.mxu0 %v3066
        %4109 = vmatprep.subr.bf16.mxu0 0
        %4110 = vmatpush1.bf16.msra.mxu0 %v3065
        %4111 = vmatprep.subr.bf16.mxu0 0
        %4112 = vmatpush1.bf16.msra.mxu0 %v3064
        %4113 = vmatprep.subr.bf16.mxu0 0
        %4114 = vmatpush1.bf16.msra.mxu0 %v3063
        %4115 = vmatprep.subr.bf16.mxu0 0
        %4116 = vmatpush1.bf16.msra.mxu0 %v3062
        %4117 = vmatprep.subr.bf16.mxu0 0
        %4118 = vmatpush1.bf16.msra.mxu0 %v3061
        %4119 = vmatprep.subr.bf16.mxu0 0
        %4120 = vmatpush1.bf16.msra.mxu0 %v3060
        %4121 = vmatprep.subr.bf16.mxu0 0
        %4122 = vmatpush1.bf16.msra.mxu0 %v3059
        %4123 = vmatprep.subr.bf16.mxu0 0
        %4124 = vmatpush2.bf16.msra.mxu0 %v3074
        %4125 = vmatprep.subr.bf16.mxu0 0
        %4126 = vmatpush2.bf16.msra.mxu0 %v3073
        %4127 = vmatprep.subr.bf16.mxu0 0
        %4128 = vmatpush2.bf16.msra.mxu0 %v3072
        %4129 = vmatprep.subr.bf16.mxu0 0
        %4130 = vmatpush2.bf16.msra.mxu0 %v3071
        %4131 = vmatprep.subr.bf16.mxu0 0
        %4132 = vmatpush2.bf16.msra.mxu0 %v3070
        %4133 = vmatprep.subr.bf16.mxu0 0
        %4134 = vmatpush2.bf16.msra.mxu0 %v3069
        %4135 = vmatprep.subr.bf16.mxu0 0
        %4136 = vmatpush2.bf16.msra.mxu0 %v3068
        %4137 = vmatprep.subr.bf16.mxu0 0
        %4138 = vmatpush2.bf16.msra.mxu0 %v3067
        %4139 = vmatprep.mubr.bf16.mxu0 %v1235
        %4140 = vmatmul.mubr.bf16.gmra.mxu0 %v1233
        %v4141 = vpop.f32.mrf.mxu0
        %v4142 = vadd.f32 %v4102, %v4141
        %v4143 = vpop.f32.mrf.mxu0
        %v4144 = vpop.f32.mrf.mxu0
        %v4145 = vpop.f32.mrf.mxu0
        %4146 = vdwg.mxu0
        %4147 = vmatprep.subr.bf16.mxu0 0
        %4148 = vmatpush1.bf16.msra.mxu0 %v3082
        %4149 = vmatprep.subr.bf16.mxu0 0
        %4150 = vmatpush1.bf16.msra.mxu0 %v3081
        %4151 = vmatprep.subr.bf16.mxu0 0
        %4152 = vmatpush1.bf16.msra.mxu0 %v3080
        %4153 = vmatprep.subr.bf16.mxu0 0
        %4154 = vmatpush1.bf16.msra.mxu0 %v3079
        %4155 = vmatprep.subr.bf16.mxu0 0
        %4156 = vmatpush1.bf16.msra.mxu0 %v3078
        %4157 = vmatprep.subr.bf16.mxu0 0
        %4158 = vmatpush1.bf16.msra.mxu0 %v3077
        %4159 = vmatprep.subr.bf16.mxu0 0
        %4160 = vmatpush1.bf16.msra.mxu0 %v3076
        %4161 = vmatprep.subr.bf16.mxu0 0
        %4162 = vmatpush1.bf16.msra.mxu0 %v3075
        %4163 = vmatprep.subr.bf16.mxu0 0
        %4164 = vmatpush2.bf16.msra.mxu0 %v3090
        %4165 = vmatprep.subr.bf16.mxu0 0
        %4166 = vmatpush2.bf16.msra.mxu0 %v3089
        %4167 = vmatprep.subr.bf16.mxu0 0
        %4168 = vmatpush2.bf16.msra.mxu0 %v3088
        %4169 = vmatprep.subr.bf16.mxu0 0
        %4170 = vmatpush2.bf16.msra.mxu0 %v3087
        %4171 = vmatprep.subr.bf16.mxu0 0
        %4172 = vmatpush2.bf16.msra.mxu0 %v3086
        %4173 = vmatprep.subr.bf16.mxu0 0
        %4174 = vmatpush2.bf16.msra.mxu0 %v3085
        %4175 = vmatprep.subr.bf16.mxu0 0
        %4176 = vmatpush2.bf16.msra.mxu0 %v3084
        %4177 = vmatprep.subr.bf16.mxu0 0
        %4178 = vmatpush2.bf16.msra.mxu0 %v3083
        %4179 = vmatprep.mubr.bf16.mxu0 %v1232
        %4180 = vmatmul.mubr.bf16.gmra.mxu0 %v1218
        %v4181 = vpop.f32.mrf.mxu0
        %v4182 = vadd.f32 %v4142, %v4181
        %v4183 = vpop.f32.mrf.mxu0
        %v4184 = vpop.f32.mrf.mxu0
        %v4185 = vpop.f32.mrf.mxu0
        %4186 = vdwg.mxu0
        %4187 = vmatprep.subr.bf16.mxu0 0
        %4188 = vmatpush1.bf16.msra.mxu0 %v3098
        %4189 = vmatprep.subr.bf16.mxu0 0
        %4190 = vmatpush1.bf16.msra.mxu0 %v3097
        %4191 = vmatprep.subr.bf16.mxu0 0
        %4192 = vmatpush1.bf16.msra.mxu0 %v3096
        %4193 = vmatprep.subr.bf16.mxu0 0
        %4194 = vmatpush1.bf16.msra.mxu0 %v3095
        %4195 = vmatprep.subr.bf16.mxu0 0
        %4196 = vmatpush1.bf16.msra.mxu0 %v3094
        %4197 = vmatprep.subr.bf16.mxu0 0
        %4198 = vmatpush1.bf16.msra.mxu0 %v3093
        %4199 = vmatprep.subr.bf16.mxu0 0
        %4200 = vmatpush1.bf16.msra.mxu0 %v3092
        %4201 = vmatprep.subr.bf16.mxu0 0
        %4202 = vmatpush1.bf16.msra.mxu0 %v3091
        %4203 = vmatprep.subr.bf16.mxu0 0
        %4204 = vmatpush2.bf16.msra.mxu0 %v3106
        %4205 = vmatprep.subr.bf16.mxu0 0
        %4206 = vmatpush2.bf16.msra.mxu0 %v3105
        %4207 = vmatprep.subr.bf16.mxu0 0
        %4208 = vmatpush2.bf16.msra.mxu0 %v3104
        %4209 = vmatprep.subr.bf16.mxu0 0
        %4210 = vmatpush2.bf16.msra.mxu0 %v3103
        %4211 = vmatprep.subr.bf16.mxu0 0
        %4212 = vmatpush2.bf16.msra.mxu0 %v3102
        %4213 = vmatprep.subr.bf16.mxu0 0
        %4214 = vmatpush2.bf16.msra.mxu0 %v3101
        %4215 = vmatprep.subr.bf16.mxu0 0
        %4216 = vmatpush2.bf16.msra.mxu0 %v3100
        %4217 = vmatprep.subr.bf16.mxu0 0
        %4218 = vmatpush2.bf16.msra.mxu0 %v3099
        %4219 = vmatprep.mubr.bf16.mxu0 %v1236
        %4220 = vmatmul.mubr.bf16.gmra.mxu0 %v1234
        %v4221 = vpop.f32.mrf.mxu0
        %v4222 = vadd.f32 %v4182, %v4221
        %v4223 = vpop.f32.mrf.mxu0
        %v4224 = vpop.f32.mrf.mxu0
        %v4225 = vpop.f32.mrf.mxu0
        %4226 = vdwg.mxu0
        %4227 = vmatprep.subr.bf16.mxu0 0
        %4228 = vmatpush1.bf16.msra.mxu0 %v3114
        %4229 = vmatprep.subr.bf16.mxu0 0
        %4230 = vmatpush1.bf16.msra.mxu0 %v3113
        %4231 = vmatprep.subr.bf16.mxu0 0
        %4232 = vmatpush1.bf16.msra.mxu0 %v3112
        %4233 = vmatprep.subr.bf16.mxu0 0
        %4234 = vmatpush1.bf16.msra.mxu0 %v3111
        %4235 = vmatprep.subr.bf16.mxu0 0
        %4236 = vmatpush1.bf16.msra.mxu0 %v3110
        %4237 = vmatprep.subr.bf16.mxu0 0
        %4238 = vmatpush1.bf16.msra.mxu0 %v3109
        %4239 = vmatprep.subr.bf16.mxu0 0
        %4240 = vmatpush1.bf16.msra.mxu0 %v3108
        %4241 = vmatprep.subr.bf16.mxu0 0
        %4242 = vmatpush1.bf16.msra.mxu0 %v3107
        %4243 = vmatprep.subr.bf16.mxu0 0
        %4244 = vmatpush2.bf16.msra.mxu0 %v3122
        %4245 = vmatprep.subr.bf16.mxu0 0
        %4246 = vmatpush2.bf16.msra.mxu0 %v3121
        %4247 = vmatprep.subr.bf16.mxu0 0
        %4248 = vmatpush2.bf16.msra.mxu0 %v3120
        %4249 = vmatprep.subr.bf16.mxu0 0
        %4250 = vmatpush2.bf16.msra.mxu0 %v3119
        %4251 = vmatprep.subr.bf16.mxu0 0
        %4252 = vmatpush2.bf16.msra.mxu0 %v3118
        %4253 = vmatprep.subr.bf16.mxu0 0
        %4254 = vmatpush2.bf16.msra.mxu0 %v3117
        %4255 = vmatprep.subr.bf16.mxu0 0
        %4256 = vmatpush2.bf16.msra.mxu0 %v3116
        %4257 = vmatprep.subr.bf16.mxu0 0
        %4258 = vmatpush2.bf16.msra.mxu0 %v3115
        %4259 = vmatprep.mubr.bf16.mxu0 %v1274
        %4260 = vmatmul.mubr.bf16.gmra.mxu0 %v1260
        %v4261 = vpop.f32.mrf.mxu0
        %v4262 = vadd.f32 %v4222, %v4261
        %v4263 = vpop.f32.mrf.mxu0
        %v4264 = vpop.f32.mrf.mxu0
        %v4265 = vpop.f32.mrf.mxu0
        %4266 = vdwg.mxu0
        %4267 = vmatprep.subr.bf16.mxu0 0
        %4268 = vmatpush1.bf16.msra.mxu0 %v3130
        %4269 = vmatprep.subr.bf16.mxu0 0
        %4270 = vmatpush1.bf16.msra.mxu0 %v3129
        %4271 = vmatprep.subr.bf16.mxu0 0
        %4272 = vmatpush1.bf16.msra.mxu0 %v3128
        %4273 = vmatprep.subr.bf16.mxu0 0
        %4274 = vmatpush1.bf16.msra.mxu0 %v3127
        %4275 = vmatprep.subr.bf16.mxu0 0
        %4276 = vmatpush1.bf16.msra.mxu0 %v3126
        %4277 = vmatprep.subr.bf16.mxu0 0
        %4278 = vmatpush1.bf16.msra.mxu0 %v3125
        %4279 = vmatprep.subr.bf16.mxu0 0
        %4280 = vmatpush1.bf16.msra.mxu0 %v3124
        %4281 = vmatprep.subr.bf16.mxu0 0
        %4282 = vmatpush1.bf16.msra.mxu0 %v3123
        %4283 = vmatprep.subr.bf16.mxu0 0
        %4284 = vmatpush2.bf16.msra.mxu0 %v3138
        %4285 = vmatprep.subr.bf16.mxu0 0
        %4286 = vmatpush2.bf16.msra.mxu0 %v3137
        %4287 = vmatprep.subr.bf16.mxu0 0
        %4288 = vmatpush2.bf16.msra.mxu0 %v3136
        %4289 = vmatprep.subr.bf16.mxu0 0
        %4290 = vmatpush2.bf16.msra.mxu0 %v3135
        %4291 = vmatprep.subr.bf16.mxu0 0
        %4292 = vmatpush2.bf16.msra.mxu0 %v3134
        %4293 = vmatprep.subr.bf16.mxu0 0
        %4294 = vmatpush2.bf16.msra.mxu0 %v3133
        %4295 = vmatprep.subr.bf16.mxu0 0
        %4296 = vmatpush2.bf16.msra.mxu0 %v3132
        %4297 = vmatprep.subr.bf16.mxu0 0
        %4298 = vmatpush2.bf16.msra.mxu0 %v3131
        %4299 = vmatprep.mubr.bf16.mxu0 %v1284
        %4300 = vmatmul.mubr.bf16.gmra.mxu0 %v1282
        %v4301 = vpop.f32.mrf.mxu0
        %v4302 = vadd.f32 %v4262, %v4301
        %v4303 = vpop.f32.mrf.mxu0
        %v4304 = vpop.f32.mrf.mxu0
        %v4305 = vpop.f32.mrf.mxu0
        %4306 = vdwg.mxu0
        %4307 = vmatprep.subr.bf16.mxu0 0
        %4308 = vmatpush1.bf16.msra.mxu0 %v3146
        %4309 = vmatprep.subr.bf16.mxu0 0
        %4310 = vmatpush1.bf16.msra.mxu0 %v3145
        %4311 = vmatprep.subr.bf16.mxu0 0
        %4312 = vmatpush1.bf16.msra.mxu0 %v3144
        %4313 = vmatprep.subr.bf16.mxu0 0
        %4314 = vmatpush1.bf16.msra.mxu0 %v3143
        %4315 = vmatprep.subr.bf16.mxu0 0
        %4316 = vmatpush1.bf16.msra.mxu0 %v3142
        %4317 = vmatprep.subr.bf16.mxu0 0
        %4318 = vmatpush1.bf16.msra.mxu0 %v3141
        %4319 = vmatprep.subr.bf16.mxu0 0
        %4320 = vmatpush1.bf16.msra.mxu0 %v3140
        %4321 = vmatprep.subr.bf16.mxu0 0
        %4322 = vmatpush1.bf16.msra.mxu0 %v3139
        %4323 = vmatprep.subr.bf16.mxu0 0
        %4324 = vmatpush2.bf16.msra.mxu0 %v3154
        %4325 = vmatprep.subr.bf16.mxu0 0
        %4326 = vmatpush2.bf16.msra.mxu0 %v3153
        %4327 = vmatprep.subr.bf16.mxu0 0
        %4328 = vmatpush2.bf16.msra.mxu0 %v3152
        %4329 = vmatprep.subr.bf16.mxu0 0
        %4330 = vmatpush2.bf16.msra.mxu0 %v3151
        %4331 = vmatprep.subr.bf16.mxu0 0
        %4332 = vmatpush2.bf16.msra.mxu0 %v3150
        %4333 = vmatprep.subr.bf16.mxu0 0
        %4334 = vmatpush2.bf16.msra.mxu0 %v3149
        %4335 = vmatprep.subr.bf16.mxu0 0
        %4336 = vmatpush2.bf16.msra.mxu0 %v3148
        %4337 = vmatprep.subr.bf16.mxu0 0
        %4338 = vmatpush2.bf16.msra.mxu0 %v3147
        %4339 = vmatprep.mubr.bf16.mxu0 %v1281
        %4340 = vmatmul.mubr.bf16.gmra.mxu0 %v1267
        %v4341 = vpop.f32.mrf.mxu0
        %v4342 = vadd.f32 %v4302, %v4341
        %v4343 = vpop.f32.mrf.mxu0
        %v4344 = vpop.f32.mrf.mxu0
        %v4345 = vpop.f32.mrf.mxu0
        %4346 = vdwg.mxu0
        %4347 = vmatprep.subr.bf16.mxu0 0
        %4348 = vmatpush1.bf16.msra.mxu0 %v3162
        %4349 = vmatprep.subr.bf16.mxu0 0
        %4350 = vmatpush1.bf16.msra.mxu0 %v3161
        %4351 = vmatprep.subr.bf16.mxu0 0
        %4352 = vmatpush1.bf16.msra.mxu0 %v3160
        %4353 = vmatprep.subr.bf16.mxu0 0
        %4354 = vmatpush1.bf16.msra.mxu0 %v3159
        %4355 = vmatprep.subr.bf16.mxu0 0
        %4356 = vmatpush1.bf16.msra.mxu0 %v3158
        %4357 = vmatprep.subr.bf16.mxu0 0
        %4358 = vmatpush1.bf16.msra.mxu0 %v3157
        %4359 = vmatprep.subr.bf16.mxu0 0
        %4360 = vmatpush1.bf16.msra.mxu0 %v3156
        %4361 = vmatprep.subr.bf16.mxu0 0
        %4362 = vmatpush1.bf16.msra.mxu0 %v3155
        %4363 = vmatprep.subr.bf16.mxu0 0
        %4364 = vmatpush2.bf16.msra.mxu0 %v3170
        %4365 = vmatprep.subr.bf16.mxu0 0
        %4366 = vmatpush2.bf16.msra.mxu0 %v3169
        %4367 = vmatprep.subr.bf16.mxu0 0
        %4368 = vmatpush2.bf16.msra.mxu0 %v3168
        %4369 = vmatprep.subr.bf16.mxu0 0
        %4370 = vmatpush2.bf16.msra.mxu0 %v3167
        %4371 = vmatprep.subr.bf16.mxu0 0
        %4372 = vmatpush2.bf16.msra.mxu0 %v3166
        %4373 = vmatprep.subr.bf16.mxu0 0
        %4374 = vmatpush2.bf16.msra.mxu0 %v3165
        %4375 = vmatprep.subr.bf16.mxu0 0
        %4376 = vmatpush2.bf16.msra.mxu0 %v3164
        %4377 = vmatprep.subr.bf16.mxu0 0
        %4378 = vmatpush2.bf16.msra.mxu0 %v3163
        %4379 = vmatprep.mubr.bf16.mxu0 %v1285
        %4380 = vmatmul.mubr.bf16.gmra.mxu0 %v1283
        %v4381 = vpop.f32.mrf.mxu0
        %v4382 = vadd.f32 %v4342, %v4381
        %v4383 = vpop.f32.mrf.mxu0
        %v4384 = vpop.f32.mrf.mxu0
        %v4385 = vpop.f32.mrf.mxu0
        %4386 = vdwg.mxu0
        %4387 = vmatprep.subr.bf16.mxu0 0
        %4388 = vmatpush1.bf16.msra.mxu0 %v3178
        %4389 = vmatprep.subr.bf16.mxu0 0
        %4390 = vmatpush1.bf16.msra.mxu0 %v3177
        %4391 = vmatprep.subr.bf16.mxu0 0
        %4392 = vmatpush1.bf16.msra.mxu0 %v3176
        %4393 = vmatprep.subr.bf16.mxu0 0
        %4394 = vmatpush1.bf16.msra.mxu0 %v3175
        %4395 = vmatprep.subr.bf16.mxu0 0
        %4396 = vmatpush1.bf16.msra.mxu0 %v3174
        %4397 = vmatprep.subr.bf16.mxu0 0
        %4398 = vmatpush1.bf16.msra.mxu0 %v3173
        %4399 = vmatprep.subr.bf16.mxu0 0
        %4400 = vmatpush1.bf16.msra.mxu0 %v3172
        %4401 = vmatprep.subr.bf16.mxu0 0
        %4402 = vmatpush1.bf16.msra.mxu0 %v3171
        %4403 = vmatprep.subr.bf16.mxu0 0
        %4404 = vmatpush2.bf16.msra.mxu0 %v3186
        %4405 = vmatprep.subr.bf16.mxu0 0
        %4406 = vmatpush2.bf16.msra.mxu0 %v3185
        %4407 = vmatprep.subr.bf16.mxu0 0
        %4408 = vmatpush2.bf16.msra.mxu0 %v3184
        %4409 = vmatprep.subr.bf16.mxu0 0
        %4410 = vmatpush2.bf16.msra.mxu0 %v3183
        %4411 = vmatprep.subr.bf16.mxu0 0
        %4412 = vmatpush2.bf16.msra.mxu0 %v3182
        %4413 = vmatprep.subr.bf16.mxu0 0
        %4414 = vmatpush2.bf16.msra.mxu0 %v3181
        %4415 = vmatprep.subr.bf16.mxu0 0
        %4416 = vmatpush2.bf16.msra.mxu0 %v3180
        %4417 = vmatprep.subr.bf16.mxu0 0
        %4418 = vmatpush2.bf16.msra.mxu0 %v3179
        %4419 = vmatprep.mubr.bf16.mxu0 %v1323
        %4420 = vmatmul.mubr.bf16.gmra.mxu0 %v1309
        %v4421 = vpop.f32.mrf.mxu0
        %v4422 = vadd.f32 %v4382, %v4421
        %v4423 = vpop.f32.mrf.mxu0
        %v4424 = vpop.f32.mrf.mxu0
        %v4425 = vpop.f32.mrf.mxu0
        %4426 = vdwg.mxu0
        %4427 = vmatprep.subr.bf16.mxu0 0
        %4428 = vmatpush1.bf16.msra.mxu0 %v3194
        %4429 = vmatprep.subr.bf16.mxu0 0
        %4430 = vmatpush1.bf16.msra.mxu0 %v3193
        %4431 = vmatprep.subr.bf16.mxu0 0
        %4432 = vmatpush1.bf16.msra.mxu0 %v3192
        %4433 = vmatprep.subr.bf16.mxu0 0
        %4434 = vmatpush1.bf16.msra.mxu0 %v3191
        %4435 = vmatprep.subr.bf16.mxu0 0
        %4436 = vmatpush1.bf16.msra.mxu0 %v3190
        %4437 = vmatprep.subr.bf16.mxu0 0
        %4438 = vmatpush1.bf16.msra.mxu0 %v3189
        %4439 = vmatprep.subr.bf16.mxu0 0
        %4440 = vmatpush1.bf16.msra.mxu0 %v3188
        %4441 = vmatprep.subr.bf16.mxu0 0
        %4442 = vmatpush1.bf16.msra.mxu0 %v3187
        %4443 = vmatprep.subr.bf16.mxu0 0
        %4444 = vmatpush2.bf16.msra.mxu0 %v3202
        %4445 = vmatprep.subr.bf16.mxu0 0
        %4446 = vmatpush2.bf16.msra.mxu0 %v3201
        %4447 = vmatprep.subr.bf16.mxu0 0
        %4448 = vmatpush2.bf16.msra.mxu0 %v3200
        %4449 = vmatprep.subr.bf16.mxu0 0
        %4450 = vmatpush2.bf16.msra.mxu0 %v3199
        %4451 = vmatprep.subr.bf16.mxu0 0
        %4452 = vmatpush2.bf16.msra.mxu0 %v3198
        %4453 = vmatprep.subr.bf16.mxu0 0
        %4454 = vmatpush2.bf16.msra.mxu0 %v3197
        %4455 = vmatprep.subr.bf16.mxu0 0
        %4456 = vmatpush2.bf16.msra.mxu0 %v3196
        %4457 = vmatprep.subr.bf16.mxu0 0
        %4458 = vmatpush2.bf16.msra.mxu0 %v3195
        %4459 = vmatprep.mubr.bf16.mxu0 %v1332
        %4460 = vmatmul.mubr.bf16.gmra.mxu0 %v1331
        %v4461 = vpop.f32.mrf.mxu0
        %v4462 = vadd.f32 %v4422, %v4461
        %v4463 = vpop.f32.mrf.mxu0
        %v4464 = vpop.f32.mrf.mxu0
        %v4465 = vpop.f32.mrf.mxu0
        %4466 = vdwg.mxu0
        %4467 = vmatprep.subr.bf16.mxu0 0
        %4468 = vmatpush1.bf16.msra.mxu0 %v3210
        %4469 = vmatprep.subr.bf16.mxu0 0
        %4470 = vmatpush1.bf16.msra.mxu0 %v3209
        %4471 = vmatprep.subr.bf16.mxu0 0
        %4472 = vmatpush1.bf16.msra.mxu0 %v3208
        %4473 = vmatprep.subr.bf16.mxu0 0
        %4474 = vmatpush1.bf16.msra.mxu0 %v3207
        %4475 = vmatprep.subr.bf16.mxu0 0
        %4476 = vmatpush1.bf16.msra.mxu0 %v3206
        %4477 = vmatprep.subr.bf16.mxu0 0
        %4478 = vmatpush1.bf16.msra.mxu0 %v3205
        %4479 = vmatprep.subr.bf16.mxu0 0
        %4480 = vmatpush1.bf16.msra.mxu0 %v3204
        %4481 = vmatprep.subr.bf16.mxu0 0
        %4482 = vmatpush1.bf16.msra.mxu0 %v3203
        %4483 = vmatprep.subr.bf16.mxu0 0
        %4484 = vmatpush2.bf16.msra.mxu0 %v3218
        %4485 = vmatprep.subr.bf16.mxu0 0
        %4486 = vmatpush2.bf16.msra.mxu0 %v3217
        %4487 = vmatprep.subr.bf16.mxu0 0
        %4488 = vmatpush2.bf16.msra.mxu0 %v3216
        %4489 = vmatprep.subr.bf16.mxu0 0
        %4490 = vmatpush2.bf16.msra.mxu0 %v3215
        %4491 = vmatprep.subr.bf16.mxu0 0
        %4492 = vmatpush2.bf16.msra.mxu0 %v3214
        %4493 = vmatprep.subr.bf16.mxu0 0
        %4494 = vmatpush2.bf16.msra.mxu0 %v3213
        %4495 = vmatprep.subr.bf16.mxu0 0
        %4496 = vmatpush2.bf16.msra.mxu0 %v3212
        %4497 = vmatprep.subr.bf16.mxu0 0
        %4498 = vmatpush2.bf16.msra.mxu0 %v3211
        %4499 = vmatprep.mubr.bf16.mxu0 %v1330
        %4500 = vmatmul.mubr.bf16.gmra.mxu0 %v1316
        %v4501 = vpop.f32.mrf.mxu0
        %v4502 = vadd.f32 %v4462, %v4501
        %v4503 = vpop.f32.mrf.mxu0
        %v4504 = vpop.f32.mrf.mxu0
        %v4505 = vpop.f32.mrf.mxu0
        %4506 = vdwg.mxu0
        %v4507 = vadd.f32 %v292, %v4502
        %4508 = vst [vmem:[#allocation2] sm:$0x3] %v4507
        %p4509 = scmp.eq.s32.totalorder %s19, 7
        // Predicated region
        $region53: #{cnn_forward.5} parent=47 // pred_check
          %p4510 = pneg %p4509
        $region54: #{cnn_forward.5} parent=47 // pred_check_branch
          %4512 = sbr.rel (%p4510) target = $region56
        $region55: #{cnn_forward.5} parent=47 // pred_region
          %v4513 = vld [vmem:[#allocation2] sm:$0x3]
          %v4514 = vld [vmem:[%s2] sm:$0x1]
          %v4516 = vlaneseq
          %v4517 = vshrl.u32 %v4516, 7
          %v4518 = vsub.s32 0, %v4517
          %v4519 = vrot.slane %v4514, %v4518
          %v4521 = vadd.f32 %v4513, %v4519
          %v4522 = vmax.f32 %v4521, 0.0
          %v4523 = vld [vmem:[%s3] sm:$0xff]
          %v4524 = vld [vmem:[%s3 + $0x8] sm:$0xff]
          %v4525 = vld [vmem:[%s3 + $0x10] sm:$0xff]
          %v4526 = vld [vmem:[%s3 + $0x18] sm:$0xff]
          %v4527 = vld [vmem:[%s3 + $0x20] sm:$0xff]
          %v4528 = vld [vmem:[%s3 + $0x28] sm:$0xff]
          %v4529 = vld [vmem:[%s3 + $0x30] sm:$0xff]
          %v4530 = vld [vmem:[%s3 + $0x38] sm:$0xff]
          %v4531 = vld [vmem:[%s3 + $0x40] sm:$0xff]
          %v4532 = vld [vmem:[%s3 + $0x48] sm:$0xff]
          %v4533 = vld [vmem:[%s3 + $0x50] sm:$0xff]
          %v4534 = vld [vmem:[%s3 + $0x58] sm:$0xff]
          %v4535 = vld [vmem:[%s3 + $0x60] sm:$0xff]
          %v4536 = vld [vmem:[%s3 + $0x68] sm:$0xff]
          %v4537 = vld [vmem:[%s3 + $0x70] sm:$0xff]
          %v4538 = vld [vmem:[%s3 + $0x78] sm:$0xff]
          %v4539 = vld [vmem:[%s4] sm:$0x1]
          %v4541 = vlaneseq
          %v4542 = vshrl.u32 %v4541, 7
          %v4543 = vsub.s32 0, %v4542
          %v4544 = vrot.slane %v4539, %v4543
          %4546 = vmatprep.subr.mxu0 0.0
          %4547 = vmatpush1.msra.mxu0 %v4538
          %4548 = vmatprep.subr.mxu0 0.0
          %4549 = vmatpush1.msra.mxu0 %v4537
          %4550 = vmatprep.subr.mxu0 0.0
          %4551 = vmatpush1.msra.mxu0 %v4536
          %4552 = vmatprep.subr.mxu0 0.0
          %4553 = vmatpush1.msra.mxu0 %v4535
          %4554 = vmatprep.subr.mxu0 0.0
          %4555 = vmatpush1.msra.mxu0 %v4534
          %4556 = vmatprep.subr.mxu0 0.0
          %4557 = vmatpush1.msra.mxu0 %v4533
          %4558 = vmatprep.subr.mxu0 0.0
          %4559 = vmatpush1.msra.mxu0 %v4532
          %4560 = vmatprep.subr.mxu0 0.0
          %4561 = vmatpush1.msra.mxu0 %v4531
          %4562 = vmatprep.subr.mxu0 0.0
          %4563 = vmatpush1.msra.mxu0 %v4530
          %4564 = vmatprep.subr.mxu0 0.0
          %4565 = vmatpush1.msra.mxu0 %v4529
          %4566 = vmatprep.subr.mxu0 0.0
          %4567 = vmatpush1.msra.mxu0 %v4528
          %4568 = vmatprep.subr.mxu0 0.0
          %4569 = vmatpush1.msra.mxu0 %v4527
          %4570 = vmatprep.subr.mxu0 0.0
          %4571 = vmatpush1.msra.mxu0 %v4526
          %4572 = vmatprep.subr.mxu0 0.0
          %4573 = vmatpush1.msra.mxu0 %v4525
          %4574 = vmatprep.subr.mxu0 0.0
          %4575 = vmatpush1.msra.mxu0 %v4524
          %4576 = vmatprep.subr.mxu0 0.0
          %4577 = vmatpush1.msra.mxu0 %v4523
          %4578 = vmatprep.subr.mxu0 0.0
          %4579 = vmatpush2.msra.mxu0 0.0
          %4580 = vmatprep.subr.mxu0 0.0
          %4581 = vmatpush2.msra.mxu0 0.0
          %4582 = vmatprep.subr.mxu0 0.0
          %4583 = vmatpush2.msra.mxu0 0.0
          %4584 = vmatprep.subr.mxu0 0.0
          %4585 = vmatpush2.msra.mxu0 0.0
          %4586 = vmatprep.subr.mxu0 0.0
          %4587 = vmatpush2.msra.mxu0 0.0
          %4588 = vmatprep.subr.mxu0 0.0
          %4589 = vmatpush2.msra.mxu0 0.0
          %4590 = vmatprep.subr.mxu0 0.0
          %4591 = vmatpush2.msra.mxu0 0.0
          %4592 = vmatprep.subr.mxu0 0.0
          %4593 = vmatpush2.msra.mxu0 0.0
          %4594 = vmatprep.subr.mxu0 0.0
          %4595 = vmatpush2.msra.mxu0 0.0
          %4596 = vmatprep.subr.mxu0 0.0
          %4597 = vmatpush2.msra.mxu0 0.0
          %4598 = vmatprep.subr.mxu0 0.0
          %4599 = vmatpush2.msra.mxu0 0.0
          %4600 = vmatprep.subr.mxu0 0.0
          %4601 = vmatpush2.msra.mxu0 0.0
          %4602 = vmatprep.subr.mxu0 0.0
          %4603 = vmatpush2.msra.mxu0 0.0
          %4604 = vmatprep.subr.mxu0 0.0
          %4605 = vmatpush2.msra.mxu0 0.0
          %4606 = vmatprep.subr.mxu0 0.0
          %4607 = vmatpush2.msra.mxu0 0.0
          %4608 = vmatprep.subr.mxu0 0.0
          %4609 = vmatpush2.msra.mxu0 0.0
          %4610 = vmatprep.mubr.f32.mxu0 0.0
          %4611 = vmatmul.mubr.f32.gmra.mxu0 %v4522
          %v4612 = vpop.f32.mrf.mxu0
          %v4613 = vadd.f32 %v4544, %v4612
          %v4614 = vpop.f32.mrf.mxu0
          %4615 = vdwg.mxu0
          %v4616 = vmax.f32 %v4613, 0.0
          %v4617 = vld [vmem:[%s5] sm:$0xff]
          %v4618 = vld [vmem:[%s5 + $0x8] sm:$0xff]
          %v4619 = vld [vmem:[%s5 + $0x10] sm:$0xff]
          %v4620 = vld [vmem:[%s5 + $0x18] sm:$0xff]
          %v4621 = vld [vmem:[%s5 + $0x20] sm:$0xff]
          %v4622 = vld [vmem:[%s5 + $0x28] sm:$0xff]
          %v4623 = vld [vmem:[%s5 + $0x30] sm:$0xff]
          %v4624 = vld [vmem:[%s5 + $0x38] sm:$0xff]
          %v4625 = vld [vmem:[%s5 + $0x40] sm:$0xff]
          %v4626 = vld [vmem:[%s5 + $0x48] sm:$0xff]
          %v4627 = vld [vmem:[%s5 + $0x50] sm:$0xff]
          %v4628 = vld [vmem:[%s5 + $0x58] sm:$0xff]
          %v4629 = vld [vmem:[%s5 + $0x60] sm:$0xff]
          %v4630 = vld [vmem:[%s5 + $0x68] sm:$0xff]
          %v4631 = vld [vmem:[%s5 + $0x70] sm:$0xff]
          %v4632 = vld [vmem:[%s5 + $0x78] sm:$0xff]
          %v4633 = vld [vmem:[%s5 + $0x80] sm:$0xff]
          %v4634 = vld [vmem:[%s5 + $0x88] sm:$0xff]
          %v4635 = vld [vmem:[%s5 + $0x90] sm:$0x3]
          %v4636 = vld [vmem:[%s5 + $0x98] sm:$0x3]
          %v4637 = vld [vmem:[%s5 + $0xa0] sm:$0x3]
          %v4638 = vld [vmem:[%s6] sm:$0x7]
          %v4640 = vlaneseq
          %v4641 = vshrl.u32 %v4640, 7
          %v4642 = vsub.s32 0, %v4641
          %v4643 = vrot.slane %v4638, %v4642
          %v4644 = vlaneseq
          %v4645 = vshrl.u32 %v4644, 7
          %v4646 = vsub.s32 1, %v4645
          %v4647 = vrot.slane %v4638, %v4646
          %v4648 = vlaneseq
          %v4649 = vshrl.u32 %v4648, 7
          %v4650 = vsub.s32 2, %v4649
          %v4651 = vrot.slane %v4638, %v4650
          %vm4655 = vcmask 408576
          %v4657 = vsel %vm4655, %v4616, 0
          %vm4659 = vcmask 1041408
          %v4661 = vsel %vm4659, %v4635, 0
          %v4664 = vsel %vm4659, %v4636, 0
          %v4667 = vsel %vm4659, %v4637, 0
          %4669 = vmatprep.subr.mxu0 0.0
          %4670 = vmatpush1.msra.mxu0 0.0
          %4671 = vmatprep.subr.mxu0 0.0
          %4672 = vmatpush1.msra.mxu0 0.0
          %4673 = vmatprep.subr.mxu0 0.0
          %4674 = vmatpush1.msra.mxu0 0.0
          %4675 = vmatprep.subr.mxu0 0.0
          %4676 = vmatpush1.msra.mxu0 0.0
          %4677 = vmatprep.subr.mxu0 0.0
          %4678 = vmatpush1.msra.mxu0 0.0
          %4679 = vmatprep.subr.mxu0 0.0
          %4680 = vmatpush1.msra.mxu0 0.0
          %4681 = vmatprep.subr.mxu0 0.0
          %4682 = vmatpush1.msra.mxu0 0.0
          %4683 = vmatprep.subr.mxu0 0.0
          %4684 = vmatpush1.msra.mxu0 0.0
          %4685 = vmatprep.subr.mxu0 0.0
          %4686 = vmatpush1.msra.mxu0 0.0
          %4687 = vmatprep.subr.mxu0 %v4664
          %4688 = vmatpush1.msra.mxu0 %v4661
          %4689 = vmatprep.subr.mxu0 %v4633
          %4690 = vmatpush1.msra.mxu0 %v4632
          %4691 = vmatprep.subr.mxu0 %v4630
          %4692 = vmatpush1.msra.mxu0 %v4629
          %4693 = vmatprep.subr.mxu0 %v4627
          %4694 = vmatpush1.msra.mxu0 %v4626
          %4695 = vmatprep.subr.mxu0 %v4624
          %4696 = vmatpush1.msra.mxu0 %v4623
          %4697 = vmatprep.subr.mxu0 %v4621
          %4698 = vmatpush1.msra.mxu0 %v4620
          %4699 = vmatprep.subr.mxu0 %v4618
          %4700 = vmatpush1.msra.mxu0 %v4617
          %4701 = vmatprep.subr.mxu0 0.0
          %4702 = vmatpush2.msra.mxu0 0.0
          %4703 = vmatprep.subr.mxu0 0.0
          %4704 = vmatpush2.msra.mxu0 0.0
          %4705 = vmatprep.subr.mxu0 0.0
          %4706 = vmatpush2.msra.mxu0 0.0
          %4707 = vmatprep.subr.mxu0 0.0
          %4708 = vmatpush2.msra.mxu0 0.0
          %4709 = vmatprep.subr.mxu0 0.0
          %4710 = vmatpush2.msra.mxu0 0.0
          %4711 = vmatprep.subr.mxu0 0.0
          %4712 = vmatpush2.msra.mxu0 0.0
          %4713 = vmatprep.subr.mxu0 0.0
          %4714 = vmatpush2.msra.mxu0 0.0
          %4715 = vmatprep.subr.mxu0 0.0
          %4716 = vmatpush2.msra.mxu0 0.0
          %4717 = vmatprep.subr.mxu0 0.0
          %4718 = vmatpush2.msra.mxu0 0.0
          %4719 = vmatprep.subr.mxu0 0.0
          %4720 = vmatpush2.msra.mxu0 0.0
          %4721 = vmatprep.subr.mxu0 0.0
          %4722 = vmatpush2.msra.mxu0 0.0
          %4723 = vmatprep.subr.mxu0 0.0
          %4724 = vmatpush2.msra.mxu0 0.0
          %4725 = vmatprep.subr.mxu0 0.0
          %4726 = vmatpush2.msra.mxu0 0.0
          %4727 = vmatprep.subr.mxu0 0.0
          %4728 = vmatpush2.msra.mxu0 0.0
          %4729 = vmatprep.subr.mxu0 0.0
          %4730 = vmatpush2.msra.mxu0 0.0
          %4731 = vmatprep.subr.mxu0 0.0
          %4732 = vmatpush2.msra.mxu0 0.0
          %4733 = vmatprep.mubr.f32.mxu0 0.0
          %4734 = vmatmul.mubr.f32.gmra.mxu0 %v4657
          %v4735 = vpop.f32.mrf.mxu0
          %v4736 = vadd.f32 %v4643, %v4735
          %v4737 = vpop.f32.mrf.mxu0
          %v4738 = vadd.f32 %v4647, %v4737
          %4739 = vdwg.mxu0
          %4740 = vmatprep.subr.mxu0 0.0
          %4741 = vmatpush1.msra.mxu0 0.0
          %4742 = vmatprep.subr.mxu0 0.0
          %4743 = vmatpush1.msra.mxu0 0.0
          %4744 = vmatprep.subr.mxu0 0.0
          %4745 = vmatpush1.msra.mxu0 0.0
          %4746 = vmatprep.subr.mxu0 0.0
          %4747 = vmatpush1.msra.mxu0 0.0
          %4748 = vmatprep.subr.mxu0 0.0
          %4749 = vmatpush1.msra.mxu0 0.0
          %4750 = vmatprep.subr.mxu0 0.0
          %4751 = vmatpush1.msra.mxu0 0.0
          %4752 = vmatprep.subr.mxu0 0.0
          %4753 = vmatpush1.msra.mxu0 0.0
          %4754 = vmatprep.subr.mxu0 0.0
          %4755 = vmatpush1.msra.mxu0 0.0
          %4756 = vmatprep.subr.mxu0 0.0
          %4757 = vmatpush1.msra.mxu0 0.0
          %4758 = vmatprep.subr.mxu0 0.0
          %4759 = vmatpush1.msra.mxu0 %v4667
          %4760 = vmatprep.subr.mxu0 0.0
          %4761 = vmatpush1.msra.mxu0 %v4634
          %4762 = vmatprep.subr.mxu0 0.0
          %4763 = vmatpush1.msra.mxu0 %v4631
          %4764 = vmatprep.subr.mxu0 0.0
          %4765 = vmatpush1.msra.mxu0 %v4628
          %4766 = vmatprep.subr.mxu0 0.0
          %4767 = vmatpush1.msra.mxu0 %v4625
          %4768 = vmatprep.subr.mxu0 0.0
          %4769 = vmatpush1.msra.mxu0 %v4622
          %4770 = vmatprep.subr.mxu0 0.0
          %4771 = vmatpush1.msra.mxu0 %v4619
          %4772 = vmatprep.subr.mxu0 0.0
          %4773 = vmatpush2.msra.mxu0 0.0
          %4774 = vmatprep.subr.mxu0 0.0
          %4775 = vmatpush2.msra.mxu0 0.0
          %4776 = vmatprep.subr.mxu0 0.0
          %4777 = vmatpush2.msra.mxu0 0.0
          %4778 = vmatprep.subr.mxu0 0.0
          %4779 = vmatpush2.msra.mxu0 0.0
          %4780 = vmatprep.subr.mxu0 0.0
          %4781 = vmatpush2.msra.mxu0 0.0
          %4782 = vmatprep.subr.mxu0 0.0
          %4783 = vmatpush2.msra.mxu0 0.0
          %4784 = vmatprep.subr.mxu0 0.0
          %4785 = vmatpush2.msra.mxu0 0.0
          %4786 = vmatprep.subr.mxu0 0.0
          %4787 = vmatpush2.msra.mxu0 0.0
          %4788 = vmatprep.subr.mxu0 0.0
          %4789 = vmatpush2.msra.mxu0 0.0
          %4790 = vmatprep.subr.mxu0 0.0
          %4791 = vmatpush2.msra.mxu0 0.0
          %4792 = vmatprep.subr.mxu0 0.0
          %4793 = vmatpush2.msra.mxu0 0.0
          %4794 = vmatprep.subr.mxu0 0.0
          %4795 = vmatpush2.msra.mxu0 0.0
          %4796 = vmatprep.subr.mxu0 0.0
          %4797 = vmatpush2.msra.mxu0 0.0
          %4798 = vmatprep.subr.mxu0 0.0
          %4799 = vmatpush2.msra.mxu0 0.0
          %4800 = vmatprep.subr.mxu0 0.0
          %4801 = vmatpush2.msra.mxu0 0.0
          %4802 = vmatprep.subr.mxu0 0.0
          %4803 = vmatpush2.msra.mxu0 0.0
          %4804 = vmatprep.mubr.f32.mxu0 0.0
          %4805 = vmatmul.mubr.f32.gmra.mxu0 %v4657
          %v4806 = vpop.f32.mrf.mxu0
          %v4807 = vadd.f32 %v4651, %v4806
          %v4808 = vpop.f32.mrf.mxu0
          %4809 = vdwg.mxu0
          %v4813 = vcombine.low %v4736, %v4738
          %v4815 = vunpack.c.l.s4 1983009808
          %v4816 = vunpack.c.0.s8 %v4815
          %v4817 = vlaneseq
          %v4818 = vshrl.u32 %v4817, 7
          %v4819 = vsub.s32 %v4816, %v4818
          %v4820 = vrot.slane %v4813, %v4819
          %v4822 = vunpack.c.l.s4 1983009808
          %v4823 = vunpack.c.0.s8 %v4822
          %v4824 = vlaneseq
          %v4825 = vshrl.u32 %v4824, 7
          %v4826 = vsub.s32 %v4823, %v4825
          %v4827 = vrot.slane %v4807, %v4826
          %v4828 = vcombine.low %v4820, %v4827
          %vm4830 = vcmask 1043458
          %vm4831 = vmor %vm4830, %vm4659
          %vm4832 = vcmask 726020
          %vm4833 = vmor %vm4832, %vm4831
          %4834 = vst.msk [vmem:[#allocation3] sm:$0x3f] %vm4833, %v4828
        $region56: #{cnn_forward.5} parent=47 // pred_fallthru
          _
        // Predicated region
        $region57: #{cnn_forward.5} parent=47 // pred_check
          %p4835 = pneg %p189
        $region58: #{cnn_forward.5} parent=47 // pred_check_branch
          %4837 = sbr.rel (%p4835) target = $region60
        $region59: #{cnn_forward.5} parent=47 // pred_region
          %s4839 = ssub.s32 96, 96
          %4840 = vsyncadd [#allocation4], %s4839
          %s4842 = sshll.u32 [#allocation3], 4
          %s4843 = int_to_ptr.vmem [resolvable:$true] %s4842
          %4845 = dma.vmem_to_hbm [thread:$0]  %s4843, 96, %s7, [#allocation4]
        $region60: #{cnn_forward.5} parent=47 // pred_fallthru
          _
        // Predicated region
        $region61: #{cnn_forward.5} parent=47 // pred_check
          %p4846 = pneg %p189
        $region62: #{cnn_forward.5} parent=47 // pred_check_branch
          %4848 = sbr.rel (%p4846) target = $region64
        $region63: #{cnn_forward.5} parent=47 // pred_region
          %4849 = dma.done [#allocation4], 96
        $region64: #{cnn_forward.5} parent=47 // pred_fallthru
          _
      $region48: #{cnn_forward.5} parent=5 // pred_fallthru
        _
      %p4850 = scmp.le.s32.totalorder 2, %s14
      // Predicated region
      $region65: #{cnn_forward.5} parent=5 // pred_check
        %p4851 = pneg %p4850
      $region66: #{cnn_forward.5} parent=5 // pred_check_branch
        %4853 = sbr.rel (%p4851) target = $region68
      $region67: #{cnn_forward.5} parent=5 // pred_region
        %s4854 = ssub.s32 %s14, 2
      $region68: #{cnn_forward.5} parent=5 // pred_fallthru
        _
    $region6: #{cnn_forward.5} parent=1 // loop_footer
      %s18 = sadd.s32 1, %s14
    $region7: #{cnn_forward.5} parent=1 // loop_footer_branch
      %13 = sbr.rel target = $region3
    $region8: #{cnn_forward.5} parent=1 // loop_exit
      _
    %4855 = vsyncpa [#allocation4], 1
    %s4856 = scalar_lea.sflag [#allocation4], 1
    %4857 = vsyncpa %s4856, 1

</llo_original>
